<compile_context>
chip_gen: v5e
topology: v5e:2x2
jax: 0.10.0
libtpu: 0.0.40
codegen_flags: <defaults>
</compile_context>

<pallas_src>
import jax
import jax.numpy as jnp
from jax import lax
from jax.experimental import pallas as pl
from jax.experimental.pallas import tpu as pltpu

CPAD = 128   # lane-dense channel / hidden padding
NCH = 40     # real conv channel count


def _sigmoid(v):
    # Numerically stable sigmoid: exp(-|v|) never overflows.
    z = jnp.exp(-jnp.abs(v))
    return jnp.where(v >= 0, 1.0 / (1.0 + z), z / (1.0 + z))


# ----------------------------------------------------------------------------
# Fully fused forward kernel: one grid step == one image.
# ----------------------------------------------------------------------------
def _model5_kernel(p1_ref, w1_ref, b1_ref, w2_ref, b2_ref,
                   wf1_ref, bf1_ref, wf2_ref, bf2_ref, wf3_ref, bf3_ref,
                   o_ref,
                   c1a_sc, c1b_sc, f1pad_sc, row_sc, h_sc):
    """p1_ref : [1,784,25] bf16  conv1 im2col patches, row p = oy*56+ox*4+dy*2+dx
       w1_ref : [25,128]   bf16  conv1 taps (tap = i*5+j), cout zero-padded
       w2_ref : [25,128,128] bf16 conv2 taps, cin/cout zero-padded
       wf1_ref: [49,40,128] bf16 fc1, K de-padded to 40 real channels, p=y*7+x
       wf2/wf3: [128,128]  bf16  fc2 / fc3 (only real rows/cols nonzero)
       biases : [1,128]    f32
       o_ref  : [1,1,128]  f32   logits (lanes >= 10 are zero)."""
    # ----------------- conv1 + bias + ReLU: one M=784 MXU matmul ------------
    acc1 = jnp.dot(p1_ref[0], w1_ref[...], preferred_element_type=jnp.float32)
    acc1 = jnp.maximum(acc1 + b1_ref[...], 0.0)                # [784,128] f32
    c1a_sc[...] = acc1

    # ----------------- 2x2 max pool via stride-2 sublane reads --------------
    # c1a rows: p = oy*56 + ox*4 + dy*2 + dx  -> stage 1 maxes over dx.
    c1b_sc[...] = jnp.maximum(c1a_sc[pl.ds(0, 392, stride=2), :],
                              c1a_sc[pl.ds(1, 392, stride=2), :])
    # c1b rows: oy*28 + ox*2 + dy -> stage 2 maxes over dy, one pooled row at a
    # time, written straight into the zero-halo conv2 input buffer (pad = 2).
    f1pad_sc[...] = jnp.zeros_like(f1pad_sc)
    for r in range(14):
        prow = jnp.maximum(c1b_sc[pl.ds(28 * r, 14, stride=2), :],
                           c1b_sc[pl.ds(28 * r + 1, 14, stride=2), :])
        f1pad_sc[2 + r, pl.ds(2, 14), :] = prow                # [14,128] f32

    # ----------- conv2 + bias + ReLU + 2x2 pool + fc1 accumulation ----------
    h_sc[...] = jnp.zeros_like(h_sc)
    bias2 = jnp.broadcast_to(b2_ref[...], (14, CPAD))          # hoisted

    def conv2_row(oy, carry):
        # Two conv rows (dy = 0, 1) accumulated together so each conv2 weight
        # tile is loaded once per pooled output row.
        a0 = jnp.zeros((14, CPAD), jnp.float32)
        a1 = jnp.zeros((14, CPAD), jnp.float32)
        for i in range(5):
            for j in range(5):
                w_tap = w2_ref[i * 5 + j]                      # [128,128] bf16
                l0 = f1pad_sc[2 * oy + i, pl.ds(j, 14), :].astype(jnp.bfloat16)
                l1 = f1pad_sc[2 * oy + 1 + i, pl.ds(j, 14), :].astype(jnp.bfloat16)
                a0 = a0 + jnp.dot(l0, w_tap,
                                  preferred_element_type=jnp.float32)
                a1 = a1 + jnp.dot(l1, w_tap,
                                  preferred_element_type=jnp.float32)
        m = jnp.maximum(jnp.maximum(a0 + bias2, 0.0),
                        jnp.maximum(a1 + bias2, 0.0))          # pool over y
        row_sc[...] = m
        pooled = jnp.maximum(row_sc[pl.ds(0, 7, stride=2), :],
                             row_sc[pl.ds(1, 7, stride=2), :])  # [7,128] f32
        # fc1 contribution of this pooled row: contract only the 40 real chans.
        hrow = jnp.zeros((1, CPAD), jnp.float32)
        for ox in range(7):
            hrow = hrow + jnp.dot(pooled[ox:ox + 1, 0:NCH],
                                  wf1_ref[oy * 7 + ox],
                                  preferred_element_type=jnp.float32)
        h_sc[...] = h_sc[...] + hrow
        return carry

    lax.fori_loop(0, 7, conv2_row, 0)

    # ----------------- fc1 -> sigmoid -> fc2 -> sigmoid -> fc3 (f32) --------
    # TODO(synk): nn.Dropout(p=0.5) is identity in eval mode; training-mode
    # stochastic masking (pltpu.prng_*) is not reproduced here.
    h1 = _sigmoid(h_sc[...] + bf1_ref[...])
    h2 = _sigmoid(jnp.dot(h1, wf2_ref[...],
                          preferred_element_type=jnp.float32) + bf2_ref[...])
    o_ref[0] = jnp.dot(h2, wf3_ref[...],
                       preferred_element_type=jnp.float32) + bf3_ref[...]


def _fused_forward(patches, params):
    B = patches.shape[0]
    c2 = lambda b: (0, 0)
    c3 = lambda b: (0, 0, 0)
    return pl.pallas_call(
        _model5_kernel,
        out_shape=jax.ShapeDtypeStruct((B, 1, CPAD), jnp.float32),
        grid=(B,),
        in_specs=[
            pl.BlockSpec((1, 784, 25), lambda b: (b, 0, 0)),   # conv1 patches
            pl.BlockSpec((25, CPAD), c2),                      # conv1 w
            pl.BlockSpec((1, CPAD), c2),                       # conv1 b
            pl.BlockSpec((25, CPAD, CPAD), c3),                # conv2 w
            pl.BlockSpec((1, CPAD), c2),                       # conv2 b
            pl.BlockSpec((49, NCH, CPAD), c3),                 # fc1 w (de-padded K)
            pl.BlockSpec((1, CPAD), c2),                       # fc1 b
            pl.BlockSpec((CPAD, CPAD), c2),                    # fc2 w
            pl.BlockSpec((1, CPAD), c2),                       # fc2 b
            pl.BlockSpec((CPAD, CPAD), c2),                    # fc3 w
            pl.BlockSpec((1, CPAD), c2),                       # fc3 b
        ],
        out_specs=pl.BlockSpec((1, 1, CPAD), lambda b: (b, 0, 0)),
        scratch_shapes=[
            pltpu.VMEM((784, CPAD), jnp.float32),      # conv1 pre-pool map
            pltpu.VMEM((392, CPAD), jnp.float32),      # conv1 x-pooled map
            pltpu.VMEM((18, 18, CPAD), jnp.float32),   # conv2 zero-halo input
            pltpu.VMEM((14, CPAD), jnp.float32),       # conv2 row (pre x-pool)
            pltpu.VMEM((1, CPAD), jnp.float32),        # fc1 accumulator
        ],
        compiler_params=pltpu.CompilerParams(
            dimension_semantics=("parallel",)),
    )(patches,
      params["conv1_w"], params["conv1_b"],
      params["conv2_w"], params["conv2_b"],
      params["fc1_w"], params["fc1_b"],
      params["fc2_w"], params["fc2_b"],
      params["fc3_w"], params["fc3_b"])


# ----------------------------------------------------------------------------
# Model_5 forward
# ----------------------------------------------------------------------------
def model5_forward(params, x_nchw):
    B = x_nchw.shape[0]
    # conv1 im2col (Cin=1): single XLA op; channel o <-> tap (i=o//5, j=o%5).
    pat = lax.conv_general_dilated_patches(
        x_nchw, (5, 5), (1, 1), ((2, 2), (2, 2)))              # [B,25,28,28]
    # Re-order pixels to (oy, ox, dy, dx) so the 2x2 pool is stride-friendly.
    pat = pat.reshape(B, 25, 14, 2, 14, 2).transpose(0, 2, 4, 3, 5, 1)
    pat = pat.reshape(B, 784, 25).astype(jnp.bfloat16)
    out = _fused_forward(pat, params)                          # [B,1,128] f32
    return out[:, 0, :10]


# ----------------------------------------------------------------------------
# Parameters: torch-shaped init + one-time repack into kernel layout
# ----------------------------------------------------------------------------
def init_torch_params(key, hidden_size):
    ks = jax.random.split(key, 10)

    def u(k, shape, fan_in):
        bound = 1.0 / float(fan_in) ** 0.5
        return jax.random.uniform(k, shape, jnp.float32, -bound, bound)

    return {
        "conv1_w": u(ks[0], (40, 1, 5, 5), 1 * 5 * 5),
        "conv1_b": u(ks[1], (40,), 1 * 5 * 5),
        "conv2_w": u(ks[2], (40, 40, 5, 5), 40 * 5 * 5),
        "conv2_b": u(ks[3], (40,), 40 * 5 * 5),
        "fc1_w": u(ks[4], (hidden_size, 7 * 7 * 40), 7 * 7 * 40),
        "fc1_b": u(ks[5], (hidden_size,), 7 * 7 * 40),
        "fc2_w": u(ks[6], (hidden_size, hidden_size), hidden_size),
        "fc2_b": u(ks[7], (hidden_size,), hidden_size),
        "fc3_w": u(ks[8], (10, hidden_size), hidden_size),
        "fc3_b": u(ks[9], (10,), hidden_size),
    }


def pack_params(p, hidden_size):
    """One-time repack: bf16 weights in [K, N] orientation, channels / hidden
    padded to 128 lanes with ZERO weights (invariant: padded rows & columns
    are zero so sigmoid(0)=0.5 in padded lanes never reaches real outputs),
    torch's NCHW flatten order folded into fc1, and fc1's contraction
    de-padded to the 40 real channels."""
    h = hidden_size
    assert h <= CPAD and 10 <= CPAD

    def pad_bias(b):
        return jnp.zeros((1, CPAD), jnp.float32).at[0, :b.shape[0]].set(b)

    # conv1: [40,1,5,5] -> [25 taps, 128 out]   (tap = i*5 + j)
    w1 = jnp.transpose(p["conv1_w"][:, 0], (1, 2, 0)).reshape(25, NCH)
    w1p = jnp.zeros((25, CPAD), jnp.float32).at[:, :NCH].set(w1)

    # conv2: [40,40,5,5] -> [25 taps, 128 in, 128 out]
    w2 = jnp.transpose(p["conv2_w"], (2, 3, 1, 0)).reshape(25, NCH, NCH)
    w2p = jnp.zeros((25, CPAD, CPAD), jnp.float32).at[:, :NCH, :NCH].set(w2)

    # fc1: torch flattens (c, y, x); kernel contracts spatial p = y*7+x
    # (leading dim) and the 40 REAL channels (sublanes); hidden padded to 128.
    fc1 = p["fc1_w"].reshape(h, NCH, 7, 7)                     # [h, c, y, x]
    fc1 = jnp.transpose(fc1, (2, 3, 1, 0)).reshape(49, NCH, h)  # [p, c, h]
    fc1p = jnp.zeros((49, NCH, CPAD), jnp.float32).at[:, :, :h].set(fc1)

    fc2p = jnp.zeros((CPAD, CPAD), jnp.float32).at[:h, :h].set(p["fc2_w"].T)
    fc3p = jnp.zeros((CPAD, CPAD), jnp.float32).at[:h, :10].set(p["fc3_w"].T)

    return {
        "conv1_w": w1p.astype(jnp.bfloat16), "conv1_b": pad_bias(p["conv1_b"]),
        "conv2_w": w2p.astype(jnp.bfloat16), "conv2_b": pad_bias(p["conv2_b"]),
        "fc1_w": fc1p.astype(jnp.bfloat16), "fc1_b": pad_bias(p["fc1_b"]),
        "fc2_w": fc2p.astype(jnp.bfloat16), "fc2_b": pad_bias(p["fc2_b"]),
        "fc3_w": fc3p.astype(jnp.bfloat16), "fc3_b": pad_bias(p["fc3_b"]),
    }


if __name__ == "__main__":
    key = jax.random.PRNGKey(0)
    k_param, k_x = jax.random.split(key)

    hidden_size = 32
    params = pack_params(init_torch_params(k_param, hidden_size), hidden_size)
    x = jax.random.normal(k_x, (2, 1, 28, 28), dtype=jnp.float32)

    fwd = jax.jit(model5_forward)
    out = jax.block_until_ready(fwd(params, x))

    assert out.shape == (2, 10), out.shape
    assert bool(jnp.all(jnp.isfinite(out)))
    print("KERNEL_OK")
</pallas_src>

<mosaic_0001>
module attributes {stable_mosaic.version = 11 : i64} {
  func.func @_model5_kernel(%arg0: i32, %arg1: memref<1x784x25xbf16, #tpu.memory_space<vmem>>, %arg2: memref<25x128xbf16, #tpu.memory_space<vmem>>, %arg3: memref<1x128xf32, #tpu.memory_space<vmem>>, %arg4: memref<25x128x128xbf16, #tpu.memory_space<vmem>>, %arg5: memref<1x128xf32, #tpu.memory_space<vmem>>, %arg6: memref<49x40x128xbf16, #tpu.memory_space<vmem>>, %arg7: memref<1x128xf32, #tpu.memory_space<vmem>>, %arg8: memref<128x128xbf16, #tpu.memory_space<vmem>>, %arg9: memref<1x128xf32, #tpu.memory_space<vmem>>, %arg10: memref<128x128xbf16, #tpu.memory_space<vmem>>, %arg11: memref<1x128xf32, #tpu.memory_space<vmem>>, %arg12: memref<1x1x128xf32, #tpu.memory_space<vmem>>, %arg13: memref<784x128xf32, #tpu.memory_space<vmem>>, %arg14: memref<392x128xf32, #tpu.memory_space<vmem>>, %arg15: memref<18x18x128xf32, #tpu.memory_space<vmem>>, %arg16: memref<14x128xf32, #tpu.memory_space<vmem>>, %arg17: memref<1x128xf32, #tpu.memory_space<vmem>>) attributes {dimension_semantics = [#tpu.dimension_semantics<parallel>], iteration_bounds = array<i64: 2>, scalar_prefetch = 0 : i64, scratch_operands = 5 : i64, tpu.core_type = #tpu.core_type<tc>, window_params = [{transform_indices = @transform_0, window_bounds = array<i64: 1, 784, 25>}, {pipeline_mode = #tpu.pipeline_mode<synchronous>, transform_indices = @transform_1, window_bounds = array<i64: 25, 128>}, {pipeline_mode = #tpu.pipeline_mode<synchronous>, transform_indices = @transform_2, window_bounds = array<i64: 1, 128>}, {pipeline_mode = #tpu.pipeline_mode<synchronous>, transform_indices = @transform_3, window_bounds = array<i64: 25, 128, 128>}, {pipeline_mode = #tpu.pipeline_mode<synchronous>, transform_indices = @transform_4, window_bounds = array<i64: 1, 128>}, {pipeline_mode = #tpu.pipeline_mode<synchronous>, transform_indices = @transform_5, window_bounds = array<i64: 49, 40, 128>}, {pipeline_mode = #tpu.pipeline_mode<synchronous>, transform_indices = @transform_6, window_bounds = array<i64: 1, 128>}, {pipeline_mode = #tpu.pipeline_mode<synchronous>, transform_indices = @transform_7, window_bounds = array<i64: 128, 128>}, {pipeline_mode = #tpu.pipeline_mode<synchronous>, transform_indices = @transform_8, window_bounds = array<i64: 1, 128>}, {pipeline_mode = #tpu.pipeline_mode<synchronous>, transform_indices = @transform_9, window_bounds = array<i64: 128, 128>}, {pipeline_mode = #tpu.pipeline_mode<synchronous>, transform_indices = @transform_10, window_bounds = array<i64: 1, 128>}, {transform_indices = @transform_11, window_bounds = array<i64: 1, 1, 128>}]} {
    %c0 = arith.constant 0 : index
    %c0_0 = arith.constant 0 : index
    %c0_1 = arith.constant 0 : index
    %0 = vector.load %arg1[%c0, %c0_0, %c0_1] : memref<1x784x25xbf16, #tpu.memory_space<vmem>>, vector<1x784x25xbf16>
    %1 = vector.shape_cast %0 : vector<1x784x25xbf16> to vector<784x25xbf16>
    %c0_2 = arith.constant 0 : index
    %c0_3 = arith.constant 0 : index
    %2 = vector.load %arg2[%c0_2, %c0_3] : memref<25x128xbf16, #tpu.memory_space<vmem>>, vector<25x128xbf16>
    %cst = arith.constant dense<0.000000e+00> : vector<784x128xf32>
    %3 = tpu.matmul %1, %2, %cst {dimension_numbers = #tpu.dot_dimension_numbers<[1], [0], [0], [1], [0, 0, 1, 1], [], []>} : vector<784x25xbf16>, vector<25x128xbf16>, vector<784x128xf32> -> vector<784x128xf32>
    %c0_4 = arith.constant 0 : index
    %c0_5 = arith.constant 0 : index
    %4 = vector.load %arg3[%c0_4, %c0_5] : memref<1x128xf32, #tpu.memory_space<vmem>>, vector<1x128xf32>
    %5 = vector.broadcast %4 : vector<1x128xf32> to vector<784x128xf32>
    %6 = arith.addf %3, %5 : vector<784x128xf32>
    %cst_6 = arith.constant 0.000000e+00 : f32
    %7 = vector.broadcast %cst_6 : f32 to vector<784x128xf32>
    %8 = arith.maximumf %6, %7 : vector<784x128xf32>
    %c0_7 = arith.constant 0 : index
    %c0_8 = arith.constant 0 : index
    %9 = vector.load %arg13[%c0_7, %c0_8] : memref<784x128xf32, #tpu.memory_space<vmem>>, vector<784x128xf32>
    tpu.vector_store %arg13[%c0_7, %c0_8], %8 {strides = array<i32>} : memref<784x128xf32, #tpu.memory_space<vmem>>, vector<784x128xf32>,
    %c0_9 = arith.constant 0 : index
    %c0_10 = arith.constant 0 : index
    %10 = tpu.strided_load %arg13[%c0_9, %c0_10] {strides = array<i32: 2, 1>} : memref<784x128xf32, #tpu.memory_space<vmem>>, vector<392x128xf32>
    %c1 = arith.constant 1 : index
    %c0_11 = arith.constant 0 : index
    %11 = tpu.strided_load %arg13[%c1, %c0_11] {strides = array<i32: 2, 1>} : memref<784x128xf32, #tpu.memory_space<vmem>>, vector<392x128xf32>
    %12 = arith.maximumf %10, %11 : vector<392x128xf32>
    %c0_12 = arith.constant 0 : index
    %c0_13 = arith.constant 0 : index
    %13 = vector.load %arg14[%c0_12, %c0_13] : memref<392x128xf32, #tpu.memory_space<vmem>>, vector<392x128xf32>
    tpu.vector_store %arg14[%c0_12, %c0_13], %12 {strides = array<i32>} : memref<392x128xf32, #tpu.memory_space<vmem>>, vector<392x128xf32>,
    %cst_14 = arith.constant 0.000000e+00 : f32
    %14 = vector.broadcast %cst_14 : f32 to vector<18x18x128xf32>
    %c0_15 = arith.constant 0 : index
    %c0_16 = arith.constant 0 : index
    %c0_17 = arith.constant 0 : index
    %15 = vector.load %arg15[%c0_15, %c0_16, %c0_17] : memref<18x18x128xf32, #tpu.memory_space<vmem>>, vector<18x18x128xf32>
    tpu.vector_store %arg15[%c0_15, %c0_16, %c0_17], %14 {strides = array<i32>} : memref<18x18x128xf32, #tpu.memory_space<vmem>>, vector<18x18x128xf32>,
    %c0_18 = arith.constant 0 : index
    %c0_19 = arith.constant 0 : index
    %16 = tpu.strided_load %arg14[%c0_18, %c0_19] {strides = array<i32: 2, 1>} : memref<392x128xf32, #tpu.memory_space<vmem>>, vector<14x128xf32>
    %c1_20 = arith.constant 1 : index
    %c0_21 = arith.constant 0 : index
    %17 = tpu.strided_load %arg14[%c1_20, %c0_21] {strides = array<i32: 2, 1>} : memref<392x128xf32, #tpu.memory_space<vmem>>, vector<14x128xf32>
    %18 = arith.maximumf %16, %17 : vector<14x128xf32>
    %c2 = arith.constant 2 : index
    %c2_22 = arith.constant 2 : index
    %c0_23 = arith.constant 0 : index
    %19 = vector.load %arg15[%c2, %c2_22, %c0_23] : memref<18x18x128xf32, #tpu.memory_space<vmem>>, vector<1x14x128xf32>
    %20 = vector.shape_cast %19 : vector<1x14x128xf32> to vector<14x128xf32>
    %21 = vector.shape_cast %18 : vector<14x128xf32> to vector<1x14x128xf32>
    tpu.vector_store %arg15[%c2, %c2_22, %c0_23], %21 {strides = array<i32>} : memref<18x18x128xf32, #tpu.memory_space<vmem>>, vector<1x14x128xf32>,
    %c28 = arith.constant 28 : index
    %c0_24 = arith.constant 0 : index
    %22 = tpu.strided_load %arg14[%c28, %c0_24] {strides = array<i32: 2, 1>} : memref<392x128xf32, #tpu.memory_space<vmem>>, vector<14x128xf32>
    %c29 = arith.constant 29 : index
    %c0_25 = arith.constant 0 : index
    %23 = tpu.strided_load %arg14[%c29, %c0_25] {strides = array<i32: 2, 1>} : memref<392x128xf32, #tpu.memory_space<vmem>>, vector<14x128xf32>
    %24 = arith.maximumf %22, %23 : vector<14x128xf32>
    %c3 = arith.constant 3 : index
    %c2_26 = arith.constant 2 : index
    %c0_27 = arith.constant 0 : index
    %25 = vector.load %arg15[%c3, %c2_26, %c0_27] : memref<18x18x128xf32, #tpu.memory_space<vmem>>, vector<1x14x128xf32>
    %26 = vector.shape_cast %25 : vector<1x14x128xf32> to vector<14x128xf32>
    %27 = vector.shape_cast %24 : vector<14x128xf32> to vector<1x14x128xf32>
    tpu.vector_store %arg15[%c3, %c2_26, %c0_27], %27 {strides = array<i32>} : memref<18x18x128xf32, #tpu.memory_space<vmem>>, vector<1x14x128xf32>,
    %c56 = arith.constant 56 : index
    %c0_28 = arith.constant 0 : index
    %28 = tpu.strided_load %arg14[%c56, %c0_28] {strides = array<i32: 2, 1>} : memref<392x128xf32, #tpu.memory_space<vmem>>, vector<14x128xf32>
    %c57 = arith.constant 57 : index
    %c0_29 = arith.constant 0 : index
    %29 = tpu.strided_load %arg14[%c57, %c0_29] {strides = array<i32: 2, 1>} : memref<392x128xf32, #tpu.memory_space<vmem>>, vector<14x128xf32>
    %30 = arith.maximumf %28, %29 : vector<14x128xf32>
    %c4 = arith.constant 4 : index
    %c2_30 = arith.constant 2 : index
    %c0_31 = arith.constant 0 : index
    %31 = vector.load %arg15[%c4, %c2_30, %c0_31] : memref<18x18x128xf32, #tpu.memory_space<vmem>>, vector<1x14x128xf32>
    %32 = vector.shape_cast %31 : vector<1x14x128xf32> to vector<14x128xf32>
    %33 = vector.shape_cast %30 : vector<14x128xf32> to vector<1x14x128xf32>
    tpu.vector_store %arg15[%c4, %c2_30, %c0_31], %33 {strides = array<i32>} : memref<18x18x128xf32, #tpu.memory_space<vmem>>, vector<1x14x128xf32>,
    %c84 = arith.constant 84 : index
    %c0_32 = arith.constant 0 : index
    %34 = tpu.strided_load %arg14[%c84, %c0_32] {strides = array<i32: 2, 1>} : memref<392x128xf32, #tpu.memory_space<vmem>>, vector<14x128xf32>
    %c85 = arith.constant 85 : index
    %c0_33 = arith.constant 0 : index
    %35 = tpu.strided_load %arg14[%c85, %c0_33] {strides = array<i32: 2, 1>} : memref<392x128xf32, #tpu.memory_space<vmem>>, vector<14x128xf32>
    %36 = arith.maximumf %34, %35 : vector<14x128xf32>
    %c5 = arith.constant 5 : index
    %c2_34 = arith.constant 2 : index
    %c0_35 = arith.constant 0 : index
    %37 = vector.load %arg15[%c5, %c2_34, %c0_35] : memref<18x18x128xf32, #tpu.memory_space<vmem>>, vector<1x14x128xf32>
    %38 = vector.shape_cast %37 : vector<1x14x128xf32> to vector<14x128xf32>
    %39 = vector.shape_cast %36 : vector<14x128xf32> to vector<1x14x128xf32>
    tpu.vector_store %arg15[%c5, %c2_34, %c0_35], %39 {strides = array<i32>} : memref<18x18x128xf32, #tpu.memory_space<vmem>>, vector<1x14x128xf32>,
    %c112 = arith.constant 112 : index
    %c0_36 = arith.constant 0 : index
    %40 = tpu.strided_load %arg14[%c112, %c0_36] {strides = array<i32: 2, 1>} : memref<392x128xf32, #tpu.memory_space<vmem>>, vector<14x128xf32>
    %c113 = arith.constant 113 : index
    %c0_37 = arith.constant 0 : index
    %41 = tpu.strided_load %arg14[%c113, %c0_37] {strides = array<i32: 2, 1>} : memref<392x128xf32, #tpu.memory_space<vmem>>, vector<14x128xf32>
    %42 = arith.maximumf %40, %41 : vector<14x128xf32>
    %c6 = arith.constant 6 : index
    %c2_38 = arith.constant 2 : index
    %c0_39 = arith.constant 0 : index
    %43 = vector.load %arg15[%c6, %c2_38, %c0_39] : memref<18x18x128xf32, #tpu.memory_space<vmem>>, vector<1x14x128xf32>
    %44 = vector.shape_cast %43 : vector<1x14x128xf32> to vector<14x128xf32>
    %45 = vector.shape_cast %42 : vector<14x128xf32> to vector<1x14x128xf32>
    tpu.vector_store %arg15[%c6, %c2_38, %c0_39], %45 {strides = array<i32>} : memref<18x18x128xf32, #tpu.memory_space<vmem>>, vector<1x14x128xf32>,
    %c140 = arith.constant 140 : index
    %c0_40 = arith.constant 0 : index
    %46 = tpu.strided_load %arg14[%c140, %c0_40] {strides = array<i32: 2, 1>} : memref<392x128xf32, #tpu.memory_space<vmem>>, vector<14x128xf32>
    %c141 = arith.constant 141 : index
    %c0_41 = arith.constant 0 : index
    %47 = tpu.strided_load %arg14[%c141, %c0_41] {strides = array<i32: 2, 1>} : memref<392x128xf32, #tpu.memory_space<vmem>>, vector<14x128xf32>
    %48 = arith.maximumf %46, %47 : vector<14x128xf32>
    %c7 = arith.constant 7 : index
    %c2_42 = arith.constant 2 : index
    %c0_43 = arith.constant 0 : index
    %49 = vector.load %arg15[%c7, %c2_42, %c0_43] : memref<18x18x128xf32, #tpu.memory_space<vmem>>, vector<1x14x128xf32>
    %50 = vector.shape_cast %49 : vector<1x14x128xf32> to vector<14x128xf32>
    %51 = vector.shape_cast %48 : vector<14x128xf32> to vector<1x14x128xf32>
    tpu.vector_store %arg15[%c7, %c2_42, %c0_43], %51 {strides = array<i32>} : memref<18x18x128xf32, #tpu.memory_space<vmem>>, vector<1x14x128xf32>,
    %c168 = arith.constant 168 : index
    %c0_44 = arith.constant 0 : index
    %52 = tpu.strided_load %arg14[%c168, %c0_44] {strides = array<i32: 2, 1>} : memref<392x128xf32, #tpu.memory_space<vmem>>, vector<14x128xf32>
    %c169 = arith.constant 169 : index
    %c0_45 = arith.constant 0 : index
    %53 = tpu.strided_load %arg14[%c169, %c0_45] {strides = array<i32: 2, 1>} : memref<392x128xf32, #tpu.memory_space<vmem>>, vector<14x128xf32>
    %54 = arith.maximumf %52, %53 : vector<14x128xf32>
    %c8 = arith.constant 8 : index
    %c2_46 = arith.constant 2 : index
    %c0_47 = arith.constant 0 : index
    %55 = vector.load %arg15[%c8, %c2_46, %c0_47] : memref<18x18x128xf32, #tpu.memory_space<vmem>>, vector<1x14x128xf32>
    %56 = vector.shape_cast %55 : vector<1x14x128xf32> to vector<14x128xf32>
    %57 = vector.shape_cast %54 : vector<14x128xf32> to vector<1x14x128xf32>
    tpu.vector_store %arg15[%c8, %c2_46, %c0_47], %57 {strides = array<i32>} : memref<18x18x128xf32, #tpu.memory_space<vmem>>, vector<1x14x128xf32>,
    %c196 = arith.constant 196 : index
    %c0_48 = arith.constant 0 : index
    %58 = tpu.strided_load %arg14[%c196, %c0_48] {strides = array<i32: 2, 1>} : memref<392x128xf32, #tpu.memory_space<vmem>>, vector<14x128xf32>
    %c197 = arith.constant 197 : index
    %c0_49 = arith.constant 0 : index
    %59 = tpu.strided_load %arg14[%c197, %c0_49] {strides = array<i32: 2, 1>} : memref<392x128xf32, #tpu.memory_space<vmem>>, vector<14x128xf32>
    %60 = arith.maximumf %58, %59 : vector<14x128xf32>
    %c9 = arith.constant 9 : index
    %c2_50 = arith.constant 2 : index
    %c0_51 = arith.constant 0 : index
    %61 = vector.load %arg15[%c9, %c2_50, %c0_51] : memref<18x18x128xf32, #tpu.memory_space<vmem>>, vector<1x14x128xf32>
    %62 = vector.shape_cast %61 : vector<1x14x128xf32> to vector<14x128xf32>
    %63 = vector.shape_cast %60 : vector<14x128xf32> to vector<1x14x128xf32>
    tpu.vector_store %arg15[%c9, %c2_50, %c0_51], %63 {strides = array<i32>} : memref<18x18x128xf32, #tpu.memory_space<vmem>>, vector<1x14x128xf32>,
    %c224 = arith.constant 224 : index
    %c0_52 = arith.constant 0 : index
    %64 = tpu.strided_load %arg14[%c224, %c0_52] {strides = array<i32: 2, 1>} : memref<392x128xf32, #tpu.memory_space<vmem>>, vector<14x128xf32>
    %c225 = arith.constant 225 : index
    %c0_53 = arith.constant 0 : index
    %65 = tpu.strided_load %arg14[%c225, %c0_53] {strides = array<i32: 2, 1>} : memref<392x128xf32, #tpu.memory_space<vmem>>, vector<14x128xf32>
    %66 = arith.maximumf %64, %65 : vector<14x128xf32>
    %c10 = arith.constant 10 : index
    %c2_54 = arith.constant 2 : index
    %c0_55 = arith.constant 0 : index
    %67 = vector.load %arg15[%c10, %c2_54, %c0_55] : memref<18x18x128xf32, #tpu.memory_space<vmem>>, vector<1x14x128xf32>
    %68 = vector.shape_cast %67 : vector<1x14x128xf32> to vector<14x128xf32>
    %69 = vector.shape_cast %66 : vector<14x128xf32> to vector<1x14x128xf32>
    tpu.vector_store %arg15[%c10, %c2_54, %c0_55], %69 {strides = array<i32>} : memref<18x18x128xf32, #tpu.memory_space<vmem>>, vector<1x14x128xf32>,
    %c252 = arith.constant 252 : index
    %c0_56 = arith.constant 0 : index
    %70 = tpu.strided_load %arg14[%c252, %c0_56] {strides = array<i32: 2, 1>} : memref<392x128xf32, #tpu.memory_space<vmem>>, vector<14x128xf32>
    %c253 = arith.constant 253 : index
    %c0_57 = arith.constant 0 : index
    %71 = tpu.strided_load %arg14[%c253, %c0_57] {strides = array<i32: 2, 1>} : memref<392x128xf32, #tpu.memory_space<vmem>>, vector<14x128xf32>
    %72 = arith.maximumf %70, %71 : vector<14x128xf32>
    %c11 = arith.constant 11 : index
    %c2_58 = arith.constant 2 : index
    %c0_59 = arith.constant 0 : index
    %73 = vector.load %arg15[%c11, %c2_58, %c0_59] : memref<18x18x128xf32, #tpu.memory_space<vmem>>, vector<1x14x128xf32>
    %74 = vector.shape_cast %73 : vector<1x14x128xf32> to vector<14x128xf32>
    %75 = vector.shape_cast %72 : vector<14x128xf32> to vector<1x14x128xf32>
    tpu.vector_store %arg15[%c11, %c2_58, %c0_59], %75 {strides = array<i32>} : memref<18x18x128xf32, #tpu.memory_space<vmem>>, vector<1x14x128xf32>,
    %c280 = arith.constant 280 : index
    %c0_60 = arith.constant 0 : index
    %76 = tpu.strided_load %arg14[%c280, %c0_60] {strides = array<i32: 2, 1>} : memref<392x128xf32, #tpu.memory_space<vmem>>, vector<14x128xf32>
    %c281 = arith.constant 281 : index
    %c0_61 = arith.constant 0 : index
    %77 = tpu.strided_load %arg14[%c281, %c0_61] {strides = array<i32: 2, 1>} : memref<392x128xf32, #tpu.memory_space<vmem>>, vector<14x128xf32>
    %78 = arith.maximumf %76, %77 : vector<14x128xf32>
    %c12 = arith.constant 12 : index
    %c2_62 = arith.constant 2 : index
    %c0_63 = arith.constant 0 : index
    %79 = vector.load %arg15[%c12, %c2_62, %c0_63] : memref<18x18x128xf32, #tpu.memory_space<vmem>>, vector<1x14x128xf32>
    %80 = vector.shape_cast %79 : vector<1x14x128xf32> to vector<14x128xf32>
    %81 = vector.shape_cast %78 : vector<14x128xf32> to vector<1x14x128xf32>
    tpu.vector_store %arg15[%c12, %c2_62, %c0_63], %81 {strides = array<i32>} : memref<18x18x128xf32, #tpu.memory_space<vmem>>, vector<1x14x128xf32>,
    %c308 = arith.constant 308 : index
    %c0_64 = arith.constant 0 : index
    %82 = tpu.strided_load %arg14[%c308, %c0_64] {strides = array<i32: 2, 1>} : memref<392x128xf32, #tpu.memory_space<vmem>>, vector<14x128xf32>
    %c309 = arith.constant 309 : index
    %c0_65 = arith.constant 0 : index
    %83 = tpu.strided_load %arg14[%c309, %c0_65] {strides = array<i32: 2, 1>} : memref<392x128xf32, #tpu.memory_space<vmem>>, vector<14x128xf32>
    %84 = arith.maximumf %82, %83 : vector<14x128xf32>
    %c13 = arith.constant 13 : index
    %c2_66 = arith.constant 2 : index
    %c0_67 = arith.constant 0 : index
    %85 = vector.load %arg15[%c13, %c2_66, %c0_67] : memref<18x18x128xf32, #tpu.memory_space<vmem>>, vector<1x14x128xf32>
    %86 = vector.shape_cast %85 : vector<1x14x128xf32> to vector<14x128xf32>
    %87 = vector.shape_cast %84 : vector<14x128xf32> to vector<1x14x128xf32>
    tpu.vector_store %arg15[%c13, %c2_66, %c0_67], %87 {strides = array<i32>} : memref<18x18x128xf32, #tpu.memory_space<vmem>>, vector<1x14x128xf32>,
    %c336 = arith.constant 336 : index
    %c0_68 = arith.constant 0 : index
    %88 = tpu.strided_load %arg14[%c336, %c0_68] {strides = array<i32: 2, 1>} : memref<392x128xf32, #tpu.memory_space<vmem>>, vector<14x128xf32>
    %c337 = arith.constant 337 : index
    %c0_69 = arith.constant 0 : index
    %89 = tpu.strided_load %arg14[%c337, %c0_69] {strides = array<i32: 2, 1>} : memref<392x128xf32, #tpu.memory_space<vmem>>, vector<14x128xf32>
    %90 = arith.maximumf %88, %89 : vector<14x128xf32>
    %c14 = arith.constant 14 : index
    %c2_70 = arith.constant 2 : index
    %c0_71 = arith.constant 0 : index
    %91 = vector.load %arg15[%c14, %c2_70, %c0_71] : memref<18x18x128xf32, #tpu.memory_space<vmem>>, vector<1x14x128xf32>
    %92 = vector.shape_cast %91 : vector<1x14x128xf32> to vector<14x128xf32>
    %93 = vector.shape_cast %90 : vector<14x128xf32> to vector<1x14x128xf32>
    tpu.vector_store %arg15[%c14, %c2_70, %c0_71], %93 {strides = array<i32>} : memref<18x18x128xf32, #tpu.memory_space<vmem>>, vector<1x14x128xf32>,
    %c364 = arith.constant 364 : index
    %c0_72 = arith.constant 0 : index
    %94 = tpu.strided_load %arg14[%c364, %c0_72] {strides = array<i32: 2, 1>} : memref<392x128xf32, #tpu.memory_space<vmem>>, vector<14x128xf32>
    %c365 = arith.constant 365 : index
    %c0_73 = arith.constant 0 : index
    %95 = tpu.strided_load %arg14[%c365, %c0_73] {strides = array<i32: 2, 1>} : memref<392x128xf32, #tpu.memory_space<vmem>>, vector<14x128xf32>
    %96 = arith.maximumf %94, %95 : vector<14x128xf32>
    %c15 = arith.constant 15 : index
    %c2_74 = arith.constant 2 : index
    %c0_75 = arith.constant 0 : index
    %97 = vector.load %arg15[%c15, %c2_74, %c0_75] : memref<18x18x128xf32, #tpu.memory_space<vmem>>, vector<1x14x128xf32>
    %98 = vector.shape_cast %97 : vector<1x14x128xf32> to vector<14x128xf32>
    %99 = vector.shape_cast %96 : vector<14x128xf32> to vector<1x14x128xf32>
    tpu.vector_store %arg15[%c15, %c2_74, %c0_75], %99 {strides = array<i32>} : memref<18x18x128xf32, #tpu.memory_space<vmem>>, vector<1x14x128xf32>,
    %cst_76 = arith.constant 0.000000e+00 : f32
    %100 = vector.broadcast %cst_76 : f32 to vector<1x128xf32>
    %c0_77 = arith.constant 0 : index
    %c0_78 = arith.constant 0 : index
    %101 = vector.load %arg17[%c0_77, %c0_78] : memref<1x128xf32, #tpu.memory_space<vmem>>, vector<1x128xf32>
    tpu.vector_store %arg17[%c0_77, %c0_78], %100 {strides = array<i32>} : memref<1x128xf32, #tpu.memory_space<vmem>>, vector<1x128xf32>,
    %c0_79 = arith.constant 0 : index
    %c0_80 = arith.constant 0 : index
    %102 = vector.load %arg5[%c0_79, %c0_80] : memref<1x128xf32, #tpu.memory_space<vmem>>, vector<1x128xf32>
    %103 = vector.shape_cast %102 : vector<1x128xf32> to vector<1x128xf32>
    %104 = vector.broadcast %103 : vector<1x128xf32> to vector<14x128xf32>
    %c0_i32 = arith.constant 0 : i32
    %c7_i32 = arith.constant 7 : i32
    %105 = arith.addi %c0_i32, %c7_i32 : i32
    %c1_i32 = arith.constant 1 : i32
    scf.for %arg18 = %c0_i32 to %105 step %c1_i32  : i32 {
      %cst_109 = arith.constant 0.000000e+00 : f32
      %148 = vector.broadcast %cst_109 : f32 to vector<14x128xf32>
      %cst_110 = arith.constant 0.000000e+00 : f32
      %149 = vector.broadcast %cst_110 : f32 to vector<14x128xf32>
      %c0_111 = arith.constant 0 : index
      %c0_112 = arith.constant 0 : index
      %c0_113 = arith.constant 0 : index
      %150 = vector.load %arg4[%c0_111, %c0_112, %c0_113] : memref<25x128x128xbf16, #tpu.memory_space<vmem>>, vector<1x128x128xbf16>
      %151 = vector.shape_cast %150 : vector<1x128x128xbf16> to vector<128x128xbf16>
      %c2_i32 = arith.constant 2 : i32
      %152 = arith.muli %c2_i32, %arg18 : i32
      %c0_i32_114 = arith.constant 0 : i32
      %153 = arith.addi %152, %c0_i32_114 : i32
      %154 = arith.index_cast %153 : i32 to index
      %c0_115 = arith.constant 0 : index
      %c0_116 = arith.constant 0 : index
      %155 = vector.load %arg15[%154, %c0_115, %c0_116] : memref<18x18x128xf32, #tpu.memory_space<vmem>>, vector<1x14x128xf32>
      %156 = vector.shape_cast %155 : vector<1x14x128xf32> to vector<14x128xf32>
      %157 = arith.truncf %156 : vector<14x128xf32> to vector<14x128xbf16>
      %c2_i32_117 = arith.constant 2 : i32
      %158 = arith.muli %c2_i32_117, %arg18 : i32
      %c1_i32_118 = arith.constant 1 : i32
      %159 = arith.addi %158, %c1_i32_118 : i32
      %c0_i32_119 = arith.constant 0 : i32
      %160 = arith.addi %159, %c0_i32_119 : i32
      %161 = arith.index_cast %160 : i32 to index
      %c0_120 = arith.constant 0 : index
      %c0_121 = arith.constant 0 : index
      %162 = vector.load %arg15[%161, %c0_120, %c0_121] : memref<18x18x128xf32, #tpu.memory_space<vmem>>, vector<1x14x128xf32>
      %163 = vector.shape_cast %162 : vector<1x14x128xf32> to vector<14x128xf32>
      %164 = arith.truncf %163 : vector<14x128xf32> to vector<14x128xbf16>
      %cst_122 = arith.constant dense<0.000000e+00> : vector<14x128xf32>
      %165 = tpu.matmul %157, %151, %cst_122 {dimension_numbers = #tpu.dot_dimension_numbers<[1], [0], [0], [1], [0, 0, 1, 1], [], []>} : vector<14x128xbf16>, vector<128x128xbf16>, vector<14x128xf32> -> vector<14x128xf32>
      %166 = arith.addf %148, %165 : vector<14x128xf32>
      %cst_123 = arith.constant dense<0.000000e+00> : vector<14x128xf32>
      %167 = tpu.matmul %164, %151, %cst_123 {dimension_numbers = #tpu.dot_dimension_numbers<[1], [0], [0], [1], [0, 0, 1, 1], [], []>} : vector<14x128xbf16>, vector<128x128xbf16>, vector<14x128xf32> -> vector<14x128xf32>
      %168 = arith.addf %149, %167 : vector<14x128xf32>
      %c1_124 = arith.constant 1 : index
      %c0_125 = arith.constant 0 : index
      %c0_126 = arith.constant 0 : index
      %169 = vector.load %arg4[%c1_124, %c0_125, %c0_126] : memref<25x128x128xbf16, #tpu.memory_space<vmem>>, vector<1x128x128xbf16>
      %170 = vector.shape_cast %169 : vector<1x128x128xbf16> to vector<128x128xbf16>
      %c2_i32_127 = arith.constant 2 : i32
      %171 = arith.muli %c2_i32_127, %arg18 : i32
      %c0_i32_128 = arith.constant 0 : i32
      %172 = arith.addi %171, %c0_i32_128 : i32
      %173 = arith.index_cast %172 : i32 to index
      %c1_129 = arith.constant 1 : index
      %c0_130 = arith.constant 0 : index
      %174 = vector.load %arg15[%173, %c1_129, %c0_130] : memref<18x18x128xf32, #tpu.memory_space<vmem>>, vector<1x14x128xf32>
      %175 = vector.shape_cast %174 : vector<1x14x128xf32> to vector<14x128xf32>
      %176 = arith.truncf %175 : vector<14x128xf32> to vector<14x128xbf16>
      %c2_i32_131 = arith.constant 2 : i32
      %177 = arith.muli %c2_i32_131, %arg18 : i32
      %c1_i32_132 = arith.constant 1 : i32
      %178 = arith.addi %177, %c1_i32_132 : i32
      %c0_i32_133 = arith.constant 0 : i32
      %179 = arith.addi %178, %c0_i32_133 : i32
      %180 = arith.index_cast %179 : i32 to index
      %c1_134 = arith.constant 1 : index
      %c0_135 = arith.constant 0 : index
      %181 = vector.load %arg15[%180, %c1_134, %c0_135] : memref<18x18x128xf32, #tpu.memory_space<vmem>>, vector<1x14x128xf32>
      %182 = vector.shape_cast %181 : vector<1x14x128xf32> to vector<14x128xf32>
      %183 = arith.truncf %182 : vector<14x128xf32> to vector<14x128xbf16>
      %cst_136 = arith.constant dense<0.000000e+00> : vector<14x128xf32>
      %184 = tpu.matmul %176, %170, %cst_136 {dimension_numbers = #tpu.dot_dimension_numbers<[1], [0], [0], [1], [0, 0, 1, 1], [], []>} : vector<14x128xbf16>, vector<128x128xbf16>, vector<14x128xf32> -> vector<14x128xf32>
      %185 = arith.addf %166, %184 : vector<14x128xf32>
      %cst_137 = arith.constant dense<0.000000e+00> : vector<14x128xf32>
      %186 = tpu.matmul %183, %170, %cst_137 {dimension_numbers = #tpu.dot_dimension_numbers<[1], [0], [0], [1], [0, 0, 1, 1], [], []>} : vector<14x128xbf16>, vector<128x128xbf16>, vector<14x128xf32> -> vector<14x128xf32>
      %187 = arith.addf %168, %186 : vector<14x128xf32>
      %c2_138 = arith.constant 2 : index
      %c0_139 = arith.constant 0 : index
      %c0_140 = arith.constant 0 : index
      %188 = vector.load %arg4[%c2_138, %c0_139, %c0_140] : memref<25x128x128xbf16, #tpu.memory_space<vmem>>, vector<1x128x128xbf16>
      %189 = vector.shape_cast %188 : vector<1x128x128xbf16> to vector<128x128xbf16>
      %c2_i32_141 = arith.constant 2 : i32
      %190 = arith.muli %c2_i32_141, %arg18 : i32
      %c0_i32_142 = arith.constant 0 : i32
      %191 = arith.addi %190, %c0_i32_142 : i32
      %192 = arith.index_cast %191 : i32 to index
      %c2_143 = arith.constant 2 : index
      %c0_144 = arith.constant 0 : index
      %193 = vector.load %arg15[%192, %c2_143, %c0_144] : memref<18x18x128xf32, #tpu.memory_space<vmem>>, vector<1x14x128xf32>
      %194 = vector.shape_cast %193 : vector<1x14x128xf32> to vector<14x128xf32>
      %195 = arith.truncf %194 : vector<14x128xf32> to vector<14x128xbf16>
      %c2_i32_145 = arith.constant 2 : i32
      %196 = arith.muli %c2_i32_145, %arg18 : i32
      %c1_i32_146 = arith.constant 1 : i32
      %197 = arith.addi %196, %c1_i32_146 : i32
      %c0_i32_147 = arith.constant 0 : i32
      %198 = arith.addi %197, %c0_i32_147 : i32
      %199 = arith.index_cast %198 : i32 to index
      %c2_148 = arith.constant 2 : index
      %c0_149 = arith.constant 0 : index
      %200 = vector.load %arg15[%199, %c2_148, %c0_149] : memref<18x18x128xf32, #tpu.memory_space<vmem>>, vector<1x14x128xf32>
      %201 = vector.shape_cast %200 : vector<1x14x128xf32> to vector<14x128xf32>
      %202 = arith.truncf %201 : vector<14x128xf32> to vector<14x128xbf16>
      %cst_150 = arith.constant dense<0.000000e+00> : vector<14x128xf32>
      %203 = tpu.matmul %195, %189, %cst_150 {dimension_numbers = #tpu.dot_dimension_numbers<[1], [0], [0], [1], [0, 0, 1, 1], [], []>} : vector<14x128xbf16>, vector<128x128xbf16>, vector<14x128xf32> -> vector<14x128xf32>
      %204 = arith.addf %185, %203 : vector<14x128xf32>
      %cst_151 = arith.constant dense<0.000000e+00> : vector<14x128xf32>
      %205 = tpu.matmul %202, %189, %cst_151 {dimension_numbers = #tpu.dot_dimension_numbers<[1], [0], [0], [1], [0, 0, 1, 1], [], []>} : vector<14x128xbf16>, vector<128x128xbf16>, vector<14x128xf32> -> vector<14x128xf32>
      %206 = arith.addf %187, %205 : vector<14x128xf32>
      %c3_152 = arith.constant 3 : index
      %c0_153 = arith.constant 0 : index
      %c0_154 = arith.constant 0 : index
      %207 = vector.load %arg4[%c3_152, %c0_153, %c0_154] : memref<25x128x128xbf16, #tpu.memory_space<vmem>>, vector<1x128x128xbf16>
      %208 = vector.shape_cast %207 : vector<1x128x128xbf16> to vector<128x128xbf16>
      %c2_i32_155 = arith.constant 2 : i32
      %209 = arith.muli %c2_i32_155, %arg18 : i32
      %c0_i32_156 = arith.constant 0 : i32
      %210 = arith.addi %209, %c0_i32_156 : i32
      %211 = arith.index_cast %210 : i32 to index
      %c3_157 = arith.constant 3 : index
      %c0_158 = arith.constant 0 : index
      %212 = vector.load %arg15[%211, %c3_157, %c0_158] : memref<18x18x128xf32, #tpu.memory_space<vmem>>, vector<1x14x128xf32>
      %213 = vector.shape_cast %212 : vector<1x14x128xf32> to vector<14x128xf32>
      %214 = arith.truncf %213 : vector<14x128xf32> to vector<14x128xbf16>
      %c2_i32_159 = arith.constant 2 : i32
      %215 = arith.muli %c2_i32_159, %arg18 : i32
      %c1_i32_160 = arith.constant 1 : i32
      %216 = arith.addi %215, %c1_i32_160 : i32
      %c0_i32_161 = arith.constant 0 : i32
      %217 = arith.addi %216, %c0_i32_161 : i32
      %218 = arith.index_cast %217 : i32 to index
      %c3_162 = arith.constant 3 : index
      %c0_163 = arith.constant 0 : index
      %219 = vector.load %arg15[%218, %c3_162, %c0_163] : memref<18x18x128xf32, #tpu.memory_space<vmem>>, vector<1x14x128xf32>
      %220 = vector.shape_cast %219 : vector<1x14x128xf32> to vector<14x128xf32>
      %221 = arith.truncf %220 : vector<14x128xf32> to vector<14x128xbf16>
      %cst_164 = arith.constant dense<0.000000e+00> : vector<14x128xf32>
      %222 = tpu.matmul %214, %208, %cst_164 {dimension_numbers = #tpu.dot_dimension_numbers<[1], [0], [0], [1], [0, 0, 1, 1], [], []>} : vector<14x128xbf16>, vector<128x128xbf16>, vector<14x128xf32> -> vector<14x128xf32>
      %223 = arith.addf %204, %222 : vector<14x128xf32>
      %cst_165 = arith.constant dense<0.000000e+00> : vector<14x128xf32>
      %224 = tpu.matmul %221, %208, %cst_165 {dimension_numbers = #tpu.dot_dimension_numbers<[1], [0], [0], [1], [0, 0, 1, 1], [], []>} : vector<14x128xbf16>, vector<128x128xbf16>, vector<14x128xf32> -> vector<14x128xf32>
      %225 = arith.addf %206, %224 : vector<14x128xf32>
      %c4_166 = arith.constant 4 : index
      %c0_167 = arith.constant 0 : index
      %c0_168 = arith.constant 0 : index
      %226 = vector.load %arg4[%c4_166, %c0_167, %c0_168] : memref<25x128x128xbf16, #tpu.memory_space<vmem>>, vector<1x128x128xbf16>
      %227 = vector.shape_cast %226 : vector<1x128x128xbf16> to vector<128x128xbf16>
      %c2_i32_169 = arith.constant 2 : i32
      %228 = arith.muli %c2_i32_169, %arg18 : i32
      %c0_i32_170 = arith.constant 0 : i32
      %229 = arith.addi %228, %c0_i32_170 : i32
      %230 = arith.index_cast %229 : i32 to index
      %c4_171 = arith.constant 4 : index
      %c0_172 = arith.constant 0 : index
      %231 = vector.load %arg15[%230, %c4_171, %c0_172] : memref<18x18x128xf32, #tpu.memory_space<vmem>>, vector<1x14x128xf32>
      %232 = vector.shape_cast %231 : vector<1x14x128xf32> to vector<14x128xf32>
      %233 = arith.truncf %232 : vector<14x128xf32> to vector<14x128xbf16>
      %c2_i32_173 = arith.constant 2 : i32
      %234 = arith.muli %c2_i32_173, %arg18 : i32
      %c1_i32_174 = arith.constant 1 : i32
      %235 = arith.addi %234, %c1_i32_174 : i32
      %c0_i32_175 = arith.constant 0 : i32
      %236 = arith.addi %235, %c0_i32_175 : i32
      %237 = arith.index_cast %236 : i32 to index
      %c4_176 = arith.constant 4 : index
      %c0_177 = arith.constant 0 : index
      %238 = vector.load %arg15[%237, %c4_176, %c0_177] : memref<18x18x128xf32, #tpu.memory_space<vmem>>, vector<1x14x128xf32>
      %239 = vector.shape_cast %238 : vector<1x14x128xf32> to vector<14x128xf32>
      %240 = arith.truncf %239 : vector<14x128xf32> to vector<14x128xbf16>
      %cst_178 = arith.constant dense<0.000000e+00> : vector<14x128xf32>
      %241 = tpu.matmul %233, %227, %cst_178 {dimension_numbers = #tpu.dot_dimension_numbers<[1], [0], [0], [1], [0, 0, 1, 1], [], []>} : vector<14x128xbf16>, vector<128x128xbf16>, vector<14x128xf32> -> vector<14x128xf32>
      %242 = arith.addf %223, %241 : vector<14x128xf32>
      %cst_179 = arith.constant dense<0.000000e+00> : vector<14x128xf32>
      %243 = tpu.matmul %240, %227, %cst_179 {dimension_numbers = #tpu.dot_dimension_numbers<[1], [0], [0], [1], [0, 0, 1, 1], [], []>} : vector<14x128xbf16>, vector<128x128xbf16>, vector<14x128xf32> -> vector<14x128xf32>
      %244 = arith.addf %225, %243 : vector<14x128xf32>
      %c5_180 = arith.constant 5 : index
      %c0_181 = arith.constant 0 : index
      %c0_182 = arith.constant 0 : index
      %245 = vector.load %arg4[%c5_180, %c0_181, %c0_182] : memref<25x128x128xbf16, #tpu.memory_space<vmem>>, vector<1x128x128xbf16>
      %246 = vector.shape_cast %245 : vector<1x128x128xbf16> to vector<128x128xbf16>
      %c2_i32_183 = arith.constant 2 : i32
      %247 = arith.muli %c2_i32_183, %arg18 : i32
      %c1_i32_184 = arith.constant 1 : i32
      %248 = arith.addi %247, %c1_i32_184 : i32
      %249 = arith.index_cast %248 : i32 to index
      %c0_185 = arith.constant 0 : index
      %c0_186 = arith.constant 0 : index
      %250 = vector.load %arg15[%249, %c0_185, %c0_186] : memref<18x18x128xf32, #tpu.memory_space<vmem>>, vector<1x14x128xf32>
      %251 = vector.shape_cast %250 : vector<1x14x128xf32> to vector<14x128xf32>
      %252 = arith.truncf %251 : vector<14x128xf32> to vector<14x128xbf16>
      %c2_i32_187 = arith.constant 2 : i32
      %253 = arith.muli %c2_i32_187, %arg18 : i32
      %c1_i32_188 = arith.constant 1 : i32
      %254 = arith.addi %253, %c1_i32_188 : i32
      %c1_i32_189 = arith.constant 1 : i32
      %255 = arith.addi %254, %c1_i32_189 : i32
      %256 = arith.index_cast %255 : i32 to index
      %c0_190 = arith.constant 0 : index
      %c0_191 = arith.constant 0 : index
      %257 = vector.load %arg15[%256, %c0_190, %c0_191] : memref<18x18x128xf32, #tpu.memory_space<vmem>>, vector<1x14x128xf32>
      %258 = vector.shape_cast %257 : vector<1x14x128xf32> to vector<14x128xf32>
      %259 = arith.truncf %258 : vector<14x128xf32> to vector<14x128xbf16>
      %cst_192 = arith.constant dense<0.000000e+00> : vector<14x128xf32>
      %260 = tpu.matmul %252, %246, %cst_192 {dimension_numbers = #tpu.dot_dimension_numbers<[1], [0], [0], [1], [0, 0, 1, 1], [], []>} : vector<14x128xbf16>, vector<128x128xbf16>, vector<14x128xf32> -> vector<14x128xf32>
      %261 = arith.addf %242, %260 : vector<14x128xf32>
      %cst_193 = arith.constant dense<0.000000e+00> : vector<14x128xf32>
      %262 = tpu.matmul %259, %246, %cst_193 {dimension_numbers = #tpu.dot_dimension_numbers<[1], [0], [0], [1], [0, 0, 1, 1], [], []>} : vector<14x128xbf16>, vector<128x128xbf16>, vector<14x128xf32> -> vector<14x128xf32>
      %263 = arith.addf %244, %262 : vector<14x128xf32>
      %c6_194 = arith.constant 6 : index
      %c0_195 = arith.constant 0 : index
      %c0_196 = arith.constant 0 : index
      %264 = vector.load %arg4[%c6_194, %c0_195, %c0_196] : memref<25x128x128xbf16, #tpu.memory_space<vmem>>, vector<1x128x128xbf16>
      %265 = vector.shape_cast %264 : vector<1x128x128xbf16> to vector<128x128xbf16>
      %c2_i32_197 = arith.constant 2 : i32
      %266 = arith.muli %c2_i32_197, %arg18 : i32
      %c1_i32_198 = arith.constant 1 : i32
      %267 = arith.addi %266, %c1_i32_198 : i32
      %268 = arith.index_cast %267 : i32 to index
      %c1_199 = arith.constant 1 : index
      %c0_200 = arith.constant 0 : index
      %269 = vector.load %arg15[%268, %c1_199, %c0_200] : memref<18x18x128xf32, #tpu.memory_space<vmem>>, vector<1x14x128xf32>
      %270 = vector.shape_cast %269 : vector<1x14x128xf32> to vector<14x128xf32>
      %271 = arith.truncf %270 : vector<14x128xf32> to vector<14x128xbf16>
      %c2_i32_201 = arith.constant 2 : i32
      %272 = arith.muli %c2_i32_201, %arg18 : i32
      %c1_i32_202 = arith.constant 1 : i32
      %273 = arith.addi %272, %c1_i32_202 : i32
      %c1_i32_203 = arith.constant 1 : i32
      %274 = arith.addi %273, %c1_i32_203 : i32
      %275 = arith.index_cast %274 : i32 to index
      %c1_204 = arith.constant 1 : index
      %c0_205 = arith.constant 0 : index
      %276 = vector.load %arg15[%275, %c1_204, %c0_205] : memref<18x18x128xf32, #tpu.memory_space<vmem>>, vector<1x14x128xf32>
      %277 = vector.shape_cast %276 : vector<1x14x128xf32> to vector<14x128xf32>
      %278 = arith.truncf %277 : vector<14x128xf32> to vector<14x128xbf16>
      %cst_206 = arith.constant dense<0.000000e+00> : vector<14x128xf32>
      %279 = tpu.matmul %271, %265, %cst_206 {dimension_numbers = #tpu.dot_dimension_numbers<[1], [0], [0], [1], [0, 0, 1, 1], [], []>} : vector<14x128xbf16>, vector<128x128xbf16>, vector<14x128xf32> -> vector<14x128xf32>
      %280 = arith.addf %261, %279 : vector<14x128xf32>
      %cst_207 = arith.constant dense<0.000000e+00> : vector<14x128xf32>
      %281 = tpu.matmul %278, %265, %cst_207 {dimension_numbers = #tpu.dot_dimension_numbers<[1], [0], [0], [1], [0, 0, 1, 1], [], []>} : vector<14x128xbf16>, vector<128x128xbf16>, vector<14x128xf32> -> vector<14x128xf32>
      %282 = arith.addf %263, %281 : vector<14x128xf32>
      %c7_208 = arith.constant 7 : index
      %c0_209 = arith.constant 0 : index
      %c0_210 = arith.constant 0 : index
      %283 = vector.load %arg4[%c7_208, %c0_209, %c0_210] : memref<25x128x128xbf16, #tpu.memory_space<vmem>>, vector<1x128x128xbf16>
      %284 = vector.shape_cast %283 : vector<1x128x128xbf16> to vector<128x128xbf16>
      %c2_i32_211 = arith.constant 2 : i32
      %285 = arith.muli %c2_i32_211, %arg18 : i32
      %c1_i32_212 = arith.constant 1 : i32
      %286 = arith.addi %285, %c1_i32_212 : i32
      %287 = arith.index_cast %286 : i32 to index
      %c2_213 = arith.constant 2 : index
      %c0_214 = arith.constant 0 : index
      %288 = vector.load %arg15[%287, %c2_213, %c0_214] : memref<18x18x128xf32, #tpu.memory_space<vmem>>, vector<1x14x128xf32>
      %289 = vector.shape_cast %288 : vector<1x14x128xf32> to vector<14x128xf32>
      %290 = arith.truncf %289 : vector<14x128xf32> to vector<14x128xbf16>
      %c2_i32_215 = arith.constant 2 : i32
      %291 = arith.muli %c2_i32_215, %arg18 : i32
      %c1_i32_216 = arith.constant 1 : i32
      %292 = arith.addi %291, %c1_i32_216 : i32
      %c1_i32_217 = arith.constant 1 : i32
      %293 = arith.addi %292, %c1_i32_217 : i32
      %294 = arith.index_cast %293 : i32 to index
      %c2_218 = arith.constant 2 : index
      %c0_219 = arith.constant 0 : index
      %295 = vector.load %arg15[%294, %c2_218, %c0_219] : memref<18x18x128xf32, #tpu.memory_space<vmem>>, vector<1x14x128xf32>
      %296 = vector.shape_cast %295 : vector<1x14x128xf32> to vector<14x128xf32>
      %297 = arith.truncf %296 : vector<14x128xf32> to vector<14x128xbf16>
      %cst_220 = arith.constant dense<0.000000e+00> : vector<14x128xf32>
      %298 = tpu.matmul %290, %284, %cst_220 {dimension_numbers = #tpu.dot_dimension_numbers<[1], [0], [0], [1], [0, 0, 1, 1], [], []>} : vector<14x128xbf16>, vector<128x128xbf16>, vector<14x128xf32> -> vector<14x128xf32>
      %299 = arith.addf %280, %298 : vector<14x128xf32>
      %cst_221 = arith.constant dense<0.000000e+00> : vector<14x128xf32>
      %300 = tpu.matmul %297, %284, %cst_221 {dimension_numbers = #tpu.dot_dimension_numbers<[1], [0], [0], [1], [0, 0, 1, 1], [], []>} : vector<14x128xbf16>, vector<128x128xbf16>, vector<14x128xf32> -> vector<14x128xf32>
      %301 = arith.addf %282, %300 : vector<14x128xf32>
      %c8_222 = arith.constant 8 : index
      %c0_223 = arith.constant 0 : index
      %c0_224 = arith.constant 0 : index
      %302 = vector.load %arg4[%c8_222, %c0_223, %c0_224] : memref<25x128x128xbf16, #tpu.memory_space<vmem>>, vector<1x128x128xbf16>
      %303 = vector.shape_cast %302 : vector<1x128x128xbf16> to vector<128x128xbf16>
      %c2_i32_225 = arith.constant 2 : i32
      %304 = arith.muli %c2_i32_225, %arg18 : i32
      %c1_i32_226 = arith.constant 1 : i32
      %305 = arith.addi %304, %c1_i32_226 : i32
      %306 = arith.index_cast %305 : i32 to index
      %c3_227 = arith.constant 3 : index
      %c0_228 = arith.constant 0 : index
      %307 = vector.load %arg15[%306, %c3_227, %c0_228] : memref<18x18x128xf32, #tpu.memory_space<vmem>>, vector<1x14x128xf32>
      %308 = vector.shape_cast %307 : vector<1x14x128xf32> to vector<14x128xf32>
      %309 = arith.truncf %308 : vector<14x128xf32> to vector<14x128xbf16>
      %c2_i32_229 = arith.constant 2 : i32
      %310 = arith.muli %c2_i32_229, %arg18 : i32
      %c1_i32_230 = arith.constant 1 : i32
      %311 = arith.addi %310, %c1_i32_230 : i32
      %c1_i32_231 = arith.constant 1 : i32
      %312 = arith.addi %311, %c1_i32_231 : i32
      %313 = arith.index_cast %312 : i32 to index
      %c3_232 = arith.constant 3 : index
      %c0_233 = arith.constant 0 : index
      %314 = vector.load %arg15[%313, %c3_232, %c0_233] : memref<18x18x128xf32, #tpu.memory_space<vmem>>, vector<1x14x128xf32>
      %315 = vector.shape_cast %314 : vector<1x14x128xf32> to vector<14x128xf32>
      %316 = arith.truncf %315 : vector<14x128xf32> to vector<14x128xbf16>
      %cst_234 = arith.constant dense<0.000000e+00> : vector<14x128xf32>
      %317 = tpu.matmul %309, %303, %cst_234 {dimension_numbers = #tpu.dot_dimension_numbers<[1], [0], [0], [1], [0, 0, 1, 1], [], []>} : vector<14x128xbf16>, vector<128x128xbf16>, vector<14x128xf32> -> vector<14x128xf32>
      %318 = arith.addf %299, %317 : vector<14x128xf32>
      %cst_235 = arith.constant dense<0.000000e+00> : vector<14x128xf32>
      %319 = tpu.matmul %316, %303, %cst_235 {dimension_numbers = #tpu.dot_dimension_numbers<[1], [0], [0], [1], [0, 0, 1, 1], [], []>} : vector<14x128xbf16>, vector<128x128xbf16>, vector<14x128xf32> -> vector<14x128xf32>
      %320 = arith.addf %301, %319 : vector<14x128xf32>
      %c9_236 = arith.constant 9 : index
      %c0_237 = arith.constant 0 : index
      %c0_238 = arith.constant 0 : index
      %321 = vector.load %arg4[%c9_236, %c0_237, %c0_238] : memref<25x128x128xbf16, #tpu.memory_space<vmem>>, vector<1x128x128xbf16>
      %322 = vector.shape_cast %321 : vector<1x128x128xbf16> to vector<128x128xbf16>
      %c2_i32_239 = arith.constant 2 : i32
      %323 = arith.muli %c2_i32_239, %arg18 : i32
      %c1_i32_240 = arith.constant 1 : i32
      %324 = arith.addi %323, %c1_i32_240 : i32
      %325 = arith.index_cast %324 : i32 to index
      %c4_241 = arith.constant 4 : index
      %c0_242 = arith.constant 0 : index
      %326 = vector.load %arg15[%325, %c4_241, %c0_242] : memref<18x18x128xf32, #tpu.memory_space<vmem>>, vector<1x14x128xf32>
      %327 = vector.shape_cast %326 : vector<1x14x128xf32> to vector<14x128xf32>
      %328 = arith.truncf %327 : vector<14x128xf32> to vector<14x128xbf16>
      %c2_i32_243 = arith.constant 2 : i32
      %329 = arith.muli %c2_i32_243, %arg18 : i32
      %c1_i32_244 = arith.constant 1 : i32
      %330 = arith.addi %329, %c1_i32_244 : i32
      %c1_i32_245 = arith.constant 1 : i32
      %331 = arith.addi %330, %c1_i32_245 : i32
      %332 = arith.index_cast %331 : i32 to index
      %c4_246 = arith.constant 4 : index
      %c0_247 = arith.constant 0 : index
      %333 = vector.load %arg15[%332, %c4_246, %c0_247] : memref<18x18x128xf32, #tpu.memory_space<vmem>>, vector<1x14x128xf32>
      %334 = vector.shape_cast %333 : vector<1x14x128xf32> to vector<14x128xf32>
      %335 = arith.truncf %334 : vector<14x128xf32> to vector<14x128xbf16>
      %cst_248 = arith.constant dense<0.000000e+00> : vector<14x128xf32>
      %336 = tpu.matmul %328, %322, %cst_248 {dimension_numbers = #tpu.dot_dimension_numbers<[1], [0], [0], [1], [0, 0, 1, 1], [], []>} : vector<14x128xbf16>, vector<128x128xbf16>, vector<14x128xf32> -> vector<14x128xf32>
      %337 = arith.addf %318, %336 : vector<14x128xf32>
      %cst_249 = arith.constant dense<0.000000e+00> : vector<14x128xf32>
      %338 = tpu.matmul %335, %322, %cst_249 {dimension_numbers = #tpu.dot_dimension_numbers<[1], [0], [0], [1], [0, 0, 1, 1], [], []>} : vector<14x128xbf16>, vector<128x128xbf16>, vector<14x128xf32> -> vector<14x128xf32>
      %339 = arith.addf %320, %338 : vector<14x128xf32>
      %c10_250 = arith.constant 10 : index
      %c0_251 = arith.constant 0 : index
      %c0_252 = arith.constant 0 : index
      %340 = vector.load %arg4[%c10_250, %c0_251, %c0_252] : memref<25x128x128xbf16, #tpu.memory_space<vmem>>, vector<1x128x128xbf16>
      %341 = vector.shape_cast %340 : vector<1x128x128xbf16> to vector<128x128xbf16>
      %c2_i32_253 = arith.constant 2 : i32
      %342 = arith.muli %c2_i32_253, %arg18 : i32
      %c2_i32_254 = arith.constant 2 : i32
      %343 = arith.addi %342, %c2_i32_254 : i32
      %344 = arith.index_cast %343 : i32 to index
      %c0_255 = arith.constant 0 : index
      %c0_256 = arith.constant 0 : index
      %345 = vector.load %arg15[%344, %c0_255, %c0_256] : memref<18x18x128xf32, #tpu.memory_space<vmem>>, vector<1x14x128xf32>
      %346 = vector.shape_cast %345 : vector<1x14x128xf32> to vector<14x128xf32>
      %347 = arith.truncf %346 : vector<14x128xf32> to vector<14x128xbf16>
      %c2_i32_257 = arith.constant 2 : i32
      %348 = arith.muli %c2_i32_257, %arg18 : i32
      %c1_i32_258 = arith.constant 1 : i32
      %349 = arith.addi %348, %c1_i32_258 : i32
      %c2_i32_259 = arith.constant 2 : i32
      %350 = arith.addi %349, %c2_i32_259 : i32
      %351 = arith.index_cast %350 : i32 to index
      %c0_260 = arith.constant 0 : index
      %c0_261 = arith.constant 0 : index
      %352 = vector.load %arg15[%351, %c0_260, %c0_261] : memref<18x18x128xf32, #tpu.memory_space<vmem>>, vector<1x14x128xf32>
      %353 = vector.shape_cast %352 : vector<1x14x128xf32> to vector<14x128xf32>
      %354 = arith.truncf %353 : vector<14x128xf32> to vector<14x128xbf16>
      %cst_262 = arith.constant dense<0.000000e+00> : vector<14x128xf32>
      %355 = tpu.matmul %347, %341, %cst_262 {dimension_numbers = #tpu.dot_dimension_numbers<[1], [0], [0], [1], [0, 0, 1, 1], [], []>} : vector<14x128xbf16>, vector<128x128xbf16>, vector<14x128xf32> -> vector<14x128xf32>
      %356 = arith.addf %337, %355 : vector<14x128xf32>
      %cst_263 = arith.constant dense<0.000000e+00> : vector<14x128xf32>
      %357 = tpu.matmul %354, %341, %cst_263 {dimension_numbers = #tpu.dot_dimension_numbers<[1], [0], [0], [1], [0, 0, 1, 1], [], []>} : vector<14x128xbf16>, vector<128x128xbf16>, vector<14x128xf32> -> vector<14x128xf32>
      %358 = arith.addf %339, %357 : vector<14x128xf32>
      %c11_264 = arith.constant 11 : index
      %c0_265 = arith.constant 0 : index
      %c0_266 = arith.constant 0 : index
      %359 = vector.load %arg4[%c11_264, %c0_265, %c0_266] : memref<25x128x128xbf16, #tpu.memory_space<vmem>>, vector<1x128x128xbf16>
      %360 = vector.shape_cast %359 : vector<1x128x128xbf16> to vector<128x128xbf16>
      %c2_i32_267 = arith.constant 2 : i32
      %361 = arith.muli %c2_i32_267, %arg18 : i32
      %c2_i32_268 = arith.constant 2 : i32
      %362 = arith.addi %361, %c2_i32_268 : i32
      %363 = arith.index_cast %362 : i32 to index
      %c1_269 = arith.constant 1 : index
      %c0_270 = arith.constant 0 : index
      %364 = vector.load %arg15[%363, %c1_269, %c0_270] : memref<18x18x128xf32, #tpu.memory_space<vmem>>, vector<1x14x128xf32>
      %365 = vector.shape_cast %364 : vector<1x14x128xf32> to vector<14x128xf32>
      %366 = arith.truncf %365 : vector<14x128xf32> to vector<14x128xbf16>
      %c2_i32_271 = arith.constant 2 : i32
      %367 = arith.muli %c2_i32_271, %arg18 : i32
      %c1_i32_272 = arith.constant 1 : i32
      %368 = arith.addi %367, %c1_i32_272 : i32
      %c2_i32_273 = arith.constant 2 : i32
      %369 = arith.addi %368, %c2_i32_273 : i32
      %370 = arith.index_cast %369 : i32 to index
      %c1_274 = arith.constant 1 : index
      %c0_275 = arith.constant 0 : index
      %371 = vector.load %arg15[%370, %c1_274, %c0_275] : memref<18x18x128xf32, #tpu.memory_space<vmem>>, vector<1x14x128xf32>
      %372 = vector.shape_cast %371 : vector<1x14x128xf32> to vector<14x128xf32>
      %373 = arith.truncf %372 : vector<14x128xf32> to vector<14x128xbf16>
      %cst_276 = arith.constant dense<0.000000e+00> : vector<14x128xf32>
      %374 = tpu.matmul %366, %360, %cst_276 {dimension_numbers = #tpu.dot_dimension_numbers<[1], [0], [0], [1], [0, 0, 1, 1], [], []>} : vector<14x128xbf16>, vector<128x128xbf16>, vector<14x128xf32> -> vector<14x128xf32>
      %375 = arith.addf %356, %374 : vector<14x128xf32>
      %cst_277 = arith.constant dense<0.000000e+00> : vector<14x128xf32>
      %376 = tpu.matmul %373, %360, %cst_277 {dimension_numbers = #tpu.dot_dimension_numbers<[1], [0], [0], [1], [0, 0, 1, 1], [], []>} : vector<14x128xbf16>, vector<128x128xbf16>, vector<14x128xf32> -> vector<14x128xf32>
      %377 = arith.addf %358, %376 : vector<14x128xf32>
      %c12_278 = arith.constant 12 : index
      %c0_279 = arith.constant 0 : index
      %c0_280 = arith.constant 0 : index
      %378 = vector.load %arg4[%c12_278, %c0_279, %c0_280] : memref<25x128x128xbf16, #tpu.memory_space<vmem>>, vector<1x128x128xbf16>
      %379 = vector.shape_cast %378 : vector<1x128x128xbf16> to vector<128x128xbf16>
      %c2_i32_281 = arith.constant 2 : i32
      %380 = arith.muli %c2_i32_281, %arg18 : i32
      %c2_i32_282 = arith.constant 2 : i32
      %381 = arith.addi %380, %c2_i32_282 : i32
      %382 = arith.index_cast %381 : i32 to index
      %c2_283 = arith.constant 2 : index
      %c0_284 = arith.constant 0 : index
      %383 = vector.load %arg15[%382, %c2_283, %c0_284] : memref<18x18x128xf32, #tpu.memory_space<vmem>>, vector<1x14x128xf32>
      %384 = vector.shape_cast %383 : vector<1x14x128xf32> to vector<14x128xf32>
      %385 = arith.truncf %384 : vector<14x128xf32> to vector<14x128xbf16>
      %c2_i32_285 = arith.constant 2 : i32
      %386 = arith.muli %c2_i32_285, %arg18 : i32
      %c1_i32_286 = arith.constant 1 : i32
      %387 = arith.addi %386, %c1_i32_286 : i32
      %c2_i32_287 = arith.constant 2 : i32
      %388 = arith.addi %387, %c2_i32_287 : i32
      %389 = arith.index_cast %388 : i32 to index
      %c2_288 = arith.constant 2 : index
      %c0_289 = arith.constant 0 : index
      %390 = vector.load %arg15[%389, %c2_288, %c0_289] : memref<18x18x128xf32, #tpu.memory_space<vmem>>, vector<1x14x128xf32>
      %391 = vector.shape_cast %390 : vector<1x14x128xf32> to vector<14x128xf32>
      %392 = arith.truncf %391 : vector<14x128xf32> to vector<14x128xbf16>
      %cst_290 = arith.constant dense<0.000000e+00> : vector<14x128xf32>
      %393 = tpu.matmul %385, %379, %cst_290 {dimension_numbers = #tpu.dot_dimension_numbers<[1], [0], [0], [1], [0, 0, 1, 1], [], []>} : vector<14x128xbf16>, vector<128x128xbf16>, vector<14x128xf32> -> vector<14x128xf32>
      %394 = arith.addf %375, %393 : vector<14x128xf32>
      %cst_291 = arith.constant dense<0.000000e+00> : vector<14x128xf32>
      %395 = tpu.matmul %392, %379, %cst_291 {dimension_numbers = #tpu.dot_dimension_numbers<[1], [0], [0], [1], [0, 0, 1, 1], [], []>} : vector<14x128xbf16>, vector<128x128xbf16>, vector<14x128xf32> -> vector<14x128xf32>
      %396 = arith.addf %377, %395 : vector<14x128xf32>
      %c13_292 = arith.constant 13 : index
      %c0_293 = arith.constant 0 : index
      %c0_294 = arith.constant 0 : index
      %397 = vector.load %arg4[%c13_292, %c0_293, %c0_294] : memref<25x128x128xbf16, #tpu.memory_space<vmem>>, vector<1x128x128xbf16>
      %398 = vector.shape_cast %397 : vector<1x128x128xbf16> to vector<128x128xbf16>
      %c2_i32_295 = arith.constant 2 : i32
      %399 = arith.muli %c2_i32_295, %arg18 : i32
      %c2_i32_296 = arith.constant 2 : i32
      %400 = arith.addi %399, %c2_i32_296 : i32
      %401 = arith.index_cast %400 : i32 to index
      %c3_297 = arith.constant 3 : index
      %c0_298 = arith.constant 0 : index
      %402 = vector.load %arg15[%401, %c3_297, %c0_298] : memref<18x18x128xf32, #tpu.memory_space<vmem>>, vector<1x14x128xf32>
      %403 = vector.shape_cast %402 : vector<1x14x128xf32> to vector<14x128xf32>
      %404 = arith.truncf %403 : vector<14x128xf32> to vector<14x128xbf16>
      %c2_i32_299 = arith.constant 2 : i32
      %405 = arith.muli %c2_i32_299, %arg18 : i32
      %c1_i32_300 = arith.constant 1 : i32
      %406 = arith.addi %405, %c1_i32_300 : i32
      %c2_i32_301 = arith.constant 2 : i32
      %407 = arith.addi %406, %c2_i32_301 : i32
      %408 = arith.index_cast %407 : i32 to index
      %c3_302 = arith.constant 3 : index
      %c0_303 = arith.constant 0 : index
      %409 = vector.load %arg15[%408, %c3_302, %c0_303] : memref<18x18x128xf32, #tpu.memory_space<vmem>>, vector<1x14x128xf32>
      %410 = vector.shape_cast %409 : vector<1x14x128xf32> to vector<14x128xf32>
      %411 = arith.truncf %410 : vector<14x128xf32> to vector<14x128xbf16>
      %cst_304 = arith.constant dense<0.000000e+00> : vector<14x128xf32>
      %412 = tpu.matmul %404, %398, %cst_304 {dimension_numbers = #tpu.dot_dimension_numbers<[1], [0], [0], [1], [0, 0, 1, 1], [], []>} : vector<14x128xbf16>, vector<128x128xbf16>, vector<14x128xf32> -> vector<14x128xf32>
      %413 = arith.addf %394, %412 : vector<14x128xf32>
      %cst_305 = arith.constant dense<0.000000e+00> : vector<14x128xf32>
      %414 = tpu.matmul %411, %398, %cst_305 {dimension_numbers = #tpu.dot_dimension_numbers<[1], [0], [0], [1], [0, 0, 1, 1], [], []>} : vector<14x128xbf16>, vector<128x128xbf16>, vector<14x128xf32> -> vector<14x128xf32>
      %415 = arith.addf %396, %414 : vector<14x128xf32>
      %c14_306 = arith.constant 14 : index
      %c0_307 = arith.constant 0 : index
      %c0_308 = arith.constant 0 : index
      %416 = vector.load %arg4[%c14_306, %c0_307, %c0_308] : memref<25x128x128xbf16, #tpu.memory_space<vmem>>, vector<1x128x128xbf16>
      %417 = vector.shape_cast %416 : vector<1x128x128xbf16> to vector<128x128xbf16>
      %c2_i32_309 = arith.constant 2 : i32
      %418 = arith.muli %c2_i32_309, %arg18 : i32
      %c2_i32_310 = arith.constant 2 : i32
      %419 = arith.addi %418, %c2_i32_310 : i32
      %420 = arith.index_cast %419 : i32 to index
      %c4_311 = arith.constant 4 : index
      %c0_312 = arith.constant 0 : index
      %421 = vector.load %arg15[%420, %c4_311, %c0_312] : memref<18x18x128xf32, #tpu.memory_space<vmem>>, vector<1x14x128xf32>
      %422 = vector.shape_cast %421 : vector<1x14x128xf32> to vector<14x128xf32>
      %423 = arith.truncf %422 : vector<14x128xf32> to vector<14x128xbf16>
      %c2_i32_313 = arith.constant 2 : i32
      %424 = arith.muli %c2_i32_313, %arg18 : i32
      %c1_i32_314 = arith.constant 1 : i32
      %425 = arith.addi %424, %c1_i32_314 : i32
      %c2_i32_315 = arith.constant 2 : i32
      %426 = arith.addi %425, %c2_i32_315 : i32
      %427 = arith.index_cast %426 : i32 to index
      %c4_316 = arith.constant 4 : index
      %c0_317 = arith.constant 0 : index
      %428 = vector.load %arg15[%427, %c4_316, %c0_317] : memref<18x18x128xf32, #tpu.memory_space<vmem>>, vector<1x14x128xf32>
      %429 = vector.shape_cast %428 : vector<1x14x128xf32> to vector<14x128xf32>
      %430 = arith.truncf %429 : vector<14x128xf32> to vector<14x128xbf16>
      %cst_318 = arith.constant dense<0.000000e+00> : vector<14x128xf32>
      %431 = tpu.matmul %423, %417, %cst_318 {dimension_numbers = #tpu.dot_dimension_numbers<[1], [0], [0], [1], [0, 0, 1, 1], [], []>} : vector<14x128xbf16>, vector<128x128xbf16>, vector<14x128xf32> -> vector<14x128xf32>
      %432 = arith.addf %413, %431 : vector<14x128xf32>
      %cst_319 = arith.constant dense<0.000000e+00> : vector<14x128xf32>
      %433 = tpu.matmul %430, %417, %cst_319 {dimension_numbers = #tpu.dot_dimension_numbers<[1], [0], [0], [1], [0, 0, 1, 1], [], []>} : vector<14x128xbf16>, vector<128x128xbf16>, vector<14x128xf32> -> vector<14x128xf32>
      %434 = arith.addf %415, %433 : vector<14x128xf32>
      %c15_320 = arith.constant 15 : index
      %c0_321 = arith.constant 0 : index
      %c0_322 = arith.constant 0 : index
      %435 = vector.load %arg4[%c15_320, %c0_321, %c0_322] : memref<25x128x128xbf16, #tpu.memory_space<vmem>>, vector<1x128x128xbf16>
      %436 = vector.shape_cast %435 : vector<1x128x128xbf16> to vector<128x128xbf16>
      %c2_i32_323 = arith.constant 2 : i32
      %437 = arith.muli %c2_i32_323, %arg18 : i32
      %c3_i32 = arith.constant 3 : i32
      %438 = arith.addi %437, %c3_i32 : i32
      %439 = arith.index_cast %438 : i32 to index
      %c0_324 = arith.constant 0 : index
      %c0_325 = arith.constant 0 : index
      %440 = vector.load %arg15[%439, %c0_324, %c0_325] : memref<18x18x128xf32, #tpu.memory_space<vmem>>, vector<1x14x128xf32>
      %441 = vector.shape_cast %440 : vector<1x14x128xf32> to vector<14x128xf32>
      %442 = arith.truncf %441 : vector<14x128xf32> to vector<14x128xbf16>
      %c2_i32_326 = arith.constant 2 : i32
      %443 = arith.muli %c2_i32_326, %arg18 : i32
      %c1_i32_327 = arith.constant 1 : i32
      %444 = arith.addi %443, %c1_i32_327 : i32
      %c3_i32_328 = arith.constant 3 : i32
      %445 = arith.addi %444, %c3_i32_328 : i32
      %446 = arith.index_cast %445 : i32 to index
      %c0_329 = arith.constant 0 : index
      %c0_330 = arith.constant 0 : index
      %447 = vector.load %arg15[%446, %c0_329, %c0_330] : memref<18x18x128xf32, #tpu.memory_space<vmem>>, vector<1x14x128xf32>
      %448 = vector.shape_cast %447 : vector<1x14x128xf32> to vector<14x128xf32>
      %449 = arith.truncf %448 : vector<14x128xf32> to vector<14x128xbf16>
      %cst_331 = arith.constant dense<0.000000e+00> : vector<14x128xf32>
      %450 = tpu.matmul %442, %436, %cst_331 {dimension_numbers = #tpu.dot_dimension_numbers<[1], [0], [0], [1], [0, 0, 1, 1], [], []>} : vector<14x128xbf16>, vector<128x128xbf16>, vector<14x128xf32> -> vector<14x128xf32>
      %451 = arith.addf %432, %450 : vector<14x128xf32>
      %cst_332 = arith.constant dense<0.000000e+00> : vector<14x128xf32>
      %452 = tpu.matmul %449, %436, %cst_332 {dimension_numbers = #tpu.dot_dimension_numbers<[1], [0], [0], [1], [0, 0, 1, 1], [], []>} : vector<14x128xbf16>, vector<128x128xbf16>, vector<14x128xf32> -> vector<14x128xf32>
      %453 = arith.addf %434, %452 : vector<14x128xf32>
      %c16 = arith.constant 16 : index
      %c0_333 = arith.constant 0 : index
      %c0_334 = arith.constant 0 : index
      %454 = vector.load %arg4[%c16, %c0_333, %c0_334] : memref<25x128x128xbf16, #tpu.memory_space<vmem>>, vector<1x128x128xbf16>
      %455 = vector.shape_cast %454 : vector<1x128x128xbf16> to vector<128x128xbf16>
      %c2_i32_335 = arith.constant 2 : i32
      %456 = arith.muli %c2_i32_335, %arg18 : i32
      %c3_i32_336 = arith.constant 3 : i32
      %457 = arith.addi %456, %c3_i32_336 : i32
      %458 = arith.index_cast %457 : i32 to index
      %c1_337 = arith.constant 1 : index
      %c0_338 = arith.constant 0 : index
      %459 = vector.load %arg15[%458, %c1_337, %c0_338] : memref<18x18x128xf32, #tpu.memory_space<vmem>>, vector<1x14x128xf32>
      %460 = vector.shape_cast %459 : vector<1x14x128xf32> to vector<14x128xf32>
      %461 = arith.truncf %460 : vector<14x128xf32> to vector<14x128xbf16>
      %c2_i32_339 = arith.constant 2 : i32
      %462 = arith.muli %c2_i32_339, %arg18 : i32
      %c1_i32_340 = arith.constant 1 : i32
      %463 = arith.addi %462, %c1_i32_340 : i32
      %c3_i32_341 = arith.constant 3 : i32
      %464 = arith.addi %463, %c3_i32_341 : i32
      %465 = arith.index_cast %464 : i32 to index
      %c1_342 = arith.constant 1 : index
      %c0_343 = arith.constant 0 : index
      %466 = vector.load %arg15[%465, %c1_342, %c0_343] : memref<18x18x128xf32, #tpu.memory_space<vmem>>, vector<1x14x128xf32>
      %467 = vector.shape_cast %466 : vector<1x14x128xf32> to vector<14x128xf32>
      %468 = arith.truncf %467 : vector<14x128xf32> to vector<14x128xbf16>
      %cst_344 = arith.constant dense<0.000000e+00> : vector<14x128xf32>
      %469 = tpu.matmul %461, %455, %cst_344 {dimension_numbers = #tpu.dot_dimension_numbers<[1], [0], [0], [1], [0, 0, 1, 1], [], []>} : vector<14x128xbf16>, vector<128x128xbf16>, vector<14x128xf32> -> vector<14x128xf32>
      %470 = arith.addf %451, %469 : vector<14x128xf32>
      %cst_345 = arith.constant dense<0.000000e+00> : vector<14x128xf32>
      %471 = tpu.matmul %468, %455, %cst_345 {dimension_numbers = #tpu.dot_dimension_numbers<[1], [0], [0], [1], [0, 0, 1, 1], [], []>} : vector<14x128xbf16>, vector<128x128xbf16>, vector<14x128xf32> -> vector<14x128xf32>
      %472 = arith.addf %453, %471 : vector<14x128xf32>
      %c17 = arith.constant 17 : index
      %c0_346 = arith.constant 0 : index
      %c0_347 = arith.constant 0 : index
      %473 = vector.load %arg4[%c17, %c0_346, %c0_347] : memref<25x128x128xbf16, #tpu.memory_space<vmem>>, vector<1x128x128xbf16>
      %474 = vector.shape_cast %473 : vector<1x128x128xbf16> to vector<128x128xbf16>
      %c2_i32_348 = arith.constant 2 : i32
      %475 = arith.muli %c2_i32_348, %arg18 : i32
      %c3_i32_349 = arith.constant 3 : i32
      %476 = arith.addi %475, %c3_i32_349 : i32
      %477 = arith.index_cast %476 : i32 to index
      %c2_350 = arith.constant 2 : index
      %c0_351 = arith.constant 0 : index
      %478 = vector.load %arg15[%477, %c2_350, %c0_351] : memref<18x18x128xf32, #tpu.memory_space<vmem>>, vector<1x14x128xf32>
      %479 = vector.shape_cast %478 : vector<1x14x128xf32> to vector<14x128xf32>
      %480 = arith.truncf %479 : vector<14x128xf32> to vector<14x128xbf16>
      %c2_i32_352 = arith.constant 2 : i32
      %481 = arith.muli %c2_i32_352, %arg18 : i32
      %c1_i32_353 = arith.constant 1 : i32
      %482 = arith.addi %481, %c1_i32_353 : i32
      %c3_i32_354 = arith.constant 3 : i32
      %483 = arith.addi %482, %c3_i32_354 : i32
      %484 = arith.index_cast %483 : i32 to index
      %c2_355 = arith.constant 2 : index
      %c0_356 = arith.constant 0 : index
      %485 = vector.load %arg15[%484, %c2_355, %c0_356] : memref<18x18x128xf32, #tpu.memory_space<vmem>>, vector<1x14x128xf32>
      %486 = vector.shape_cast %485 : vector<1x14x128xf32> to vector<14x128xf32>
      %487 = arith.truncf %486 : vector<14x128xf32> to vector<14x128xbf16>
      %cst_357 = arith.constant dense<0.000000e+00> : vector<14x128xf32>
      %488 = tpu.matmul %480, %474, %cst_357 {dimension_numbers = #tpu.dot_dimension_numbers<[1], [0], [0], [1], [0, 0, 1, 1], [], []>} : vector<14x128xbf16>, vector<128x128xbf16>, vector<14x128xf32> -> vector<14x128xf32>
      %489 = arith.addf %470, %488 : vector<14x128xf32>
      %cst_358 = arith.constant dense<0.000000e+00> : vector<14x128xf32>
      %490 = tpu.matmul %487, %474, %cst_358 {dimension_numbers = #tpu.dot_dimension_numbers<[1], [0], [0], [1], [0, 0, 1, 1], [], []>} : vector<14x128xbf16>, vector<128x128xbf16>, vector<14x128xf32> -> vector<14x128xf32>
      %491 = arith.addf %472, %490 : vector<14x128xf32>
      %c18 = arith.constant 18 : index
      %c0_359 = arith.constant 0 : index
      %c0_360 = arith.constant 0 : index
      %492 = vector.load %arg4[%c18, %c0_359, %c0_360] : memref<25x128x128xbf16, #tpu.memory_space<vmem>>, vector<1x128x128xbf16>
      %493 = vector.shape_cast %492 : vector<1x128x128xbf16> to vector<128x128xbf16>
      %c2_i32_361 = arith.constant 2 : i32
      %494 = arith.muli %c2_i32_361, %arg18 : i32
      %c3_i32_362 = arith.constant 3 : i32
      %495 = arith.addi %494, %c3_i32_362 : i32
      %496 = arith.index_cast %495 : i32 to index
      %c3_363 = arith.constant 3 : index
      %c0_364 = arith.constant 0 : index
      %497 = vector.load %arg15[%496, %c3_363, %c0_364] : memref<18x18x128xf32, #tpu.memory_space<vmem>>, vector<1x14x128xf32>
      %498 = vector.shape_cast %497 : vector<1x14x128xf32> to vector<14x128xf32>
      %499 = arith.truncf %498 : vector<14x128xf32> to vector<14x128xbf16>
      %c2_i32_365 = arith.constant 2 : i32
      %500 = arith.muli %c2_i32_365, %arg18 : i32
      %c1_i32_366 = arith.constant 1 : i32
      %501 = arith.addi %500, %c1_i32_366 : i32
      %c3_i32_367 = arith.constant 3 : i32
      %502 = arith.addi %501, %c3_i32_367 : i32
      %503 = arith.index_cast %502 : i32 to index
      %c3_368 = arith.constant 3 : index
      %c0_369 = arith.constant 0 : index
      %504 = vector.load %arg15[%503, %c3_368, %c0_369] : memref<18x18x128xf32, #tpu.memory_space<vmem>>, vector<1x14x128xf32>
      %505 = vector.shape_cast %504 : vector<1x14x128xf32> to vector<14x128xf32>
      %506 = arith.truncf %505 : vector<14x128xf32> to vector<14x128xbf16>
      %cst_370 = arith.constant dense<0.000000e+00> : vector<14x128xf32>
      %507 = tpu.matmul %499, %493, %cst_370 {dimension_numbers = #tpu.dot_dimension_numbers<[1], [0], [0], [1], [0, 0, 1, 1], [], []>} : vector<14x128xbf16>, vector<128x128xbf16>, vector<14x128xf32> -> vector<14x128xf32>
      %508 = arith.addf %489, %507 : vector<14x128xf32>
      %cst_371 = arith.constant dense<0.000000e+00> : vector<14x128xf32>
      %509 = tpu.matmul %506, %493, %cst_371 {dimension_numbers = #tpu.dot_dimension_numbers<[1], [0], [0], [1], [0, 0, 1, 1], [], []>} : vector<14x128xbf16>, vector<128x128xbf16>, vector<14x128xf32> -> vector<14x128xf32>
      %510 = arith.addf %491, %509 : vector<14x128xf32>
      %c19 = arith.constant 19 : index
      %c0_372 = arith.constant 0 : index
      %c0_373 = arith.constant 0 : index
      %511 = vector.load %arg4[%c19, %c0_372, %c0_373] : memref<25x128x128xbf16, #tpu.memory_space<vmem>>, vector<1x128x128xbf16>
      %512 = vector.shape_cast %511 : vector<1x128x128xbf16> to vector<128x128xbf16>
      %c2_i32_374 = arith.constant 2 : i32
      %513 = arith.muli %c2_i32_374, %arg18 : i32
      %c3_i32_375 = arith.constant 3 : i32
      %514 = arith.addi %513, %c3_i32_375 : i32
      %515 = arith.index_cast %514 : i32 to index
      %c4_376 = arith.constant 4 : index
      %c0_377 = arith.constant 0 : index
      %516 = vector.load %arg15[%515, %c4_376, %c0_377] : memref<18x18x128xf32, #tpu.memory_space<vmem>>, vector<1x14x128xf32>
      %517 = vector.shape_cast %516 : vector<1x14x128xf32> to vector<14x128xf32>
      %518 = arith.truncf %517 : vector<14x128xf32> to vector<14x128xbf16>
      %c2_i32_378 = arith.constant 2 : i32
      %519 = arith.muli %c2_i32_378, %arg18 : i32
      %c1_i32_379 = arith.constant 1 : i32
      %520 = arith.addi %519, %c1_i32_379 : i32
      %c3_i32_380 = arith.constant 3 : i32
      %521 = arith.addi %520, %c3_i32_380 : i32
      %522 = arith.index_cast %521 : i32 to index
      %c4_381 = arith.constant 4 : index
      %c0_382 = arith.constant 0 : index
      %523 = vector.load %arg15[%522, %c4_381, %c0_382] : memref<18x18x128xf32, #tpu.memory_space<vmem>>, vector<1x14x128xf32>
      %524 = vector.shape_cast %523 : vector<1x14x128xf32> to vector<14x128xf32>
      %525 = arith.truncf %524 : vector<14x128xf32> to vector<14x128xbf16>
      %cst_383 = arith.constant dense<0.000000e+00> : vector<14x128xf32>
      %526 = tpu.matmul %518, %512, %cst_383 {dimension_numbers = #tpu.dot_dimension_numbers<[1], [0], [0], [1], [0, 0, 1, 1], [], []>} : vector<14x128xbf16>, vector<128x128xbf16>, vector<14x128xf32> -> vector<14x128xf32>
      %527 = arith.addf %508, %526 : vector<14x128xf32>
      %cst_384 = arith.constant dense<0.000000e+00> : vector<14x128xf32>
      %528 = tpu.matmul %525, %512, %cst_384 {dimension_numbers = #tpu.dot_dimension_numbers<[1], [0], [0], [1], [0, 0, 1, 1], [], []>} : vector<14x128xbf16>, vector<128x128xbf16>, vector<14x128xf32> -> vector<14x128xf32>
      %529 = arith.addf %510, %528 : vector<14x128xf32>
      %c20 = arith.constant 20 : index
      %c0_385 = arith.constant 0 : index
      %c0_386 = arith.constant 0 : index
      %530 = vector.load %arg4[%c20, %c0_385, %c0_386] : memref<25x128x128xbf16, #tpu.memory_space<vmem>>, vector<1x128x128xbf16>
      %531 = vector.shape_cast %530 : vector<1x128x128xbf16> to vector<128x128xbf16>
      %c2_i32_387 = arith.constant 2 : i32
      %532 = arith.muli %c2_i32_387, %arg18 : i32
      %c4_i32 = arith.constant 4 : i32
      %533 = arith.addi %532, %c4_i32 : i32
      %534 = arith.index_cast %533 : i32 to index
      %c0_388 = arith.constant 0 : index
      %c0_389 = arith.constant 0 : index
      %535 = vector.load %arg15[%534, %c0_388, %c0_389] : memref<18x18x128xf32, #tpu.memory_space<vmem>>, vector<1x14x128xf32>
      %536 = vector.shape_cast %535 : vector<1x14x128xf32> to vector<14x128xf32>
      %537 = arith.truncf %536 : vector<14x128xf32> to vector<14x128xbf16>
      %c2_i32_390 = arith.constant 2 : i32
      %538 = arith.muli %c2_i32_390, %arg18 : i32
      %c1_i32_391 = arith.constant 1 : i32
      %539 = arith.addi %538, %c1_i32_391 : i32
      %c4_i32_392 = arith.constant 4 : i32
      %540 = arith.addi %539, %c4_i32_392 : i32
      %541 = arith.index_cast %540 : i32 to index
      %c0_393 = arith.constant 0 : index
      %c0_394 = arith.constant 0 : index
      %542 = vector.load %arg15[%541, %c0_393, %c0_394] : memref<18x18x128xf32, #tpu.memory_space<vmem>>, vector<1x14x128xf32>
      %543 = vector.shape_cast %542 : vector<1x14x128xf32> to vector<14x128xf32>
      %544 = arith.truncf %543 : vector<14x128xf32> to vector<14x128xbf16>
      %cst_395 = arith.constant dense<0.000000e+00> : vector<14x128xf32>
      %545 = tpu.matmul %537, %531, %cst_395 {dimension_numbers = #tpu.dot_dimension_numbers<[1], [0], [0], [1], [0, 0, 1, 1], [], []>} : vector<14x128xbf16>, vector<128x128xbf16>, vector<14x128xf32> -> vector<14x128xf32>
      %546 = arith.addf %527, %545 : vector<14x128xf32>
      %cst_396 = arith.constant dense<0.000000e+00> : vector<14x128xf32>
      %547 = tpu.matmul %544, %531, %cst_396 {dimension_numbers = #tpu.dot_dimension_numbers<[1], [0], [0], [1], [0, 0, 1, 1], [], []>} : vector<14x128xbf16>, vector<128x128xbf16>, vector<14x128xf32> -> vector<14x128xf32>
      %548 = arith.addf %529, %547 : vector<14x128xf32>
      %c21 = arith.constant 21 : index
      %c0_397 = arith.constant 0 : index
      %c0_398 = arith.constant 0 : index
      %549 = vector.load %arg4[%c21, %c0_397, %c0_398] : memref<25x128x128xbf16, #tpu.memory_space<vmem>>, vector<1x128x128xbf16>
      %550 = vector.shape_cast %549 : vector<1x128x128xbf16> to vector<128x128xbf16>
      %c2_i32_399 = arith.constant 2 : i32
      %551 = arith.muli %c2_i32_399, %arg18 : i32
      %c4_i32_400 = arith.constant 4 : i32
      %552 = arith.addi %551, %c4_i32_400 : i32
      %553 = arith.index_cast %552 : i32 to index
      %c1_401 = arith.constant 1 : index
      %c0_402 = arith.constant 0 : index
      %554 = vector.load %arg15[%553, %c1_401, %c0_402] : memref<18x18x128xf32, #tpu.memory_space<vmem>>, vector<1x14x128xf32>
      %555 = vector.shape_cast %554 : vector<1x14x128xf32> to vector<14x128xf32>
      %556 = arith.truncf %555 : vector<14x128xf32> to vector<14x128xbf16>
      %c2_i32_403 = arith.constant 2 : i32
      %557 = arith.muli %c2_i32_403, %arg18 : i32
      %c1_i32_404 = arith.constant 1 : i32
      %558 = arith.addi %557, %c1_i32_404 : i32
      %c4_i32_405 = arith.constant 4 : i32
      %559 = arith.addi %558, %c4_i32_405 : i32
      %560 = arith.index_cast %559 : i32 to index
      %c1_406 = arith.constant 1 : index
      %c0_407 = arith.constant 0 : index
      %561 = vector.load %arg15[%560, %c1_406, %c0_407] : memref<18x18x128xf32, #tpu.memory_space<vmem>>, vector<1x14x128xf32>
      %562 = vector.shape_cast %561 : vector<1x14x128xf32> to vector<14x128xf32>
      %563 = arith.truncf %562 : vector<14x128xf32> to vector<14x128xbf16>
      %cst_408 = arith.constant dense<0.000000e+00> : vector<14x128xf32>
      %564 = tpu.matmul %556, %550, %cst_408 {dimension_numbers = #tpu.dot_dimension_numbers<[1], [0], [0], [1], [0, 0, 1, 1], [], []>} : vector<14x128xbf16>, vector<128x128xbf16>, vector<14x128xf32> -> vector<14x128xf32>
      %565 = arith.addf %546, %564 : vector<14x128xf32>
      %cst_409 = arith.constant dense<0.000000e+00> : vector<14x128xf32>
      %566 = tpu.matmul %563, %550, %cst_409 {dimension_numbers = #tpu.dot_dimension_numbers<[1], [0], [0], [1], [0, 0, 1, 1], [], []>} : vector<14x128xbf16>, vector<128x128xbf16>, vector<14x128xf32> -> vector<14x128xf32>
      %567 = arith.addf %548, %566 : vector<14x128xf32>
      %c22 = arith.constant 22 : index
      %c0_410 = arith.constant 0 : index
      %c0_411 = arith.constant 0 : index
      %568 = vector.load %arg4[%c22, %c0_410, %c0_411] : memref<25x128x128xbf16, #tpu.memory_space<vmem>>, vector<1x128x128xbf16>
      %569 = vector.shape_cast %568 : vector<1x128x128xbf16> to vector<128x128xbf16>
      %c2_i32_412 = arith.constant 2 : i32
      %570 = arith.muli %c2_i32_412, %arg18 : i32
      %c4_i32_413 = arith.constant 4 : i32
      %571 = arith.addi %570, %c4_i32_413 : i32
      %572 = arith.index_cast %571 : i32 to index
      %c2_414 = arith.constant 2 : index
      %c0_415 = arith.constant 0 : index
      %573 = vector.load %arg15[%572, %c2_414, %c0_415] : memref<18x18x128xf32, #tpu.memory_space<vmem>>, vector<1x14x128xf32>
      %574 = vector.shape_cast %573 : vector<1x14x128xf32> to vector<14x128xf32>
      %575 = arith.truncf %574 : vector<14x128xf32> to vector<14x128xbf16>
      %c2_i32_416 = arith.constant 2 : i32
      %576 = arith.muli %c2_i32_416, %arg18 : i32
      %c1_i32_417 = arith.constant 1 : i32
      %577 = arith.addi %576, %c1_i32_417 : i32
      %c4_i32_418 = arith.constant 4 : i32
      %578 = arith.addi %577, %c4_i32_418 : i32
      %579 = arith.index_cast %578 : i32 to index
      %c2_419 = arith.constant 2 : index
      %c0_420 = arith.constant 0 : index
      %580 = vector.load %arg15[%579, %c2_419, %c0_420] : memref<18x18x128xf32, #tpu.memory_space<vmem>>, vector<1x14x128xf32>
      %581 = vector.shape_cast %580 : vector<1x14x128xf32> to vector<14x128xf32>
      %582 = arith.truncf %581 : vector<14x128xf32> to vector<14x128xbf16>
      %cst_421 = arith.constant dense<0.000000e+00> : vector<14x128xf32>
      %583 = tpu.matmul %575, %569, %cst_421 {dimension_numbers = #tpu.dot_dimension_numbers<[1], [0], [0], [1], [0, 0, 1, 1], [], []>} : vector<14x128xbf16>, vector<128x128xbf16>, vector<14x128xf32> -> vector<14x128xf32>
      %584 = arith.addf %565, %583 : vector<14x128xf32>
      %cst_422 = arith.constant dense<0.000000e+00> : vector<14x128xf32>
      %585 = tpu.matmul %582, %569, %cst_422 {dimension_numbers = #tpu.dot_dimension_numbers<[1], [0], [0], [1], [0, 0, 1, 1], [], []>} : vector<14x128xbf16>, vector<128x128xbf16>, vector<14x128xf32> -> vector<14x128xf32>
      %586 = arith.addf %567, %585 : vector<14x128xf32>
      %c23 = arith.constant 23 : index
      %c0_423 = arith.constant 0 : index
      %c0_424 = arith.constant 0 : index
      %587 = vector.load %arg4[%c23, %c0_423, %c0_424] : memref<25x128x128xbf16, #tpu.memory_space<vmem>>, vector<1x128x128xbf16>
      %588 = vector.shape_cast %587 : vector<1x128x128xbf16> to vector<128x128xbf16>
      %c2_i32_425 = arith.constant 2 : i32
      %589 = arith.muli %c2_i32_425, %arg18 : i32
      %c4_i32_426 = arith.constant 4 : i32
      %590 = arith.addi %589, %c4_i32_426 : i32
      %591 = arith.index_cast %590 : i32 to index
      %c3_427 = arith.constant 3 : index
      %c0_428 = arith.constant 0 : index
      %592 = vector.load %arg15[%591, %c3_427, %c0_428] : memref<18x18x128xf32, #tpu.memory_space<vmem>>, vector<1x14x128xf32>
      %593 = vector.shape_cast %592 : vector<1x14x128xf32> to vector<14x128xf32>
      %594 = arith.truncf %593 : vector<14x128xf32> to vector<14x128xbf16>
      %c2_i32_429 = arith.constant 2 : i32
      %595 = arith.muli %c2_i32_429, %arg18 : i32
      %c1_i32_430 = arith.constant 1 : i32
      %596 = arith.addi %595, %c1_i32_430 : i32
      %c4_i32_431 = arith.constant 4 : i32
      %597 = arith.addi %596, %c4_i32_431 : i32
      %598 = arith.index_cast %597 : i32 to index
      %c3_432 = arith.constant 3 : index
      %c0_433 = arith.constant 0 : index
      %599 = vector.load %arg15[%598, %c3_432, %c0_433] : memref<18x18x128xf32, #tpu.memory_space<vmem>>, vector<1x14x128xf32>
      %600 = vector.shape_cast %599 : vector<1x14x128xf32> to vector<14x128xf32>
      %601 = arith.truncf %600 : vector<14x128xf32> to vector<14x128xbf16>
      %cst_434 = arith.constant dense<0.000000e+00> : vector<14x128xf32>
      %602 = tpu.matmul %594, %588, %cst_434 {dimension_numbers = #tpu.dot_dimension_numbers<[1], [0], [0], [1], [0, 0, 1, 1], [], []>} : vector<14x128xbf16>, vector<128x128xbf16>, vector<14x128xf32> -> vector<14x128xf32>
      %603 = arith.addf %584, %602 : vector<14x128xf32>
      %cst_435 = arith.constant dense<0.000000e+00> : vector<14x128xf32>
      %604 = tpu.matmul %601, %588, %cst_435 {dimension_numbers = #tpu.dot_dimension_numbers<[1], [0], [0], [1], [0, 0, 1, 1], [], []>} : vector<14x128xbf16>, vector<128x128xbf16>, vector<14x128xf32> -> vector<14x128xf32>
      %605 = arith.addf %586, %604 : vector<14x128xf32>
      %c24 = arith.constant 24 : index
      %c0_436 = arith.constant 0 : index
      %c0_437 = arith.constant 0 : index
      %606 = vector.load %arg4[%c24, %c0_436, %c0_437] : memref<25x128x128xbf16, #tpu.memory_space<vmem>>, vector<1x128x128xbf16>
      %607 = vector.shape_cast %606 : vector<1x128x128xbf16> to vector<128x128xbf16>
      %c2_i32_438 = arith.constant 2 : i32
      %608 = arith.muli %c2_i32_438, %arg18 : i32
      %c4_i32_439 = arith.constant 4 : i32
      %609 = arith.addi %608, %c4_i32_439 : i32
      %610 = arith.index_cast %609 : i32 to index
      %c4_440 = arith.constant 4 : index
      %c0_441 = arith.constant 0 : index
      %611 = vector.load %arg15[%610, %c4_440, %c0_441] : memref<18x18x128xf32, #tpu.memory_space<vmem>>, vector<1x14x128xf32>
      %612 = vector.shape_cast %611 : vector<1x14x128xf32> to vector<14x128xf32>
      %613 = arith.truncf %612 : vector<14x128xf32> to vector<14x128xbf16>
      %c2_i32_442 = arith.constant 2 : i32
      %614 = arith.muli %c2_i32_442, %arg18 : i32
      %c1_i32_443 = arith.constant 1 : i32
      %615 = arith.addi %614, %c1_i32_443 : i32
      %c4_i32_444 = arith.constant 4 : i32
      %616 = arith.addi %615, %c4_i32_444 : i32
      %617 = arith.index_cast %616 : i32 to index
      %c4_445 = arith.constant 4 : index
      %c0_446 = arith.constant 0 : index
      %618 = vector.load %arg15[%617, %c4_445, %c0_446] : memref<18x18x128xf32, #tpu.memory_space<vmem>>, vector<1x14x128xf32>
      %619 = vector.shape_cast %618 : vector<1x14x128xf32> to vector<14x128xf32>
      %620 = arith.truncf %619 : vector<14x128xf32> to vector<14x128xbf16>
      %cst_447 = arith.constant dense<0.000000e+00> : vector<14x128xf32>
      %621 = tpu.matmul %613, %607, %cst_447 {dimension_numbers = #tpu.dot_dimension_numbers<[1], [0], [0], [1], [0, 0, 1, 1], [], []>} : vector<14x128xbf16>, vector<128x128xbf16>, vector<14x128xf32> -> vector<14x128xf32>
      %622 = arith.addf %603, %621 : vector<14x128xf32>
      %cst_448 = arith.constant dense<0.000000e+00> : vector<14x128xf32>
      %623 = tpu.matmul %620, %607, %cst_448 {dimension_numbers = #tpu.dot_dimension_numbers<[1], [0], [0], [1], [0, 0, 1, 1], [], []>} : vector<14x128xbf16>, vector<128x128xbf16>, vector<14x128xf32> -> vector<14x128xf32>
      %624 = arith.addf %605, %623 : vector<14x128xf32>
      %625 = arith.addf %622, %104 : vector<14x128xf32>
      %cst_449 = arith.constant 0.000000e+00 : f32
      %626 = vector.broadcast %cst_449 : f32 to vector<14x128xf32>
      %627 = arith.maximumf %625, %626 : vector<14x128xf32>
      %628 = arith.addf %624, %104 : vector<14x128xf32>
      %cst_450 = arith.constant 0.000000e+00 : f32
      %629 = vector.broadcast %cst_450 : f32 to vector<14x128xf32>
      %630 = arith.maximumf %628, %629 : vector<14x128xf32>
      %631 = arith.maximumf %627, %630 : vector<14x128xf32>
      %c0_451 = arith.constant 0 : index
      %c0_452 = arith.constant 0 : index
      %632 = vector.load %arg16[%c0_451, %c0_452] : memref<14x128xf32, #tpu.memory_space<vmem>>, vector<14x128xf32>
      tpu.vector_store %arg16[%c0_451, %c0_452], %631 {strides = array<i32>} : memref<14x128xf32, #tpu.memory_space<vmem>>, vector<14x128xf32>,
      %c0_453 = arith.constant 0 : index
      %c0_454 = arith.constant 0 : index
      %633 = tpu.strided_load %arg16[%c0_453, %c0_454] {strides = array<i32: 2, 1>} : memref<14x128xf32, #tpu.memory_space<vmem>>, vector<7x128xf32>
      %c1_455 = arith.constant 1 : index
      %c0_456 = arith.constant 0 : index
      %634 = tpu.strided_load %arg16[%c1_455, %c0_456] {strides = array<i32: 2, 1>} : memref<14x128xf32, #tpu.memory_space<vmem>>, vector<7x128xf32>
      %635 = arith.maximumf %633, %634 : vector<7x128xf32>
      %cst_457 = arith.constant 0.000000e+00 : f32
      %636 = vector.broadcast %cst_457 : f32 to vector<1x128xf32>
      %637 = vector.extract_strided_slice %635 {offsets = [0, 0], sizes = [1, 40], strides = [1, 1]} : vector<7x128xf32> to vector<1x40xf32>
      %c7_i32_458 = arith.constant 7 : i32
      %638 = arith.muli %arg18, %c7_i32_458 : i32
      %c0_i32_459 = arith.constant 0 : i32
      %639 = arith.addi %638, %c0_i32_459 : i32
      %640 = arith.index_cast %639 : i32 to index
      %c0_460 = arith.constant 0 : index
      %c0_461 = arith.constant 0 : index
      %641 = vector.load %arg6[%640, %c0_460, %c0_461] : memref<49x40x128xbf16, #tpu.memory_space<vmem>>, vector<1x40x128xbf16>
      %642 = vector.shape_cast %641 : vector<1x40x128xbf16> to vector<40x128xbf16>
      %cst_462 = arith.constant dense<0.000000e+00> : vector<1x128xf32>
      %643 = tpu.matmul %637, %642, %cst_462 {dimension_numbers = #tpu.dot_dimension_numbers<[1], [0], [0], [1], [0, 0, 1, 1], [], []>} : vector<1x40xf32>, vector<40x128xbf16>, vector<1x128xf32> -> vector<1x128xf32>
      %644 = arith.addf %636, %643 : vector<1x128xf32>
      %645 = vector.extract_strided_slice %635 {offsets = [1, 0], sizes = [1, 40], strides = [1, 1]} : vector<7x128xf32> to vector<1x40xf32>
      %c7_i32_463 = arith.constant 7 : i32
      %646 = arith.muli %arg18, %c7_i32_463 : i32
      %c1_i32_464 = arith.constant 1 : i32
      %647 = arith.addi %646, %c1_i32_464 : i32
      %648 = arith.index_cast %647 : i32 to index
      %c0_465 = arith.constant 0 : index
      %c0_466 = arith.constant 0 : index
      %649 = vector.load %arg6[%648, %c0_465, %c0_466] : memref<49x40x128xbf16, #tpu.memory_space<vmem>>, vector<1x40x128xbf16>
      %650 = vector.shape_cast %649 : vector<1x40x128xbf16> to vector<40x128xbf16>
      %cst_467 = arith.constant dense<0.000000e+00> : vector<1x128xf32>
      %651 = tpu.matmul %645, %650, %cst_467 {dimension_numbers = #tpu.dot_dimension_numbers<[1], [0], [0], [1], [0, 0, 1, 1], [], []>} : vector<1x40xf32>, vector<40x128xbf16>, vector<1x128xf32> -> vector<1x128xf32>
      %652 = arith.addf %644, %651 : vector<1x128xf32>
      %653 = vector.extract_strided_slice %635 {offsets = [2, 0], sizes = [1, 40], strides = [1, 1]} : vector<7x128xf32> to vector<1x40xf32>
      %c7_i32_468 = arith.constant 7 : i32
      %654 = arith.muli %arg18, %c7_i32_468 : i32
      %c2_i32_469 = arith.constant 2 : i32
      %655 = arith.addi %654, %c2_i32_469 : i32
      %656 = arith.index_cast %655 : i32 to index
      %c0_470 = arith.constant 0 : index
      %c0_471 = arith.constant 0 : index
      %657 = vector.load %arg6[%656, %c0_470, %c0_471] : memref<49x40x128xbf16, #tpu.memory_space<vmem>>, vector<1x40x128xbf16>
      %658 = vector.shape_cast %657 : vector<1x40x128xbf16> to vector<40x128xbf16>
      %cst_472 = arith.constant dense<0.000000e+00> : vector<1x128xf32>
      %659 = tpu.matmul %653, %658, %cst_472 {dimension_numbers = #tpu.dot_dimension_numbers<[1], [0], [0], [1], [0, 0, 1, 1], [], []>} : vector<1x40xf32>, vector<40x128xbf16>, vector<1x128xf32> -> vector<1x128xf32>
      %660 = arith.addf %652, %659 : vector<1x128xf32>
      %661 = vector.extract_strided_slice %635 {offsets = [3, 0], sizes = [1, 40], strides = [1, 1]} : vector<7x128xf32> to vector<1x40xf32>
      %c7_i32_473 = arith.constant 7 : i32
      %662 = arith.muli %arg18, %c7_i32_473 : i32
      %c3_i32_474 = arith.constant 3 : i32
      %663 = arith.addi %662, %c3_i32_474 : i32
      %664 = arith.index_cast %663 : i32 to index
      %c0_475 = arith.constant 0 : index
      %c0_476 = arith.constant 0 : index
      %665 = vector.load %arg6[%664, %c0_475, %c0_476] : memref<49x40x128xbf16, #tpu.memory_space<vmem>>, vector<1x40x128xbf16>
      %666 = vector.shape_cast %665 : vector<1x40x128xbf16> to vector<40x128xbf16>
      %cst_477 = arith.constant dense<0.000000e+00> : vector<1x128xf32>
      %667 = tpu.matmul %661, %666, %cst_477 {dimension_numbers = #tpu.dot_dimension_numbers<[1], [0], [0], [1], [0, 0, 1, 1], [], []>} : vector<1x40xf32>, vector<40x128xbf16>, vector<1x128xf32> -> vector<1x128xf32>
      %668 = arith.addf %660, %667 : vector<1x128xf32>
      %669 = vector.extract_strided_slice %635 {offsets = [4, 0], sizes = [1, 40], strides = [1, 1]} : vector<7x128xf32> to vector<1x40xf32>
      %c7_i32_478 = arith.constant 7 : i32
      %670 = arith.muli %arg18, %c7_i32_478 : i32
      %c4_i32_479 = arith.constant 4 : i32
      %671 = arith.addi %670, %c4_i32_479 : i32
      %672 = arith.index_cast %671 : i32 to index
      %c0_480 = arith.constant 0 : index
      %c0_481 = arith.constant 0 : index
      %673 = vector.load %arg6[%672, %c0_480, %c0_481] : memref<49x40x128xbf16, #tpu.memory_space<vmem>>, vector<1x40x128xbf16>
      %674 = vector.shape_cast %673 : vector<1x40x128xbf16> to vector<40x128xbf16>
      %cst_482 = arith.constant dense<0.000000e+00> : vector<1x128xf32>
      %675 = tpu.matmul %669, %674, %cst_482 {dimension_numbers = #tpu.dot_dimension_numbers<[1], [0], [0], [1], [0, 0, 1, 1], [], []>} : vector<1x40xf32>, vector<40x128xbf16>, vector<1x128xf32> -> vector<1x128xf32>
      %676 = arith.addf %668, %675 : vector<1x128xf32>
      %677 = vector.extract_strided_slice %635 {offsets = [5, 0], sizes = [1, 40], strides = [1, 1]} : vector<7x128xf32> to vector<1x40xf32>
      %c7_i32_483 = arith.constant 7 : i32
      %678 = arith.muli %arg18, %c7_i32_483 : i32
      %c5_i32 = arith.constant 5 : i32
      %679 = arith.addi %678, %c5_i32 : i32
      %680 = arith.index_cast %679 : i32 to index
      %c0_484 = arith.constant 0 : index
      %c0_485 = arith.constant 0 : index
      %681 = vector.load %arg6[%680, %c0_484, %c0_485] : memref<49x40x128xbf16, #tpu.memory_space<vmem>>, vector<1x40x128xbf16>
      %682 = vector.shape_cast %681 : vector<1x40x128xbf16> to vector<40x128xbf16>
      %cst_486 = arith.constant dense<0.000000e+00> : vector<1x128xf32>
      %683 = tpu.matmul %677, %682, %cst_486 {dimension_numbers = #tpu.dot_dimension_numbers<[1], [0], [0], [1], [0, 0, 1, 1], [], []>} : vector<1x40xf32>, vector<40x128xbf16>, vector<1x128xf32> -> vector<1x128xf32>
      %684 = arith.addf %676, %683 : vector<1x128xf32>
      %685 = vector.extract_strided_slice %635 {offsets = [6, 0], sizes = [1, 40], strides = [1, 1]} : vector<7x128xf32> to vector<1x40xf32>
      %c7_i32_487 = arith.constant 7 : i32
      %686 = arith.muli %arg18, %c7_i32_487 : i32
      %c6_i32 = arith.constant 6 : i32
      %687 = arith.addi %686, %c6_i32 : i32
      %688 = arith.index_cast %687 : i32 to index
      %c0_488 = arith.constant 0 : index
      %c0_489 = arith.constant 0 : index
      %689 = vector.load %arg6[%688, %c0_488, %c0_489] : memref<49x40x128xbf16, #tpu.memory_space<vmem>>, vector<1x40x128xbf16>
      %690 = vector.shape_cast %689 : vector<1x40x128xbf16> to vector<40x128xbf16>
      %cst_490 = arith.constant dense<0.000000e+00> : vector<1x128xf32>
      %691 = tpu.matmul %685, %690, %cst_490 {dimension_numbers = #tpu.dot_dimension_numbers<[1], [0], [0], [1], [0, 0, 1, 1], [], []>} : vector<1x40xf32>, vector<40x128xbf16>, vector<1x128xf32> -> vector<1x128xf32>
      %692 = arith.addf %684, %691 : vector<1x128xf32>
      %c0_491 = arith.constant 0 : index
      %c0_492 = arith.constant 0 : index
      %693 = vector.load %arg17[%c0_491, %c0_492] : memref<1x128xf32, #tpu.memory_space<vmem>>, vector<1x128xf32>
      %694 = arith.addf %693, %692 : vector<1x128xf32>
      %c0_493 = arith.constant 0 : index
      %c0_494 = arith.constant 0 : index
      %695 = vector.load %arg17[%c0_493, %c0_494] : memref<1x128xf32, #tpu.memory_space<vmem>>, vector<1x128xf32>
      tpu.vector_store %arg17[%c0_493, %c0_494], %694 {strides = array<i32>} : memref<1x128xf32, #tpu.memory_space<vmem>>, vector<1x128xf32>,
    }
    %c7_i32_81 = arith.constant 7 : i32
    %c0_82 = arith.constant 0 : index
    %c0_83 = arith.constant 0 : index
    %106 = vector.load %arg17[%c0_82, %c0_83] : memref<1x128xf32, #tpu.memory_space<vmem>>, vector<1x128xf32>
    %c0_84 = arith.constant 0 : index
    %c0_85 = arith.constant 0 : index
    %107 = vector.load %arg7[%c0_84, %c0_85] : memref<1x128xf32, #tpu.memory_space<vmem>>, vector<1x128xf32>
    %108 = arith.addf %106, %107 : vector<1x128xf32>
    %109 = math.absf %108 : vector<1x128xf32>
    %cst_86 = arith.constant 0.000000e+00 : f32
    %110 = vector.broadcast %cst_86 : f32 to vector<1x128xf32>
    %111 = arith.subf %110, %109 : vector<1x128xf32>
    %112 = math.exp %111 : vector<1x128xf32>
    %cst_87 = arith.constant 0.000000e+00 : f32
    %113 = vector.broadcast %cst_87 : f32 to vector<1x128xf32>
    %114 = arith.cmpf oge, %108, %113 : vector<1x128xf32>
    %cst_88 = arith.constant 1.000000e+00 : f32
    %115 = vector.broadcast %cst_88 : f32 to vector<1x128xf32>
    %116 = arith.addf %115, %112 : vector<1x128xf32>
    %cst_89 = arith.constant 1.000000e+00 : f32
    %117 = vector.broadcast %cst_89 : f32 to vector<1x128xf32>
    %118 = arith.divf %117, %116 : vector<1x128xf32>
    %cst_90 = arith.constant 1.000000e+00 : f32
    %119 = vector.broadcast %cst_90 : f32 to vector<1x128xf32>
    %120 = arith.addf %119, %112 : vector<1x128xf32>
    %121 = arith.divf %112, %120 : vector<1x128xf32>
    %122 = arith.select %114, %118, %121 : vector<1x128xi1>, vector<1x128xf32>
    %c0_91 = arith.constant 0 : index
    %c0_92 = arith.constant 0 : index
    %123 = vector.load %arg8[%c0_91, %c0_92] : memref<128x128xbf16, #tpu.memory_space<vmem>>, vector<128x128xbf16>
    %cst_93 = arith.constant dense<0.000000e+00> : vector<1x128xf32>
    %124 = tpu.matmul %122, %123, %cst_93 {dimension_numbers = #tpu.dot_dimension_numbers<[1], [0], [0], [1], [0, 0, 1, 1], [], []>} : vector<1x128xf32>, vector<128x128xbf16>, vector<1x128xf32> -> vector<1x128xf32>
    %c0_94 = arith.constant 0 : index
    %c0_95 = arith.constant 0 : index
    %125 = vector.load %arg9[%c0_94, %c0_95] : memref<1x128xf32, #tpu.memory_space<vmem>>, vector<1x128xf32>
    %126 = arith.addf %124, %125 : vector<1x128xf32>
    %127 = math.absf %126 : vector<1x128xf32>
    %cst_96 = arith.constant 0.000000e+00 : f32
    %128 = vector.broadcast %cst_96 : f32 to vector<1x128xf32>
    %129 = arith.subf %128, %127 : vector<1x128xf32>
    %130 = math.exp %129 : vector<1x128xf32>
    %cst_97 = arith.constant 0.000000e+00 : f32
    %131 = vector.broadcast %cst_97 : f32 to vector<1x128xf32>
    %132 = arith.cmpf oge, %126, %131 : vector<1x128xf32>
    %cst_98 = arith.constant 1.000000e+00 : f32
    %133 = vector.broadcast %cst_98 : f32 to vector<1x128xf32>
    %134 = arith.addf %133, %130 : vector<1x128xf32>
    %cst_99 = arith.constant 1.000000e+00 : f32
    %135 = vector.broadcast %cst_99 : f32 to vector<1x128xf32>
    %136 = arith.divf %135, %134 : vector<1x128xf32>
    %cst_100 = arith.constant 1.000000e+00 : f32
    %137 = vector.broadcast %cst_100 : f32 to vector<1x128xf32>
    %138 = arith.addf %137, %130 : vector<1x128xf32>
    %139 = arith.divf %130, %138 : vector<1x128xf32>
    %140 = arith.select %132, %136, %139 : vector<1x128xi1>, vector<1x128xf32>
    %c0_101 = arith.constant 0 : index
    %c0_102 = arith.constant 0 : index
    %141 = vector.load %arg10[%c0_101, %c0_102] : memref<128x128xbf16, #tpu.memory_space<vmem>>, vector<128x128xbf16>
    %cst_103 = arith.constant dense<0.000000e+00> : vector<1x128xf32>
    %142 = tpu.matmul %140, %141, %cst_103 {dimension_numbers = #tpu.dot_dimension_numbers<[1], [0], [0], [1], [0, 0, 1, 1], [], []>} : vector<1x128xf32>, vector<128x128xbf16>, vector<1x128xf32> -> vector<1x128xf32>
    %c0_104 = arith.constant 0 : index
    %c0_105 = arith.constant 0 : index
    %143 = vector.load %arg11[%c0_104, %c0_105] : memref<1x128xf32, #tpu.memory_space<vmem>>, vector<1x128xf32>
    %144 = arith.addf %142, %143 : vector<1x128xf32>
    %c0_106 = arith.constant 0 : index
    %c0_107 = arith.constant 0 : index
    %c0_108 = arith.constant 0 : index
    %145 = vector.load %arg12[%c0_106, %c0_107, %c0_108] : memref<1x1x128xf32, #tpu.memory_space<vmem>>, vector<1x1x128xf32>
    %146 = vector.shape_cast %145 : vector<1x1x128xf32> to vector<1x128xf32>
    %147 = vector.shape_cast %144 : vector<1x128xf32> to vector<1x1x128xf32>
    tpu.vector_store %arg12[%c0_106, %c0_107, %c0_108], %147 {strides = array<i32>} : memref<1x1x128xf32, #tpu.memory_space<vmem>>, vector<1x1x128xf32>,
    return
  }
  func.func @transform_0(%arg0: i32) -> (i32, i32, i32) {
    %c0_i32 = arith.constant 0 : i32
    %c0_i32_0 = arith.constant 0 : i32
    %c0_i32_1 = arith.constant 0 : i32
    return %arg0, %c0_i32, %c0_i32_0 : i32, i32, i32
  }
  func.func @transform_1(%arg0: i32) -> (i32, i32) {
    %c0_i32 = arith.constant 0 : i32
    %c0_i32_0 = arith.constant 0 : i32
    %c0_i32_1 = arith.constant 0 : i32
    return %c0_i32, %c0_i32_0 : i32, i32
  }
  func.func @transform_2(%arg0: i32) -> (i32, i32) {
    %c0_i32 = arith.constant 0 : i32
    %c0_i32_0 = arith.constant 0 : i32
    %c0_i32_1 = arith.constant 0 : i32
    return %c0_i32, %c0_i32_0 : i32, i32
  }
  func.func @transform_3(%arg0: i32) -> (i32, i32, i32) {
    %c0_i32 = arith.constant 0 : i32
    %c0_i32_0 = arith.constant 0 : i32
    %c0_i32_1 = arith.constant 0 : i32
    %c0_i32_2 = arith.constant 0 : i32
    return %c0_i32, %c0_i32_0, %c0_i32_1 : i32, i32, i32
  }
  func.func @transform_4(%arg0: i32) -> (i32, i32) {
    %c0_i32 = arith.constant 0 : i32
    %c0_i32_0 = arith.constant 0 : i32
    %c0_i32_1 = arith.constant 0 : i32
    return %c0_i32, %c0_i32_0 : i32, i32
  }
  func.func @transform_5(%arg0: i32) -> (i32, i32, i32) {
    %c0_i32 = arith.constant 0 : i32
    %c0_i32_0 = arith.constant 0 : i32
    %c0_i32_1 = arith.constant 0 : i32
    %c0_i32_2 = arith.constant 0 : i32
    return %c0_i32, %c0_i32_0, %c0_i32_1 : i32, i32, i32
  }
  func.func @transform_6(%arg0: i32) -> (i32, i32) {
    %c0_i32 = arith.constant 0 : i32
    %c0_i32_0 = arith.constant 0 : i32
    %c0_i32_1 = arith.constant 0 : i32
    return %c0_i32, %c0_i32_0 : i32, i32
  }
  func.func @transform_7(%arg0: i32) -> (i32, i32) {
    %c0_i32 = arith.constant 0 : i32
    %c0_i32_0 = arith.constant 0 : i32
    %c0_i32_1 = arith.constant 0 : i32
    return %c0_i32, %c0_i32_0 : i32, i32
  }
  func.func @transform_8(%arg0: i32) -> (i32, i32) {
    %c0_i32 = arith.constant 0 : i32
    %c0_i32_0 = arith.constant 0 : i32
    %c0_i32_1 = arith.constant 0 : i32
    return %c0_i32, %c0_i32_0 : i32, i32
  }
  func.func @transform_9(%arg0: i32) -> (i32, i32) {
    %c0_i32 = arith.constant 0 : i32
    %c0_i32_0 = arith.constant 0 : i32
    %c0_i32_1 = arith.constant 0 : i32
    return %c0_i32, %c0_i32_0 : i32, i32
  }
  func.func @transform_10(%arg0: i32) -> (i32, i32) {
    %c0_i32 = arith.constant 0 : i32
    %c0_i32_0 = arith.constant 0 : i32
    %c0_i32_1 = arith.constant 0 : i32
    return %c0_i32, %c0_i32_0 : i32, i32
  }
  func.func @transform_11(%arg0: i32) -> (i32, i32, i32) {
    %c0_i32 = arith.constant 0 : i32
    %c0_i32_0 = arith.constant 0 : i32
    %c0_i32_1 = arith.constant 0 : i32
    return %arg0, %c0_i32, %c0_i32_0 : i32, i32, i32
  }
}

</mosaic_0001>

<llo_original>
// kernel: model5_forward.1
$region0: #{model5_forward.1}
  #allocation0 [shape = 'u32[]', space=smem, size = 0x4, offset = 0x4, fixed_abs, tag = 'smem constant byte address 0x4 - core index']
  #allocation1 [shape = 'u32[72,128]{1,0:T(1,128)}', space=vmem, size = 0x9000, scoped, tag = 'internal scratch']
  #allocation2 [shape = 'f32[784,128]{1,0:T(8,128)}', space=vmem, size = 0x62000, scoped, tag = 'scratch operand']
  #allocation3 [shape = 'f32[392,128]{1,0:T(8,128)}', space=vmem, size = 0x31000, scoped, tag = 'scratch operand']
  #allocation4 [shape = 'f32[18,18,128]{2,1,0:T(8,128)}', space=vmem, size = 0x36000, scoped, tag = 'scratch operand']
  #allocation5 [shape = 'f32[14,128]{1,0:T(8,128)}', space=vmem, size = 0x2000, scoped, tag = 'scratch operand']
  #allocation6 [shape = 'f32[1,128]{1,0:T(1,128)}', space=vmem, size = 0x200, scoped, tag = 'scratch operand']
  %s0 = inlined_call_operand.vmem [shape: bf16[2,784,25], index: 0, kind: input, shape index: {}]
  %s1 = inlined_call_operand.vmem [shape: bf16[25,128], index: 1, kind: input, shape index: {}]
  %s2 = inlined_call_operand.vmem [shape: f32[1,128], index: 2, kind: input, shape index: {}]
  %s3 = inlined_call_operand.vmem [shape: bf16[25,128,128], index: 3, kind: input, shape index: {}]
  %s4 = inlined_call_operand.vmem [shape: f32[1,128], index: 4, kind: input, shape index: {}]
  %s5 = inlined_call_operand.vmem [shape: bf16[49,40,128], index: 5, kind: input, shape index: {}]
  %s6 = inlined_call_operand.vmem [shape: f32[1,128], index: 6, kind: input, shape index: {}]
  %s7 = inlined_call_operand.vmem [shape: bf16[128,128], index: 7, kind: input, shape index: {}]
  %s8 = inlined_call_operand.vmem [shape: f32[1,128], index: 8, kind: input, shape index: {}]
  %s9 = inlined_call_operand.vmem [shape: bf16[128,128], index: 9, kind: input, shape index: {}]
  %s10 = inlined_call_operand.vmem [shape: f32[1,128], index: 10, kind: input, shape index: {}]
  %s11 = inlined_call_operand.hbm [shape: f32[2,1,128], index: 11, kind: output, shape index: {}]
  %s12 = sld [smem:[#allocation0]]
  $region84: #{model5_forward.1} parent=0
    _
  %s14 = ssub.s32 1, %s12
  %s15 = scalar_select 0, %s14, %s12
  $region1: #{model5_forward.1} parent=0
    #allocation7 [shape = 'u8[1024]{0}', space=vmem, size = 0x400, scoped, tag = 'output window, operand 0']
    #allocation8 [shape = 's32[2]{0}', space=sflag, size = 0x8, scoped, tag = 'scoped memory for model5_forward.1']
    %16 = vsyncpa [#allocation8], 0
    %s17 = scalar_lea.sflag [#allocation8], 1
    %18 = vsyncpa %s17, 0
    loop: start=0, step=1, limit=4
    $region2: #{model5_forward.1} parent=1 // loop_pre_header
      _
    $region3: #{model5_forward.1} parent=1 // loop_header
      %s20 = sphi 0, %s24
      %p21 = scmp.ge.s32.totalorder %s20, 4
      %s30 = sphi 0, %s32
      %s33 = sphi 0, %s30
      %s34 = sphi 0, %s33
      %s50 = sphi 0, %s34
      %s54 = sphi 0, %s54
      %s56 = sphi 0, %s54
      %s57 = sphi 0, %s56
      %s71 = sphi 0, %s57
      %s75 = sphi 0, %s75
      %s77 = sphi 0, %s75
      %s78 = sphi 0, %s77
      %s92 = sphi 0, %s78
      %s96 = sphi 0, %s96
      %s98 = sphi 0, %s96
      %s99 = sphi 0, %s98
      %s113 = sphi 0, %s99
      %s117 = sphi 0, %s117
      %s119 = sphi 0, %s117
      %s120 = sphi 0, %s119
      %s134 = sphi 0, %s120
      %s138 = sphi 0, %s138
      %s140 = sphi 0, %s138
      %s141 = sphi 0, %s140
      %s155 = sphi 0, %s141
      %s159 = sphi 0, %s159
      %s161 = sphi 0, %s159
      %s162 = sphi 0, %s161
      %s176 = sphi 0, %s162
      %s180 = sphi 0, %s180
      %s182 = sphi 0, %s180
      %s183 = sphi 0, %s182
      %s197 = sphi 0, %s183
      %s201 = sphi 0, %s201
      %s203 = sphi 0, %s201
      %s204 = sphi 0, %s203
      %s218 = sphi 0, %s204
      %s222 = sphi 0, %s222
      %s224 = sphi 0, %s222
      %s225 = sphi 0, %s224
      %s239 = sphi 0, %s225
      %s243 = sphi 0, %s243
      %s245 = sphi 0, %s243
      %s246 = sphi 0, %s245
      %s260 = sphi 0, %s246
      %s266 = sphi 0, %s268
      %s269 = sphi 0, %s266
      %s270 = sphi 0, %s269
      %s286 = sphi 0, %s270
    $region4: #{model5_forward.1} parent=1 // loop_header_branch
      %23 = sbr.rel (%p21) target = $region8
    $region5: #{model5_forward.1} parent=1 // loop_body
      %s25 = ssub.s32 %s20, 1
      %s26 = ssub.s32 %s20, 2
      %s27 = sadd.s32 %s20, 1
      %s28 = ssub.s32 %s20, %s27
      %p29 = scmp.eq.s32.totalorder %s28, 0
      %s31 = sadd.s32 %s30, 1
      %s32 = scalar_select %p29, %s30, %s31
      %p35 = pneg %p29
      %p36 = scmp.eq.s32.totalorder %s20, 1
      %p37 = por %p35, %p36
      %p38 = scmp.ne.s32.totalorder %s30, %s33
      %p39 = scmp.eq.s32.totalorder %s20, 0
      %p40 = por %p38, %p39
      %p41 = scmp.ne.s32.totalorder %s30, %s33
      %p42 = scmp.eq.s32.totalorder %s25, 1
      %p43 = por %p41, %p42
      %p44 = scmp.ne.s32.totalorder %s33, %s34
      %p45 = scmp.eq.s32.totalorder %s25, 0
      %p46 = por %p44, %p45
      %p47 = scmp.ne.s32.totalorder %s33, %s34
      %p48 = scmp.eq.s32.totalorder %s26, 1
      %p49 = por %p47, %p48
      %p51 = scmp.ne.s32.totalorder %s34, %s50
      %p52 = scmp.eq.s32.totalorder %s26, 0
      %p53 = por %p51, %p52
      %s55 = sadd.s32 %s54, 1
      %p58 = scmp.eq.s32.totalorder %s20, 1
      %p59 = scmp.ne.s32.totalorder %s54, %s56
      %p60 = scmp.eq.s32.totalorder %s20, 0
      %p61 = por %p59, %p60
      %p62 = scmp.ne.s32.totalorder %s54, %s56
      %p63 = scmp.eq.s32.totalorder %s25, 1
      %p64 = por %p62, %p63
      %p65 = scmp.ne.s32.totalorder %s56, %s57
      %p66 = scmp.eq.s32.totalorder %s25, 0
      %p67 = por %p65, %p66
      %p68 = scmp.ne.s32.totalorder %s56, %s57
      %p69 = scmp.eq.s32.totalorder %s26, 1
      %p70 = por %p68, %p69
      %p72 = scmp.ne.s32.totalorder %s57, %s71
      %p73 = scmp.eq.s32.totalorder %s26, 0
      %p74 = por %p72, %p73
      %s76 = sadd.s32 %s75, 1
      %p79 = scmp.eq.s32.totalorder %s20, 1
      %p80 = scmp.ne.s32.totalorder %s75, %s77
      %p81 = scmp.eq.s32.totalorder %s20, 0
      %p82 = por %p80, %p81
      %p83 = scmp.ne.s32.totalorder %s75, %s77
      %p84 = scmp.eq.s32.totalorder %s25, 1
      %p85 = por %p83, %p84
      %p86 = scmp.ne.s32.totalorder %s77, %s78
      %p87 = scmp.eq.s32.totalorder %s25, 0
      %p88 = por %p86, %p87
      %p89 = scmp.ne.s32.totalorder %s77, %s78
      %p90 = scmp.eq.s32.totalorder %s26, 1
      %p91 = por %p89, %p90
      %p93 = scmp.ne.s32.totalorder %s78, %s92
      %p94 = scmp.eq.s32.totalorder %s26, 0
      %p95 = por %p93, %p94
      %s97 = sadd.s32 %s96, 1
      %p100 = scmp.eq.s32.totalorder %s20, 1
      %p101 = scmp.ne.s32.totalorder %s96, %s98
      %p102 = scmp.eq.s32.totalorder %s20, 0
      %p103 = por %p101, %p102
      %p104 = scmp.ne.s32.totalorder %s96, %s98
      %p105 = scmp.eq.s32.totalorder %s25, 1
      %p106 = por %p104, %p105
      %p107 = scmp.ne.s32.totalorder %s98, %s99
      %p108 = scmp.eq.s32.totalorder %s25, 0
      %p109 = por %p107, %p108
      %p110 = scmp.ne.s32.totalorder %s98, %s99
      %p111 = scmp.eq.s32.totalorder %s26, 1
      %p112 = por %p110, %p111
      %p114 = scmp.ne.s32.totalorder %s99, %s113
      %p115 = scmp.eq.s32.totalorder %s26, 0
      %p116 = por %p114, %p115
      %s118 = sadd.s32 %s117, 1
      %p121 = scmp.eq.s32.totalorder %s20, 1
      %p122 = scmp.ne.s32.totalorder %s117, %s119
      %p123 = scmp.eq.s32.totalorder %s20, 0
      %p124 = por %p122, %p123
      %p125 = scmp.ne.s32.totalorder %s117, %s119
      %p126 = scmp.eq.s32.totalorder %s25, 1
      %p127 = por %p125, %p126
      %p128 = scmp.ne.s32.totalorder %s119, %s120
      %p129 = scmp.eq.s32.totalorder %s25, 0
      %p130 = por %p128, %p129
      %p131 = scmp.ne.s32.totalorder %s119, %s120
      %p132 = scmp.eq.s32.totalorder %s26, 1
      %p133 = por %p131, %p132
      %p135 = scmp.ne.s32.totalorder %s120, %s134
      %p136 = scmp.eq.s32.totalorder %s26, 0
      %p137 = por %p135, %p136
      %s139 = sadd.s32 %s138, 1
      %p142 = scmp.eq.s32.totalorder %s20, 1
      %p143 = scmp.ne.s32.totalorder %s138, %s140
      %p144 = scmp.eq.s32.totalorder %s20, 0
      %p145 = por %p143, %p144
      %p146 = scmp.ne.s32.totalorder %s138, %s140
      %p147 = scmp.eq.s32.totalorder %s25, 1
      %p148 = por %p146, %p147
      %p149 = scmp.ne.s32.totalorder %s140, %s141
      %p150 = scmp.eq.s32.totalorder %s25, 0
      %p151 = por %p149, %p150
      %p152 = scmp.ne.s32.totalorder %s140, %s141
      %p153 = scmp.eq.s32.totalorder %s26, 1
      %p154 = por %p152, %p153
      %p156 = scmp.ne.s32.totalorder %s141, %s155
      %p157 = scmp.eq.s32.totalorder %s26, 0
      %p158 = por %p156, %p157
      %s160 = sadd.s32 %s159, 1
      %p163 = scmp.eq.s32.totalorder %s20, 1
      %p164 = scmp.ne.s32.totalorder %s159, %s161
      %p165 = scmp.eq.s32.totalorder %s20, 0
      %p166 = por %p164, %p165
      %p167 = scmp.ne.s32.totalorder %s159, %s161
      %p168 = scmp.eq.s32.totalorder %s25, 1
      %p169 = por %p167, %p168
      %p170 = scmp.ne.s32.totalorder %s161, %s162
      %p171 = scmp.eq.s32.totalorder %s25, 0
      %p172 = por %p170, %p171
      %p173 = scmp.ne.s32.totalorder %s161, %s162
      %p174 = scmp.eq.s32.totalorder %s26, 1
      %p175 = por %p173, %p174
      %p177 = scmp.ne.s32.totalorder %s162, %s176
      %p178 = scmp.eq.s32.totalorder %s26, 0
      %p179 = por %p177, %p178
      %s181 = sadd.s32 %s180, 1
      %p184 = scmp.eq.s32.totalorder %s20, 1
      %p185 = scmp.ne.s32.totalorder %s180, %s182
      %p186 = scmp.eq.s32.totalorder %s20, 0
      %p187 = por %p185, %p186
      %p188 = scmp.ne.s32.totalorder %s180, %s182
      %p189 = scmp.eq.s32.totalorder %s25, 1
      %p190 = por %p188, %p189
      %p191 = scmp.ne.s32.totalorder %s182, %s183
      %p192 = scmp.eq.s32.totalorder %s25, 0
      %p193 = por %p191, %p192
      %p194 = scmp.ne.s32.totalorder %s182, %s183
      %p195 = scmp.eq.s32.totalorder %s26, 1
      %p196 = por %p194, %p195
      %p198 = scmp.ne.s32.totalorder %s183, %s197
      %p199 = scmp.eq.s32.totalorder %s26, 0
      %p200 = por %p198, %p199
      %s202 = sadd.s32 %s201, 1
      %p205 = scmp.eq.s32.totalorder %s20, 1
      %p206 = scmp.ne.s32.totalorder %s201, %s203
      %p207 = scmp.eq.s32.totalorder %s20, 0
      %p208 = por %p206, %p207
      %p209 = scmp.ne.s32.totalorder %s201, %s203
      %p210 = scmp.eq.s32.totalorder %s25, 1
      %p211 = por %p209, %p210
      %p212 = scmp.ne.s32.totalorder %s203, %s204
      %p213 = scmp.eq.s32.totalorder %s25, 0
      %p214 = por %p212, %p213
      %p215 = scmp.ne.s32.totalorder %s203, %s204
      %p216 = scmp.eq.s32.totalorder %s26, 1
      %p217 = por %p215, %p216
      %p219 = scmp.ne.s32.totalorder %s204, %s218
      %p220 = scmp.eq.s32.totalorder %s26, 0
      %p221 = por %p219, %p220
      %s223 = sadd.s32 %s222, 1
      %p226 = scmp.eq.s32.totalorder %s20, 1
      %p227 = scmp.ne.s32.totalorder %s222, %s224
      %p228 = scmp.eq.s32.totalorder %s20, 0
      %p229 = por %p227, %p228
      %p230 = scmp.ne.s32.totalorder %s222, %s224
      %p231 = scmp.eq.s32.totalorder %s25, 1
      %p232 = por %p230, %p231
      %p233 = scmp.ne.s32.totalorder %s224, %s225
      %p234 = scmp.eq.s32.totalorder %s25, 0
      %p235 = por %p233, %p234
      %p236 = scmp.ne.s32.totalorder %s224, %s225
      %p237 = scmp.eq.s32.totalorder %s26, 1
      %p238 = por %p236, %p237
      %p240 = scmp.ne.s32.totalorder %s225, %s239
      %p241 = scmp.eq.s32.totalorder %s26, 0
      %p242 = por %p240, %p241
      %s244 = sadd.s32 %s243, 1
      %p247 = scmp.eq.s32.totalorder %s20, 1
      %p248 = scmp.ne.s32.totalorder %s243, %s245
      %p249 = scmp.eq.s32.totalorder %s20, 0
      %p250 = por %p248, %p249
      %p251 = scmp.ne.s32.totalorder %s243, %s245
      %p252 = scmp.eq.s32.totalorder %s25, 1
      %p253 = por %p251, %p252
      %p254 = scmp.ne.s32.totalorder %s245, %s246
      %p255 = scmp.eq.s32.totalorder %s25, 0
      %p256 = por %p254, %p255
      %p257 = scmp.ne.s32.totalorder %s245, %s246
      %p258 = scmp.eq.s32.totalorder %s26, 1
      %p259 = por %p257, %p258
      %p261 = scmp.ne.s32.totalorder %s246, %s260
      %p262 = scmp.eq.s32.totalorder %s26, 0
      %p263 = por %p261, %p262
      %s264 = ssub.s32 %s20, %s27
      %p265 = scmp.eq.s32.totalorder %s264, 0
      %s267 = sadd.s32 %s266, 1
      %s268 = scalar_select %p265, %s266, %s267
      %p271 = pneg %p265
      %p272 = scmp.eq.s32.totalorder %s20, 1
      %p273 = por %p271, %p272
      %p274 = scmp.ne.s32.totalorder %s266, %s269
      %p275 = scmp.eq.s32.totalorder %s20, 0
      %p276 = por %p274, %p275
      %p277 = scmp.ne.s32.totalorder %s266, %s269
      %p278 = scmp.eq.s32.totalorder %s25, 1
      %p279 = por %p277, %p278
      %p280 = scmp.ne.s32.totalorder %s269, %s270
      %p281 = scmp.eq.s32.totalorder %s25, 0
      %p282 = por %p280, %p281
      %p283 = scmp.ne.s32.totalorder %s269, %s270
      %p284 = scmp.eq.s32.totalorder %s26, 1
      %p285 = por %p283, %p284
      %p287 = scmp.ne.s32.totalorder %s270, %s286
      %p288 = scmp.eq.s32.totalorder %s26, 0
      %p289 = por %p287, %p288
      %p290 = scmp.le.s32.totalorder 1, %s20
      %p291 = scmp.lt.s32.totalorder %s20, 3
      %p292 = pnand %p290, %p291
      %p293 = pneg %p292
      // Predicated region
      $region9: #{model5_forward.1} parent=5 // pred_check
        _
      $region10: #{model5_forward.1} parent=5 // pred_check_branch
        %295 = sbr.rel (%p292) target = $region12
      $region11: #{model5_forward.1} parent=5 // pred_region
        %s296 = ssub.s32 %s20, 1
        // Predicated region
        $region13: #{model5_forward.1} parent=11 // pred_check
          %p297 = pneg %p67
        $region14: #{model5_forward.1} parent=11 // pred_check_branch
          %299 = sbr.rel (%p297) target = $region16
        $region15: #{model5_forward.1} parent=11 // pred_region
          _
        $region16: #{model5_forward.1} parent=11 // pred_fallthru
          _
        // Predicated region
        $region17: #{model5_forward.1} parent=11 // pred_check
          %p300 = pneg %p88
        $region18: #{model5_forward.1} parent=11 // pred_check_branch
          %302 = sbr.rel (%p300) target = $region20
        $region19: #{model5_forward.1} parent=11 // pred_region
          _
        $region20: #{model5_forward.1} parent=11 // pred_fallthru
          _
        // Predicated region
        $region21: #{model5_forward.1} parent=11 // pred_check
          %p303 = pneg %p109
        $region22: #{model5_forward.1} parent=11 // pred_check_branch
          %305 = sbr.rel (%p303) target = $region24
        $region23: #{model5_forward.1} parent=11 // pred_region
          _
        $region24: #{model5_forward.1} parent=11 // pred_fallthru
          _
        // Predicated region
        $region25: #{model5_forward.1} parent=11 // pred_check
          %p306 = pneg %p130
        $region26: #{model5_forward.1} parent=11 // pred_check_branch
          %308 = sbr.rel (%p306) target = $region28
        $region27: #{model5_forward.1} parent=11 // pred_region
          _
        $region28: #{model5_forward.1} parent=11 // pred_fallthru
          _
        // Predicated region
        $region29: #{model5_forward.1} parent=11 // pred_check
          %p309 = pneg %p151
        $region30: #{model5_forward.1} parent=11 // pred_check_branch
          %311 = sbr.rel (%p309) target = $region32
        $region31: #{model5_forward.1} parent=11 // pred_region
          _
        $region32: #{model5_forward.1} parent=11 // pred_fallthru
          _
        // Predicated region
        $region33: #{model5_forward.1} parent=11 // pred_check
          %p312 = pneg %p172
        $region34: #{model5_forward.1} parent=11 // pred_check_branch
          %314 = sbr.rel (%p312) target = $region36
        $region35: #{model5_forward.1} parent=11 // pred_region
          _
        $region36: #{model5_forward.1} parent=11 // pred_fallthru
          _
        // Predicated region
        $region37: #{model5_forward.1} parent=11 // pred_check
          %p315 = pneg %p193
        $region38: #{model5_forward.1} parent=11 // pred_check_branch
          %317 = sbr.rel (%p315) target = $region40
        $region39: #{model5_forward.1} parent=11 // pred_region
          _
        $region40: #{model5_forward.1} parent=11 // pred_fallthru
          _
        // Predicated region
        $region41: #{model5_forward.1} parent=11 // pred_check
          %p318 = pneg %p214
        $region42: #{model5_forward.1} parent=11 // pred_check_branch
          %320 = sbr.rel (%p318) target = $region44
        $region43: #{model5_forward.1} parent=11 // pred_region
          _
        $region44: #{model5_forward.1} parent=11 // pred_fallthru
          _
        // Predicated region
        $region45: #{model5_forward.1} parent=11 // pred_check
          %p321 = pneg %p235
        $region46: #{model5_forward.1} parent=11 // pred_check_branch
          %323 = sbr.rel (%p321) target = $region48
        $region47: #{model5_forward.1} parent=11 // pred_region
          _
        $region48: #{model5_forward.1} parent=11 // pred_fallthru
          _
        // Predicated region
        $region49: #{model5_forward.1} parent=11 // pred_check
          %p324 = pneg %p256
        $region50: #{model5_forward.1} parent=11 // pred_check_branch
          %326 = sbr.rel (%p324) target = $region52
        $region51: #{model5_forward.1} parent=11 // pred_region
          _
        $region52: #{model5_forward.1} parent=11 // pred_fallthru
          _
      $region12: #{model5_forward.1} parent=5 // pred_fallthru
        _
      %p327 = scmp.lt.s32.totalorder %s20, 2
      // Predicated region
      $region53: #{model5_forward.1} parent=5 // pred_check
        %p328 = pneg %p327
      $region54: #{model5_forward.1} parent=5 // pred_check_branch
        %330 = sbr.rel (%p328) target = $region56
      $region55: #{model5_forward.1} parent=5 // pred_region
        // Predicated region
        $region57: #{model5_forward.1} parent=55 // pred_check
          %p331 = pneg %p40
        $region58: #{model5_forward.1} parent=55 // pred_check_branch
          %333 = sbr.rel (%p331) target = $region60
        $region59: #{model5_forward.1} parent=55 // pred_region
          %p334 = scmp.lt.s32.totalorder %s20, 1
          %s335 = scalar_select %p334, %s20, 1
          %s336 = smul.addr %s335, 98
          %s337 = smul.addr %s336, 4
          %s338 = scalar_lea.vmem %s0, %s337
        $region60: #{model5_forward.1} parent=55 // pred_fallthru
          _
      $region56: #{model5_forward.1} parent=5 // pred_fallthru
        _
      %p339 = scmp.le.s32.totalorder 1, %s20
      %p340 = scmp.lt.s32.totalorder %s20, 3
      %p341 = pnand %p339, %p340
      %p342 = pneg %p341
      // Predicated region
      $region61: #{model5_forward.1} parent=5 // pred_check
        _
      $region62: #{model5_forward.1} parent=5 // pred_check_branch
        %344 = sbr.rel (%p341) target = $region64
      $region63: #{model5_forward.1} parent=5 // pred_region
        %s345 = ssub.s32 %s20, 1
        %p346 = scmp.lt.s32.totalorder %s25, 1
        %s347 = scalar_select %p346, %s25, 1
        %s348 = smul.addr %s347, 98
        %s349 = smul.addr %s348, 4
        %s350 = scalar_lea.vmem %s0, %s349
        %p351 = pneg %p46
        %p352 = pneg %p43
        %p353 = pneg %p67
        %p354 = pneg %p64
        %p355 = pneg %p88
        %p356 = pneg %p85
        %p357 = pneg %p109
        %p358 = pneg %p106
        %p359 = pneg %p130
        %p360 = pneg %p127
        %p361 = pneg %p151
        %p362 = pneg %p148
        %p363 = pneg %p172
        %p364 = pneg %p169
        %p365 = pneg %p193
        %p366 = pneg %p190
        %p367 = pneg %p214
        %p368 = pneg %p211
        %p369 = pneg %p235
        %p370 = pneg %p232
        %p371 = pneg %p256
        %p372 = pneg %p253
        %p373 = pneg %p282
        %p374 = pneg %p279
        %s375 = sand.u32 %s269, 1
        %s376 = scalar_lea.sflag [#allocation8], %s375
        %s377 = sand.u32 %s269, 1
        %s378 = scalar_lea.vmem [#allocation7], %s377
        %p379 = scmp.lt.s32.totalorder %s25, 1
        %s380 = scalar_select %p379, %s25, 1
        %s381 = smul.addr %s380, 98
        %s382 = smul.addr %s381, 4
        %s383 = scalar_lea.vmem %s0, %s382
        %v385 = vld [vmem:[%s383] sm:$0xf]
        %v386 = vld [vmem:[%s383 + $0x4] sm:$0xf]
        %v387 = vld [vmem:[%s383 + $0x8] sm:$0xf]
        %v388 = vld [vmem:[%s383 + $0xc] sm:$0xf]
        %v389 = vld [vmem:[%s383 + $0x10] sm:$0xf]
        %v390 = vld [vmem:[%s383 + $0x14] sm:$0xf]
        %v391 = vld [vmem:[%s383 + $0x18] sm:$0xf]
        %v392 = vld [vmem:[%s383 + $0x1c] sm:$0xf]
        %v393 = vld [vmem:[%s383 + $0x20] sm:$0xf]
        %v394 = vld [vmem:[%s383 + $0x24] sm:$0xf]
        %v395 = vld [vmem:[%s383 + $0x28] sm:$0xf]
        %v396 = vld [vmem:[%s383 + $0x2c] sm:$0xf]
        %v397 = vld [vmem:[%s383 + $0x30] sm:$0xf]
        %v398 = vld [vmem:[%s383 + $0x34] sm:$0xf]
        %v399 = vld [vmem:[%s383 + $0x38] sm:$0xf]
        %v400 = vld [vmem:[%s383 + $0x3c] sm:$0xf]
        %v401 = vld [vmem:[%s383 + $0x40] sm:$0xf]
        %v402 = vld [vmem:[%s383 + $0x44] sm:$0xf]
        %v403 = vld [vmem:[%s383 + $0x48] sm:$0xf]
        %v404 = vld [vmem:[%s383 + $0x4c] sm:$0xf]
        %v405 = vld [vmem:[%s383 + $0x50] sm:$0xf]
        %v406 = vld [vmem:[%s383 + $0x54] sm:$0xf]
        %v407 = vld [vmem:[%s383 + $0x58] sm:$0xf]
        %v408 = vld [vmem:[%s383 + $0x5c] sm:$0xf]
        %v409 = vld [vmem:[%s383 + $0x60] sm:$0xf]
        %v410 = vld [vmem:[%s383 + $0x64] sm:$0xf]
        %v411 = vld [vmem:[%s383 + $0x68] sm:$0xf]
        %v412 = vld [vmem:[%s383 + $0x6c] sm:$0xf]
        %v413 = vld [vmem:[%s383 + $0x70] sm:$0xf]
        %v414 = vld [vmem:[%s383 + $0x74] sm:$0xf]
        %v415 = vld [vmem:[%s383 + $0x78] sm:$0xf]
        %v416 = vld [vmem:[%s383 + $0x7c] sm:$0xf]
        %v417 = vld [vmem:[%s383 + $0x80] sm:$0xf]
        %v418 = vld [vmem:[%s383 + $0x84] sm:$0xf]
        %v419 = vld [vmem:[%s383 + $0x88] sm:$0xf]
        %v420 = vld [vmem:[%s383 + $0x8c] sm:$0xf]
        %v421 = vld [vmem:[%s383 + $0x90] sm:$0xf]
        %v422 = vld [vmem:[%s383 + $0x94] sm:$0xf]
        %v423 = vld [vmem:[%s383 + $0x98] sm:$0xf]
        %v424 = vld [vmem:[%s383 + $0x9c] sm:$0xf]
        %v425 = vld [vmem:[%s383 + $0xa0] sm:$0xf]
        %v426 = vld [vmem:[%s383 + $0xa4] sm:$0xf]
        %v427 = vld [vmem:[%s383 + $0xa8] sm:$0xf]
        %v428 = vld [vmem:[%s383 + $0xac] sm:$0xf]
        %v429 = vld [vmem:[%s383 + $0xb0] sm:$0xf]
        %v430 = vld [vmem:[%s383 + $0xb4] sm:$0xf]
        %v431 = vld [vmem:[%s383 + $0xb8] sm:$0xf]
        %v432 = vld [vmem:[%s383 + $0xbc] sm:$0xf]
        %v433 = vld [vmem:[%s383 + $0xc0] sm:$0xf]
        %v434 = vld [vmem:[%s383 + $0xc4] sm:$0xf]
        %v435 = vld [vmem:[%s383 + $0xc8] sm:$0xf]
        %v436 = vld [vmem:[%s383 + $0xcc] sm:$0xf]
        %v437 = vld [vmem:[%s383 + $0xd0] sm:$0xf]
        %v438 = vld [vmem:[%s383 + $0xd4] sm:$0xf]
        %v439 = vld [vmem:[%s383 + $0xd8] sm:$0xf]
        %v440 = vld [vmem:[%s383 + $0xdc] sm:$0xf]
        %v441 = vld [vmem:[%s383 + $0xe0] sm:$0xf]
        %v442 = vld [vmem:[%s383 + $0xe4] sm:$0xf]
        %v443 = vld [vmem:[%s383 + $0xe8] sm:$0xf]
        %v444 = vld [vmem:[%s383 + $0xec] sm:$0xf]
        %v445 = vld [vmem:[%s383 + $0xf0] sm:$0xf]
        %v446 = vld [vmem:[%s383 + $0xf4] sm:$0xf]
        %v447 = vld [vmem:[%s383 + $0xf8] sm:$0xf]
        %v448 = vld [vmem:[%s383 + $0xfc] sm:$0xf]
        %v449 = vld [vmem:[%s383 + $0x100] sm:$0xf]
        %v450 = vld [vmem:[%s383 + $0x104] sm:$0xf]
        %v451 = vld [vmem:[%s383 + $0x108] sm:$0xf]
        %v452 = vld [vmem:[%s383 + $0x10c] sm:$0xf]
        %v453 = vld [vmem:[%s383 + $0x110] sm:$0xf]
        %v454 = vld [vmem:[%s383 + $0x114] sm:$0xf]
        %v455 = vld [vmem:[%s383 + $0x118] sm:$0xf]
        %v456 = vld [vmem:[%s383 + $0x11c] sm:$0xf]
        %v457 = vld [vmem:[%s383 + $0x120] sm:$0xf]
        %v458 = vld [vmem:[%s383 + $0x124] sm:$0xf]
        %v459 = vld [vmem:[%s383 + $0x128] sm:$0xf]
        %v460 = vld [vmem:[%s383 + $0x12c] sm:$0xf]
        %v461 = vld [vmem:[%s383 + $0x130] sm:$0xf]
        %v462 = vld [vmem:[%s383 + $0x134] sm:$0xf]
        %v463 = vld [vmem:[%s383 + $0x138] sm:$0xf]
        %v464 = vld [vmem:[%s383 + $0x13c] sm:$0xf]
        %v465 = vld [vmem:[%s383 + $0x140] sm:$0xf]
        %v466 = vld [vmem:[%s383 + $0x144] sm:$0xf]
        %v467 = vld [vmem:[%s383 + $0x148] sm:$0xf]
        %v468 = vld [vmem:[%s383 + $0x14c] sm:$0xf]
        %v469 = vld [vmem:[%s383 + $0x150] sm:$0xf]
        %v470 = vld [vmem:[%s383 + $0x154] sm:$0xf]
        %v471 = vld [vmem:[%s383 + $0x158] sm:$0xf]
        %v472 = vld [vmem:[%s383 + $0x15c] sm:$0xf]
        %v473 = vld [vmem:[%s383 + $0x160] sm:$0xf]
        %v474 = vld [vmem:[%s383 + $0x164] sm:$0xf]
        %v475 = vld [vmem:[%s383 + $0x168] sm:$0xf]
        %v476 = vld [vmem:[%s383 + $0x16c] sm:$0xf]
        %v477 = vld [vmem:[%s383 + $0x170] sm:$0xf]
        %v478 = vld [vmem:[%s383 + $0x174] sm:$0xf]
        %v479 = vld [vmem:[%s383 + $0x178] sm:$0xf]
        %v480 = vld [vmem:[%s383 + $0x17c] sm:$0xf]
        %v481 = vld [vmem:[%s383 + $0x180] sm:$0xf]
        %v482 = vld [vmem:[%s383 + $0x184] sm:$0xf]
        %v483 = vld [vmem:[%s1] sm:$0xf]
        %v484 = vld [vmem:[%s1 + $0x4] sm:$0xf]
        %v485 = vld [vmem:[%s1 + $0x8] sm:$0xf]
        %v486 = vld [vmem:[%s1 + $0xc] sm:$0x1]
        %v487 = vld [vmem:[%s2] sm:$0x1]
        %v489 = vperm.slane %v487, 0
        %v589 = vunpack.c.l.b16 %v385
        %v590 = vunpack.c.l.b16 %v386
        %v591 = vunpack.c.l.b16 %v387
        %v592 = vunpack.c.l.b16 %v388
        %v593 = vunpack.c.l.b16 %v389
        %v594 = vunpack.c.l.b16 %v390
        %v595 = vunpack.c.l.b16 %v391
        %v596 = vunpack.c.l.b16 %v392
        %v597 = vunpack.c.l.b16 %v393
        %v598 = vunpack.c.l.b16 %v394
        %v599 = vunpack.c.l.b16 %v395
        %v600 = vunpack.c.l.b16 %v396
        %v601 = vunpack.c.l.b16 %v397
        %v602 = vunpack.c.l.b16 %v398
        %v603 = vunpack.c.l.b16 %v399
        %v604 = vunpack.c.l.b16 %v400
        %v605 = vunpack.c.l.b16 %v401
        %v606 = vunpack.c.l.b16 %v402
        %v607 = vunpack.c.l.b16 %v403
        %v608 = vunpack.c.l.b16 %v404
        %v609 = vunpack.c.l.b16 %v405
        %v610 = vunpack.c.l.b16 %v406
        %v611 = vunpack.c.l.b16 %v407
        %v612 = vunpack.c.l.b16 %v408
        %v613 = vunpack.c.l.b16 %v409
        %v614 = vunpack.c.l.b16 %v410
        %v615 = vunpack.c.l.b16 %v411
        %v616 = vunpack.c.l.b16 %v412
        %v617 = vunpack.c.l.b16 %v413
        %v618 = vunpack.c.l.b16 %v414
        %v619 = vunpack.c.l.b16 %v415
        %v620 = vunpack.c.l.b16 %v416
        %v621 = vunpack.c.l.b16 %v417
        %v622 = vunpack.c.l.b16 %v418
        %v623 = vunpack.c.l.b16 %v419
        %v624 = vunpack.c.l.b16 %v420
        %v625 = vunpack.c.l.b16 %v421
        %v626 = vunpack.c.l.b16 %v422
        %v627 = vunpack.c.l.b16 %v423
        %v628 = vunpack.c.l.b16 %v424
        %v629 = vunpack.c.l.b16 %v425
        %v630 = vunpack.c.l.b16 %v426
        %v631 = vunpack.c.l.b16 %v427
        %v632 = vunpack.c.l.b16 %v428
        %v633 = vunpack.c.l.b16 %v429
        %v634 = vunpack.c.l.b16 %v430
        %v635 = vunpack.c.l.b16 %v431
        %v636 = vunpack.c.l.b16 %v432
        %v637 = vunpack.c.l.b16 %v433
        %v638 = vunpack.c.l.b16 %v434
        %v639 = vunpack.c.l.b16 %v435
        %v640 = vunpack.c.l.b16 %v436
        %v641 = vunpack.c.l.b16 %v437
        %v642 = vunpack.c.l.b16 %v438
        %v643 = vunpack.c.l.b16 %v439
        %v644 = vunpack.c.l.b16 %v440
        %v645 = vunpack.c.l.b16 %v441
        %v646 = vunpack.c.l.b16 %v442
        %v647 = vunpack.c.l.b16 %v443
        %v648 = vunpack.c.l.b16 %v444
        %v649 = vunpack.c.l.b16 %v445
        %v650 = vunpack.c.l.b16 %v446
        %v651 = vunpack.c.l.b16 %v447
        %v652 = vunpack.c.l.b16 %v448
        %v653 = vunpack.c.l.b16 %v449
        %v654 = vunpack.c.l.b16 %v450
        %v655 = vunpack.c.l.b16 %v451
        %v656 = vunpack.c.l.b16 %v452
        %v657 = vunpack.c.l.b16 %v453
        %v658 = vunpack.c.l.b16 %v454
        %v659 = vunpack.c.l.b16 %v455
        %v660 = vunpack.c.l.b16 %v456
        %v661 = vunpack.c.l.b16 %v457
        %v662 = vunpack.c.l.b16 %v458
        %v663 = vunpack.c.l.b16 %v459
        %v664 = vunpack.c.l.b16 %v460
        %v665 = vunpack.c.l.b16 %v461
        %v666 = vunpack.c.l.b16 %v462
        %v667 = vunpack.c.l.b16 %v463
        %v668 = vunpack.c.l.b16 %v464
        %v669 = vunpack.c.l.b16 %v465
        %v670 = vunpack.c.l.b16 %v466
        %v671 = vunpack.c.l.b16 %v467
        %v672 = vunpack.c.l.b16 %v468
        %v673 = vunpack.c.l.b16 %v469
        %v674 = vunpack.c.l.b16 %v470
        %v675 = vunpack.c.l.b16 %v471
        %v676 = vunpack.c.l.b16 %v472
        %v677 = vunpack.c.l.b16 %v473
        %v678 = vunpack.c.l.b16 %v474
        %v679 = vunpack.c.l.b16 %v475
        %v680 = vunpack.c.l.b16 %v476
        %v681 = vunpack.c.l.b16 %v477
        %v682 = vunpack.c.l.b16 %v478
        %v683 = vunpack.c.l.b16 %v479
        %v684 = vunpack.c.l.b16 %v480
        %v685 = vunpack.c.l.b16 %v481
        %v686 = vunpack.c.l.b16 %v482
        %v687 = vpack.c.b16 %v590, %v589
        %v688 = vpack.c.b16 %v592, %v591
        %v689 = vpack.c.b16 %v594, %v593
        %v690 = vpack.c.b16 %v596, %v595
        %v691 = vpack.c.b16 %v598, %v597
        %v692 = vpack.c.b16 %v600, %v599
        %v693 = vpack.c.b16 %v602, %v601
        %v694 = vpack.c.b16 %v604, %v603
        %v695 = vpack.c.b16 %v606, %v605
        %v696 = vpack.c.b16 %v608, %v607
        %v697 = vpack.c.b16 %v610, %v609
        %v698 = vpack.c.b16 %v612, %v611
        %v699 = vpack.c.b16 %v614, %v613
        %v700 = vpack.c.b16 %v616, %v615
        %v701 = vpack.c.b16 %v618, %v617
        %v702 = vpack.c.b16 %v620, %v619
        %v703 = vpack.c.b16 %v622, %v621
        %v704 = vpack.c.b16 %v624, %v623
        %v705 = vpack.c.b16 %v626, %v625
        %v706 = vpack.c.b16 %v628, %v627
        %v707 = vpack.c.b16 %v630, %v629
        %v708 = vpack.c.b16 %v632, %v631
        %v709 = vpack.c.b16 %v634, %v633
        %v710 = vpack.c.b16 %v636, %v635
        %v711 = vpack.c.b16 %v638, %v637
        %v712 = vpack.c.b16 %v640, %v639
        %v713 = vpack.c.b16 %v642, %v641
        %v714 = vpack.c.b16 %v644, %v643
        %v715 = vpack.c.b16 %v646, %v645
        %v716 = vpack.c.b16 %v648, %v647
        %v717 = vpack.c.b16 %v650, %v649
        %v718 = vpack.c.b16 %v652, %v651
        %v719 = vpack.c.b16 %v654, %v653
        %v720 = vpack.c.b16 %v656, %v655
        %v721 = vpack.c.b16 %v658, %v657
        %v722 = vpack.c.b16 %v660, %v659
        %v723 = vpack.c.b16 %v662, %v661
        %v724 = vpack.c.b16 %v664, %v663
        %v725 = vpack.c.b16 %v666, %v665
        %v726 = vpack.c.b16 %v668, %v667
        %v727 = vpack.c.b16 %v670, %v669
        %v728 = vpack.c.b16 %v672, %v671
        %v729 = vpack.c.b16 %v674, %v673
        %v730 = vpack.c.b16 %v676, %v675
        %v731 = vpack.c.b16 %v678, %v677
        %v732 = vpack.c.b16 %v680, %v679
        %v733 = vpack.c.b16 %v682, %v681
        %v734 = vpack.c.b16 %v684, %v683
        %v735 = vpack.c.b16 %v686, %v685
        %v740 = vunpack.c.l.b16 %v483
        %v741 = vunpack.c.l.b16 %v484
        %v742 = vunpack.c.l.b16 %v485
        %v743 = vunpack.c.l.b16 %v486
        %v744 = vpack.c.b16 %v741, %v740
        %v745 = vpack.c.b16 %v743, %v742
        %vm747 = vcmask 203776
        %v749 = vsel %vm747, %v687, 0
        %v752 = vsel %vm747, %v688, 0
        %v755 = vsel %vm747, %v689, 0
        %v758 = vsel %vm747, %v690, 0
        %v761 = vsel %vm747, %v691, 0
        %v764 = vsel %vm747, %v692, 0
        %v767 = vsel %vm747, %v693, 0
        %v770 = vsel %vm747, %v694, 0
        %v773 = vsel %vm747, %v695, 0
        %v776 = vsel %vm747, %v696, 0
        %v779 = vsel %vm747, %v697, 0
        %v782 = vsel %vm747, %v698, 0
        %v785 = vsel %vm747, %v699, 0
        %v788 = vsel %vm747, %v700, 0
        %v791 = vsel %vm747, %v701, 0
        %v794 = vsel %vm747, %v702, 0
        %v797 = vsel %vm747, %v703, 0
        %v800 = vsel %vm747, %v704, 0
        %v803 = vsel %vm747, %v705, 0
        %v806 = vsel %vm747, %v706, 0
        %v809 = vsel %vm747, %v707, 0
        %v812 = vsel %vm747, %v708, 0
        %v815 = vsel %vm747, %v709, 0
        %v818 = vsel %vm747, %v710, 0
        %v821 = vsel %vm747, %v711, 0
        %v824 = vsel %vm747, %v712, 0
        %v827 = vsel %vm747, %v713, 0
        %v830 = vsel %vm747, %v714, 0
        %v833 = vsel %vm747, %v715, 0
        %v836 = vsel %vm747, %v716, 0
        %v839 = vsel %vm747, %v717, 0
        %v842 = vsel %vm747, %v718, 0
        %v845 = vsel %vm747, %v719, 0
        %v848 = vsel %vm747, %v720, 0
        %v851 = vsel %vm747, %v721, 0
        %v854 = vsel %vm747, %v722, 0
        %v857 = vsel %vm747, %v723, 0
        %v860 = vsel %vm747, %v724, 0
        %v863 = vsel %vm747, %v725, 0
        %v866 = vsel %vm747, %v726, 0
        %v869 = vsel %vm747, %v727, 0
        %v872 = vsel %vm747, %v728, 0
        %v875 = vsel %vm747, %v729, 0
        %v878 = vsel %vm747, %v730, 0
        %v881 = vsel %vm747, %v731, 0
        %v884 = vsel %vm747, %v732, 0
        %v887 = vsel %vm747, %v733, 0
        %v890 = vsel %vm747, %v734, 0
        %v893 = vsel %vm747, %v735, 0
        %vm895 = vcmask 1043456
        %vm896 = vcmask 1044480
        %v897 = vsel %vm895, 4294967295, 65535
        %v898 = vsel %vm896, %v897, 0
        %v900 = vand.u32 %v745, %v898
        %902 = vmatpush.bf16.msra.mxu0 0
        %903 = vmatpush.bf16.msra.mxu0 0
        %904 = vmatpush.bf16.msra.mxu0 0
        %905 = vmatpush.bf16.msra.mxu0 0
        %906 = vmatpush.bf16.msra.mxu0 0
        %907 = vmatpush.bf16.msra.mxu0 0
        %908 = vmatpush.bf16.msra.mxu0 %v900
        %909 = vmatpush.bf16.msra.mxu0 %v744
        %910 = vmatmul.bf16.gmra.mxu0 %v749
        %v911 = vpop.f32.mrf.mxu0
        %v912 = vadd.f32 %v489, %v911
        %v913 = vpop.f32.mrf.mxu0
        %v914 = vadd.f32 %v489, %v913
        %915 = vmatmul.bf16.gmra.mxu0 %v752
        %v916 = vpop.f32.mrf.mxu0
        %v917 = vadd.f32 %v489, %v916
        %v918 = vpop.f32.mrf.mxu0
        %v919 = vadd.f32 %v489, %v918
        %920 = vmatmul.bf16.gmra.mxu0 %v755
        %v921 = vpop.f32.mrf.mxu0
        %v922 = vadd.f32 %v489, %v921
        %v923 = vpop.f32.mrf.mxu0
        %v924 = vadd.f32 %v489, %v923
        %925 = vmatmul.bf16.gmra.mxu0 %v758
        %v926 = vpop.f32.mrf.mxu0
        %v927 = vadd.f32 %v489, %v926
        %v928 = vpop.f32.mrf.mxu0
        %v929 = vadd.f32 %v489, %v928
        %930 = vmatmul.bf16.gmra.mxu0 %v761
        %v931 = vpop.f32.mrf.mxu0
        %v932 = vadd.f32 %v489, %v931
        %v933 = vpop.f32.mrf.mxu0
        %v934 = vadd.f32 %v489, %v933
        %935 = vmatmul.bf16.gmra.mxu0 %v764
        %v936 = vpop.f32.mrf.mxu0
        %v937 = vadd.f32 %v489, %v936
        %v938 = vpop.f32.mrf.mxu0
        %v939 = vadd.f32 %v489, %v938
        %940 = vmatmul.bf16.gmra.mxu0 %v767
        %v941 = vpop.f32.mrf.mxu0
        %v942 = vadd.f32 %v489, %v941
        %v943 = vpop.f32.mrf.mxu0
        %v944 = vadd.f32 %v489, %v943
        %945 = vmatmul.bf16.gmra.mxu0 %v770
        %v946 = vpop.f32.mrf.mxu0
        %v947 = vadd.f32 %v489, %v946
        %v948 = vpop.f32.mrf.mxu0
        %v949 = vadd.f32 %v489, %v948
        %950 = vmatmul.bf16.gmra.mxu0 %v773
        %v951 = vpop.f32.mrf.mxu0
        %v952 = vadd.f32 %v489, %v951
        %v953 = vpop.f32.mrf.mxu0
        %v954 = vadd.f32 %v489, %v953
        %955 = vmatmul.bf16.gmra.mxu0 %v776
        %v956 = vpop.f32.mrf.mxu0
        %v957 = vadd.f32 %v489, %v956
        %v958 = vpop.f32.mrf.mxu0
        %v959 = vadd.f32 %v489, %v958
        %960 = vmatmul.bf16.gmra.mxu0 %v779
        %v961 = vpop.f32.mrf.mxu0
        %v962 = vadd.f32 %v489, %v961
        %v963 = vpop.f32.mrf.mxu0
        %v964 = vadd.f32 %v489, %v963
        %965 = vmatmul.bf16.gmra.mxu0 %v782
        %v966 = vpop.f32.mrf.mxu0
        %v967 = vadd.f32 %v489, %v966
        %v968 = vpop.f32.mrf.mxu0
        %v969 = vadd.f32 %v489, %v968
        %970 = vmatmul.bf16.gmra.mxu0 %v785
        %v971 = vpop.f32.mrf.mxu0
        %v972 = vadd.f32 %v489, %v971
        %v973 = vpop.f32.mrf.mxu0
        %v974 = vadd.f32 %v489, %v973
        %975 = vmatmul.bf16.gmra.mxu0 %v788
        %v976 = vpop.f32.mrf.mxu0
        %v977 = vadd.f32 %v489, %v976
        %v978 = vpop.f32.mrf.mxu0
        %v979 = vadd.f32 %v489, %v978
        %980 = vmatmul.bf16.gmra.mxu0 %v791
        %v981 = vpop.f32.mrf.mxu0
        %v982 = vadd.f32 %v489, %v981
        %v983 = vpop.f32.mrf.mxu0
        %v984 = vadd.f32 %v489, %v983
        %985 = vmatmul.bf16.gmra.mxu0 %v794
        %v986 = vpop.f32.mrf.mxu0
        %v987 = vadd.f32 %v489, %v986
        %v988 = vpop.f32.mrf.mxu0
        %v989 = vadd.f32 %v489, %v988
        %990 = vmatmul.bf16.gmra.mxu0 %v797
        %v991 = vpop.f32.mrf.mxu0
        %v992 = vadd.f32 %v489, %v991
        %v993 = vpop.f32.mrf.mxu0
        %v994 = vadd.f32 %v489, %v993
        %995 = vmatmul.bf16.gmra.mxu0 %v800
        %v996 = vpop.f32.mrf.mxu0
        %v997 = vadd.f32 %v489, %v996
        %v998 = vpop.f32.mrf.mxu0
        %v999 = vadd.f32 %v489, %v998
        %1000 = vmatmul.bf16.gmra.mxu0 %v803
        %v1001 = vpop.f32.mrf.mxu0
        %v1002 = vadd.f32 %v489, %v1001
        %v1003 = vpop.f32.mrf.mxu0
        %v1004 = vadd.f32 %v489, %v1003
        %1005 = vmatmul.bf16.gmra.mxu0 %v806
        %v1006 = vpop.f32.mrf.mxu0
        %v1007 = vadd.f32 %v489, %v1006
        %v1008 = vpop.f32.mrf.mxu0
        %v1009 = vadd.f32 %v489, %v1008
        %1010 = vmatmul.bf16.gmra.mxu0 %v809
        %v1011 = vpop.f32.mrf.mxu0
        %v1012 = vadd.f32 %v489, %v1011
        %v1013 = vpop.f32.mrf.mxu0
        %v1014 = vadd.f32 %v489, %v1013
        %1015 = vmatmul.bf16.gmra.mxu0 %v812
        %v1016 = vpop.f32.mrf.mxu0
        %v1017 = vadd.f32 %v489, %v1016
        %v1018 = vpop.f32.mrf.mxu0
        %v1019 = vadd.f32 %v489, %v1018
        %1020 = vmatmul.bf16.gmra.mxu0 %v815
        %v1021 = vpop.f32.mrf.mxu0
        %v1022 = vadd.f32 %v489, %v1021
        %v1023 = vpop.f32.mrf.mxu0
        %v1024 = vadd.f32 %v489, %v1023
        %1025 = vmatmul.bf16.gmra.mxu0 %v818
        %v1026 = vpop.f32.mrf.mxu0
        %v1027 = vadd.f32 %v489, %v1026
        %v1028 = vpop.f32.mrf.mxu0
        %v1029 = vadd.f32 %v489, %v1028
        %1030 = vmatmul.bf16.gmra.mxu0 %v821
        %v1031 = vpop.f32.mrf.mxu0
        %v1032 = vadd.f32 %v489, %v1031
        %v1033 = vpop.f32.mrf.mxu0
        %v1034 = vadd.f32 %v489, %v1033
        %1035 = vmatmul.bf16.gmra.mxu0 %v824
        %v1036 = vpop.f32.mrf.mxu0
        %v1037 = vadd.f32 %v489, %v1036
        %v1038 = vpop.f32.mrf.mxu0
        %v1039 = vadd.f32 %v489, %v1038
        %1040 = vmatmul.bf16.gmra.mxu0 %v827
        %v1041 = vpop.f32.mrf.mxu0
        %v1042 = vadd.f32 %v489, %v1041
        %v1043 = vpop.f32.mrf.mxu0
        %v1044 = vadd.f32 %v489, %v1043
        %1045 = vmatmul.bf16.gmra.mxu0 %v830
        %v1046 = vpop.f32.mrf.mxu0
        %v1047 = vadd.f32 %v489, %v1046
        %v1048 = vpop.f32.mrf.mxu0
        %v1049 = vadd.f32 %v489, %v1048
        %1050 = vmatmul.bf16.gmra.mxu0 %v833
        %v1051 = vpop.f32.mrf.mxu0
        %v1052 = vadd.f32 %v489, %v1051
        %v1053 = vpop.f32.mrf.mxu0
        %v1054 = vadd.f32 %v489, %v1053
        %1055 = vmatmul.bf16.gmra.mxu0 %v836
        %v1056 = vpop.f32.mrf.mxu0
        %v1057 = vadd.f32 %v489, %v1056
        %v1058 = vpop.f32.mrf.mxu0
        %v1059 = vadd.f32 %v489, %v1058
        %1060 = vmatmul.bf16.gmra.mxu0 %v839
        %v1061 = vpop.f32.mrf.mxu0
        %v1062 = vadd.f32 %v489, %v1061
        %v1063 = vpop.f32.mrf.mxu0
        %v1064 = vadd.f32 %v489, %v1063
        %1065 = vmatmul.bf16.gmra.mxu0 %v842
        %v1066 = vpop.f32.mrf.mxu0
        %v1067 = vadd.f32 %v489, %v1066
        %v1068 = vpop.f32.mrf.mxu0
        %v1069 = vadd.f32 %v489, %v1068
        %1070 = vmatmul.bf16.gmra.mxu0 %v845
        %v1071 = vpop.f32.mrf.mxu0
        %v1072 = vadd.f32 %v489, %v1071
        %v1073 = vpop.f32.mrf.mxu0
        %v1074 = vadd.f32 %v489, %v1073
        %1075 = vmatmul.bf16.gmra.mxu0 %v848
        %v1076 = vpop.f32.mrf.mxu0
        %v1077 = vadd.f32 %v489, %v1076
        %v1078 = vpop.f32.mrf.mxu0
        %v1079 = vadd.f32 %v489, %v1078
        %1080 = vmatmul.bf16.gmra.mxu0 %v851
        %v1081 = vpop.f32.mrf.mxu0
        %v1082 = vadd.f32 %v489, %v1081
        %v1083 = vpop.f32.mrf.mxu0
        %v1084 = vadd.f32 %v489, %v1083
        %1085 = vmatmul.bf16.gmra.mxu0 %v854
        %v1086 = vpop.f32.mrf.mxu0
        %v1087 = vadd.f32 %v489, %v1086
        %v1088 = vpop.f32.mrf.mxu0
        %v1089 = vadd.f32 %v489, %v1088
        %1090 = vmatmul.bf16.gmra.mxu0 %v857
        %v1091 = vpop.f32.mrf.mxu0
        %v1092 = vadd.f32 %v489, %v1091
        %v1093 = vpop.f32.mrf.mxu0
        %v1094 = vadd.f32 %v489, %v1093
        %1095 = vmatmul.bf16.gmra.mxu0 %v860
        %v1096 = vpop.f32.mrf.mxu0
        %v1097 = vadd.f32 %v489, %v1096
        %v1098 = vpop.f32.mrf.mxu0
        %v1099 = vadd.f32 %v489, %v1098
        %1100 = vmatmul.bf16.gmra.mxu0 %v863
        %v1101 = vpop.f32.mrf.mxu0
        %v1102 = vadd.f32 %v489, %v1101
        %v1103 = vpop.f32.mrf.mxu0
        %v1104 = vadd.f32 %v489, %v1103
        %1105 = vmatmul.bf16.gmra.mxu0 %v866
        %v1106 = vpop.f32.mrf.mxu0
        %v1107 = vadd.f32 %v489, %v1106
        %v1108 = vpop.f32.mrf.mxu0
        %v1109 = vadd.f32 %v489, %v1108
        %1110 = vmatmul.bf16.gmra.mxu0 %v869
        %v1111 = vpop.f32.mrf.mxu0
        %v1112 = vadd.f32 %v489, %v1111
        %v1113 = vpop.f32.mrf.mxu0
        %v1114 = vadd.f32 %v489, %v1113
        %1115 = vmatmul.bf16.gmra.mxu0 %v872
        %v1116 = vpop.f32.mrf.mxu0
        %v1117 = vadd.f32 %v489, %v1116
        %v1118 = vpop.f32.mrf.mxu0
        %v1119 = vadd.f32 %v489, %v1118
        %1120 = vmatmul.bf16.gmra.mxu0 %v875
        %v1121 = vpop.f32.mrf.mxu0
        %v1122 = vadd.f32 %v489, %v1121
        %v1123 = vpop.f32.mrf.mxu0
        %v1124 = vadd.f32 %v489, %v1123
        %1125 = vmatmul.bf16.gmra.mxu0 %v878
        %v1126 = vpop.f32.mrf.mxu0
        %v1127 = vadd.f32 %v489, %v1126
        %v1128 = vpop.f32.mrf.mxu0
        %v1129 = vadd.f32 %v489, %v1128
        %1130 = vmatmul.bf16.gmra.mxu0 %v881
        %v1131 = vpop.f32.mrf.mxu0
        %v1132 = vadd.f32 %v489, %v1131
        %v1133 = vpop.f32.mrf.mxu0
        %v1134 = vadd.f32 %v489, %v1133
        %1135 = vmatmul.bf16.gmra.mxu0 %v884
        %v1136 = vpop.f32.mrf.mxu0
        %v1137 = vadd.f32 %v489, %v1136
        %v1138 = vpop.f32.mrf.mxu0
        %v1139 = vadd.f32 %v489, %v1138
        %1140 = vmatmul.bf16.gmra.mxu0 %v887
        %v1141 = vpop.f32.mrf.mxu0
        %v1142 = vadd.f32 %v489, %v1141
        %v1143 = vpop.f32.mrf.mxu0
        %v1144 = vadd.f32 %v489, %v1143
        %1145 = vmatmul.bf16.gmra.mxu0 %v890
        %v1146 = vpop.f32.mrf.mxu0
        %v1147 = vadd.f32 %v489, %v1146
        %v1148 = vpop.f32.mrf.mxu0
        %v1149 = vadd.f32 %v489, %v1148
        %1150 = vmatmul.bf16.gmra.mxu0 %v893
        %v1151 = vpop.f32.mrf.mxu0
        %v1152 = vadd.f32 %v489, %v1151
        %v1153 = vpop.f32.mrf.mxu0
        %v1154 = vadd.f32 %v489, %v1153
        %1155 = vdwg.mxu0
        %v1156 = vmax.f32 %v912, 0.0
        %v1157 = vmax.f32 %v914, 0.0
        %v1158 = vmax.f32 %v917, 0.0
        %v1159 = vmax.f32 %v919, 0.0
        %v1160 = vmax.f32 %v922, 0.0
        %v1161 = vmax.f32 %v924, 0.0
        %v1162 = vmax.f32 %v927, 0.0
        %v1163 = vmax.f32 %v929, 0.0
        %v1164 = vmax.f32 %v932, 0.0
        %v1165 = vmax.f32 %v934, 0.0
        %v1166 = vmax.f32 %v937, 0.0
        %v1167 = vmax.f32 %v939, 0.0
        %v1168 = vmax.f32 %v942, 0.0
        %v1169 = vmax.f32 %v944, 0.0
        %v1170 = vmax.f32 %v947, 0.0
        %v1171 = vmax.f32 %v949, 0.0
        %v1172 = vmax.f32 %v952, 0.0
        %v1173 = vmax.f32 %v954, 0.0
        %v1174 = vmax.f32 %v957, 0.0
        %v1175 = vmax.f32 %v959, 0.0
        %v1176 = vmax.f32 %v962, 0.0
        %v1177 = vmax.f32 %v964, 0.0
        %v1178 = vmax.f32 %v967, 0.0
        %v1179 = vmax.f32 %v969, 0.0
        %v1180 = vmax.f32 %v972, 0.0
        %v1181 = vmax.f32 %v974, 0.0
        %v1182 = vmax.f32 %v977, 0.0
        %v1183 = vmax.f32 %v979, 0.0
        %v1184 = vmax.f32 %v982, 0.0
        %v1185 = vmax.f32 %v984, 0.0
        %v1186 = vmax.f32 %v987, 0.0
        %v1187 = vmax.f32 %v989, 0.0
        %v1188 = vmax.f32 %v992, 0.0
        %v1189 = vmax.f32 %v994, 0.0
        %v1190 = vmax.f32 %v997, 0.0
        %v1191 = vmax.f32 %v999, 0.0
        %v1192 = vmax.f32 %v1002, 0.0
        %v1193 = vmax.f32 %v1004, 0.0
        %v1194 = vmax.f32 %v1007, 0.0
        %v1195 = vmax.f32 %v1009, 0.0
        %v1196 = vmax.f32 %v1012, 0.0
        %v1197 = vmax.f32 %v1014, 0.0
        %v1198 = vmax.f32 %v1017, 0.0
        %v1199 = vmax.f32 %v1019, 0.0
        %v1200 = vmax.f32 %v1022, 0.0
        %v1201 = vmax.f32 %v1024, 0.0
        %v1202 = vmax.f32 %v1027, 0.0
        %v1203 = vmax.f32 %v1029, 0.0
        %v1204 = vmax.f32 %v1032, 0.0
        %v1205 = vmax.f32 %v1034, 0.0
        %v1206 = vmax.f32 %v1037, 0.0
        %v1207 = vmax.f32 %v1039, 0.0
        %v1208 = vmax.f32 %v1042, 0.0
        %v1209 = vmax.f32 %v1044, 0.0
        %v1210 = vmax.f32 %v1047, 0.0
        %v1211 = vmax.f32 %v1049, 0.0
        %v1212 = vmax.f32 %v1052, 0.0
        %v1213 = vmax.f32 %v1054, 0.0
        %v1214 = vmax.f32 %v1057, 0.0
        %v1215 = vmax.f32 %v1059, 0.0
        %v1216 = vmax.f32 %v1062, 0.0
        %v1217 = vmax.f32 %v1064, 0.0
        %v1218 = vmax.f32 %v1067, 0.0
        %v1219 = vmax.f32 %v1069, 0.0
        %v1220 = vmax.f32 %v1072, 0.0
        %v1221 = vmax.f32 %v1074, 0.0
        %v1222 = vmax.f32 %v1077, 0.0
        %v1223 = vmax.f32 %v1079, 0.0
        %v1224 = vmax.f32 %v1082, 0.0
        %v1225 = vmax.f32 %v1084, 0.0
        %v1226 = vmax.f32 %v1087, 0.0
        %v1227 = vmax.f32 %v1089, 0.0
        %v1228 = vmax.f32 %v1092, 0.0
        %v1229 = vmax.f32 %v1094, 0.0
        %v1230 = vmax.f32 %v1097, 0.0
        %v1231 = vmax.f32 %v1099, 0.0
        %v1232 = vmax.f32 %v1102, 0.0
        %v1233 = vmax.f32 %v1104, 0.0
        %v1234 = vmax.f32 %v1107, 0.0
        %v1235 = vmax.f32 %v1109, 0.0
        %v1236 = vmax.f32 %v1112, 0.0
        %v1237 = vmax.f32 %v1114, 0.0
        %v1238 = vmax.f32 %v1117, 0.0
        %v1239 = vmax.f32 %v1119, 0.0
        %v1240 = vmax.f32 %v1122, 0.0
        %v1241 = vmax.f32 %v1124, 0.0
        %v1242 = vmax.f32 %v1127, 0.0
        %v1243 = vmax.f32 %v1129, 0.0
        %v1244 = vmax.f32 %v1132, 0.0
        %v1245 = vmax.f32 %v1134, 0.0
        %v1246 = vmax.f32 %v1137, 0.0
        %v1247 = vmax.f32 %v1139, 0.0
        %v1248 = vmax.f32 %v1142, 0.0
        %v1249 = vmax.f32 %v1144, 0.0
        %v1250 = vmax.f32 %v1147, 0.0
        %v1251 = vmax.f32 %v1149, 0.0
        %v1252 = vmax.f32 %v1152, 0.0
        %v1253 = vmax.f32 %v1154, 0.0
        %1254 = vst [vmem:[#allocation2] sm:$0xff] %v1156
        %1255 = vst [vmem:[#allocation2 + $0x8] sm:$0xff] %v1157
        %1256 = vst [vmem:[#allocation2 + $0x10] sm:$0xff] %v1158
        %1257 = vst [vmem:[#allocation2 + $0x18] sm:$0xff] %v1159
        %1258 = vst [vmem:[#allocation2 + $0x20] sm:$0xff] %v1160
        %1259 = vst [vmem:[#allocation2 + $0x28] sm:$0xff] %v1161
        %1260 = vst [vmem:[#allocation2 + $0x30] sm:$0xff] %v1162
        %1261 = vst [vmem:[#allocation2 + $0x38] sm:$0xff] %v1163
        %1262 = vst [vmem:[#allocation2 + $0x40] sm:$0xff] %v1164
        %1263 = vst [vmem:[#allocation2 + $0x48] sm:$0xff] %v1165
        %1264 = vst [vmem:[#allocation2 + $0x50] sm:$0xff] %v1166
        %1265 = vst [vmem:[#allocation2 + $0x58] sm:$0xff] %v1167
        %1266 = vst [vmem:[#allocation2 + $0x60] sm:$0xff] %v1168
        %1267 = vst [vmem:[#allocation2 + $0x68] sm:$0xff] %v1169
        %1268 = vst [vmem:[#allocation2 + $0x70] sm:$0xff] %v1170
        %1269 = vst [vmem:[#allocation2 + $0x78] sm:$0xff] %v1171
        %1270 = vst [vmem:[#allocation2 + $0x80] sm:$0xff] %v1172
        %1271 = vst [vmem:[#allocation2 + $0x88] sm:$0xff] %v1173
        %1272 = vst [vmem:[#allocation2 + $0x90] sm:$0xff] %v1174
        %1273 = vst [vmem:[#allocation2 + $0x98] sm:$0xff] %v1175
        %1274 = vst [vmem:[#allocation2 + $0xa0] sm:$0xff] %v1176
        %1275 = vst [vmem:[#allocation2 + $0xa8] sm:$0xff] %v1177
        %1276 = vst [vmem:[#allocation2 + $0xb0] sm:$0xff] %v1178
        %1277 = vst [vmem:[#allocation2 + $0xb8] sm:$0xff] %v1179
        %1278 = vst [vmem:[#allocation2 + $0xc0] sm:$0xff] %v1180
        %1279 = vst [vmem:[#allocation2 + $0xc8] sm:$0xff] %v1181
        %1280 = vst [vmem:[#allocation2 + $0xd0] sm:$0xff] %v1182
        %1281 = vst [vmem:[#allocation2 + $0xd8] sm:$0xff] %v1183
        %1282 = vst [vmem:[#allocation2 + $0xe0] sm:$0xff] %v1184
        %1283 = vst [vmem:[#allocation2 + $0xe8] sm:$0xff] %v1185
        %1284 = vst [vmem:[#allocation2 + $0xf0] sm:$0xff] %v1186
        %1285 = vst [vmem:[#allocation2 + $0xf8] sm:$0xff] %v1187
        %1286 = vst [vmem:[#allocation2 + $0x100] sm:$0xff] %v1188
        %1287 = vst [vmem:[#allocation2 + $0x108] sm:$0xff] %v1189
        %1288 = vst [vmem:[#allocation2 + $0x110] sm:$0xff] %v1190
        %1289 = vst [vmem:[#allocation2 + $0x118] sm:$0xff] %v1191
        %1290 = vst [vmem:[#allocation2 + $0x120] sm:$0xff] %v1192
        %1291 = vst [vmem:[#allocation2 + $0x128] sm:$0xff] %v1193
        %1292 = vst [vmem:[#allocation2 + $0x130] sm:$0xff] %v1194
        %1293 = vst [vmem:[#allocation2 + $0x138] sm:$0xff] %v1195
        %1294 = vst [vmem:[#allocation2 + $0x140] sm:$0xff] %v1196
        %1295 = vst [vmem:[#allocation2 + $0x148] sm:$0xff] %v1197
        %1296 = vst [vmem:[#allocation2 + $0x150] sm:$0xff] %v1198
        %1297 = vst [vmem:[#allocation2 + $0x158] sm:$0xff] %v1199
        %1298 = vst [vmem:[#allocation2 + $0x160] sm:$0xff] %v1200
        %1299 = vst [vmem:[#allocation2 + $0x168] sm:$0xff] %v1201
        %1300 = vst [vmem:[#allocation2 + $0x170] sm:$0xff] %v1202
        %1301 = vst [vmem:[#allocation2 + $0x178] sm:$0xff] %v1203
        %1302 = vst [vmem:[#allocation2 + $0x180] sm:$0xff] %v1204
        %1303 = vst [vmem:[#allocation2 + $0x188] sm:$0xff] %v1205
        %1304 = vst [vmem:[#allocation2 + $0x190] sm:$0xff] %v1206
        %1305 = vst [vmem:[#allocation2 + $0x198] sm:$0xff] %v1207
        %1306 = vst [vmem:[#allocation2 + $0x1a0] sm:$0xff] %v1208
        %1307 = vst [vmem:[#allocation2 + $0x1a8] sm:$0xff] %v1209
        %1308 = vst [vmem:[#allocation2 + $0x1b0] sm:$0xff] %v1210
        %1309 = vst [vmem:[#allocation2 + $0x1b8] sm:$0xff] %v1211
        %1310 = vst [vmem:[#allocation2 + $0x1c0] sm:$0xff] %v1212
        %1311 = vst [vmem:[#allocation2 + $0x1c8] sm:$0xff] %v1213
        %1312 = vst [vmem:[#allocation2 + $0x1d0] sm:$0xff] %v1214
        %1313 = vst [vmem:[#allocation2 + $0x1d8] sm:$0xff] %v1215
        %1314 = vst [vmem:[#allocation2 + $0x1e0] sm:$0xff] %v1216
        %1315 = vst [vmem:[#allocation2 + $0x1e8] sm:$0xff] %v1217
        %1316 = vst [vmem:[#allocation2 + $0x1f0] sm:$0xff] %v1218
        %1317 = vst [vmem:[#allocation2 + $0x1f8] sm:$0xff] %v1219
        %1318 = vst [vmem:[#allocation2 + $0x200] sm:$0xff] %v1220
        %1319 = vst [vmem:[#allocation2 + $0x208] sm:$0xff] %v1221
        %1320 = vst [vmem:[#allocation2 + $0x210] sm:$0xff] %v1222
        %1321 = vst [vmem:[#allocation2 + $0x218] sm:$0xff] %v1223
        %1322 = vst [vmem:[#allocation2 + $0x220] sm:$0xff] %v1224
        %1323 = vst [vmem:[#allocation2 + $0x228] sm:$0xff] %v1225
        %1324 = vst [vmem:[#allocation2 + $0x230] sm:$0xff] %v1226
        %1325 = vst [vmem:[#allocation2 + $0x238] sm:$0xff] %v1227
        %1326 = vst [vmem:[#allocation2 + $0x240] sm:$0xff] %v1228
        %1327 = vst [vmem:[#allocation2 + $0x248] sm:$0xff] %v1229
        %1328 = vst [vmem:[#allocation2 + $0x250] sm:$0xff] %v1230
        %1329 = vst [vmem:[#allocation2 + $0x258] sm:$0xff] %v1231
        %1330 = vst [vmem:[#allocation2 + $0x260] sm:$0xff] %v1232
        %1331 = vst [vmem:[#allocation2 + $0x268] sm:$0xff] %v1233
        %1332 = vst [vmem:[#allocation2 + $0x270] sm:$0xff] %v1234
        %1333 = vst [vmem:[#allocation2 + $0x278] sm:$0xff] %v1235
        %1334 = vst [vmem:[#allocation2 + $0x280] sm:$0xff] %v1236
        %1335 = vst [vmem:[#allocation2 + $0x288] sm:$0xff] %v1237
        %1336 = vst [vmem:[#allocation2 + $0x290] sm:$0xff] %v1238
        %1337 = vst [vmem:[#allocation2 + $0x298] sm:$0xff] %v1239
        %1338 = vst [vmem:[#allocation2 + $0x2a0] sm:$0xff] %v1240
        %1339 = vst [vmem:[#allocation2 + $0x2a8] sm:$0xff] %v1241
        %1340 = vst [vmem:[#allocation2 + $0x2b0] sm:$0xff] %v1242
        %1341 = vst [vmem:[#allocation2 + $0x2b8] sm:$0xff] %v1243
        %1342 = vst [vmem:[#allocation2 + $0x2c0] sm:$0xff] %v1244
        %1343 = vst [vmem:[#allocation2 + $0x2c8] sm:$0xff] %v1245
        %1344 = vst [vmem:[#allocation2 + $0x2d0] sm:$0xff] %v1246
        %1345 = vst [vmem:[#allocation2 + $0x2d8] sm:$0xff] %v1247
        %1346 = vst [vmem:[#allocation2 + $0x2e0] sm:$0xff] %v1248
        %1347 = vst [vmem:[#allocation2 + $0x2e8] sm:$0xff] %v1249
        %1348 = vst [vmem:[#allocation2 + $0x2f0] sm:$0xff] %v1250
        %1349 = vst [vmem:[#allocation2 + $0x2f8] sm:$0xff] %v1251
        %1350 = vst [vmem:[#allocation2 + $0x300] sm:$0xff] %v1252
        %1351 = vst [vmem:[#allocation2 + $0x308] sm:$0xff] %v1253
        %v1352 = vld [vmem:[#allocation2] ss:$2 sm:$0xff]
        %s1353 = scalar_lea.vmem [#allocation2], 16
        %v1354 = vld [vmem:[%s1353] ss:$2 sm:$0xff]
        %s1355 = scalar_lea.vmem [#allocation2], 32
        %v1356 = vld [vmem:[%s1355] ss:$2 sm:$0xff]
        %s1357 = scalar_lea.vmem [#allocation2], 48
        %v1358 = vld [vmem:[%s1357] ss:$2 sm:$0xff]
        %s1359 = scalar_lea.vmem [#allocation2], 64
        %v1360 = vld [vmem:[%s1359] ss:$2 sm:$0xff]
        %s1361 = scalar_lea.vmem [#allocation2], 80
        %v1362 = vld [vmem:[%s1361] ss:$2 sm:$0xff]
        %s1363 = scalar_lea.vmem [#allocation2], 96
        %v1364 = vld [vmem:[%s1363] ss:$2 sm:$0xff]
        %s1365 = scalar_lea.vmem [#allocation2], 112
        %v1366 = vld [vmem:[%s1365] ss:$2 sm:$0xff]
        %s1367 = scalar_lea.vmem [#allocation2], 128
        %v1368 = vld [vmem:[%s1367] ss:$2 sm:$0xff]
        %s1369 = scalar_lea.vmem [#allocation2], 144
        %v1370 = vld [vmem:[%s1369] ss:$2 sm:$0xff]
        %s1371 = scalar_lea.vmem [#allocation2], 160
        %v1372 = vld [vmem:[%s1371] ss:$2 sm:$0xff]
        %s1373 = scalar_lea.vmem [#allocation2], 176
        %v1374 = vld [vmem:[%s1373] ss:$2 sm:$0xff]
        %s1375 = scalar_lea.vmem [#allocation2], 192
        %v1376 = vld [vmem:[%s1375] ss:$2 sm:$0xff]
        %s1377 = scalar_lea.vmem [#allocation2], 208
        %v1378 = vld [vmem:[%s1377] ss:$2 sm:$0xff]
        %s1379 = scalar_lea.vmem [#allocation2], 224
        %v1380 = vld [vmem:[%s1379] ss:$2 sm:$0xff]
        %s1381 = scalar_lea.vmem [#allocation2], 240
        %v1382 = vld [vmem:[%s1381] ss:$2 sm:$0xff]
        %s1383 = scalar_lea.vmem [#allocation2], 256
        %v1384 = vld [vmem:[%s1383] ss:$2 sm:$0xff]
        %s1385 = scalar_lea.vmem [#allocation2], 272
        %v1386 = vld [vmem:[%s1385] ss:$2 sm:$0xff]
        %s1387 = scalar_lea.vmem [#allocation2], 288
        %v1388 = vld [vmem:[%s1387] ss:$2 sm:$0xff]
        %s1389 = scalar_lea.vmem [#allocation2], 304
        %v1390 = vld [vmem:[%s1389] ss:$2 sm:$0xff]
        %s1391 = scalar_lea.vmem [#allocation2], 320
        %v1392 = vld [vmem:[%s1391] ss:$2 sm:$0xff]
        %s1393 = scalar_lea.vmem [#allocation2], 336
        %v1394 = vld [vmem:[%s1393] ss:$2 sm:$0xff]
        %s1395 = scalar_lea.vmem [#allocation2], 352
        %v1396 = vld [vmem:[%s1395] ss:$2 sm:$0xff]
        %s1397 = scalar_lea.vmem [#allocation2], 368
        %v1398 = vld [vmem:[%s1397] ss:$2 sm:$0xff]
        %s1399 = scalar_lea.vmem [#allocation2], 384
        %v1400 = vld [vmem:[%s1399] ss:$2 sm:$0xff]
        %s1401 = scalar_lea.vmem [#allocation2], 400
        %v1402 = vld [vmem:[%s1401] ss:$2 sm:$0xff]
        %s1403 = scalar_lea.vmem [#allocation2], 416
        %v1404 = vld [vmem:[%s1403] ss:$2 sm:$0xff]
        %s1405 = scalar_lea.vmem [#allocation2], 432
        %v1406 = vld [vmem:[%s1405] ss:$2 sm:$0xff]
        %s1407 = scalar_lea.vmem [#allocation2], 448
        %v1408 = vld [vmem:[%s1407] ss:$2 sm:$0xff]
        %s1409 = scalar_lea.vmem [#allocation2], 464
        %v1410 = vld [vmem:[%s1409] ss:$2 sm:$0xff]
        %s1411 = scalar_lea.vmem [#allocation2], 480
        %v1412 = vld [vmem:[%s1411] ss:$2 sm:$0xff]
        %s1413 = scalar_lea.vmem [#allocation2], 496
        %v1414 = vld [vmem:[%s1413] ss:$2 sm:$0xff]
        %s1415 = scalar_lea.vmem [#allocation2], 512
        %v1416 = vld [vmem:[%s1415] ss:$2 sm:$0xff]
        %s1417 = scalar_lea.vmem [#allocation2], 528
        %v1418 = vld [vmem:[%s1417] ss:$2 sm:$0xff]
        %s1419 = scalar_lea.vmem [#allocation2], 544
        %v1420 = vld [vmem:[%s1419] ss:$2 sm:$0xff]
        %s1421 = scalar_lea.vmem [#allocation2], 560
        %v1422 = vld [vmem:[%s1421] ss:$2 sm:$0xff]
        %s1423 = scalar_lea.vmem [#allocation2], 576
        %v1424 = vld [vmem:[%s1423] ss:$2 sm:$0xff]
        %s1425 = scalar_lea.vmem [#allocation2], 592
        %v1426 = vld [vmem:[%s1425] ss:$2 sm:$0xff]
        %s1427 = scalar_lea.vmem [#allocation2], 608
        %v1428 = vld [vmem:[%s1427] ss:$2 sm:$0xff]
        %s1429 = scalar_lea.vmem [#allocation2], 624
        %v1430 = vld [vmem:[%s1429] ss:$2 sm:$0xff]
        %s1431 = scalar_lea.vmem [#allocation2], 640
        %v1432 = vld [vmem:[%s1431] ss:$2 sm:$0xff]
        %s1433 = scalar_lea.vmem [#allocation2], 656
        %v1434 = vld [vmem:[%s1433] ss:$2 sm:$0xff]
        %s1435 = scalar_lea.vmem [#allocation2], 672
        %v1436 = vld [vmem:[%s1435] ss:$2 sm:$0xff]
        %s1437 = scalar_lea.vmem [#allocation2], 688
        %v1438 = vld [vmem:[%s1437] ss:$2 sm:$0xff]
        %s1439 = scalar_lea.vmem [#allocation2], 704
        %v1440 = vld [vmem:[%s1439] ss:$2 sm:$0xff]
        %s1441 = scalar_lea.vmem [#allocation2], 720
        %v1442 = vld [vmem:[%s1441] ss:$2 sm:$0xff]
        %s1443 = scalar_lea.vmem [#allocation2], 736
        %v1444 = vld [vmem:[%s1443] ss:$2 sm:$0xff]
        %s1445 = scalar_lea.vmem [#allocation2], 752
        %v1446 = vld [vmem:[%s1445] ss:$2 sm:$0xff]
        %s1447 = scalar_lea.vmem [#allocation2], 768
        %v1448 = vld [vmem:[%s1447] ss:$2 sm:$0xff]
        %s1449 = scalar_lea.vmem [#allocation2], 1
        %v1450 = vld [vmem:[%s1449] ss:$2 sm:$0xff]
        %s1451 = scalar_lea.vmem [#allocation2], 17
        %v1452 = vld [vmem:[%s1451] ss:$2 sm:$0xff]
        %s1453 = scalar_lea.vmem [#allocation2], 33
        %v1454 = vld [vmem:[%s1453] ss:$2 sm:$0xff]
        %s1455 = scalar_lea.vmem [#allocation2], 49
        %v1456 = vld [vmem:[%s1455] ss:$2 sm:$0xff]
        %s1457 = scalar_lea.vmem [#allocation2], 65
        %v1458 = vld [vmem:[%s1457] ss:$2 sm:$0xff]
        %s1459 = scalar_lea.vmem [#allocation2], 81
        %v1460 = vld [vmem:[%s1459] ss:$2 sm:$0xff]
        %s1461 = scalar_lea.vmem [#allocation2], 97
        %v1462 = vld [vmem:[%s1461] ss:$2 sm:$0xff]
        %s1463 = scalar_lea.vmem [#allocation2], 113
        %v1464 = vld [vmem:[%s1463] ss:$2 sm:$0xff]
        %s1465 = scalar_lea.vmem [#allocation2], 129
        %v1466 = vld [vmem:[%s1465] ss:$2 sm:$0xff]
        %s1467 = scalar_lea.vmem [#allocation2], 145
        %v1468 = vld [vmem:[%s1467] ss:$2 sm:$0xff]
        %s1469 = scalar_lea.vmem [#allocation2], 161
        %v1470 = vld [vmem:[%s1469] ss:$2 sm:$0xff]
        %s1471 = scalar_lea.vmem [#allocation2], 177
        %v1472 = vld [vmem:[%s1471] ss:$2 sm:$0xff]
        %s1473 = scalar_lea.vmem [#allocation2], 193
        %v1474 = vld [vmem:[%s1473] ss:$2 sm:$0xff]
        %s1475 = scalar_lea.vmem [#allocation2], 209
        %v1476 = vld [vmem:[%s1475] ss:$2 sm:$0xff]
        %s1477 = scalar_lea.vmem [#allocation2], 225
        %v1478 = vld [vmem:[%s1477] ss:$2 sm:$0xff]
        %s1479 = scalar_lea.vmem [#allocation2], 241
        %v1480 = vld [vmem:[%s1479] ss:$2 sm:$0xff]
        %s1481 = scalar_lea.vmem [#allocation2], 257
        %v1482 = vld [vmem:[%s1481] ss:$2 sm:$0xff]
        %s1483 = scalar_lea.vmem [#allocation2], 273
        %v1484 = vld [vmem:[%s1483] ss:$2 sm:$0xff]
        %s1485 = scalar_lea.vmem [#allocation2], 289
        %v1486 = vld [vmem:[%s1485] ss:$2 sm:$0xff]
        %s1487 = scalar_lea.vmem [#allocation2], 305
        %v1488 = vld [vmem:[%s1487] ss:$2 sm:$0xff]
        %s1489 = scalar_lea.vmem [#allocation2], 321
        %v1490 = vld [vmem:[%s1489] ss:$2 sm:$0xff]
        %s1491 = scalar_lea.vmem [#allocation2], 337
        %v1492 = vld [vmem:[%s1491] ss:$2 sm:$0xff]
        %s1493 = scalar_lea.vmem [#allocation2], 353
        %v1494 = vld [vmem:[%s1493] ss:$2 sm:$0xff]
        %s1495 = scalar_lea.vmem [#allocation2], 369
        %v1496 = vld [vmem:[%s1495] ss:$2 sm:$0xff]
        %s1497 = scalar_lea.vmem [#allocation2], 385
        %v1498 = vld [vmem:[%s1497] ss:$2 sm:$0xff]
        %s1499 = scalar_lea.vmem [#allocation2], 401
        %v1500 = vld [vmem:[%s1499] ss:$2 sm:$0xff]
        %s1501 = scalar_lea.vmem [#allocation2], 417
        %v1502 = vld [vmem:[%s1501] ss:$2 sm:$0xff]
        %s1503 = scalar_lea.vmem [#allocation2], 433
        %v1504 = vld [vmem:[%s1503] ss:$2 sm:$0xff]
        %s1505 = scalar_lea.vmem [#allocation2], 449
        %v1506 = vld [vmem:[%s1505] ss:$2 sm:$0xff]
        %s1507 = scalar_lea.vmem [#allocation2], 465
        %v1508 = vld [vmem:[%s1507] ss:$2 sm:$0xff]
        %s1509 = scalar_lea.vmem [#allocation2], 481
        %v1510 = vld [vmem:[%s1509] ss:$2 sm:$0xff]
        %s1511 = scalar_lea.vmem [#allocation2], 497
        %v1512 = vld [vmem:[%s1511] ss:$2 sm:$0xff]
        %s1513 = scalar_lea.vmem [#allocation2], 513
        %v1514 = vld [vmem:[%s1513] ss:$2 sm:$0xff]
        %s1515 = scalar_lea.vmem [#allocation2], 529
        %v1516 = vld [vmem:[%s1515] ss:$2 sm:$0xff]
        %s1517 = scalar_lea.vmem [#allocation2], 545
        %v1518 = vld [vmem:[%s1517] ss:$2 sm:$0xff]
        %s1519 = scalar_lea.vmem [#allocation2], 561
        %v1520 = vld [vmem:[%s1519] ss:$2 sm:$0xff]
        %s1521 = scalar_lea.vmem [#allocation2], 577
        %v1522 = vld [vmem:[%s1521] ss:$2 sm:$0xff]
        %s1523 = scalar_lea.vmem [#allocation2], 593
        %v1524 = vld [vmem:[%s1523] ss:$2 sm:$0xff]
        %s1525 = scalar_lea.vmem [#allocation2], 609
        %v1526 = vld [vmem:[%s1525] ss:$2 sm:$0xff]
        %s1527 = scalar_lea.vmem [#allocation2], 625
        %v1528 = vld [vmem:[%s1527] ss:$2 sm:$0xff]
        %s1529 = scalar_lea.vmem [#allocation2], 641
        %v1530 = vld [vmem:[%s1529] ss:$2 sm:$0xff]
        %s1531 = scalar_lea.vmem [#allocation2], 657
        %v1532 = vld [vmem:[%s1531] ss:$2 sm:$0xff]
        %s1533 = scalar_lea.vmem [#allocation2], 673
        %v1534 = vld [vmem:[%s1533] ss:$2 sm:$0xff]
        %s1535 = scalar_lea.vmem [#allocation2], 689
        %v1536 = vld [vmem:[%s1535] ss:$2 sm:$0xff]
        %s1537 = scalar_lea.vmem [#allocation2], 705
        %v1538 = vld [vmem:[%s1537] ss:$2 sm:$0xff]
        %s1539 = scalar_lea.vmem [#allocation2], 721
        %v1540 = vld [vmem:[%s1539] ss:$2 sm:$0xff]
        %s1541 = scalar_lea.vmem [#allocation2], 737
        %v1542 = vld [vmem:[%s1541] ss:$2 sm:$0xff]
        %s1543 = scalar_lea.vmem [#allocation2], 753
        %v1544 = vld [vmem:[%s1543] ss:$2 sm:$0xff]
        %s1545 = scalar_lea.vmem [#allocation2], 769
        %v1546 = vld [vmem:[%s1545] ss:$2 sm:$0xff]
        %v1547 = vmax.f32 %v1352, %v1450
        %v1548 = vmax.f32 %v1354, %v1452
        %v1549 = vmax.f32 %v1356, %v1454
        %v1550 = vmax.f32 %v1358, %v1456
        %v1551 = vmax.f32 %v1360, %v1458
        %v1552 = vmax.f32 %v1362, %v1460
        %v1553 = vmax.f32 %v1364, %v1462
        %v1554 = vmax.f32 %v1366, %v1464
        %v1555 = vmax.f32 %v1368, %v1466
        %v1556 = vmax.f32 %v1370, %v1468
        %v1557 = vmax.f32 %v1372, %v1470
        %v1558 = vmax.f32 %v1374, %v1472
        %v1559 = vmax.f32 %v1376, %v1474
        %v1560 = vmax.f32 %v1378, %v1476
        %v1561 = vmax.f32 %v1380, %v1478
        %v1562 = vmax.f32 %v1382, %v1480
        %v1563 = vmax.f32 %v1384, %v1482
        %v1564 = vmax.f32 %v1386, %v1484
        %v1565 = vmax.f32 %v1388, %v1486
        %v1566 = vmax.f32 %v1390, %v1488
        %v1567 = vmax.f32 %v1392, %v1490
        %v1568 = vmax.f32 %v1394, %v1492
        %v1569 = vmax.f32 %v1396, %v1494
        %v1570 = vmax.f32 %v1398, %v1496
        %v1571 = vmax.f32 %v1400, %v1498
        %v1572 = vmax.f32 %v1402, %v1500
        %v1573 = vmax.f32 %v1404, %v1502
        %v1574 = vmax.f32 %v1406, %v1504
        %v1575 = vmax.f32 %v1408, %v1506
        %v1576 = vmax.f32 %v1410, %v1508
        %v1577 = vmax.f32 %v1412, %v1510
        %v1578 = vmax.f32 %v1414, %v1512
        %v1579 = vmax.f32 %v1416, %v1514
        %v1580 = vmax.f32 %v1418, %v1516
        %v1581 = vmax.f32 %v1420, %v1518
        %v1582 = vmax.f32 %v1422, %v1520
        %v1583 = vmax.f32 %v1424, %v1522
        %v1584 = vmax.f32 %v1426, %v1524
        %v1585 = vmax.f32 %v1428, %v1526
        %v1586 = vmax.f32 %v1430, %v1528
        %v1587 = vmax.f32 %v1432, %v1530
        %v1588 = vmax.f32 %v1434, %v1532
        %v1589 = vmax.f32 %v1436, %v1534
        %v1590 = vmax.f32 %v1438, %v1536
        %v1591 = vmax.f32 %v1440, %v1538
        %v1592 = vmax.f32 %v1442, %v1540
        %v1593 = vmax.f32 %v1444, %v1542
        %v1594 = vmax.f32 %v1446, %v1544
        %v1595 = vmax.f32 %v1448, %v1546
        %1596 = vst [vmem:[#allocation3] sm:$0xff] %v1547
        %1597 = vst [vmem:[#allocation3 + $0x8] sm:$0xff] %v1548
        %1598 = vst [vmem:[#allocation3 + $0x10] sm:$0xff] %v1549
        %1599 = vst [vmem:[#allocation3 + $0x18] sm:$0xff] %v1550
        %1600 = vst [vmem:[#allocation3 + $0x20] sm:$0xff] %v1551
        %1601 = vst [vmem:[#allocation3 + $0x28] sm:$0xff] %v1552
        %1602 = vst [vmem:[#allocation3 + $0x30] sm:$0xff] %v1553
        %1603 = vst [vmem:[#allocation3 + $0x38] sm:$0xff] %v1554
        %1604 = vst [vmem:[#allocation3 + $0x40] sm:$0xff] %v1555
        %1605 = vst [vmem:[#allocation3 + $0x48] sm:$0xff] %v1556
        %1606 = vst [vmem:[#allocation3 + $0x50] sm:$0xff] %v1557
        %1607 = vst [vmem:[#allocation3 + $0x58] sm:$0xff] %v1558
        %1608 = vst [vmem:[#allocation3 + $0x60] sm:$0xff] %v1559
        %1609 = vst [vmem:[#allocation3 + $0x68] sm:$0xff] %v1560
        %1610 = vst [vmem:[#allocation3 + $0x70] sm:$0xff] %v1561
        %1611 = vst [vmem:[#allocation3 + $0x78] sm:$0xff] %v1562
        %1612 = vst [vmem:[#allocation3 + $0x80] sm:$0xff] %v1563
        %1613 = vst [vmem:[#allocation3 + $0x88] sm:$0xff] %v1564
        %1614 = vst [vmem:[#allocation3 + $0x90] sm:$0xff] %v1565
        %1615 = vst [vmem:[#allocation3 + $0x98] sm:$0xff] %v1566
        %1616 = vst [vmem:[#allocation3 + $0xa0] sm:$0xff] %v1567
        %1617 = vst [vmem:[#allocation3 + $0xa8] sm:$0xff] %v1568
        %1618 = vst [vmem:[#allocation3 + $0xb0] sm:$0xff] %v1569
        %1619 = vst [vmem:[#allocation3 + $0xb8] sm:$0xff] %v1570
        %1620 = vst [vmem:[#allocation3 + $0xc0] sm:$0xff] %v1571
        %1621 = vst [vmem:[#allocation3 + $0xc8] sm:$0xff] %v1572
        %1622 = vst [vmem:[#allocation3 + $0xd0] sm:$0xff] %v1573
        %1623 = vst [vmem:[#allocation3 + $0xd8] sm:$0xff] %v1574
        %1624 = vst [vmem:[#allocation3 + $0xe0] sm:$0xff] %v1575
        %1625 = vst [vmem:[#allocation3 + $0xe8] sm:$0xff] %v1576
        %1626 = vst [vmem:[#allocation3 + $0xf0] sm:$0xff] %v1577
        %1627 = vst [vmem:[#allocation3 + $0xf8] sm:$0xff] %v1578
        %1628 = vst [vmem:[#allocation3 + $0x100] sm:$0xff] %v1579
        %1629 = vst [vmem:[#allocation3 + $0x108] sm:$0xff] %v1580
        %1630 = vst [vmem:[#allocation3 + $0x110] sm:$0xff] %v1581
        %1631 = vst [vmem:[#allocation3 + $0x118] sm:$0xff] %v1582
        %1632 = vst [vmem:[#allocation3 + $0x120] sm:$0xff] %v1583
        %1633 = vst [vmem:[#allocation3 + $0x128] sm:$0xff] %v1584
        %1634 = vst [vmem:[#allocation3 + $0x130] sm:$0xff] %v1585
        %1635 = vst [vmem:[#allocation3 + $0x138] sm:$0xff] %v1586
        %1636 = vst [vmem:[#allocation3 + $0x140] sm:$0xff] %v1587
        %1637 = vst [vmem:[#allocation3 + $0x148] sm:$0xff] %v1588
        %1638 = vst [vmem:[#allocation3 + $0x150] sm:$0xff] %v1589
        %1639 = vst [vmem:[#allocation3 + $0x158] sm:$0xff] %v1590
        %1640 = vst [vmem:[#allocation3 + $0x160] sm:$0xff] %v1591
        %1641 = vst [vmem:[#allocation3 + $0x168] sm:$0xff] %v1592
        %1642 = vst [vmem:[#allocation3 + $0x170] sm:$0xff] %v1593
        %1643 = vst [vmem:[#allocation3 + $0x178] sm:$0xff] %v1594
        %1644 = vst [vmem:[#allocation3 + $0x180] sm:$0xff] %v1595
        %1645 = vst [vmem:[#allocation4] sm:$0xff] 0.0
        %1646 = vst [vmem:[#allocation4 + $0x8] sm:$0xff] 0.0
        %1647 = vst [vmem:[#allocation4 + $0x10] sm:$0x3] 0.0
        %1648 = vst [vmem:[#allocation4 + $0x18] sm:$0xff] 0.0
        %1649 = vst [vmem:[#allocation4 + $0x20] sm:$0xff] 0.0
        %1650 = vst [vmem:[#allocation4 + $0x28] sm:$0x3] 0.0
        %1651 = vst [vmem:[#allocation4 + $0x30] sm:$0xff] 0.0
        %1652 = vst [vmem:[#allocation4 + $0x38] sm:$0xff] 0.0
        %1653 = vst [vmem:[#allocation4 + $0x40] sm:$0x3] 0.0
        %1654 = vst [vmem:[#allocation4 + $0x48] sm:$0xff] 0.0
        %1655 = vst [vmem:[#allocation4 + $0x50] sm:$0xff] 0.0
        %1656 = vst [vmem:[#allocation4 + $0x58] sm:$0x3] 0.0
        %1657 = vst [vmem:[#allocation4 + $0x60] sm:$0xff] 0.0
        %1658 = vst [vmem:[#allocation4 + $0x68] sm:$0xff] 0.0
        %1659 = vst [vmem:[#allocation4 + $0x70] sm:$0x3] 0.0
        %1660 = vst [vmem:[#allocation4 + $0x78] sm:$0xff] 0.0
        %1661 = vst [vmem:[#allocation4 + $0x80] sm:$0xff] 0.0
        %1662 = vst [vmem:[#allocation4 + $0x88] sm:$0x3] 0.0
        %1663 = vst [vmem:[#allocation4 + $0x90] sm:$0xff] 0.0
        %1664 = vst [vmem:[#allocation4 + $0x98] sm:$0xff] 0.0
        %1665 = vst [vmem:[#allocation4 + $0xa0] sm:$0x3] 0.0
        %1666 = vst [vmem:[#allocation4 + $0xa8] sm:$0xff] 0.0
        %1667 = vst [vmem:[#allocation4 + $0xb0] sm:$0xff] 0.0
        %1668 = vst [vmem:[#allocation4 + $0xb8] sm:$0x3] 0.0
        %1669 = vst [vmem:[#allocation4 + $0xc0] sm:$0xff] 0.0
        %1670 = vst [vmem:[#allocation4 + $0xc8] sm:$0xff] 0.0
        %1671 = vst [vmem:[#allocation4 + $0xd0] sm:$0x3] 0.0
        %1672 = vst [vmem:[#allocation4 + $0xd8] sm:$0xff] 0.0
        %1673 = vst [vmem:[#allocation4 + $0xe0] sm:$0xff] 0.0
        %1674 = vst [vmem:[#allocation4 + $0xe8] sm:$0x3] 0.0
        %1675 = vst [vmem:[#allocation4 + $0xf0] sm:$0xff] 0.0
        %1676 = vst [vmem:[#allocation4 + $0xf8] sm:$0xff] 0.0
        %1677 = vst [vmem:[#allocation4 + $0x100] sm:$0x3] 0.0
        %1678 = vst [vmem:[#allocation4 + $0x108] sm:$0xff] 0.0
        %1679 = vst [vmem:[#allocation4 + $0x110] sm:$0xff] 0.0
        %1680 = vst [vmem:[#allocation4 + $0x118] sm:$0x3] 0.0
        %1681 = vst [vmem:[#allocation4 + $0x120] sm:$0xff] 0.0
        %1682 = vst [vmem:[#allocation4 + $0x128] sm:$0xff] 0.0
        %1683 = vst [vmem:[#allocation4 + $0x130] sm:$0x3] 0.0
        %1684 = vst [vmem:[#allocation4 + $0x138] sm:$0xff] 0.0
        %1685 = vst [vmem:[#allocation4 + $0x140] sm:$0xff] 0.0
        %1686 = vst [vmem:[#allocation4 + $0x148] sm:$0x3] 0.0
        %1687 = vst [vmem:[#allocation4 + $0x150] sm:$0xff] 0.0
        %1688 = vst [vmem:[#allocation4 + $0x158] sm:$0xff] 0.0
        %1689 = vst [vmem:[#allocation4 + $0x160] sm:$0x3] 0.0
        %1690 = vst [vmem:[#allocation4 + $0x168] sm:$0xff] 0.0
        %1691 = vst [vmem:[#allocation4 + $0x170] sm:$0xff] 0.0
        %1692 = vst [vmem:[#allocation4 + $0x178] sm:$0x3] 0.0
        %1693 = vst [vmem:[#allocation4 + $0x180] sm:$0xff] 0.0
        %1694 = vst [vmem:[#allocation4 + $0x188] sm:$0xff] 0.0
        %1695 = vst [vmem:[#allocation4 + $0x190] sm:$0x3] 0.0
        %1696 = vst [vmem:[#allocation4 + $0x198] sm:$0xff] 0.0
        %1697 = vst [vmem:[#allocation4 + $0x1a0] sm:$0xff] 0.0
        %1698 = vst [vmem:[#allocation4 + $0x1a8] sm:$0x3] 0.0
        %v1699 = vld [vmem:[#allocation3] ss:$2 sm:$0xff]
        %s1700 = scalar_lea.vmem [#allocation3], 16
        %v1701 = vld [vmem:[%s1700] ss:$2 sm:$0x3f]
        %s1702 = scalar_lea.vmem [#allocation3], 1
        %v1703 = vld [vmem:[%s1702] ss:$2 sm:$0xff]
        %s1704 = scalar_lea.vmem [#allocation3], 17
        %v1705 = vld [vmem:[%s1704] ss:$2 sm:$0x3f]
        %v1706 = vmax.f32 %v1699, %v1703
        %v1707 = vmax.f32 %v1701, %v1705
        %s1708 = scalar_lea.vmem [#allocation4], 48
        %1709 = vst [vmem:[%s1708 + $0x2] sm:$0xff] %v1706
        %1710 = vst [vmem:[%s1708 + $0xa] sm:$0x3f] %v1707
        %s1711 = scalar_lea.vmem [#allocation3], 28
        %v1712 = vld [vmem:[%s1711] ss:$2 sm:$0xff]
        %s1713 = scalar_lea.vmem [#allocation3], 44
        %v1714 = vld [vmem:[%s1713] ss:$2 sm:$0x3f]
        %s1715 = scalar_lea.vmem [#allocation3], 29
        %v1716 = vld [vmem:[%s1715] ss:$2 sm:$0xff]
        %s1717 = scalar_lea.vmem [#allocation3], 45
        %v1718 = vld [vmem:[%s1717] ss:$2 sm:$0x3f]
        %v1719 = vmax.f32 %v1712, %v1716
        %v1720 = vmax.f32 %v1714, %v1718
        %s1721 = scalar_lea.vmem [#allocation4], 72
        %1722 = vst [vmem:[%s1721 + $0x2] sm:$0xff] %v1719
        %1723 = vst [vmem:[%s1721 + $0xa] sm:$0x3f] %v1720
        %s1724 = scalar_lea.vmem [#allocation3], 56
        %v1725 = vld [vmem:[%s1724] ss:$2 sm:$0xff]
        %s1726 = scalar_lea.vmem [#allocation3], 72
        %v1727 = vld [vmem:[%s1726] ss:$2 sm:$0x3f]
        %s1728 = scalar_lea.vmem [#allocation3], 57
        %v1729 = vld [vmem:[%s1728] ss:$2 sm:$0xff]
        %s1730 = scalar_lea.vmem [#allocation3], 73
        %v1731 = vld [vmem:[%s1730] ss:$2 sm:$0x3f]
        %v1732 = vmax.f32 %v1725, %v1729
        %v1733 = vmax.f32 %v1727, %v1731
        %s1734 = scalar_lea.vmem [#allocation4], 96
        %1735 = vst [vmem:[%s1734 + $0x2] sm:$0xff] %v1732
        %1736 = vst [vmem:[%s1734 + $0xa] sm:$0x3f] %v1733
        %s1737 = scalar_lea.vmem [#allocation3], 84
        %v1738 = vld [vmem:[%s1737] ss:$2 sm:$0xff]
        %s1739 = scalar_lea.vmem [#allocation3], 100
        %v1740 = vld [vmem:[%s1739] ss:$2 sm:$0x3f]
        %s1741 = scalar_lea.vmem [#allocation3], 85
        %v1742 = vld [vmem:[%s1741] ss:$2 sm:$0xff]
        %s1743 = scalar_lea.vmem [#allocation3], 101
        %v1744 = vld [vmem:[%s1743] ss:$2 sm:$0x3f]
        %v1745 = vmax.f32 %v1738, %v1742
        %v1746 = vmax.f32 %v1740, %v1744
        %s1747 = scalar_lea.vmem [#allocation4], 120
        %1748 = vst [vmem:[%s1747 + $0x2] sm:$0xff] %v1745
        %1749 = vst [vmem:[%s1747 + $0xa] sm:$0x3f] %v1746
        %s1750 = scalar_lea.vmem [#allocation3], 112
        %v1751 = vld [vmem:[%s1750] ss:$2 sm:$0xff]
        %s1752 = scalar_lea.vmem [#allocation3], 128
        %v1753 = vld [vmem:[%s1752] ss:$2 sm:$0x3f]
        %s1754 = scalar_lea.vmem [#allocation3], 113
        %v1755 = vld [vmem:[%s1754] ss:$2 sm:$0xff]
        %s1756 = scalar_lea.vmem [#allocation3], 129
        %v1757 = vld [vmem:[%s1756] ss:$2 sm:$0x3f]
        %v1758 = vmax.f32 %v1751, %v1755
        %v1759 = vmax.f32 %v1753, %v1757
        %s1760 = scalar_lea.vmem [#allocation4], 144
        %1761 = vst [vmem:[%s1760 + $0x2] sm:$0xff] %v1758
        %1762 = vst [vmem:[%s1760 + $0xa] sm:$0x3f] %v1759
        %s1763 = scalar_lea.vmem [#allocation3], 140
        %v1764 = vld [vmem:[%s1763] ss:$2 sm:$0xff]
        %s1765 = scalar_lea.vmem [#allocation3], 156
        %v1766 = vld [vmem:[%s1765] ss:$2 sm:$0x3f]
        %s1767 = scalar_lea.vmem [#allocation3], 141
        %v1768 = vld [vmem:[%s1767] ss:$2 sm:$0xff]
        %s1769 = scalar_lea.vmem [#allocation3], 157
        %v1770 = vld [vmem:[%s1769] ss:$2 sm:$0x3f]
        %v1771 = vmax.f32 %v1764, %v1768
        %v1772 = vmax.f32 %v1766, %v1770
        %s1773 = scalar_lea.vmem [#allocation4], 168
        %1774 = vst [vmem:[%s1773 + $0x2] sm:$0xff] %v1771
        %1775 = vst [vmem:[%s1773 + $0xa] sm:$0x3f] %v1772
        %s1776 = scalar_lea.vmem [#allocation3], 168
        %v1777 = vld [vmem:[%s1776] ss:$2 sm:$0xff]
        %s1778 = scalar_lea.vmem [#allocation3], 184
        %v1779 = vld [vmem:[%s1778] ss:$2 sm:$0x3f]
        %s1780 = scalar_lea.vmem [#allocation3], 169
        %v1781 = vld [vmem:[%s1780] ss:$2 sm:$0xff]
        %s1782 = scalar_lea.vmem [#allocation3], 185
        %v1783 = vld [vmem:[%s1782] ss:$2 sm:$0x3f]
        %v1784 = vmax.f32 %v1777, %v1781
        %v1785 = vmax.f32 %v1779, %v1783
        %s1786 = scalar_lea.vmem [#allocation4], 192
        %1787 = vst [vmem:[%s1786 + $0x2] sm:$0xff] %v1784
        %1788 = vst [vmem:[%s1786 + $0xa] sm:$0x3f] %v1785
        %s1789 = scalar_lea.vmem [#allocation3], 196
        %v1790 = vld [vmem:[%s1789] ss:$2 sm:$0xff]
        %s1791 = scalar_lea.vmem [#allocation3], 212
        %v1792 = vld [vmem:[%s1791] ss:$2 sm:$0x3f]
        %s1793 = scalar_lea.vmem [#allocation3], 197
        %v1794 = vld [vmem:[%s1793] ss:$2 sm:$0xff]
        %s1795 = scalar_lea.vmem [#allocation3], 213
        %v1796 = vld [vmem:[%s1795] ss:$2 sm:$0x3f]
        %v1797 = vmax.f32 %v1790, %v1794
        %v1798 = vmax.f32 %v1792, %v1796
        %s1799 = scalar_lea.vmem [#allocation4], 216
        %1800 = vst [vmem:[%s1799 + $0x2] sm:$0xff] %v1797
        %1801 = vst [vmem:[%s1799 + $0xa] sm:$0x3f] %v1798
        %s1802 = scalar_lea.vmem [#allocation3], 224
        %v1803 = vld [vmem:[%s1802] ss:$2 sm:$0xff]
        %s1804 = scalar_lea.vmem [#allocation3], 240
        %v1805 = vld [vmem:[%s1804] ss:$2 sm:$0x3f]
        %s1806 = scalar_lea.vmem [#allocation3], 225
        %v1807 = vld [vmem:[%s1806] ss:$2 sm:$0xff]
        %s1808 = scalar_lea.vmem [#allocation3], 241
        %v1809 = vld [vmem:[%s1808] ss:$2 sm:$0x3f]
        %v1810 = vmax.f32 %v1803, %v1807
        %v1811 = vmax.f32 %v1805, %v1809
        %s1812 = scalar_lea.vmem [#allocation4], 240
        %1813 = vst [vmem:[%s1812 + $0x2] sm:$0xff] %v1810
        %1814 = vst [vmem:[%s1812 + $0xa] sm:$0x3f] %v1811
        %s1815 = scalar_lea.vmem [#allocation3], 252
        %v1816 = vld [vmem:[%s1815] ss:$2 sm:$0xff]
        %s1817 = scalar_lea.vmem [#allocation3], 268
        %v1818 = vld [vmem:[%s1817] ss:$2 sm:$0x3f]
        %s1819 = scalar_lea.vmem [#allocation3], 253
        %v1820 = vld [vmem:[%s1819] ss:$2 sm:$0xff]
        %s1821 = scalar_lea.vmem [#allocation3], 269
        %v1822 = vld [vmem:[%s1821] ss:$2 sm:$0x3f]
        %v1823 = vmax.f32 %v1816, %v1820
        %v1824 = vmax.f32 %v1818, %v1822
        %s1825 = scalar_lea.vmem [#allocation4], 264
        %1826 = vst [vmem:[%s1825 + $0x2] sm:$0xff] %v1823
        %1827 = vst [vmem:[%s1825 + $0xa] sm:$0x3f] %v1824
        %s1828 = scalar_lea.vmem [#allocation3], 280
        %v1829 = vld [vmem:[%s1828] ss:$2 sm:$0xff]
        %s1830 = scalar_lea.vmem [#allocation3], 296
        %v1831 = vld [vmem:[%s1830] ss:$2 sm:$0x3f]
        %s1832 = scalar_lea.vmem [#allocation3], 281
        %v1833 = vld [vmem:[%s1832] ss:$2 sm:$0xff]
        %s1834 = scalar_lea.vmem [#allocation3], 297
        %v1835 = vld [vmem:[%s1834] ss:$2 sm:$0x3f]
        %v1836 = vmax.f32 %v1829, %v1833
        %v1837 = vmax.f32 %v1831, %v1835
        %s1838 = scalar_lea.vmem [#allocation4], 288
        %1839 = vst [vmem:[%s1838 + $0x2] sm:$0xff] %v1836
        %1840 = vst [vmem:[%s1838 + $0xa] sm:$0x3f] %v1837
        %s1841 = scalar_lea.vmem [#allocation3], 308
        %v1842 = vld [vmem:[%s1841] ss:$2 sm:$0xff]
        %s1843 = scalar_lea.vmem [#allocation3], 324
        %v1844 = vld [vmem:[%s1843] ss:$2 sm:$0x3f]
        %s1845 = scalar_lea.vmem [#allocation3], 309
        %v1846 = vld [vmem:[%s1845] ss:$2 sm:$0xff]
        %s1847 = scalar_lea.vmem [#allocation3], 325
        %v1848 = vld [vmem:[%s1847] ss:$2 sm:$0x3f]
        %v1849 = vmax.f32 %v1842, %v1846
        %v1850 = vmax.f32 %v1844, %v1848
        %s1851 = scalar_lea.vmem [#allocation4], 312
        %1852 = vst [vmem:[%s1851 + $0x2] sm:$0xff] %v1849
        %1853 = vst [vmem:[%s1851 + $0xa] sm:$0x3f] %v1850
        %s1854 = scalar_lea.vmem [#allocation3], 336
        %v1855 = vld [vmem:[%s1854] ss:$2 sm:$0xff]
        %s1856 = scalar_lea.vmem [#allocation3], 352
        %v1857 = vld [vmem:[%s1856] ss:$2 sm:$0x3f]
        %s1858 = scalar_lea.vmem [#allocation3], 337
        %v1859 = vld [vmem:[%s1858] ss:$2 sm:$0xff]
        %s1860 = scalar_lea.vmem [#allocation3], 353
        %v1861 = vld [vmem:[%s1860] ss:$2 sm:$0x3f]
        %v1862 = vmax.f32 %v1855, %v1859
        %v1863 = vmax.f32 %v1857, %v1861
        %s1864 = scalar_lea.vmem [#allocation4], 336
        %1865 = vst [vmem:[%s1864 + $0x2] sm:$0xff] %v1862
        %1866 = vst [vmem:[%s1864 + $0xa] sm:$0x3f] %v1863
        %s1867 = scalar_lea.vmem [#allocation3], 364
        %v1868 = vld [vmem:[%s1867] ss:$2 sm:$0xff]
        %s1869 = scalar_lea.vmem [#allocation3], 380
        %v1870 = vld [vmem:[%s1869] ss:$2 sm:$0x3f]
        %s1871 = scalar_lea.vmem [#allocation3], 365
        %v1872 = vld [vmem:[%s1871] ss:$2 sm:$0xff]
        %s1873 = scalar_lea.vmem [#allocation3], 381
        %v1874 = vld [vmem:[%s1873] ss:$2 sm:$0x3f]
        %v1875 = vmax.f32 %v1868, %v1872
        %v1876 = vmax.f32 %v1870, %v1874
        %s1877 = scalar_lea.vmem [#allocation4], 360
        %1878 = vst [vmem:[%s1877 + $0x2] sm:$0xff] %v1875
        %1879 = vst [vmem:[%s1877 + $0xa] sm:$0x3f] %v1876
        %1880 = vst [vmem:[#allocation6] sm:$0x1] 0.0
        %v1881 = vld [vmem:[%s4] sm:$0x1]
        %v1883 = vperm.slane %v1881, 0
        loop: start=0, step=1, limit=7
        $region65: #{model5_forward.1} parent=63 // loop_pre_header
          _
        $region66: #{model5_forward.1} parent=63 // loop_header
          %s1886 = sphi 0, %s1890
          %p1887 = scmp.ge.s32.totalorder %s1886, 7
        $region67: #{model5_forward.1} parent=63 // loop_header_branch
          %1889 = sbr.rel (%p1887) target = $region71
        $region68: #{model5_forward.1} parent=63 // loop_body
          %v1891 = vld [vmem:[%s3] sm:$0xf]
          %v1892 = vld [vmem:[%s3 + $0x4] sm:$0xf]
          %v1893 = vld [vmem:[%s3 + $0x8] sm:$0xf]
          %v1894 = vld [vmem:[%s3 + $0xc] sm:$0xf]
          %v1895 = vld [vmem:[%s3 + $0x10] sm:$0xf]
          %v1896 = vld [vmem:[%s3 + $0x14] sm:$0xf]
          %v1897 = vld [vmem:[%s3 + $0x18] sm:$0xf]
          %v1898 = vld [vmem:[%s3 + $0x1c] sm:$0xf]
          %v1899 = vld [vmem:[%s3 + $0x20] sm:$0xf]
          %v1900 = vld [vmem:[%s3 + $0x24] sm:$0xf]
          %v1901 = vld [vmem:[%s3 + $0x28] sm:$0xf]
          %v1902 = vld [vmem:[%s3 + $0x2c] sm:$0xf]
          %v1903 = vld [vmem:[%s3 + $0x30] sm:$0xf]
          %v1904 = vld [vmem:[%s3 + $0x34] sm:$0xf]
          %v1905 = vld [vmem:[%s3 + $0x38] sm:$0xf]
          %v1906 = vld [vmem:[%s3 + $0x3c] sm:$0xf]
          %s1907 = smul.u32 %s1886, 2
          %s1908 = smul.u32 %s1907, 24
          %s1909 = scalar_lea.vmem [#allocation4], %s1908
          %v1910 = vld [vmem:[%s1909] sm:$0xff]
          %v1911 = vld [vmem:[%s1909 + $0x8] sm:$0x3f]
          %v1912 = vpack.c.bf16 %v1911, %v1910
          %s1913 = sadd.s32 %s1907, 1
          %s1914 = smul.u32 %s1913, 24
          %s1915 = scalar_lea.vmem [#allocation4], %s1914
          %v1916 = vld [vmem:[%s1915] sm:$0xff]
          %v1917 = vld [vmem:[%s1915 + $0x8] sm:$0x3f]
          %v1918 = vpack.c.bf16 %v1917, %v1916
          %s1919 = scalar_lea.vmem %s3, 64
          %v1920 = vld [vmem:[%s1919] sm:$0xf]
          %v1921 = vld [vmem:[%s1919 + $0x4] sm:$0xf]
          %v1922 = vld [vmem:[%s1919 + $0x8] sm:$0xf]
          %v1923 = vld [vmem:[%s1919 + $0xc] sm:$0xf]
          %v1924 = vld [vmem:[%s1919 + $0x10] sm:$0xf]
          %v1925 = vld [vmem:[%s1919 + $0x14] sm:$0xf]
          %v1926 = vld [vmem:[%s1919 + $0x18] sm:$0xf]
          %v1927 = vld [vmem:[%s1919 + $0x1c] sm:$0xf]
          %v1928 = vld [vmem:[%s1919 + $0x20] sm:$0xf]
          %v1929 = vld [vmem:[%s1919 + $0x24] sm:$0xf]
          %v1930 = vld [vmem:[%s1919 + $0x28] sm:$0xf]
          %v1931 = vld [vmem:[%s1919 + $0x2c] sm:$0xf]
          %v1932 = vld [vmem:[%s1919 + $0x30] sm:$0xf]
          %v1933 = vld [vmem:[%s1919 + $0x34] sm:$0xf]
          %v1934 = vld [vmem:[%s1919 + $0x38] sm:$0xf]
          %v1935 = vld [vmem:[%s1919 + $0x3c] sm:$0xf]
          %v1936 = vld [vmem:[%s1909 + $0x1] sm:$0xff]
          %v1937 = vld [vmem:[%s1909 + $0x9] sm:$0x3f]
          %v1938 = vpack.c.bf16 %v1937, %v1936
          %v1939 = vld [vmem:[%s1915 + $0x1] sm:$0xff]
          %v1940 = vld [vmem:[%s1915 + $0x9] sm:$0x3f]
          %v1941 = vpack.c.bf16 %v1940, %v1939
          %v1958 = vunpack.c.l.b16 %v1920
          %v1959 = vunpack.c.l.b16 %v1921
          %v1960 = vunpack.c.l.b16 %v1922
          %v1961 = vunpack.c.l.b16 %v1923
          %v1962 = vunpack.c.l.b16 %v1924
          %v1963 = vunpack.c.l.b16 %v1925
          %v1964 = vunpack.c.l.b16 %v1926
          %v1965 = vunpack.c.l.b16 %v1927
          %v1966 = vunpack.c.l.b16 %v1928
          %v1967 = vunpack.c.l.b16 %v1929
          %v1968 = vunpack.c.l.b16 %v1930
          %v1969 = vunpack.c.l.b16 %v1931
          %v1970 = vunpack.c.l.b16 %v1932
          %v1971 = vunpack.c.l.b16 %v1933
          %v1972 = vunpack.c.l.b16 %v1934
          %v1973 = vunpack.c.l.b16 %v1935
          %v1974 = vpack.c.b16 %v1959, %v1958
          %v1975 = vpack.c.b16 %v1961, %v1960
          %v1976 = vpack.c.b16 %v1963, %v1962
          %v1977 = vpack.c.b16 %v1965, %v1964
          %v1978 = vpack.c.b16 %v1967, %v1966
          %v1979 = vpack.c.b16 %v1969, %v1968
          %v1980 = vpack.c.b16 %v1971, %v1970
          %v1981 = vpack.c.b16 %v1973, %v1972
          %1990 = vmatpush.bf16.msra.mxu0 %v1981
          %1991 = vmatpush.bf16.msra.mxu0 %v1980
          %1992 = vmatpush.bf16.msra.mxu0 %v1979
          %1993 = vmatpush.bf16.msra.mxu0 %v1978
          %1994 = vmatpush.bf16.msra.mxu0 %v1977
          %1995 = vmatpush.bf16.msra.mxu0 %v1976
          %1996 = vmatpush.bf16.msra.mxu0 %v1975
          %1997 = vmatpush.bf16.msra.mxu0 %v1974
          %1998 = vmatmul.bf16.gmra.mxu0 %v1938
          %v1999 = vpop.f32.mrf.mxu0
          %v2000 = vadd.f32 0.0, %v1999
          %v2001 = vpop.f32.mrf.mxu0
          %v2002 = vadd.f32 0.0, %v2001
          %2003 = vdwg.mxu0
          %v2020 = vunpack.c.l.b16 %v1891
          %v2021 = vunpack.c.l.b16 %v1892
          %v2022 = vunpack.c.l.b16 %v1893
          %v2023 = vunpack.c.l.b16 %v1894
          %v2024 = vunpack.c.l.b16 %v1895
          %v2025 = vunpack.c.l.b16 %v1896
          %v2026 = vunpack.c.l.b16 %v1897
          %v2027 = vunpack.c.l.b16 %v1898
          %v2028 = vunpack.c.l.b16 %v1899
          %v2029 = vunpack.c.l.b16 %v1900
          %v2030 = vunpack.c.l.b16 %v1901
          %v2031 = vunpack.c.l.b16 %v1902
          %v2032 = vunpack.c.l.b16 %v1903
          %v2033 = vunpack.c.l.b16 %v1904
          %v2034 = vunpack.c.l.b16 %v1905
          %v2035 = vunpack.c.l.b16 %v1906
          %v2036 = vpack.c.b16 %v2021, %v2020
          %v2037 = vpack.c.b16 %v2023, %v2022
          %v2038 = vpack.c.b16 %v2025, %v2024
          %v2039 = vpack.c.b16 %v2027, %v2026
          %v2040 = vpack.c.b16 %v2029, %v2028
          %v2041 = vpack.c.b16 %v2031, %v2030
          %v2042 = vpack.c.b16 %v2033, %v2032
          %v2043 = vpack.c.b16 %v2035, %v2034
          %2052 = vmatpush.bf16.msra.mxu0 %v2043
          %2053 = vmatpush.bf16.msra.mxu0 %v2042
          %2054 = vmatpush.bf16.msra.mxu0 %v2041
          %2055 = vmatpush.bf16.msra.mxu0 %v2040
          %2056 = vmatpush.bf16.msra.mxu0 %v2039
          %2057 = vmatpush.bf16.msra.mxu0 %v2038
          %2058 = vmatpush.bf16.msra.mxu0 %v2037
          %2059 = vmatpush.bf16.msra.mxu0 %v2036
          %2060 = vmatmul.bf16.gmra.mxu0 %v1912
          %v2061 = vpop.f32.mrf.mxu0
          %v2062 = vadd.f32 %v2000, %v2061
          %v2063 = vpop.f32.mrf.mxu0
          %v2064 = vadd.f32 %v2002, %v2063
          %2065 = vdwg.mxu0
          %2066 = vmatpush.bf16.msra.mxu0 %v1981
          %2067 = vmatpush.bf16.msra.mxu0 %v1980
          %2068 = vmatpush.bf16.msra.mxu0 %v1979
          %2069 = vmatpush.bf16.msra.mxu0 %v1978
          %2070 = vmatpush.bf16.msra.mxu0 %v1977
          %2071 = vmatpush.bf16.msra.mxu0 %v1976
          %2072 = vmatpush.bf16.msra.mxu0 %v1975
          %2073 = vmatpush.bf16.msra.mxu0 %v1974
          %2074 = vmatmul.bf16.gmra.mxu0 %v1941
          %v2075 = vpop.f32.mrf.mxu0
          %v2076 = vadd.f32 0.0, %v2075
          %v2077 = vpop.f32.mrf.mxu0
          %v2078 = vadd.f32 0.0, %v2077
          %2079 = vdwg.mxu0
          %2080 = vmatpush.bf16.msra.mxu0 %v2043
          %2081 = vmatpush.bf16.msra.mxu0 %v2042
          %2082 = vmatpush.bf16.msra.mxu0 %v2041
          %2083 = vmatpush.bf16.msra.mxu0 %v2040
          %2084 = vmatpush.bf16.msra.mxu0 %v2039
          %2085 = vmatpush.bf16.msra.mxu0 %v2038
          %2086 = vmatpush.bf16.msra.mxu0 %v2037
          %2087 = vmatpush.bf16.msra.mxu0 %v2036
          %2088 = vmatmul.bf16.gmra.mxu0 %v1918
          %v2089 = vpop.f32.mrf.mxu0
          %v2090 = vadd.f32 %v2076, %v2089
          %v2091 = vpop.f32.mrf.mxu0
          %v2092 = vadd.f32 %v2078, %v2091
          %2093 = vdwg.mxu0
          %s2094 = scalar_lea.vmem %s3, 128
          %v2095 = vld [vmem:[%s2094] sm:$0xf]
          %v2096 = vld [vmem:[%s2094 + $0x4] sm:$0xf]
          %v2097 = vld [vmem:[%s2094 + $0x8] sm:$0xf]
          %v2098 = vld [vmem:[%s2094 + $0xc] sm:$0xf]
          %v2099 = vld [vmem:[%s2094 + $0x10] sm:$0xf]
          %v2100 = vld [vmem:[%s2094 + $0x14] sm:$0xf]
          %v2101 = vld [vmem:[%s2094 + $0x18] sm:$0xf]
          %v2102 = vld [vmem:[%s2094 + $0x1c] sm:$0xf]
          %v2103 = vld [vmem:[%s2094 + $0x20] sm:$0xf]
          %v2104 = vld [vmem:[%s2094 + $0x24] sm:$0xf]
          %v2105 = vld [vmem:[%s2094 + $0x28] sm:$0xf]
          %v2106 = vld [vmem:[%s2094 + $0x2c] sm:$0xf]
          %v2107 = vld [vmem:[%s2094 + $0x30] sm:$0xf]
          %v2108 = vld [vmem:[%s2094 + $0x34] sm:$0xf]
          %v2109 = vld [vmem:[%s2094 + $0x38] sm:$0xf]
          %v2110 = vld [vmem:[%s2094 + $0x3c] sm:$0xf]
          %v2111 = vld [vmem:[%s1909 + $0x2] sm:$0xff]
          %v2112 = vld [vmem:[%s1909 + $0xa] sm:$0x3f]
          %v2113 = vpack.c.bf16 %v2112, %v2111
          %v2114 = vld [vmem:[%s1915 + $0x2] sm:$0xff]
          %v2115 = vld [vmem:[%s1915 + $0xa] sm:$0x3f]
          %v2116 = vpack.c.bf16 %v2115, %v2114
          %v2133 = vunpack.c.l.b16 %v2095
          %v2134 = vunpack.c.l.b16 %v2096
          %v2135 = vunpack.c.l.b16 %v2097
          %v2136 = vunpack.c.l.b16 %v2098
          %v2137 = vunpack.c.l.b16 %v2099
          %v2138 = vunpack.c.l.b16 %v2100
          %v2139 = vunpack.c.l.b16 %v2101
          %v2140 = vunpack.c.l.b16 %v2102
          %v2141 = vunpack.c.l.b16 %v2103
          %v2142 = vunpack.c.l.b16 %v2104
          %v2143 = vunpack.c.l.b16 %v2105
          %v2144 = vunpack.c.l.b16 %v2106
          %v2145 = vunpack.c.l.b16 %v2107
          %v2146 = vunpack.c.l.b16 %v2108
          %v2147 = vunpack.c.l.b16 %v2109
          %v2148 = vunpack.c.l.b16 %v2110
          %v2149 = vpack.c.b16 %v2134, %v2133
          %v2150 = vpack.c.b16 %v2136, %v2135
          %v2151 = vpack.c.b16 %v2138, %v2137
          %v2152 = vpack.c.b16 %v2140, %v2139
          %v2153 = vpack.c.b16 %v2142, %v2141
          %v2154 = vpack.c.b16 %v2144, %v2143
          %v2155 = vpack.c.b16 %v2146, %v2145
          %v2156 = vpack.c.b16 %v2148, %v2147
          %2165 = vmatpush.bf16.msra.mxu0 %v2156
          %2166 = vmatpush.bf16.msra.mxu0 %v2155
          %2167 = vmatpush.bf16.msra.mxu0 %v2154
          %2168 = vmatpush.bf16.msra.mxu0 %v2153
          %2169 = vmatpush.bf16.msra.mxu0 %v2152
          %2170 = vmatpush.bf16.msra.mxu0 %v2151
          %2171 = vmatpush.bf16.msra.mxu0 %v2150
          %2172 = vmatpush.bf16.msra.mxu0 %v2149
          %2173 = vmatmul.bf16.gmra.mxu0 %v2113
          %v2174 = vpop.f32.mrf.mxu0
          %v2175 = vadd.f32 0.0, %v2174
          %v2176 = vpop.f32.mrf.mxu0
          %v2177 = vadd.f32 0.0, %v2176
          %2178 = vdwg.mxu0
          %v2179 = vadd.f32 %v2062, %v2175
          %v2180 = vadd.f32 %v2064, %v2177
          %2181 = vmatpush.bf16.msra.mxu0 %v2156
          %2182 = vmatpush.bf16.msra.mxu0 %v2155
          %2183 = vmatpush.bf16.msra.mxu0 %v2154
          %2184 = vmatpush.bf16.msra.mxu0 %v2153
          %2185 = vmatpush.bf16.msra.mxu0 %v2152
          %2186 = vmatpush.bf16.msra.mxu0 %v2151
          %2187 = vmatpush.bf16.msra.mxu0 %v2150
          %2188 = vmatpush.bf16.msra.mxu0 %v2149
          %2189 = vmatmul.bf16.gmra.mxu0 %v2116
          %v2190 = vpop.f32.mrf.mxu0
          %v2191 = vadd.f32 0.0, %v2190
          %v2192 = vpop.f32.mrf.mxu0
          %v2193 = vadd.f32 0.0, %v2192
          %2194 = vdwg.mxu0
          %v2195 = vadd.f32 %v2090, %v2191
          %v2196 = vadd.f32 %v2092, %v2193
          %s2197 = scalar_lea.vmem %s3, 192
          %v2198 = vld [vmem:[%s2197] sm:$0xf]
          %v2199 = vld [vmem:[%s2197 + $0x4] sm:$0xf]
          %v2200 = vld [vmem:[%s2197 + $0x8] sm:$0xf]
          %v2201 = vld [vmem:[%s2197 + $0xc] sm:$0xf]
          %v2202 = vld [vmem:[%s2197 + $0x10] sm:$0xf]
          %v2203 = vld [vmem:[%s2197 + $0x14] sm:$0xf]
          %v2204 = vld [vmem:[%s2197 + $0x18] sm:$0xf]
          %v2205 = vld [vmem:[%s2197 + $0x1c] sm:$0xf]
          %v2206 = vld [vmem:[%s2197 + $0x20] sm:$0xf]
          %v2207 = vld [vmem:[%s2197 + $0x24] sm:$0xf]
          %v2208 = vld [vmem:[%s2197 + $0x28] sm:$0xf]
          %v2209 = vld [vmem:[%s2197 + $0x2c] sm:$0xf]
          %v2210 = vld [vmem:[%s2197 + $0x30] sm:$0xf]
          %v2211 = vld [vmem:[%s2197 + $0x34] sm:$0xf]
          %v2212 = vld [vmem:[%s2197 + $0x38] sm:$0xf]
          %v2213 = vld [vmem:[%s2197 + $0x3c] sm:$0xf]
          %v2214 = vld [vmem:[%s1909 + $0x3] sm:$0xff]
          %v2215 = vld [vmem:[%s1909 + $0xb] sm:$0x3f]
          %v2216 = vpack.c.bf16 %v2215, %v2214
          %v2217 = vld [vmem:[%s1915 + $0x3] sm:$0xff]
          %v2218 = vld [vmem:[%s1915 + $0xb] sm:$0x3f]
          %v2219 = vpack.c.bf16 %v2218, %v2217
          %v2236 = vunpack.c.l.b16 %v2198
          %v2237 = vunpack.c.l.b16 %v2199
          %v2238 = vunpack.c.l.b16 %v2200
          %v2239 = vunpack.c.l.b16 %v2201
          %v2240 = vunpack.c.l.b16 %v2202
          %v2241 = vunpack.c.l.b16 %v2203
          %v2242 = vunpack.c.l.b16 %v2204
          %v2243 = vunpack.c.l.b16 %v2205
          %v2244 = vunpack.c.l.b16 %v2206
          %v2245 = vunpack.c.l.b16 %v2207
          %v2246 = vunpack.c.l.b16 %v2208
          %v2247 = vunpack.c.l.b16 %v2209
          %v2248 = vunpack.c.l.b16 %v2210
          %v2249 = vunpack.c.l.b16 %v2211
          %v2250 = vunpack.c.l.b16 %v2212
          %v2251 = vunpack.c.l.b16 %v2213
          %v2252 = vpack.c.b16 %v2237, %v2236
          %v2253 = vpack.c.b16 %v2239, %v2238
          %v2254 = vpack.c.b16 %v2241, %v2240
          %v2255 = vpack.c.b16 %v2243, %v2242
          %v2256 = vpack.c.b16 %v2245, %v2244
          %v2257 = vpack.c.b16 %v2247, %v2246
          %v2258 = vpack.c.b16 %v2249, %v2248
          %v2259 = vpack.c.b16 %v2251, %v2250
          %2268 = vmatpush.bf16.msra.mxu0 %v2259
          %2269 = vmatpush.bf16.msra.mxu0 %v2258
          %2270 = vmatpush.bf16.msra.mxu0 %v2257
          %2271 = vmatpush.bf16.msra.mxu0 %v2256
          %2272 = vmatpush.bf16.msra.mxu0 %v2255
          %2273 = vmatpush.bf16.msra.mxu0 %v2254
          %2274 = vmatpush.bf16.msra.mxu0 %v2253
          %2275 = vmatpush.bf16.msra.mxu0 %v2252
          %2276 = vmatmul.bf16.gmra.mxu0 %v2216
          %v2277 = vpop.f32.mrf.mxu0
          %v2278 = vadd.f32 0.0, %v2277
          %v2279 = vpop.f32.mrf.mxu0
          %v2280 = vadd.f32 0.0, %v2279
          %2281 = vdwg.mxu0
          %v2282 = vadd.f32 %v2179, %v2278
          %v2283 = vadd.f32 %v2180, %v2280
          %2284 = vmatpush.bf16.msra.mxu0 %v2259
          %2285 = vmatpush.bf16.msra.mxu0 %v2258
          %2286 = vmatpush.bf16.msra.mxu0 %v2257
          %2287 = vmatpush.bf16.msra.mxu0 %v2256
          %2288 = vmatpush.bf16.msra.mxu0 %v2255
          %2289 = vmatpush.bf16.msra.mxu0 %v2254
          %2290 = vmatpush.bf16.msra.mxu0 %v2253
          %2291 = vmatpush.bf16.msra.mxu0 %v2252
          %2292 = vmatmul.bf16.gmra.mxu0 %v2219
          %v2293 = vpop.f32.mrf.mxu0
          %v2294 = vadd.f32 0.0, %v2293
          %v2295 = vpop.f32.mrf.mxu0
          %v2296 = vadd.f32 0.0, %v2295
          %2297 = vdwg.mxu0
          %v2298 = vadd.f32 %v2195, %v2294
          %v2299 = vadd.f32 %v2196, %v2296
          %s2300 = scalar_lea.vmem %s3, 256
          %v2301 = vld [vmem:[%s2300] sm:$0xf]
          %v2302 = vld [vmem:[%s2300 + $0x4] sm:$0xf]
          %v2303 = vld [vmem:[%s2300 + $0x8] sm:$0xf]
          %v2304 = vld [vmem:[%s2300 + $0xc] sm:$0xf]
          %v2305 = vld [vmem:[%s2300 + $0x10] sm:$0xf]
          %v2306 = vld [vmem:[%s2300 + $0x14] sm:$0xf]
          %v2307 = vld [vmem:[%s2300 + $0x18] sm:$0xf]
          %v2308 = vld [vmem:[%s2300 + $0x1c] sm:$0xf]
          %v2309 = vld [vmem:[%s2300 + $0x20] sm:$0xf]
          %v2310 = vld [vmem:[%s2300 + $0x24] sm:$0xf]
          %v2311 = vld [vmem:[%s2300 + $0x28] sm:$0xf]
          %v2312 = vld [vmem:[%s2300 + $0x2c] sm:$0xf]
          %v2313 = vld [vmem:[%s2300 + $0x30] sm:$0xf]
          %v2314 = vld [vmem:[%s2300 + $0x34] sm:$0xf]
          %v2315 = vld [vmem:[%s2300 + $0x38] sm:$0xf]
          %v2316 = vld [vmem:[%s2300 + $0x3c] sm:$0xf]
          %v2317 = vld [vmem:[%s1909 + $0x4] sm:$0xff]
          %v2318 = vld [vmem:[%s1909 + $0xc] sm:$0x3f]
          %v2319 = vpack.c.bf16 %v2318, %v2317
          %v2320 = vld [vmem:[%s1915 + $0x4] sm:$0xff]
          %v2321 = vld [vmem:[%s1915 + $0xc] sm:$0x3f]
          %v2322 = vpack.c.bf16 %v2321, %v2320
          %v2339 = vunpack.c.l.b16 %v2301
          %v2340 = vunpack.c.l.b16 %v2302
          %v2341 = vunpack.c.l.b16 %v2303
          %v2342 = vunpack.c.l.b16 %v2304
          %v2343 = vunpack.c.l.b16 %v2305
          %v2344 = vunpack.c.l.b16 %v2306
          %v2345 = vunpack.c.l.b16 %v2307
          %v2346 = vunpack.c.l.b16 %v2308
          %v2347 = vunpack.c.l.b16 %v2309
          %v2348 = vunpack.c.l.b16 %v2310
          %v2349 = vunpack.c.l.b16 %v2311
          %v2350 = vunpack.c.l.b16 %v2312
          %v2351 = vunpack.c.l.b16 %v2313
          %v2352 = vunpack.c.l.b16 %v2314
          %v2353 = vunpack.c.l.b16 %v2315
          %v2354 = vunpack.c.l.b16 %v2316
          %v2355 = vpack.c.b16 %v2340, %v2339
          %v2356 = vpack.c.b16 %v2342, %v2341
          %v2357 = vpack.c.b16 %v2344, %v2343
          %v2358 = vpack.c.b16 %v2346, %v2345
          %v2359 = vpack.c.b16 %v2348, %v2347
          %v2360 = vpack.c.b16 %v2350, %v2349
          %v2361 = vpack.c.b16 %v2352, %v2351
          %v2362 = vpack.c.b16 %v2354, %v2353
          %2371 = vmatpush.bf16.msra.mxu0 %v2362
          %2372 = vmatpush.bf16.msra.mxu0 %v2361
          %2373 = vmatpush.bf16.msra.mxu0 %v2360
          %2374 = vmatpush.bf16.msra.mxu0 %v2359
          %2375 = vmatpush.bf16.msra.mxu0 %v2358
          %2376 = vmatpush.bf16.msra.mxu0 %v2357
          %2377 = vmatpush.bf16.msra.mxu0 %v2356
          %2378 = vmatpush.bf16.msra.mxu0 %v2355
          %2379 = vmatmul.bf16.gmra.mxu0 %v2319
          %v2380 = vpop.f32.mrf.mxu0
          %v2381 = vadd.f32 0.0, %v2380
          %v2382 = vpop.f32.mrf.mxu0
          %v2383 = vadd.f32 0.0, %v2382
          %2384 = vdwg.mxu0
          %v2385 = vadd.f32 %v2282, %v2381
          %v2386 = vadd.f32 %v2283, %v2383
          %2387 = vmatpush.bf16.msra.mxu0 %v2362
          %2388 = vmatpush.bf16.msra.mxu0 %v2361
          %2389 = vmatpush.bf16.msra.mxu0 %v2360
          %2390 = vmatpush.bf16.msra.mxu0 %v2359
          %2391 = vmatpush.bf16.msra.mxu0 %v2358
          %2392 = vmatpush.bf16.msra.mxu0 %v2357
          %2393 = vmatpush.bf16.msra.mxu0 %v2356
          %2394 = vmatpush.bf16.msra.mxu0 %v2355
          %2395 = vmatmul.bf16.gmra.mxu0 %v2322
          %v2396 = vpop.f32.mrf.mxu0
          %v2397 = vadd.f32 0.0, %v2396
          %v2398 = vpop.f32.mrf.mxu0
          %v2399 = vadd.f32 0.0, %v2398
          %2400 = vdwg.mxu0
          %v2401 = vadd.f32 %v2298, %v2397
          %v2402 = vadd.f32 %v2299, %v2399
          %s2403 = scalar_lea.vmem %s3, 320
          %v2404 = vld [vmem:[%s2403] sm:$0xf]
          %v2405 = vld [vmem:[%s2403 + $0x4] sm:$0xf]
          %v2406 = vld [vmem:[%s2403 + $0x8] sm:$0xf]
          %v2407 = vld [vmem:[%s2403 + $0xc] sm:$0xf]
          %v2408 = vld [vmem:[%s2403 + $0x10] sm:$0xf]
          %v2409 = vld [vmem:[%s2403 + $0x14] sm:$0xf]
          %v2410 = vld [vmem:[%s2403 + $0x18] sm:$0xf]
          %v2411 = vld [vmem:[%s2403 + $0x1c] sm:$0xf]
          %v2412 = vld [vmem:[%s2403 + $0x20] sm:$0xf]
          %v2413 = vld [vmem:[%s2403 + $0x24] sm:$0xf]
          %v2414 = vld [vmem:[%s2403 + $0x28] sm:$0xf]
          %v2415 = vld [vmem:[%s2403 + $0x2c] sm:$0xf]
          %v2416 = vld [vmem:[%s2403 + $0x30] sm:$0xf]
          %v2417 = vld [vmem:[%s2403 + $0x34] sm:$0xf]
          %v2418 = vld [vmem:[%s2403 + $0x38] sm:$0xf]
          %v2419 = vld [vmem:[%s2403 + $0x3c] sm:$0xf]
          %s2420 = sadd.s32 %s1907, 2
          %s2421 = smul.u32 %s2420, 24
          %s2422 = scalar_lea.vmem [#allocation4], %s2421
          %v2423 = vld [vmem:[%s2422] sm:$0xff]
          %v2424 = vld [vmem:[%s2422 + $0x8] sm:$0x3f]
          %v2425 = vpack.c.bf16 %v2424, %v2423
          %v2442 = vunpack.c.l.b16 %v2404
          %v2443 = vunpack.c.l.b16 %v2405
          %v2444 = vunpack.c.l.b16 %v2406
          %v2445 = vunpack.c.l.b16 %v2407
          %v2446 = vunpack.c.l.b16 %v2408
          %v2447 = vunpack.c.l.b16 %v2409
          %v2448 = vunpack.c.l.b16 %v2410
          %v2449 = vunpack.c.l.b16 %v2411
          %v2450 = vunpack.c.l.b16 %v2412
          %v2451 = vunpack.c.l.b16 %v2413
          %v2452 = vunpack.c.l.b16 %v2414
          %v2453 = vunpack.c.l.b16 %v2415
          %v2454 = vunpack.c.l.b16 %v2416
          %v2455 = vunpack.c.l.b16 %v2417
          %v2456 = vunpack.c.l.b16 %v2418
          %v2457 = vunpack.c.l.b16 %v2419
          %v2458 = vpack.c.b16 %v2443, %v2442
          %v2459 = vpack.c.b16 %v2445, %v2444
          %v2460 = vpack.c.b16 %v2447, %v2446
          %v2461 = vpack.c.b16 %v2449, %v2448
          %v2462 = vpack.c.b16 %v2451, %v2450
          %v2463 = vpack.c.b16 %v2453, %v2452
          %v2464 = vpack.c.b16 %v2455, %v2454
          %v2465 = vpack.c.b16 %v2457, %v2456
          %2474 = vmatpush.bf16.msra.mxu0 %v2465
          %2475 = vmatpush.bf16.msra.mxu0 %v2464
          %2476 = vmatpush.bf16.msra.mxu0 %v2463
          %2477 = vmatpush.bf16.msra.mxu0 %v2462
          %2478 = vmatpush.bf16.msra.mxu0 %v2461
          %2479 = vmatpush.bf16.msra.mxu0 %v2460
          %2480 = vmatpush.bf16.msra.mxu0 %v2459
          %2481 = vmatpush.bf16.msra.mxu0 %v2458
          %2482 = vmatmul.bf16.gmra.mxu0 %v1918
          %v2483 = vpop.f32.mrf.mxu0
          %v2484 = vadd.f32 0.0, %v2483
          %v2485 = vpop.f32.mrf.mxu0
          %v2486 = vadd.f32 0.0, %v2485
          %2487 = vdwg.mxu0
          %v2488 = vadd.f32 %v2385, %v2484
          %v2489 = vadd.f32 %v2386, %v2486
          %2490 = vmatpush.bf16.msra.mxu0 %v2465
          %2491 = vmatpush.bf16.msra.mxu0 %v2464
          %2492 = vmatpush.bf16.msra.mxu0 %v2463
          %2493 = vmatpush.bf16.msra.mxu0 %v2462
          %2494 = vmatpush.bf16.msra.mxu0 %v2461
          %2495 = vmatpush.bf16.msra.mxu0 %v2460
          %2496 = vmatpush.bf16.msra.mxu0 %v2459
          %2497 = vmatpush.bf16.msra.mxu0 %v2458
          %2498 = vmatmul.bf16.gmra.mxu0 %v2425
          %v2499 = vpop.f32.mrf.mxu0
          %v2500 = vadd.f32 0.0, %v2499
          %v2501 = vpop.f32.mrf.mxu0
          %v2502 = vadd.f32 0.0, %v2501
          %2503 = vdwg.mxu0
          %v2504 = vadd.f32 %v2401, %v2500
          %v2505 = vadd.f32 %v2402, %v2502
          %s2506 = scalar_lea.vmem %s3, 384
          %v2507 = vld [vmem:[%s2506] sm:$0xf]
          %v2508 = vld [vmem:[%s2506 + $0x4] sm:$0xf]
          %v2509 = vld [vmem:[%s2506 + $0x8] sm:$0xf]
          %v2510 = vld [vmem:[%s2506 + $0xc] sm:$0xf]
          %v2511 = vld [vmem:[%s2506 + $0x10] sm:$0xf]
          %v2512 = vld [vmem:[%s2506 + $0x14] sm:$0xf]
          %v2513 = vld [vmem:[%s2506 + $0x18] sm:$0xf]
          %v2514 = vld [vmem:[%s2506 + $0x1c] sm:$0xf]
          %v2515 = vld [vmem:[%s2506 + $0x20] sm:$0xf]
          %v2516 = vld [vmem:[%s2506 + $0x24] sm:$0xf]
          %v2517 = vld [vmem:[%s2506 + $0x28] sm:$0xf]
          %v2518 = vld [vmem:[%s2506 + $0x2c] sm:$0xf]
          %v2519 = vld [vmem:[%s2506 + $0x30] sm:$0xf]
          %v2520 = vld [vmem:[%s2506 + $0x34] sm:$0xf]
          %v2521 = vld [vmem:[%s2506 + $0x38] sm:$0xf]
          %v2522 = vld [vmem:[%s2506 + $0x3c] sm:$0xf]
          %v2523 = vld [vmem:[%s2422 + $0x1] sm:$0xff]
          %v2524 = vld [vmem:[%s2422 + $0x9] sm:$0x3f]
          %v2525 = vpack.c.bf16 %v2524, %v2523
          %v2542 = vunpack.c.l.b16 %v2507
          %v2543 = vunpack.c.l.b16 %v2508
          %v2544 = vunpack.c.l.b16 %v2509
          %v2545 = vunpack.c.l.b16 %v2510
          %v2546 = vunpack.c.l.b16 %v2511
          %v2547 = vunpack.c.l.b16 %v2512
          %v2548 = vunpack.c.l.b16 %v2513
          %v2549 = vunpack.c.l.b16 %v2514
          %v2550 = vunpack.c.l.b16 %v2515
          %v2551 = vunpack.c.l.b16 %v2516
          %v2552 = vunpack.c.l.b16 %v2517
          %v2553 = vunpack.c.l.b16 %v2518
          %v2554 = vunpack.c.l.b16 %v2519
          %v2555 = vunpack.c.l.b16 %v2520
          %v2556 = vunpack.c.l.b16 %v2521
          %v2557 = vunpack.c.l.b16 %v2522
          %v2558 = vpack.c.b16 %v2543, %v2542
          %v2559 = vpack.c.b16 %v2545, %v2544
          %v2560 = vpack.c.b16 %v2547, %v2546
          %v2561 = vpack.c.b16 %v2549, %v2548
          %v2562 = vpack.c.b16 %v2551, %v2550
          %v2563 = vpack.c.b16 %v2553, %v2552
          %v2564 = vpack.c.b16 %v2555, %v2554
          %v2565 = vpack.c.b16 %v2557, %v2556
          %2574 = vmatpush.bf16.msra.mxu0 %v2565
          %2575 = vmatpush.bf16.msra.mxu0 %v2564
          %2576 = vmatpush.bf16.msra.mxu0 %v2563
          %2577 = vmatpush.bf16.msra.mxu0 %v2562
          %2578 = vmatpush.bf16.msra.mxu0 %v2561
          %2579 = vmatpush.bf16.msra.mxu0 %v2560
          %2580 = vmatpush.bf16.msra.mxu0 %v2559
          %2581 = vmatpush.bf16.msra.mxu0 %v2558
          %2582 = vmatmul.bf16.gmra.mxu0 %v1941
          %v2583 = vpop.f32.mrf.mxu0
          %v2584 = vadd.f32 0.0, %v2583
          %v2585 = vpop.f32.mrf.mxu0
          %v2586 = vadd.f32 0.0, %v2585
          %2587 = vdwg.mxu0
          %v2588 = vadd.f32 %v2488, %v2584
          %v2589 = vadd.f32 %v2489, %v2586
          %2590 = vmatpush.bf16.msra.mxu0 %v2565
          %2591 = vmatpush.bf16.msra.mxu0 %v2564
          %2592 = vmatpush.bf16.msra.mxu0 %v2563
          %2593 = vmatpush.bf16.msra.mxu0 %v2562
          %2594 = vmatpush.bf16.msra.mxu0 %v2561
          %2595 = vmatpush.bf16.msra.mxu0 %v2560
          %2596 = vmatpush.bf16.msra.mxu0 %v2559
          %2597 = vmatpush.bf16.msra.mxu0 %v2558
          %2598 = vmatmul.bf16.gmra.mxu0 %v2525
          %v2599 = vpop.f32.mrf.mxu0
          %v2600 = vadd.f32 0.0, %v2599
          %v2601 = vpop.f32.mrf.mxu0
          %v2602 = vadd.f32 0.0, %v2601
          %2603 = vdwg.mxu0
          %v2604 = vadd.f32 %v2504, %v2600
          %v2605 = vadd.f32 %v2505, %v2602
          %s2606 = scalar_lea.vmem %s3, 448
          %v2607 = vld [vmem:[%s2606] sm:$0xf]
          %v2608 = vld [vmem:[%s2606 + $0x4] sm:$0xf]
          %v2609 = vld [vmem:[%s2606 + $0x8] sm:$0xf]
          %v2610 = vld [vmem:[%s2606 + $0xc] sm:$0xf]
          %v2611 = vld [vmem:[%s2606 + $0x10] sm:$0xf]
          %v2612 = vld [vmem:[%s2606 + $0x14] sm:$0xf]
          %v2613 = vld [vmem:[%s2606 + $0x18] sm:$0xf]
          %v2614 = vld [vmem:[%s2606 + $0x1c] sm:$0xf]
          %v2615 = vld [vmem:[%s2606 + $0x20] sm:$0xf]
          %v2616 = vld [vmem:[%s2606 + $0x24] sm:$0xf]
          %v2617 = vld [vmem:[%s2606 + $0x28] sm:$0xf]
          %v2618 = vld [vmem:[%s2606 + $0x2c] sm:$0xf]
          %v2619 = vld [vmem:[%s2606 + $0x30] sm:$0xf]
          %v2620 = vld [vmem:[%s2606 + $0x34] sm:$0xf]
          %v2621 = vld [vmem:[%s2606 + $0x38] sm:$0xf]
          %v2622 = vld [vmem:[%s2606 + $0x3c] sm:$0xf]
          %v2623 = vld [vmem:[%s2422 + $0x2] sm:$0xff]
          %v2624 = vld [vmem:[%s2422 + $0xa] sm:$0x3f]
          %v2625 = vpack.c.bf16 %v2624, %v2623
          %v2642 = vunpack.c.l.b16 %v2607
          %v2643 = vunpack.c.l.b16 %v2608
          %v2644 = vunpack.c.l.b16 %v2609
          %v2645 = vunpack.c.l.b16 %v2610
          %v2646 = vunpack.c.l.b16 %v2611
          %v2647 = vunpack.c.l.b16 %v2612
          %v2648 = vunpack.c.l.b16 %v2613
          %v2649 = vunpack.c.l.b16 %v2614
          %v2650 = vunpack.c.l.b16 %v2615
          %v2651 = vunpack.c.l.b16 %v2616
          %v2652 = vunpack.c.l.b16 %v2617
          %v2653 = vunpack.c.l.b16 %v2618
          %v2654 = vunpack.c.l.b16 %v2619
          %v2655 = vunpack.c.l.b16 %v2620
          %v2656 = vunpack.c.l.b16 %v2621
          %v2657 = vunpack.c.l.b16 %v2622
          %v2658 = vpack.c.b16 %v2643, %v2642
          %v2659 = vpack.c.b16 %v2645, %v2644
          %v2660 = vpack.c.b16 %v2647, %v2646
          %v2661 = vpack.c.b16 %v2649, %v2648
          %v2662 = vpack.c.b16 %v2651, %v2650
          %v2663 = vpack.c.b16 %v2653, %v2652
          %v2664 = vpack.c.b16 %v2655, %v2654
          %v2665 = vpack.c.b16 %v2657, %v2656
          %2674 = vmatpush.bf16.msra.mxu0 %v2665
          %2675 = vmatpush.bf16.msra.mxu0 %v2664
          %2676 = vmatpush.bf16.msra.mxu0 %v2663
          %2677 = vmatpush.bf16.msra.mxu0 %v2662
          %2678 = vmatpush.bf16.msra.mxu0 %v2661
          %2679 = vmatpush.bf16.msra.mxu0 %v2660
          %2680 = vmatpush.bf16.msra.mxu0 %v2659
          %2681 = vmatpush.bf16.msra.mxu0 %v2658
          %2682 = vmatmul.bf16.gmra.mxu0 %v2116
          %v2683 = vpop.f32.mrf.mxu0
          %v2684 = vadd.f32 0.0, %v2683
          %v2685 = vpop.f32.mrf.mxu0
          %v2686 = vadd.f32 0.0, %v2685
          %2687 = vdwg.mxu0
          %v2688 = vadd.f32 %v2588, %v2684
          %v2689 = vadd.f32 %v2589, %v2686
          %2690 = vmatpush.bf16.msra.mxu0 %v2665
          %2691 = vmatpush.bf16.msra.mxu0 %v2664
          %2692 = vmatpush.bf16.msra.mxu0 %v2663
          %2693 = vmatpush.bf16.msra.mxu0 %v2662
          %2694 = vmatpush.bf16.msra.mxu0 %v2661
          %2695 = vmatpush.bf16.msra.mxu0 %v2660
          %2696 = vmatpush.bf16.msra.mxu0 %v2659
          %2697 = vmatpush.bf16.msra.mxu0 %v2658
          %2698 = vmatmul.bf16.gmra.mxu0 %v2625
          %v2699 = vpop.f32.mrf.mxu0
          %v2700 = vadd.f32 0.0, %v2699
          %v2701 = vpop.f32.mrf.mxu0
          %v2702 = vadd.f32 0.0, %v2701
          %2703 = vdwg.mxu0
          %v2704 = vadd.f32 %v2604, %v2700
          %v2705 = vadd.f32 %v2605, %v2702
          %s2706 = scalar_lea.vmem %s3, 512
          %v2707 = vld [vmem:[%s2706] sm:$0xf]
          %v2708 = vld [vmem:[%s2706 + $0x4] sm:$0xf]
          %v2709 = vld [vmem:[%s2706 + $0x8] sm:$0xf]
          %v2710 = vld [vmem:[%s2706 + $0xc] sm:$0xf]
          %v2711 = vld [vmem:[%s2706 + $0x10] sm:$0xf]
          %v2712 = vld [vmem:[%s2706 + $0x14] sm:$0xf]
          %v2713 = vld [vmem:[%s2706 + $0x18] sm:$0xf]
          %v2714 = vld [vmem:[%s2706 + $0x1c] sm:$0xf]
          %v2715 = vld [vmem:[%s2706 + $0x20] sm:$0xf]
          %v2716 = vld [vmem:[%s2706 + $0x24] sm:$0xf]
          %v2717 = vld [vmem:[%s2706 + $0x28] sm:$0xf]
          %v2718 = vld [vmem:[%s2706 + $0x2c] sm:$0xf]
          %v2719 = vld [vmem:[%s2706 + $0x30] sm:$0xf]
          %v2720 = vld [vmem:[%s2706 + $0x34] sm:$0xf]
          %v2721 = vld [vmem:[%s2706 + $0x38] sm:$0xf]
          %v2722 = vld [vmem:[%s2706 + $0x3c] sm:$0xf]
          %v2723 = vld [vmem:[%s2422 + $0x3] sm:$0xff]
          %v2724 = vld [vmem:[%s2422 + $0xb] sm:$0x3f]
          %v2725 = vpack.c.bf16 %v2724, %v2723
          %v2742 = vunpack.c.l.b16 %v2707
          %v2743 = vunpack.c.l.b16 %v2708
          %v2744 = vunpack.c.l.b16 %v2709
          %v2745 = vunpack.c.l.b16 %v2710
          %v2746 = vunpack.c.l.b16 %v2711
          %v2747 = vunpack.c.l.b16 %v2712
          %v2748 = vunpack.c.l.b16 %v2713
          %v2749 = vunpack.c.l.b16 %v2714
          %v2750 = vunpack.c.l.b16 %v2715
          %v2751 = vunpack.c.l.b16 %v2716
          %v2752 = vunpack.c.l.b16 %v2717
          %v2753 = vunpack.c.l.b16 %v2718
          %v2754 = vunpack.c.l.b16 %v2719
          %v2755 = vunpack.c.l.b16 %v2720
          %v2756 = vunpack.c.l.b16 %v2721
          %v2757 = vunpack.c.l.b16 %v2722
          %v2758 = vpack.c.b16 %v2743, %v2742
          %v2759 = vpack.c.b16 %v2745, %v2744
          %v2760 = vpack.c.b16 %v2747, %v2746
          %v2761 = vpack.c.b16 %v2749, %v2748
          %v2762 = vpack.c.b16 %v2751, %v2750
          %v2763 = vpack.c.b16 %v2753, %v2752
          %v2764 = vpack.c.b16 %v2755, %v2754
          %v2765 = vpack.c.b16 %v2757, %v2756
          %2774 = vmatpush.bf16.msra.mxu0 %v2765
          %2775 = vmatpush.bf16.msra.mxu0 %v2764
          %2776 = vmatpush.bf16.msra.mxu0 %v2763
          %2777 = vmatpush.bf16.msra.mxu0 %v2762
          %2778 = vmatpush.bf16.msra.mxu0 %v2761
          %2779 = vmatpush.bf16.msra.mxu0 %v2760
          %2780 = vmatpush.bf16.msra.mxu0 %v2759
          %2781 = vmatpush.bf16.msra.mxu0 %v2758
          %2782 = vmatmul.bf16.gmra.mxu0 %v2219
          %v2783 = vpop.f32.mrf.mxu0
          %v2784 = vadd.f32 0.0, %v2783
          %v2785 = vpop.f32.mrf.mxu0
          %v2786 = vadd.f32 0.0, %v2785
          %2787 = vdwg.mxu0
          %v2788 = vadd.f32 %v2688, %v2784
          %v2789 = vadd.f32 %v2689, %v2786
          %2790 = vmatpush.bf16.msra.mxu0 %v2765
          %2791 = vmatpush.bf16.msra.mxu0 %v2764
          %2792 = vmatpush.bf16.msra.mxu0 %v2763
          %2793 = vmatpush.bf16.msra.mxu0 %v2762
          %2794 = vmatpush.bf16.msra.mxu0 %v2761
          %2795 = vmatpush.bf16.msra.mxu0 %v2760
          %2796 = vmatpush.bf16.msra.mxu0 %v2759
          %2797 = vmatpush.bf16.msra.mxu0 %v2758
          %2798 = vmatmul.bf16.gmra.mxu0 %v2725
          %v2799 = vpop.f32.mrf.mxu0
          %v2800 = vadd.f32 0.0, %v2799
          %v2801 = vpop.f32.mrf.mxu0
          %v2802 = vadd.f32 0.0, %v2801
          %2803 = vdwg.mxu0
          %v2804 = vadd.f32 %v2704, %v2800
          %v2805 = vadd.f32 %v2705, %v2802
          %s2806 = scalar_lea.vmem %s3, 576
          %v2807 = vld [vmem:[%s2806] sm:$0xf]
          %v2808 = vld [vmem:[%s2806 + $0x4] sm:$0xf]
          %v2809 = vld [vmem:[%s2806 + $0x8] sm:$0xf]
          %v2810 = vld [vmem:[%s2806 + $0xc] sm:$0xf]
          %v2811 = vld [vmem:[%s2806 + $0x10] sm:$0xf]
          %v2812 = vld [vmem:[%s2806 + $0x14] sm:$0xf]
          %v2813 = vld [vmem:[%s2806 + $0x18] sm:$0xf]
          %v2814 = vld [vmem:[%s2806 + $0x1c] sm:$0xf]
          %v2815 = vld [vmem:[%s2806 + $0x20] sm:$0xf]
          %v2816 = vld [vmem:[%s2806 + $0x24] sm:$0xf]
          %v2817 = vld [vmem:[%s2806 + $0x28] sm:$0xf]
          %v2818 = vld [vmem:[%s2806 + $0x2c] sm:$0xf]
          %v2819 = vld [vmem:[%s2806 + $0x30] sm:$0xf]
          %v2820 = vld [vmem:[%s2806 + $0x34] sm:$0xf]
          %v2821 = vld [vmem:[%s2806 + $0x38] sm:$0xf]
          %v2822 = vld [vmem:[%s2806 + $0x3c] sm:$0xf]
          %v2823 = vld [vmem:[%s2422 + $0x4] sm:$0xff]
          %v2824 = vld [vmem:[%s2422 + $0xc] sm:$0x3f]
          %v2825 = vpack.c.bf16 %v2824, %v2823
          %v2842 = vunpack.c.l.b16 %v2807
          %v2843 = vunpack.c.l.b16 %v2808
          %v2844 = vunpack.c.l.b16 %v2809
          %v2845 = vunpack.c.l.b16 %v2810
          %v2846 = vunpack.c.l.b16 %v2811
          %v2847 = vunpack.c.l.b16 %v2812
          %v2848 = vunpack.c.l.b16 %v2813
          %v2849 = vunpack.c.l.b16 %v2814
          %v2850 = vunpack.c.l.b16 %v2815
          %v2851 = vunpack.c.l.b16 %v2816
          %v2852 = vunpack.c.l.b16 %v2817
          %v2853 = vunpack.c.l.b16 %v2818
          %v2854 = vunpack.c.l.b16 %v2819
          %v2855 = vunpack.c.l.b16 %v2820
          %v2856 = vunpack.c.l.b16 %v2821
          %v2857 = vunpack.c.l.b16 %v2822
          %v2858 = vpack.c.b16 %v2843, %v2842
          %v2859 = vpack.c.b16 %v2845, %v2844
          %v2860 = vpack.c.b16 %v2847, %v2846
          %v2861 = vpack.c.b16 %v2849, %v2848
          %v2862 = vpack.c.b16 %v2851, %v2850
          %v2863 = vpack.c.b16 %v2853, %v2852
          %v2864 = vpack.c.b16 %v2855, %v2854
          %v2865 = vpack.c.b16 %v2857, %v2856
          %2874 = vmatpush.bf16.msra.mxu0 %v2865
          %2875 = vmatpush.bf16.msra.mxu0 %v2864
          %2876 = vmatpush.bf16.msra.mxu0 %v2863
          %2877 = vmatpush.bf16.msra.mxu0 %v2862
          %2878 = vmatpush.bf16.msra.mxu0 %v2861
          %2879 = vmatpush.bf16.msra.mxu0 %v2860
          %2880 = vmatpush.bf16.msra.mxu0 %v2859
          %2881 = vmatpush.bf16.msra.mxu0 %v2858
          %2882 = vmatmul.bf16.gmra.mxu0 %v2322
          %v2883 = vpop.f32.mrf.mxu0
          %v2884 = vadd.f32 0.0, %v2883
          %v2885 = vpop.f32.mrf.mxu0
          %v2886 = vadd.f32 0.0, %v2885
          %2887 = vdwg.mxu0
          %v2888 = vadd.f32 %v2788, %v2884
          %v2889 = vadd.f32 %v2789, %v2886
          %2890 = vmatpush.bf16.msra.mxu0 %v2865
          %2891 = vmatpush.bf16.msra.mxu0 %v2864
          %2892 = vmatpush.bf16.msra.mxu0 %v2863
          %2893 = vmatpush.bf16.msra.mxu0 %v2862
          %2894 = vmatpush.bf16.msra.mxu0 %v2861
          %2895 = vmatpush.bf16.msra.mxu0 %v2860
          %2896 = vmatpush.bf16.msra.mxu0 %v2859
          %2897 = vmatpush.bf16.msra.mxu0 %v2858
          %2898 = vmatmul.bf16.gmra.mxu0 %v2825
          %v2899 = vpop.f32.mrf.mxu0
          %v2900 = vadd.f32 0.0, %v2899
          %v2901 = vpop.f32.mrf.mxu0
          %v2902 = vadd.f32 0.0, %v2901
          %2903 = vdwg.mxu0
          %v2904 = vadd.f32 %v2804, %v2900
          %v2905 = vadd.f32 %v2805, %v2902
          %s2906 = scalar_lea.vmem %s3, 640
          %v2907 = vld [vmem:[%s2906] sm:$0xf]
          %v2908 = vld [vmem:[%s2906 + $0x4] sm:$0xf]
          %v2909 = vld [vmem:[%s2906 + $0x8] sm:$0xf]
          %v2910 = vld [vmem:[%s2906 + $0xc] sm:$0xf]
          %v2911 = vld [vmem:[%s2906 + $0x10] sm:$0xf]
          %v2912 = vld [vmem:[%s2906 + $0x14] sm:$0xf]
          %v2913 = vld [vmem:[%s2906 + $0x18] sm:$0xf]
          %v2914 = vld [vmem:[%s2906 + $0x1c] sm:$0xf]
          %v2915 = vld [vmem:[%s2906 + $0x20] sm:$0xf]
          %v2916 = vld [vmem:[%s2906 + $0x24] sm:$0xf]
          %v2917 = vld [vmem:[%s2906 + $0x28] sm:$0xf]
          %v2918 = vld [vmem:[%s2906 + $0x2c] sm:$0xf]
          %v2919 = vld [vmem:[%s2906 + $0x30] sm:$0xf]
          %v2920 = vld [vmem:[%s2906 + $0x34] sm:$0xf]
          %v2921 = vld [vmem:[%s2906 + $0x38] sm:$0xf]
          %v2922 = vld [vmem:[%s2906 + $0x3c] sm:$0xf]
          %s2923 = sadd.s32 %s1907, 3
          %s2924 = smul.u32 %s2923, 24
          %s2925 = scalar_lea.vmem [#allocation4], %s2924
          %v2926 = vld [vmem:[%s2925] sm:$0xff]
          %v2927 = vld [vmem:[%s2925 + $0x8] sm:$0x3f]
          %v2928 = vpack.c.bf16 %v2927, %v2926
          %v2945 = vunpack.c.l.b16 %v2907
          %v2946 = vunpack.c.l.b16 %v2908
          %v2947 = vunpack.c.l.b16 %v2909
          %v2948 = vunpack.c.l.b16 %v2910
          %v2949 = vunpack.c.l.b16 %v2911
          %v2950 = vunpack.c.l.b16 %v2912
          %v2951 = vunpack.c.l.b16 %v2913
          %v2952 = vunpack.c.l.b16 %v2914
          %v2953 = vunpack.c.l.b16 %v2915
          %v2954 = vunpack.c.l.b16 %v2916
          %v2955 = vunpack.c.l.b16 %v2917
          %v2956 = vunpack.c.l.b16 %v2918
          %v2957 = vunpack.c.l.b16 %v2919
          %v2958 = vunpack.c.l.b16 %v2920
          %v2959 = vunpack.c.l.b16 %v2921
          %v2960 = vunpack.c.l.b16 %v2922
          %v2961 = vpack.c.b16 %v2946, %v2945
          %v2962 = vpack.c.b16 %v2948, %v2947
          %v2963 = vpack.c.b16 %v2950, %v2949
          %v2964 = vpack.c.b16 %v2952, %v2951
          %v2965 = vpack.c.b16 %v2954, %v2953
          %v2966 = vpack.c.b16 %v2956, %v2955
          %v2967 = vpack.c.b16 %v2958, %v2957
          %v2968 = vpack.c.b16 %v2960, %v2959
          %2977 = vmatpush.bf16.msra.mxu0 %v2968
          %2978 = vmatpush.bf16.msra.mxu0 %v2967
          %2979 = vmatpush.bf16.msra.mxu0 %v2966
          %2980 = vmatpush.bf16.msra.mxu0 %v2965
          %2981 = vmatpush.bf16.msra.mxu0 %v2964
          %2982 = vmatpush.bf16.msra.mxu0 %v2963
          %2983 = vmatpush.bf16.msra.mxu0 %v2962
          %2984 = vmatpush.bf16.msra.mxu0 %v2961
          %2985 = vmatmul.bf16.gmra.mxu0 %v2425
          %v2986 = vpop.f32.mrf.mxu0
          %v2987 = vadd.f32 0.0, %v2986
          %v2988 = vpop.f32.mrf.mxu0
          %v2989 = vadd.f32 0.0, %v2988
          %2990 = vdwg.mxu0
          %v2991 = vadd.f32 %v2888, %v2987
          %v2992 = vadd.f32 %v2889, %v2989
          %2993 = vmatpush.bf16.msra.mxu0 %v2968
          %2994 = vmatpush.bf16.msra.mxu0 %v2967
          %2995 = vmatpush.bf16.msra.mxu0 %v2966
          %2996 = vmatpush.bf16.msra.mxu0 %v2965
          %2997 = vmatpush.bf16.msra.mxu0 %v2964
          %2998 = vmatpush.bf16.msra.mxu0 %v2963
          %2999 = vmatpush.bf16.msra.mxu0 %v2962
          %3000 = vmatpush.bf16.msra.mxu0 %v2961
          %3001 = vmatmul.bf16.gmra.mxu0 %v2928
          %v3002 = vpop.f32.mrf.mxu0
          %v3003 = vadd.f32 0.0, %v3002
          %v3004 = vpop.f32.mrf.mxu0
          %v3005 = vadd.f32 0.0, %v3004
          %3006 = vdwg.mxu0
          %v3007 = vadd.f32 %v2904, %v3003
          %v3008 = vadd.f32 %v2905, %v3005
          %s3009 = scalar_lea.vmem %s3, 704
          %v3010 = vld [vmem:[%s3009] sm:$0xf]
          %v3011 = vld [vmem:[%s3009 + $0x4] sm:$0xf]
          %v3012 = vld [vmem:[%s3009 + $0x8] sm:$0xf]
          %v3013 = vld [vmem:[%s3009 + $0xc] sm:$0xf]
          %v3014 = vld [vmem:[%s3009 + $0x10] sm:$0xf]
          %v3015 = vld [vmem:[%s3009 + $0x14] sm:$0xf]
          %v3016 = vld [vmem:[%s3009 + $0x18] sm:$0xf]
          %v3017 = vld [vmem:[%s3009 + $0x1c] sm:$0xf]
          %v3018 = vld [vmem:[%s3009 + $0x20] sm:$0xf]
          %v3019 = vld [vmem:[%s3009 + $0x24] sm:$0xf]
          %v3020 = vld [vmem:[%s3009 + $0x28] sm:$0xf]
          %v3021 = vld [vmem:[%s3009 + $0x2c] sm:$0xf]
          %v3022 = vld [vmem:[%s3009 + $0x30] sm:$0xf]
          %v3023 = vld [vmem:[%s3009 + $0x34] sm:$0xf]
          %v3024 = vld [vmem:[%s3009 + $0x38] sm:$0xf]
          %v3025 = vld [vmem:[%s3009 + $0x3c] sm:$0xf]
          %v3026 = vld [vmem:[%s2925 + $0x1] sm:$0xff]
          %v3027 = vld [vmem:[%s2925 + $0x9] sm:$0x3f]
          %v3028 = vpack.c.bf16 %v3027, %v3026
          %v3045 = vunpack.c.l.b16 %v3010
          %v3046 = vunpack.c.l.b16 %v3011
          %v3047 = vunpack.c.l.b16 %v3012
          %v3048 = vunpack.c.l.b16 %v3013
          %v3049 = vunpack.c.l.b16 %v3014
          %v3050 = vunpack.c.l.b16 %v3015
          %v3051 = vunpack.c.l.b16 %v3016
          %v3052 = vunpack.c.l.b16 %v3017
          %v3053 = vunpack.c.l.b16 %v3018
          %v3054 = vunpack.c.l.b16 %v3019
          %v3055 = vunpack.c.l.b16 %v3020
          %v3056 = vunpack.c.l.b16 %v3021
          %v3057 = vunpack.c.l.b16 %v3022
          %v3058 = vunpack.c.l.b16 %v3023
          %v3059 = vunpack.c.l.b16 %v3024
          %v3060 = vunpack.c.l.b16 %v3025
          %v3061 = vpack.c.b16 %v3046, %v3045
          %v3062 = vpack.c.b16 %v3048, %v3047
          %v3063 = vpack.c.b16 %v3050, %v3049
          %v3064 = vpack.c.b16 %v3052, %v3051
          %v3065 = vpack.c.b16 %v3054, %v3053
          %v3066 = vpack.c.b16 %v3056, %v3055
          %v3067 = vpack.c.b16 %v3058, %v3057
          %v3068 = vpack.c.b16 %v3060, %v3059
          %3077 = vmatpush.bf16.msra.mxu0 %v3068
          %3078 = vmatpush.bf16.msra.mxu0 %v3067
          %3079 = vmatpush.bf16.msra.mxu0 %v3066
          %3080 = vmatpush.bf16.msra.mxu0 %v3065
          %3081 = vmatpush.bf16.msra.mxu0 %v3064
          %3082 = vmatpush.bf16.msra.mxu0 %v3063
          %3083 = vmatpush.bf16.msra.mxu0 %v3062
          %3084 = vmatpush.bf16.msra.mxu0 %v3061
          %3085 = vmatmul.bf16.gmra.mxu0 %v2525
          %v3086 = vpop.f32.mrf.mxu0
          %v3087 = vadd.f32 0.0, %v3086
          %v3088 = vpop.f32.mrf.mxu0
          %v3089 = vadd.f32 0.0, %v3088
          %3090 = vdwg.mxu0
          %v3091 = vadd.f32 %v2991, %v3087
          %v3092 = vadd.f32 %v2992, %v3089
          %3093 = vmatpush.bf16.msra.mxu0 %v3068
          %3094 = vmatpush.bf16.msra.mxu0 %v3067
          %3095 = vmatpush.bf16.msra.mxu0 %v3066
          %3096 = vmatpush.bf16.msra.mxu0 %v3065
          %3097 = vmatpush.bf16.msra.mxu0 %v3064
          %3098 = vmatpush.bf16.msra.mxu0 %v3063
          %3099 = vmatpush.bf16.msra.mxu0 %v3062
          %3100 = vmatpush.bf16.msra.mxu0 %v3061
          %3101 = vmatmul.bf16.gmra.mxu0 %v3028
          %v3102 = vpop.f32.mrf.mxu0
          %v3103 = vadd.f32 0.0, %v3102
          %v3104 = vpop.f32.mrf.mxu0
          %v3105 = vadd.f32 0.0, %v3104
          %3106 = vdwg.mxu0
          %v3107 = vadd.f32 %v3007, %v3103
          %v3108 = vadd.f32 %v3008, %v3105
          %s3109 = scalar_lea.vmem %s3, 768
          %v3110 = vld [vmem:[%s3109] sm:$0xf]
          %v3111 = vld [vmem:[%s3109 + $0x4] sm:$0xf]
          %v3112 = vld [vmem:[%s3109 + $0x8] sm:$0xf]
          %v3113 = vld [vmem:[%s3109 + $0xc] sm:$0xf]
          %v3114 = vld [vmem:[%s3109 + $0x10] sm:$0xf]
          %v3115 = vld [vmem:[%s3109 + $0x14] sm:$0xf]
          %v3116 = vld [vmem:[%s3109 + $0x18] sm:$0xf]
          %v3117 = vld [vmem:[%s3109 + $0x1c] sm:$0xf]
          %v3118 = vld [vmem:[%s3109 + $0x20] sm:$0xf]
          %v3119 = vld [vmem:[%s3109 + $0x24] sm:$0xf]
          %v3120 = vld [vmem:[%s3109 + $0x28] sm:$0xf]
          %v3121 = vld [vmem:[%s3109 + $0x2c] sm:$0xf]
          %v3122 = vld [vmem:[%s3109 + $0x30] sm:$0xf]
          %v3123 = vld [vmem:[%s3109 + $0x34] sm:$0xf]
          %v3124 = vld [vmem:[%s3109 + $0x38] sm:$0xf]
          %v3125 = vld [vmem:[%s3109 + $0x3c] sm:$0xf]
          %v3126 = vld [vmem:[%s2925 + $0x2] sm:$0xff]
          %v3127 = vld [vmem:[%s2925 + $0xa] sm:$0x3f]
          %v3128 = vpack.c.bf16 %v3127, %v3126
          %v3145 = vunpack.c.l.b16 %v3110
          %v3146 = vunpack.c.l.b16 %v3111
          %v3147 = vunpack.c.l.b16 %v3112
          %v3148 = vunpack.c.l.b16 %v3113
          %v3149 = vunpack.c.l.b16 %v3114
          %v3150 = vunpack.c.l.b16 %v3115
          %v3151 = vunpack.c.l.b16 %v3116
          %v3152 = vunpack.c.l.b16 %v3117
          %v3153 = vunpack.c.l.b16 %v3118
          %v3154 = vunpack.c.l.b16 %v3119
          %v3155 = vunpack.c.l.b16 %v3120
          %v3156 = vunpack.c.l.b16 %v3121
          %v3157 = vunpack.c.l.b16 %v3122
          %v3158 = vunpack.c.l.b16 %v3123
          %v3159 = vunpack.c.l.b16 %v3124
          %v3160 = vunpack.c.l.b16 %v3125
          %v3161 = vpack.c.b16 %v3146, %v3145
          %v3162 = vpack.c.b16 %v3148, %v3147
          %v3163 = vpack.c.b16 %v3150, %v3149
          %v3164 = vpack.c.b16 %v3152, %v3151
          %v3165 = vpack.c.b16 %v3154, %v3153
          %v3166 = vpack.c.b16 %v3156, %v3155
          %v3167 = vpack.c.b16 %v3158, %v3157
          %v3168 = vpack.c.b16 %v3160, %v3159
          %3177 = vmatpush.bf16.msra.mxu0 %v3168
          %3178 = vmatpush.bf16.msra.mxu0 %v3167
          %3179 = vmatpush.bf16.msra.mxu0 %v3166
          %3180 = vmatpush.bf16.msra.mxu0 %v3165
          %3181 = vmatpush.bf16.msra.mxu0 %v3164
          %3182 = vmatpush.bf16.msra.mxu0 %v3163
          %3183 = vmatpush.bf16.msra.mxu0 %v3162
          %3184 = vmatpush.bf16.msra.mxu0 %v3161
          %3185 = vmatmul.bf16.gmra.mxu0 %v2625
          %v3186 = vpop.f32.mrf.mxu0
          %v3187 = vadd.f32 0.0, %v3186
          %v3188 = vpop.f32.mrf.mxu0
          %v3189 = vadd.f32 0.0, %v3188
          %3190 = vdwg.mxu0
          %v3191 = vadd.f32 %v3091, %v3187
          %v3192 = vadd.f32 %v3092, %v3189
          %3193 = vmatpush.bf16.msra.mxu0 %v3168
          %3194 = vmatpush.bf16.msra.mxu0 %v3167
          %3195 = vmatpush.bf16.msra.mxu0 %v3166
          %3196 = vmatpush.bf16.msra.mxu0 %v3165
          %3197 = vmatpush.bf16.msra.mxu0 %v3164
          %3198 = vmatpush.bf16.msra.mxu0 %v3163
          %3199 = vmatpush.bf16.msra.mxu0 %v3162
          %3200 = vmatpush.bf16.msra.mxu0 %v3161
          %3201 = vmatmul.bf16.gmra.mxu0 %v3128
          %v3202 = vpop.f32.mrf.mxu0
          %v3203 = vadd.f32 0.0, %v3202
          %v3204 = vpop.f32.mrf.mxu0
          %v3205 = vadd.f32 0.0, %v3204
          %3206 = vdwg.mxu0
          %v3207 = vadd.f32 %v3107, %v3203
          %v3208 = vadd.f32 %v3108, %v3205
          %s3209 = scalar_lea.vmem %s3, 832
          %v3210 = vld [vmem:[%s3209] sm:$0xf]
          %v3211 = vld [vmem:[%s3209 + $0x4] sm:$0xf]
          %v3212 = vld [vmem:[%s3209 + $0x8] sm:$0xf]
          %v3213 = vld [vmem:[%s3209 + $0xc] sm:$0xf]
          %v3214 = vld [vmem:[%s3209 + $0x10] sm:$0xf]
          %v3215 = vld [vmem:[%s3209 + $0x14] sm:$0xf]
          %v3216 = vld [vmem:[%s3209 + $0x18] sm:$0xf]
          %v3217 = vld [vmem:[%s3209 + $0x1c] sm:$0xf]
          %v3218 = vld [vmem:[%s3209 + $0x20] sm:$0xf]
          %v3219 = vld [vmem:[%s3209 + $0x24] sm:$0xf]
          %v3220 = vld [vmem:[%s3209 + $0x28] sm:$0xf]
          %v3221 = vld [vmem:[%s3209 + $0x2c] sm:$0xf]
          %v3222 = vld [vmem:[%s3209 + $0x30] sm:$0xf]
          %v3223 = vld [vmem:[%s3209 + $0x34] sm:$0xf]
          %v3224 = vld [vmem:[%s3209 + $0x38] sm:$0xf]
          %v3225 = vld [vmem:[%s3209 + $0x3c] sm:$0xf]
          %v3226 = vld [vmem:[%s2925 + $0x3] sm:$0xff]
          %v3227 = vld [vmem:[%s2925 + $0xb] sm:$0x3f]
          %v3228 = vpack.c.bf16 %v3227, %v3226
          %v3245 = vunpack.c.l.b16 %v3210
          %v3246 = vunpack.c.l.b16 %v3211
          %v3247 = vunpack.c.l.b16 %v3212
          %v3248 = vunpack.c.l.b16 %v3213
          %v3249 = vunpack.c.l.b16 %v3214
          %v3250 = vunpack.c.l.b16 %v3215
          %v3251 = vunpack.c.l.b16 %v3216
          %v3252 = vunpack.c.l.b16 %v3217
          %v3253 = vunpack.c.l.b16 %v3218
          %v3254 = vunpack.c.l.b16 %v3219
          %v3255 = vunpack.c.l.b16 %v3220
          %v3256 = vunpack.c.l.b16 %v3221
          %v3257 = vunpack.c.l.b16 %v3222
          %v3258 = vunpack.c.l.b16 %v3223
          %v3259 = vunpack.c.l.b16 %v3224
          %v3260 = vunpack.c.l.b16 %v3225
          %v3261 = vpack.c.b16 %v3246, %v3245
          %v3262 = vpack.c.b16 %v3248, %v3247
          %v3263 = vpack.c.b16 %v3250, %v3249
          %v3264 = vpack.c.b16 %v3252, %v3251
          %v3265 = vpack.c.b16 %v3254, %v3253
          %v3266 = vpack.c.b16 %v3256, %v3255
          %v3267 = vpack.c.b16 %v3258, %v3257
          %v3268 = vpack.c.b16 %v3260, %v3259
          %3277 = vmatpush.bf16.msra.mxu0 %v3268
          %3278 = vmatpush.bf16.msra.mxu0 %v3267
          %3279 = vmatpush.bf16.msra.mxu0 %v3266
          %3280 = vmatpush.bf16.msra.mxu0 %v3265
          %3281 = vmatpush.bf16.msra.mxu0 %v3264
          %3282 = vmatpush.bf16.msra.mxu0 %v3263
          %3283 = vmatpush.bf16.msra.mxu0 %v3262
          %3284 = vmatpush.bf16.msra.mxu0 %v3261
          %3285 = vmatmul.bf16.gmra.mxu0 %v2725
          %v3286 = vpop.f32.mrf.mxu0
          %v3287 = vadd.f32 0.0, %v3286
          %v3288 = vpop.f32.mrf.mxu0
          %v3289 = vadd.f32 0.0, %v3288
          %3290 = vdwg.mxu0
          %v3291 = vadd.f32 %v3191, %v3287
          %v3292 = vadd.f32 %v3192, %v3289
          %3293 = vmatpush.bf16.msra.mxu0 %v3268
          %3294 = vmatpush.bf16.msra.mxu0 %v3267
          %3295 = vmatpush.bf16.msra.mxu0 %v3266
          %3296 = vmatpush.bf16.msra.mxu0 %v3265
          %3297 = vmatpush.bf16.msra.mxu0 %v3264
          %3298 = vmatpush.bf16.msra.mxu0 %v3263
          %3299 = vmatpush.bf16.msra.mxu0 %v3262
          %3300 = vmatpush.bf16.msra.mxu0 %v3261
          %3301 = vmatmul.bf16.gmra.mxu0 %v3228
          %v3302 = vpop.f32.mrf.mxu0
          %v3303 = vadd.f32 0.0, %v3302
          %v3304 = vpop.f32.mrf.mxu0
          %v3305 = vadd.f32 0.0, %v3304
          %3306 = vdwg.mxu0
          %v3307 = vadd.f32 %v3207, %v3303
          %v3308 = vadd.f32 %v3208, %v3305
          %s3309 = scalar_lea.vmem %s3, 896
          %v3310 = vld [vmem:[%s3309] sm:$0xf]
          %v3311 = vld [vmem:[%s3309 + $0x4] sm:$0xf]
          %v3312 = vld [vmem:[%s3309 + $0x8] sm:$0xf]
          %v3313 = vld [vmem:[%s3309 + $0xc] sm:$0xf]
          %v3314 = vld [vmem:[%s3309 + $0x10] sm:$0xf]
          %v3315 = vld [vmem:[%s3309 + $0x14] sm:$0xf]
          %v3316 = vld [vmem:[%s3309 + $0x18] sm:$0xf]
          %v3317 = vld [vmem:[%s3309 + $0x1c] sm:$0xf]
          %v3318 = vld [vmem:[%s3309 + $0x20] sm:$0xf]
          %v3319 = vld [vmem:[%s3309 + $0x24] sm:$0xf]
          %v3320 = vld [vmem:[%s3309 + $0x28] sm:$0xf]
          %v3321 = vld [vmem:[%s3309 + $0x2c] sm:$0xf]
          %v3322 = vld [vmem:[%s3309 + $0x30] sm:$0xf]
          %v3323 = vld [vmem:[%s3309 + $0x34] sm:$0xf]
          %v3324 = vld [vmem:[%s3309 + $0x38] sm:$0xf]
          %v3325 = vld [vmem:[%s3309 + $0x3c] sm:$0xf]
          %v3326 = vld [vmem:[%s2925 + $0x4] sm:$0xff]
          %v3327 = vld [vmem:[%s2925 + $0xc] sm:$0x3f]
          %v3328 = vpack.c.bf16 %v3327, %v3326
          %v3345 = vunpack.c.l.b16 %v3310
          %v3346 = vunpack.c.l.b16 %v3311
          %v3347 = vunpack.c.l.b16 %v3312
          %v3348 = vunpack.c.l.b16 %v3313
          %v3349 = vunpack.c.l.b16 %v3314
          %v3350 = vunpack.c.l.b16 %v3315
          %v3351 = vunpack.c.l.b16 %v3316
          %v3352 = vunpack.c.l.b16 %v3317
          %v3353 = vunpack.c.l.b16 %v3318
          %v3354 = vunpack.c.l.b16 %v3319
          %v3355 = vunpack.c.l.b16 %v3320
          %v3356 = vunpack.c.l.b16 %v3321
          %v3357 = vunpack.c.l.b16 %v3322
          %v3358 = vunpack.c.l.b16 %v3323
          %v3359 = vunpack.c.l.b16 %v3324
          %v3360 = vunpack.c.l.b16 %v3325
          %v3361 = vpack.c.b16 %v3346, %v3345
          %v3362 = vpack.c.b16 %v3348, %v3347
          %v3363 = vpack.c.b16 %v3350, %v3349
          %v3364 = vpack.c.b16 %v3352, %v3351
          %v3365 = vpack.c.b16 %v3354, %v3353
          %v3366 = vpack.c.b16 %v3356, %v3355
          %v3367 = vpack.c.b16 %v3358, %v3357
          %v3368 = vpack.c.b16 %v3360, %v3359
          %3377 = vmatpush.bf16.msra.mxu0 %v3368
          %3378 = vmatpush.bf16.msra.mxu0 %v3367
          %3379 = vmatpush.bf16.msra.mxu0 %v3366
          %3380 = vmatpush.bf16.msra.mxu0 %v3365
          %3381 = vmatpush.bf16.msra.mxu0 %v3364
          %3382 = vmatpush.bf16.msra.mxu0 %v3363
          %3383 = vmatpush.bf16.msra.mxu0 %v3362
          %3384 = vmatpush.bf16.msra.mxu0 %v3361
          %3385 = vmatmul.bf16.gmra.mxu0 %v2825
          %v3386 = vpop.f32.mrf.mxu0
          %v3387 = vadd.f32 0.0, %v3386
          %v3388 = vpop.f32.mrf.mxu0
          %v3389 = vadd.f32 0.0, %v3388
          %3390 = vdwg.mxu0
          %v3391 = vadd.f32 %v3291, %v3387
          %v3392 = vadd.f32 %v3292, %v3389
          %3393 = vmatpush.bf16.msra.mxu0 %v3368
          %3394 = vmatpush.bf16.msra.mxu0 %v3367
          %3395 = vmatpush.bf16.msra.mxu0 %v3366
          %3396 = vmatpush.bf16.msra.mxu0 %v3365
          %3397 = vmatpush.bf16.msra.mxu0 %v3364
          %3398 = vmatpush.bf16.msra.mxu0 %v3363
          %3399 = vmatpush.bf16.msra.mxu0 %v3362
          %3400 = vmatpush.bf16.msra.mxu0 %v3361
          %3401 = vmatmul.bf16.gmra.mxu0 %v3328
          %v3402 = vpop.f32.mrf.mxu0
          %v3403 = vadd.f32 0.0, %v3402
          %v3404 = vpop.f32.mrf.mxu0
          %v3405 = vadd.f32 0.0, %v3404
          %3406 = vdwg.mxu0
          %v3407 = vadd.f32 %v3307, %v3403
          %v3408 = vadd.f32 %v3308, %v3405
          %s3409 = scalar_lea.vmem %s3, 960
          %v3410 = vld [vmem:[%s3409] sm:$0xf]
          %v3411 = vld [vmem:[%s3409 + $0x4] sm:$0xf]
          %v3412 = vld [vmem:[%s3409 + $0x8] sm:$0xf]
          %v3413 = vld [vmem:[%s3409 + $0xc] sm:$0xf]
          %v3414 = vld [vmem:[%s3409 + $0x10] sm:$0xf]
          %v3415 = vld [vmem:[%s3409 + $0x14] sm:$0xf]
          %v3416 = vld [vmem:[%s3409 + $0x18] sm:$0xf]
          %v3417 = vld [vmem:[%s3409 + $0x1c] sm:$0xf]
          %v3418 = vld [vmem:[%s3409 + $0x20] sm:$0xf]
          %v3419 = vld [vmem:[%s3409 + $0x24] sm:$0xf]
          %v3420 = vld [vmem:[%s3409 + $0x28] sm:$0xf]
          %v3421 = vld [vmem:[%s3409 + $0x2c] sm:$0xf]
          %v3422 = vld [vmem:[%s3409 + $0x30] sm:$0xf]
          %v3423 = vld [vmem:[%s3409 + $0x34] sm:$0xf]
          %v3424 = vld [vmem:[%s3409 + $0x38] sm:$0xf]
          %v3425 = vld [vmem:[%s3409 + $0x3c] sm:$0xf]
          %s3426 = sadd.s32 %s1907, 4
          %s3427 = smul.u32 %s3426, 24
          %s3428 = scalar_lea.vmem [#allocation4], %s3427
          %v3429 = vld [vmem:[%s3428] sm:$0xff]
          %v3430 = vld [vmem:[%s3428 + $0x8] sm:$0x3f]
          %v3431 = vpack.c.bf16 %v3430, %v3429
          %v3448 = vunpack.c.l.b16 %v3410
          %v3449 = vunpack.c.l.b16 %v3411
          %v3450 = vunpack.c.l.b16 %v3412
          %v3451 = vunpack.c.l.b16 %v3413
          %v3452 = vunpack.c.l.b16 %v3414
          %v3453 = vunpack.c.l.b16 %v3415
          %v3454 = vunpack.c.l.b16 %v3416
          %v3455 = vunpack.c.l.b16 %v3417
          %v3456 = vunpack.c.l.b16 %v3418
          %v3457 = vunpack.c.l.b16 %v3419
          %v3458 = vunpack.c.l.b16 %v3420
          %v3459 = vunpack.c.l.b16 %v3421
          %v3460 = vunpack.c.l.b16 %v3422
          %v3461 = vunpack.c.l.b16 %v3423
          %v3462 = vunpack.c.l.b16 %v3424
          %v3463 = vunpack.c.l.b16 %v3425
          %v3464 = vpack.c.b16 %v3449, %v3448
          %v3465 = vpack.c.b16 %v3451, %v3450
          %v3466 = vpack.c.b16 %v3453, %v3452
          %v3467 = vpack.c.b16 %v3455, %v3454
          %v3468 = vpack.c.b16 %v3457, %v3456
          %v3469 = vpack.c.b16 %v3459, %v3458
          %v3470 = vpack.c.b16 %v3461, %v3460
          %v3471 = vpack.c.b16 %v3463, %v3462
          %3480 = vmatpush.bf16.msra.mxu0 %v3471
          %3481 = vmatpush.bf16.msra.mxu0 %v3470
          %3482 = vmatpush.bf16.msra.mxu0 %v3469
          %3483 = vmatpush.bf16.msra.mxu0 %v3468
          %3484 = vmatpush.bf16.msra.mxu0 %v3467
          %3485 = vmatpush.bf16.msra.mxu0 %v3466
          %3486 = vmatpush.bf16.msra.mxu0 %v3465
          %3487 = vmatpush.bf16.msra.mxu0 %v3464
          %3488 = vmatmul.bf16.gmra.mxu0 %v2928
          %v3489 = vpop.f32.mrf.mxu0
          %v3490 = vadd.f32 0.0, %v3489
          %v3491 = vpop.f32.mrf.mxu0
          %v3492 = vadd.f32 0.0, %v3491
          %3493 = vdwg.mxu0
          %v3494 = vadd.f32 %v3391, %v3490
          %v3495 = vadd.f32 %v3392, %v3492
          %3496 = vmatpush.bf16.msra.mxu0 %v3471
          %3497 = vmatpush.bf16.msra.mxu0 %v3470
          %3498 = vmatpush.bf16.msra.mxu0 %v3469
          %3499 = vmatpush.bf16.msra.mxu0 %v3468
          %3500 = vmatpush.bf16.msra.mxu0 %v3467
          %3501 = vmatpush.bf16.msra.mxu0 %v3466
          %3502 = vmatpush.bf16.msra.mxu0 %v3465
          %3503 = vmatpush.bf16.msra.mxu0 %v3464
          %3504 = vmatmul.bf16.gmra.mxu0 %v3431
          %v3505 = vpop.f32.mrf.mxu0
          %v3506 = vadd.f32 0.0, %v3505
          %v3507 = vpop.f32.mrf.mxu0
          %v3508 = vadd.f32 0.0, %v3507
          %3509 = vdwg.mxu0
          %v3510 = vadd.f32 %v3407, %v3506
          %v3511 = vadd.f32 %v3408, %v3508
          %s3512 = scalar_lea.vmem %s3, 1024
          %v3513 = vld [vmem:[%s3512] sm:$0xf]
          %v3514 = vld [vmem:[%s3512 + $0x4] sm:$0xf]
          %v3515 = vld [vmem:[%s3512 + $0x8] sm:$0xf]
          %v3516 = vld [vmem:[%s3512 + $0xc] sm:$0xf]
          %v3517 = vld [vmem:[%s3512 + $0x10] sm:$0xf]
          %v3518 = vld [vmem:[%s3512 + $0x14] sm:$0xf]
          %v3519 = vld [vmem:[%s3512 + $0x18] sm:$0xf]
          %v3520 = vld [vmem:[%s3512 + $0x1c] sm:$0xf]
          %v3521 = vld [vmem:[%s3512 + $0x20] sm:$0xf]
          %v3522 = vld [vmem:[%s3512 + $0x24] sm:$0xf]
          %v3523 = vld [vmem:[%s3512 + $0x28] sm:$0xf]
          %v3524 = vld [vmem:[%s3512 + $0x2c] sm:$0xf]
          %v3525 = vld [vmem:[%s3512 + $0x30] sm:$0xf]
          %v3526 = vld [vmem:[%s3512 + $0x34] sm:$0xf]
          %v3527 = vld [vmem:[%s3512 + $0x38] sm:$0xf]
          %v3528 = vld [vmem:[%s3512 + $0x3c] sm:$0xf]
          %v3529 = vld [vmem:[%s3428 + $0x1] sm:$0xff]
          %v3530 = vld [vmem:[%s3428 + $0x9] sm:$0x3f]
          %v3531 = vpack.c.bf16 %v3530, %v3529
          %v3548 = vunpack.c.l.b16 %v3513
          %v3549 = vunpack.c.l.b16 %v3514
          %v3550 = vunpack.c.l.b16 %v3515
          %v3551 = vunpack.c.l.b16 %v3516
          %v3552 = vunpack.c.l.b16 %v3517
          %v3553 = vunpack.c.l.b16 %v3518
          %v3554 = vunpack.c.l.b16 %v3519
          %v3555 = vunpack.c.l.b16 %v3520
          %v3556 = vunpack.c.l.b16 %v3521
          %v3557 = vunpack.c.l.b16 %v3522
          %v3558 = vunpack.c.l.b16 %v3523
          %v3559 = vunpack.c.l.b16 %v3524
          %v3560 = vunpack.c.l.b16 %v3525
          %v3561 = vunpack.c.l.b16 %v3526
          %v3562 = vunpack.c.l.b16 %v3527
          %v3563 = vunpack.c.l.b16 %v3528
          %v3564 = vpack.c.b16 %v3549, %v3548
          %v3565 = vpack.c.b16 %v3551, %v3550
          %v3566 = vpack.c.b16 %v3553, %v3552
          %v3567 = vpack.c.b16 %v3555, %v3554
          %v3568 = vpack.c.b16 %v3557, %v3556
          %v3569 = vpack.c.b16 %v3559, %v3558
          %v3570 = vpack.c.b16 %v3561, %v3560
          %v3571 = vpack.c.b16 %v3563, %v3562
          %3580 = vmatpush.bf16.msra.mxu0 %v3571
          %3581 = vmatpush.bf16.msra.mxu0 %v3570
          %3582 = vmatpush.bf16.msra.mxu0 %v3569
          %3583 = vmatpush.bf16.msra.mxu0 %v3568
          %3584 = vmatpush.bf16.msra.mxu0 %v3567
          %3585 = vmatpush.bf16.msra.mxu0 %v3566
          %3586 = vmatpush.bf16.msra.mxu0 %v3565
          %3587 = vmatpush.bf16.msra.mxu0 %v3564
          %3588 = vmatmul.bf16.gmra.mxu0 %v3028
          %v3589 = vpop.f32.mrf.mxu0
          %v3590 = vadd.f32 0.0, %v3589
          %v3591 = vpop.f32.mrf.mxu0
          %v3592 = vadd.f32 0.0, %v3591
          %3593 = vdwg.mxu0
          %v3594 = vadd.f32 %v3494, %v3590
          %v3595 = vadd.f32 %v3495, %v3592
          %3596 = vmatpush.bf16.msra.mxu0 %v3571
          %3597 = vmatpush.bf16.msra.mxu0 %v3570
          %3598 = vmatpush.bf16.msra.mxu0 %v3569
          %3599 = vmatpush.bf16.msra.mxu0 %v3568
          %3600 = vmatpush.bf16.msra.mxu0 %v3567
          %3601 = vmatpush.bf16.msra.mxu0 %v3566
          %3602 = vmatpush.bf16.msra.mxu0 %v3565
          %3603 = vmatpush.bf16.msra.mxu0 %v3564
          %3604 = vmatmul.bf16.gmra.mxu0 %v3531
          %v3605 = vpop.f32.mrf.mxu0
          %v3606 = vadd.f32 0.0, %v3605
          %v3607 = vpop.f32.mrf.mxu0
          %v3608 = vadd.f32 0.0, %v3607
          %3609 = vdwg.mxu0
          %v3610 = vadd.f32 %v3510, %v3606
          %v3611 = vadd.f32 %v3511, %v3608
          %s3612 = scalar_lea.vmem %s3, 1088
          %v3613 = vld [vmem:[%s3612] sm:$0xf]
          %v3614 = vld [vmem:[%s3612 + $0x4] sm:$0xf]
          %v3615 = vld [vmem:[%s3612 + $0x8] sm:$0xf]
          %v3616 = vld [vmem:[%s3612 + $0xc] sm:$0xf]
          %v3617 = vld [vmem:[%s3612 + $0x10] sm:$0xf]
          %v3618 = vld [vmem:[%s3612 + $0x14] sm:$0xf]
          %v3619 = vld [vmem:[%s3612 + $0x18] sm:$0xf]
          %v3620 = vld [vmem:[%s3612 + $0x1c] sm:$0xf]
          %v3621 = vld [vmem:[%s3612 + $0x20] sm:$0xf]
          %v3622 = vld [vmem:[%s3612 + $0x24] sm:$0xf]
          %v3623 = vld [vmem:[%s3612 + $0x28] sm:$0xf]
          %v3624 = vld [vmem:[%s3612 + $0x2c] sm:$0xf]
          %v3625 = vld [vmem:[%s3612 + $0x30] sm:$0xf]
          %v3626 = vld [vmem:[%s3612 + $0x34] sm:$0xf]
          %v3627 = vld [vmem:[%s3612 + $0x38] sm:$0xf]
          %v3628 = vld [vmem:[%s3612 + $0x3c] sm:$0xf]
          %v3629 = vld [vmem:[%s3428 + $0x2] sm:$0xff]
          %v3630 = vld [vmem:[%s3428 + $0xa] sm:$0x3f]
          %v3631 = vpack.c.bf16 %v3630, %v3629
          %v3648 = vunpack.c.l.b16 %v3613
          %v3649 = vunpack.c.l.b16 %v3614
          %v3650 = vunpack.c.l.b16 %v3615
          %v3651 = vunpack.c.l.b16 %v3616
          %v3652 = vunpack.c.l.b16 %v3617
          %v3653 = vunpack.c.l.b16 %v3618
          %v3654 = vunpack.c.l.b16 %v3619
          %v3655 = vunpack.c.l.b16 %v3620
          %v3656 = vunpack.c.l.b16 %v3621
          %v3657 = vunpack.c.l.b16 %v3622
          %v3658 = vunpack.c.l.b16 %v3623
          %v3659 = vunpack.c.l.b16 %v3624
          %v3660 = vunpack.c.l.b16 %v3625
          %v3661 = vunpack.c.l.b16 %v3626
          %v3662 = vunpack.c.l.b16 %v3627
          %v3663 = vunpack.c.l.b16 %v3628
          %v3664 = vpack.c.b16 %v3649, %v3648
          %v3665 = vpack.c.b16 %v3651, %v3650
          %v3666 = vpack.c.b16 %v3653, %v3652
          %v3667 = vpack.c.b16 %v3655, %v3654
          %v3668 = vpack.c.b16 %v3657, %v3656
          %v3669 = vpack.c.b16 %v3659, %v3658
          %v3670 = vpack.c.b16 %v3661, %v3660
          %v3671 = vpack.c.b16 %v3663, %v3662
          %3680 = vmatpush.bf16.msra.mxu0 %v3671
          %3681 = vmatpush.bf16.msra.mxu0 %v3670
          %3682 = vmatpush.bf16.msra.mxu0 %v3669
          %3683 = vmatpush.bf16.msra.mxu0 %v3668
          %3684 = vmatpush.bf16.msra.mxu0 %v3667
          %3685 = vmatpush.bf16.msra.mxu0 %v3666
          %3686 = vmatpush.bf16.msra.mxu0 %v3665
          %3687 = vmatpush.bf16.msra.mxu0 %v3664
          %3688 = vmatmul.bf16.gmra.mxu0 %v3128
          %v3689 = vpop.f32.mrf.mxu0
          %v3690 = vadd.f32 0.0, %v3689
          %v3691 = vpop.f32.mrf.mxu0
          %v3692 = vadd.f32 0.0, %v3691
          %3693 = vdwg.mxu0
          %v3694 = vadd.f32 %v3594, %v3690
          %v3695 = vadd.f32 %v3595, %v3692
          %3696 = vmatpush.bf16.msra.mxu0 %v3671
          %3697 = vmatpush.bf16.msra.mxu0 %v3670
          %3698 = vmatpush.bf16.msra.mxu0 %v3669
          %3699 = vmatpush.bf16.msra.mxu0 %v3668
          %3700 = vmatpush.bf16.msra.mxu0 %v3667
          %3701 = vmatpush.bf16.msra.mxu0 %v3666
          %3702 = vmatpush.bf16.msra.mxu0 %v3665
          %3703 = vmatpush.bf16.msra.mxu0 %v3664
          %3704 = vmatmul.bf16.gmra.mxu0 %v3631
          %v3705 = vpop.f32.mrf.mxu0
          %v3706 = vadd.f32 0.0, %v3705
          %v3707 = vpop.f32.mrf.mxu0
          %v3708 = vadd.f32 0.0, %v3707
          %3709 = vdwg.mxu0
          %v3710 = vadd.f32 %v3610, %v3706
          %v3711 = vadd.f32 %v3611, %v3708
          %s3712 = scalar_lea.vmem %s3, 1152
          %v3713 = vld [vmem:[%s3712] sm:$0xf]
          %v3714 = vld [vmem:[%s3712 + $0x4] sm:$0xf]
          %v3715 = vld [vmem:[%s3712 + $0x8] sm:$0xf]
          %v3716 = vld [vmem:[%s3712 + $0xc] sm:$0xf]
          %v3717 = vld [vmem:[%s3712 + $0x10] sm:$0xf]
          %v3718 = vld [vmem:[%s3712 + $0x14] sm:$0xf]
          %v3719 = vld [vmem:[%s3712 + $0x18] sm:$0xf]
          %v3720 = vld [vmem:[%s3712 + $0x1c] sm:$0xf]
          %v3721 = vld [vmem:[%s3712 + $0x20] sm:$0xf]
          %v3722 = vld [vmem:[%s3712 + $0x24] sm:$0xf]
          %v3723 = vld [vmem:[%s3712 + $0x28] sm:$0xf]
          %v3724 = vld [vmem:[%s3712 + $0x2c] sm:$0xf]
          %v3725 = vld [vmem:[%s3712 + $0x30] sm:$0xf]
          %v3726 = vld [vmem:[%s3712 + $0x34] sm:$0xf]
          %v3727 = vld [vmem:[%s3712 + $0x38] sm:$0xf]
          %v3728 = vld [vmem:[%s3712 + $0x3c] sm:$0xf]
          %v3729 = vld [vmem:[%s3428 + $0x3] sm:$0xff]
          %v3730 = vld [vmem:[%s3428 + $0xb] sm:$0x3f]
          %v3731 = vpack.c.bf16 %v3730, %v3729
          %v3748 = vunpack.c.l.b16 %v3713
          %v3749 = vunpack.c.l.b16 %v3714
          %v3750 = vunpack.c.l.b16 %v3715
          %v3751 = vunpack.c.l.b16 %v3716
          %v3752 = vunpack.c.l.b16 %v3717
          %v3753 = vunpack.c.l.b16 %v3718
          %v3754 = vunpack.c.l.b16 %v3719
          %v3755 = vunpack.c.l.b16 %v3720
          %v3756 = vunpack.c.l.b16 %v3721
          %v3757 = vunpack.c.l.b16 %v3722
          %v3758 = vunpack.c.l.b16 %v3723
          %v3759 = vunpack.c.l.b16 %v3724
          %v3760 = vunpack.c.l.b16 %v3725
          %v3761 = vunpack.c.l.b16 %v3726
          %v3762 = vunpack.c.l.b16 %v3727
          %v3763 = vunpack.c.l.b16 %v3728
          %v3764 = vpack.c.b16 %v3749, %v3748
          %v3765 = vpack.c.b16 %v3751, %v3750
          %v3766 = vpack.c.b16 %v3753, %v3752
          %v3767 = vpack.c.b16 %v3755, %v3754
          %v3768 = vpack.c.b16 %v3757, %v3756
          %v3769 = vpack.c.b16 %v3759, %v3758
          %v3770 = vpack.c.b16 %v3761, %v3760
          %v3771 = vpack.c.b16 %v3763, %v3762
          %3780 = vmatpush.bf16.msra.mxu0 %v3771
          %3781 = vmatpush.bf16.msra.mxu0 %v3770
          %3782 = vmatpush.bf16.msra.mxu0 %v3769
          %3783 = vmatpush.bf16.msra.mxu0 %v3768
          %3784 = vmatpush.bf16.msra.mxu0 %v3767
          %3785 = vmatpush.bf16.msra.mxu0 %v3766
          %3786 = vmatpush.bf16.msra.mxu0 %v3765
          %3787 = vmatpush.bf16.msra.mxu0 %v3764
          %3788 = vmatmul.bf16.gmra.mxu0 %v3228
          %v3789 = vpop.f32.mrf.mxu0
          %v3790 = vadd.f32 0.0, %v3789
          %v3791 = vpop.f32.mrf.mxu0
          %v3792 = vadd.f32 0.0, %v3791
          %3793 = vdwg.mxu0
          %v3794 = vadd.f32 %v3694, %v3790
          %v3795 = vadd.f32 %v3695, %v3792
          %3796 = vmatpush.bf16.msra.mxu0 %v3771
          %3797 = vmatpush.bf16.msra.mxu0 %v3770
          %3798 = vmatpush.bf16.msra.mxu0 %v3769
          %3799 = vmatpush.bf16.msra.mxu0 %v3768
          %3800 = vmatpush.bf16.msra.mxu0 %v3767
          %3801 = vmatpush.bf16.msra.mxu0 %v3766
          %3802 = vmatpush.bf16.msra.mxu0 %v3765
          %3803 = vmatpush.bf16.msra.mxu0 %v3764
          %3804 = vmatmul.bf16.gmra.mxu0 %v3731
          %v3805 = vpop.f32.mrf.mxu0
          %v3806 = vadd.f32 0.0, %v3805
          %v3807 = vpop.f32.mrf.mxu0
          %v3808 = vadd.f32 0.0, %v3807
          %3809 = vdwg.mxu0
          %v3810 = vadd.f32 %v3710, %v3806
          %v3811 = vadd.f32 %v3711, %v3808
          %s3812 = scalar_lea.vmem %s3, 1216
          %v3813 = vld [vmem:[%s3812] sm:$0xf]
          %v3814 = vld [vmem:[%s3812 + $0x4] sm:$0xf]
          %v3815 = vld [vmem:[%s3812 + $0x8] sm:$0xf]
          %v3816 = vld [vmem:[%s3812 + $0xc] sm:$0xf]
          %v3817 = vld [vmem:[%s3812 + $0x10] sm:$0xf]
          %v3818 = vld [vmem:[%s3812 + $0x14] sm:$0xf]
          %v3819 = vld [vmem:[%s3812 + $0x18] sm:$0xf]
          %v3820 = vld [vmem:[%s3812 + $0x1c] sm:$0xf]
          %v3821 = vld [vmem:[%s3812 + $0x20] sm:$0xf]
          %v3822 = vld [vmem:[%s3812 + $0x24] sm:$0xf]
          %v3823 = vld [vmem:[%s3812 + $0x28] sm:$0xf]
          %v3824 = vld [vmem:[%s3812 + $0x2c] sm:$0xf]
          %v3825 = vld [vmem:[%s3812 + $0x30] sm:$0xf]
          %v3826 = vld [vmem:[%s3812 + $0x34] sm:$0xf]
          %v3827 = vld [vmem:[%s3812 + $0x38] sm:$0xf]
          %v3828 = vld [vmem:[%s3812 + $0x3c] sm:$0xf]
          %v3829 = vld [vmem:[%s3428 + $0x4] sm:$0xff]
          %v3830 = vld [vmem:[%s3428 + $0xc] sm:$0x3f]
          %v3831 = vpack.c.bf16 %v3830, %v3829
          %v3848 = vunpack.c.l.b16 %v3813
          %v3849 = vunpack.c.l.b16 %v3814
          %v3850 = vunpack.c.l.b16 %v3815
          %v3851 = vunpack.c.l.b16 %v3816
          %v3852 = vunpack.c.l.b16 %v3817
          %v3853 = vunpack.c.l.b16 %v3818
          %v3854 = vunpack.c.l.b16 %v3819
          %v3855 = vunpack.c.l.b16 %v3820
          %v3856 = vunpack.c.l.b16 %v3821
          %v3857 = vunpack.c.l.b16 %v3822
          %v3858 = vunpack.c.l.b16 %v3823
          %v3859 = vunpack.c.l.b16 %v3824
          %v3860 = vunpack.c.l.b16 %v3825
          %v3861 = vunpack.c.l.b16 %v3826
          %v3862 = vunpack.c.l.b16 %v3827
          %v3863 = vunpack.c.l.b16 %v3828
          %v3864 = vpack.c.b16 %v3849, %v3848
          %v3865 = vpack.c.b16 %v3851, %v3850
          %v3866 = vpack.c.b16 %v3853, %v3852
          %v3867 = vpack.c.b16 %v3855, %v3854
          %v3868 = vpack.c.b16 %v3857, %v3856
          %v3869 = vpack.c.b16 %v3859, %v3858
          %v3870 = vpack.c.b16 %v3861, %v3860
          %v3871 = vpack.c.b16 %v3863, %v3862
          %3880 = vmatpush.bf16.msra.mxu0 %v3871
          %3881 = vmatpush.bf16.msra.mxu0 %v3870
          %3882 = vmatpush.bf16.msra.mxu0 %v3869
          %3883 = vmatpush.bf16.msra.mxu0 %v3868
          %3884 = vmatpush.bf16.msra.mxu0 %v3867
          %3885 = vmatpush.bf16.msra.mxu0 %v3866
          %3886 = vmatpush.bf16.msra.mxu0 %v3865
          %3887 = vmatpush.bf16.msra.mxu0 %v3864
          %3888 = vmatmul.bf16.gmra.mxu0 %v3328
          %v3889 = vpop.f32.mrf.mxu0
          %v3890 = vadd.f32 0.0, %v3889
          %v3891 = vpop.f32.mrf.mxu0
          %v3892 = vadd.f32 0.0, %v3891
          %3893 = vdwg.mxu0
          %v3894 = vadd.f32 %v3794, %v3890
          %v3895 = vadd.f32 %v3795, %v3892
          %3896 = vmatpush.bf16.msra.mxu0 %v3871
          %3897 = vmatpush.bf16.msra.mxu0 %v3870
          %3898 = vmatpush.bf16.msra.mxu0 %v3869
          %3899 = vmatpush.bf16.msra.mxu0 %v3868
          %3900 = vmatpush.bf16.msra.mxu0 %v3867
          %3901 = vmatpush.bf16.msra.mxu0 %v3866
          %3902 = vmatpush.bf16.msra.mxu0 %v3865
          %3903 = vmatpush.bf16.msra.mxu0 %v3864
          %3904 = vmatmul.bf16.gmra.mxu0 %v3831
          %v3905 = vpop.f32.mrf.mxu0
          %v3906 = vadd.f32 0.0, %v3905
          %v3907 = vpop.f32.mrf.mxu0
          %v3908 = vadd.f32 0.0, %v3907
          %3909 = vdwg.mxu0
          %v3910 = vadd.f32 %v3810, %v3906
          %v3911 = vadd.f32 %v3811, %v3908
          %s3912 = scalar_lea.vmem %s3, 1280
          %v3913 = vld [vmem:[%s3912] sm:$0xf]
          %v3914 = vld [vmem:[%s3912 + $0x4] sm:$0xf]
          %v3915 = vld [vmem:[%s3912 + $0x8] sm:$0xf]
          %v3916 = vld [vmem:[%s3912 + $0xc] sm:$0xf]
          %v3917 = vld [vmem:[%s3912 + $0x10] sm:$0xf]
          %v3918 = vld [vmem:[%s3912 + $0x14] sm:$0xf]
          %v3919 = vld [vmem:[%s3912 + $0x18] sm:$0xf]
          %v3920 = vld [vmem:[%s3912 + $0x1c] sm:$0xf]
          %v3921 = vld [vmem:[%s3912 + $0x20] sm:$0xf]
          %v3922 = vld [vmem:[%s3912 + $0x24] sm:$0xf]
          %v3923 = vld [vmem:[%s3912 + $0x28] sm:$0xf]
          %v3924 = vld [vmem:[%s3912 + $0x2c] sm:$0xf]
          %v3925 = vld [vmem:[%s3912 + $0x30] sm:$0xf]
          %v3926 = vld [vmem:[%s3912 + $0x34] sm:$0xf]
          %v3927 = vld [vmem:[%s3912 + $0x38] sm:$0xf]
          %v3928 = vld [vmem:[%s3912 + $0x3c] sm:$0xf]
          %s3929 = sadd.s32 %s1907, 5
          %s3930 = smul.u32 %s3929, 24
          %s3931 = scalar_lea.vmem [#allocation4], %s3930
          %v3932 = vld [vmem:[%s3931] sm:$0xff]
          %v3933 = vld [vmem:[%s3931 + $0x8] sm:$0x3f]
          %v3934 = vpack.c.bf16 %v3933, %v3932
          %v3951 = vunpack.c.l.b16 %v3913
          %v3952 = vunpack.c.l.b16 %v3914
          %v3953 = vunpack.c.l.b16 %v3915
          %v3954 = vunpack.c.l.b16 %v3916
          %v3955 = vunpack.c.l.b16 %v3917
          %v3956 = vunpack.c.l.b16 %v3918
          %v3957 = vunpack.c.l.b16 %v3919
          %v3958 = vunpack.c.l.b16 %v3920
          %v3959 = vunpack.c.l.b16 %v3921
          %v3960 = vunpack.c.l.b16 %v3922
          %v3961 = vunpack.c.l.b16 %v3923
          %v3962 = vunpack.c.l.b16 %v3924
          %v3963 = vunpack.c.l.b16 %v3925
          %v3964 = vunpack.c.l.b16 %v3926
          %v3965 = vunpack.c.l.b16 %v3927
          %v3966 = vunpack.c.l.b16 %v3928
          %v3967 = vpack.c.b16 %v3952, %v3951
          %v3968 = vpack.c.b16 %v3954, %v3953
          %v3969 = vpack.c.b16 %v3956, %v3955
          %v3970 = vpack.c.b16 %v3958, %v3957
          %v3971 = vpack.c.b16 %v3960, %v3959
          %v3972 = vpack.c.b16 %v3962, %v3961
          %v3973 = vpack.c.b16 %v3964, %v3963
          %v3974 = vpack.c.b16 %v3966, %v3965
          %3983 = vmatpush.bf16.msra.mxu0 %v3974
          %3984 = vmatpush.bf16.msra.mxu0 %v3973
          %3985 = vmatpush.bf16.msra.mxu0 %v3972
          %3986 = vmatpush.bf16.msra.mxu0 %v3971
          %3987 = vmatpush.bf16.msra.mxu0 %v3970
          %3988 = vmatpush.bf16.msra.mxu0 %v3969
          %3989 = vmatpush.bf16.msra.mxu0 %v3968
          %3990 = vmatpush.bf16.msra.mxu0 %v3967
          %3991 = vmatmul.bf16.gmra.mxu0 %v3431
          %v3992 = vpop.f32.mrf.mxu0
          %v3993 = vadd.f32 0.0, %v3992
          %v3994 = vpop.f32.mrf.mxu0
          %v3995 = vadd.f32 0.0, %v3994
          %3996 = vdwg.mxu0
          %v3997 = vadd.f32 %v3894, %v3993
          %v3998 = vadd.f32 %v3895, %v3995
          %3999 = vmatpush.bf16.msra.mxu0 %v3974
          %4000 = vmatpush.bf16.msra.mxu0 %v3973
          %4001 = vmatpush.bf16.msra.mxu0 %v3972
          %4002 = vmatpush.bf16.msra.mxu0 %v3971
          %4003 = vmatpush.bf16.msra.mxu0 %v3970
          %4004 = vmatpush.bf16.msra.mxu0 %v3969
          %4005 = vmatpush.bf16.msra.mxu0 %v3968
          %4006 = vmatpush.bf16.msra.mxu0 %v3967
          %4007 = vmatmul.bf16.gmra.mxu0 %v3934
          %v4008 = vpop.f32.mrf.mxu0
          %v4009 = vadd.f32 0.0, %v4008
          %v4010 = vpop.f32.mrf.mxu0
          %v4011 = vadd.f32 0.0, %v4010
          %4012 = vdwg.mxu0
          %v4013 = vadd.f32 %v3910, %v4009
          %v4014 = vadd.f32 %v3911, %v4011
          %s4015 = scalar_lea.vmem %s3, 1344
          %v4016 = vld [vmem:[%s4015] sm:$0xf]
          %v4017 = vld [vmem:[%s4015 + $0x4] sm:$0xf]
          %v4018 = vld [vmem:[%s4015 + $0x8] sm:$0xf]
          %v4019 = vld [vmem:[%s4015 + $0xc] sm:$0xf]
          %v4020 = vld [vmem:[%s4015 + $0x10] sm:$0xf]
          %v4021 = vld [vmem:[%s4015 + $0x14] sm:$0xf]
          %v4022 = vld [vmem:[%s4015 + $0x18] sm:$0xf]
          %v4023 = vld [vmem:[%s4015 + $0x1c] sm:$0xf]
          %v4024 = vld [vmem:[%s4015 + $0x20] sm:$0xf]
          %v4025 = vld [vmem:[%s4015 + $0x24] sm:$0xf]
          %v4026 = vld [vmem:[%s4015 + $0x28] sm:$0xf]
          %v4027 = vld [vmem:[%s4015 + $0x2c] sm:$0xf]
          %v4028 = vld [vmem:[%s4015 + $0x30] sm:$0xf]
          %v4029 = vld [vmem:[%s4015 + $0x34] sm:$0xf]
          %v4030 = vld [vmem:[%s4015 + $0x38] sm:$0xf]
          %v4031 = vld [vmem:[%s4015 + $0x3c] sm:$0xf]
          %v4032 = vld [vmem:[%s3931 + $0x1] sm:$0xff]
          %v4033 = vld [vmem:[%s3931 + $0x9] sm:$0x3f]
          %v4034 = vpack.c.bf16 %v4033, %v4032
          %v4051 = vunpack.c.l.b16 %v4016
          %v4052 = vunpack.c.l.b16 %v4017
          %v4053 = vunpack.c.l.b16 %v4018
          %v4054 = vunpack.c.l.b16 %v4019
          %v4055 = vunpack.c.l.b16 %v4020
          %v4056 = vunpack.c.l.b16 %v4021
          %v4057 = vunpack.c.l.b16 %v4022
          %v4058 = vunpack.c.l.b16 %v4023
          %v4059 = vunpack.c.l.b16 %v4024
          %v4060 = vunpack.c.l.b16 %v4025
          %v4061 = vunpack.c.l.b16 %v4026
          %v4062 = vunpack.c.l.b16 %v4027
          %v4063 = vunpack.c.l.b16 %v4028
          %v4064 = vunpack.c.l.b16 %v4029
          %v4065 = vunpack.c.l.b16 %v4030
          %v4066 = vunpack.c.l.b16 %v4031
          %v4067 = vpack.c.b16 %v4052, %v4051
          %v4068 = vpack.c.b16 %v4054, %v4053
          %v4069 = vpack.c.b16 %v4056, %v4055
          %v4070 = vpack.c.b16 %v4058, %v4057
          %v4071 = vpack.c.b16 %v4060, %v4059
          %v4072 = vpack.c.b16 %v4062, %v4061
          %v4073 = vpack.c.b16 %v4064, %v4063
          %v4074 = vpack.c.b16 %v4066, %v4065
          %4083 = vmatpush.bf16.msra.mxu0 %v4074
          %4084 = vmatpush.bf16.msra.mxu0 %v4073
          %4085 = vmatpush.bf16.msra.mxu0 %v4072
          %4086 = vmatpush.bf16.msra.mxu0 %v4071
          %4087 = vmatpush.bf16.msra.mxu0 %v4070
          %4088 = vmatpush.bf16.msra.mxu0 %v4069
          %4089 = vmatpush.bf16.msra.mxu0 %v4068
          %4090 = vmatpush.bf16.msra.mxu0 %v4067
          %4091 = vmatmul.bf16.gmra.mxu0 %v3531
          %v4092 = vpop.f32.mrf.mxu0
          %v4093 = vadd.f32 0.0, %v4092
          %v4094 = vpop.f32.mrf.mxu0
          %v4095 = vadd.f32 0.0, %v4094
          %4096 = vdwg.mxu0
          %v4097 = vadd.f32 %v3997, %v4093
          %v4098 = vadd.f32 %v3998, %v4095
          %4099 = vmatpush.bf16.msra.mxu0 %v4074
          %4100 = vmatpush.bf16.msra.mxu0 %v4073
          %4101 = vmatpush.bf16.msra.mxu0 %v4072
          %4102 = vmatpush.bf16.msra.mxu0 %v4071
          %4103 = vmatpush.bf16.msra.mxu0 %v4070
          %4104 = vmatpush.bf16.msra.mxu0 %v4069
          %4105 = vmatpush.bf16.msra.mxu0 %v4068
          %4106 = vmatpush.bf16.msra.mxu0 %v4067
          %4107 = vmatmul.bf16.gmra.mxu0 %v4034
          %v4108 = vpop.f32.mrf.mxu0
          %v4109 = vadd.f32 0.0, %v4108
          %v4110 = vpop.f32.mrf.mxu0
          %v4111 = vadd.f32 0.0, %v4110
          %4112 = vdwg.mxu0
          %v4113 = vadd.f32 %v4013, %v4109
          %v4114 = vadd.f32 %v4014, %v4111
          %s4115 = scalar_lea.vmem %s3, 1408
          %v4116 = vld [vmem:[%s4115] sm:$0xf]
          %v4117 = vld [vmem:[%s4115 + $0x4] sm:$0xf]
          %v4118 = vld [vmem:[%s4115 + $0x8] sm:$0xf]
          %v4119 = vld [vmem:[%s4115 + $0xc] sm:$0xf]
          %v4120 = vld [vmem:[%s4115 + $0x10] sm:$0xf]
          %v4121 = vld [vmem:[%s4115 + $0x14] sm:$0xf]
          %v4122 = vld [vmem:[%s4115 + $0x18] sm:$0xf]
          %v4123 = vld [vmem:[%s4115 + $0x1c] sm:$0xf]
          %v4124 = vld [vmem:[%s4115 + $0x20] sm:$0xf]
          %v4125 = vld [vmem:[%s4115 + $0x24] sm:$0xf]
          %v4126 = vld [vmem:[%s4115 + $0x28] sm:$0xf]
          %v4127 = vld [vmem:[%s4115 + $0x2c] sm:$0xf]
          %v4128 = vld [vmem:[%s4115 + $0x30] sm:$0xf]
          %v4129 = vld [vmem:[%s4115 + $0x34] sm:$0xf]
          %v4130 = vld [vmem:[%s4115 + $0x38] sm:$0xf]
          %v4131 = vld [vmem:[%s4115 + $0x3c] sm:$0xf]
          %v4132 = vld [vmem:[%s3931 + $0x2] sm:$0xff]
          %v4133 = vld [vmem:[%s3931 + $0xa] sm:$0x3f]
          %v4134 = vpack.c.bf16 %v4133, %v4132
          %v4151 = vunpack.c.l.b16 %v4116
          %v4152 = vunpack.c.l.b16 %v4117
          %v4153 = vunpack.c.l.b16 %v4118
          %v4154 = vunpack.c.l.b16 %v4119
          %v4155 = vunpack.c.l.b16 %v4120
          %v4156 = vunpack.c.l.b16 %v4121
          %v4157 = vunpack.c.l.b16 %v4122
          %v4158 = vunpack.c.l.b16 %v4123
          %v4159 = vunpack.c.l.b16 %v4124
          %v4160 = vunpack.c.l.b16 %v4125
          %v4161 = vunpack.c.l.b16 %v4126
          %v4162 = vunpack.c.l.b16 %v4127
          %v4163 = vunpack.c.l.b16 %v4128
          %v4164 = vunpack.c.l.b16 %v4129
          %v4165 = vunpack.c.l.b16 %v4130
          %v4166 = vunpack.c.l.b16 %v4131
          %v4167 = vpack.c.b16 %v4152, %v4151
          %v4168 = vpack.c.b16 %v4154, %v4153
          %v4169 = vpack.c.b16 %v4156, %v4155
          %v4170 = vpack.c.b16 %v4158, %v4157
          %v4171 = vpack.c.b16 %v4160, %v4159
          %v4172 = vpack.c.b16 %v4162, %v4161
          %v4173 = vpack.c.b16 %v4164, %v4163
          %v4174 = vpack.c.b16 %v4166, %v4165
          %4183 = vmatpush.bf16.msra.mxu0 %v4174
          %4184 = vmatpush.bf16.msra.mxu0 %v4173
          %4185 = vmatpush.bf16.msra.mxu0 %v4172
          %4186 = vmatpush.bf16.msra.mxu0 %v4171
          %4187 = vmatpush.bf16.msra.mxu0 %v4170
          %4188 = vmatpush.bf16.msra.mxu0 %v4169
          %4189 = vmatpush.bf16.msra.mxu0 %v4168
          %4190 = vmatpush.bf16.msra.mxu0 %v4167
          %4191 = vmatmul.bf16.gmra.mxu0 %v3631
          %v4192 = vpop.f32.mrf.mxu0
          %v4193 = vadd.f32 0.0, %v4192
          %v4194 = vpop.f32.mrf.mxu0
          %v4195 = vadd.f32 0.0, %v4194
          %4196 = vdwg.mxu0
          %v4197 = vadd.f32 %v4097, %v4193
          %v4198 = vadd.f32 %v4098, %v4195
          %4199 = vmatpush.bf16.msra.mxu0 %v4174
          %4200 = vmatpush.bf16.msra.mxu0 %v4173
          %4201 = vmatpush.bf16.msra.mxu0 %v4172
          %4202 = vmatpush.bf16.msra.mxu0 %v4171
          %4203 = vmatpush.bf16.msra.mxu0 %v4170
          %4204 = vmatpush.bf16.msra.mxu0 %v4169
          %4205 = vmatpush.bf16.msra.mxu0 %v4168
          %4206 = vmatpush.bf16.msra.mxu0 %v4167
          %4207 = vmatmul.bf16.gmra.mxu0 %v4134
          %v4208 = vpop.f32.mrf.mxu0
          %v4209 = vadd.f32 0.0, %v4208
          %v4210 = vpop.f32.mrf.mxu0
          %v4211 = vadd.f32 0.0, %v4210
          %4212 = vdwg.mxu0
          %v4213 = vadd.f32 %v4113, %v4209
          %v4214 = vadd.f32 %v4114, %v4211
          %s4215 = scalar_lea.vmem %s3, 1472
          %v4216 = vld [vmem:[%s4215] sm:$0xf]
          %v4217 = vld [vmem:[%s4215 + $0x4] sm:$0xf]
          %v4218 = vld [vmem:[%s4215 + $0x8] sm:$0xf]
          %v4219 = vld [vmem:[%s4215 + $0xc] sm:$0xf]
          %v4220 = vld [vmem:[%s4215 + $0x10] sm:$0xf]
          %v4221 = vld [vmem:[%s4215 + $0x14] sm:$0xf]
          %v4222 = vld [vmem:[%s4215 + $0x18] sm:$0xf]
          %v4223 = vld [vmem:[%s4215 + $0x1c] sm:$0xf]
          %v4224 = vld [vmem:[%s4215 + $0x20] sm:$0xf]
          %v4225 = vld [vmem:[%s4215 + $0x24] sm:$0xf]
          %v4226 = vld [vmem:[%s4215 + $0x28] sm:$0xf]
          %v4227 = vld [vmem:[%s4215 + $0x2c] sm:$0xf]
          %v4228 = vld [vmem:[%s4215 + $0x30] sm:$0xf]
          %v4229 = vld [vmem:[%s4215 + $0x34] sm:$0xf]
          %v4230 = vld [vmem:[%s4215 + $0x38] sm:$0xf]
          %v4231 = vld [vmem:[%s4215 + $0x3c] sm:$0xf]
          %v4232 = vld [vmem:[%s3931 + $0x3] sm:$0xff]
          %v4233 = vld [vmem:[%s3931 + $0xb] sm:$0x3f]
          %v4234 = vpack.c.bf16 %v4233, %v4232
          %v4251 = vunpack.c.l.b16 %v4216
          %v4252 = vunpack.c.l.b16 %v4217
          %v4253 = vunpack.c.l.b16 %v4218
          %v4254 = vunpack.c.l.b16 %v4219
          %v4255 = vunpack.c.l.b16 %v4220
          %v4256 = vunpack.c.l.b16 %v4221
          %v4257 = vunpack.c.l.b16 %v4222
          %v4258 = vunpack.c.l.b16 %v4223
          %v4259 = vunpack.c.l.b16 %v4224
          %v4260 = vunpack.c.l.b16 %v4225
          %v4261 = vunpack.c.l.b16 %v4226
          %v4262 = vunpack.c.l.b16 %v4227
          %v4263 = vunpack.c.l.b16 %v4228
          %v4264 = vunpack.c.l.b16 %v4229
          %v4265 = vunpack.c.l.b16 %v4230
          %v4266 = vunpack.c.l.b16 %v4231
          %v4267 = vpack.c.b16 %v4252, %v4251
          %v4268 = vpack.c.b16 %v4254, %v4253
          %v4269 = vpack.c.b16 %v4256, %v4255
          %v4270 = vpack.c.b16 %v4258, %v4257
          %v4271 = vpack.c.b16 %v4260, %v4259
          %v4272 = vpack.c.b16 %v4262, %v4261
          %v4273 = vpack.c.b16 %v4264, %v4263
          %v4274 = vpack.c.b16 %v4266, %v4265
          %4283 = vmatpush.bf16.msra.mxu0 %v4274
          %4284 = vmatpush.bf16.msra.mxu0 %v4273
          %4285 = vmatpush.bf16.msra.mxu0 %v4272
          %4286 = vmatpush.bf16.msra.mxu0 %v4271
          %4287 = vmatpush.bf16.msra.mxu0 %v4270
          %4288 = vmatpush.bf16.msra.mxu0 %v4269
          %4289 = vmatpush.bf16.msra.mxu0 %v4268
          %4290 = vmatpush.bf16.msra.mxu0 %v4267
          %4291 = vmatmul.bf16.gmra.mxu0 %v3731
          %v4292 = vpop.f32.mrf.mxu0
          %v4293 = vadd.f32 0.0, %v4292
          %v4294 = vpop.f32.mrf.mxu0
          %v4295 = vadd.f32 0.0, %v4294
          %4296 = vdwg.mxu0
          %v4297 = vadd.f32 %v4197, %v4293
          %v4298 = vadd.f32 %v4198, %v4295
          %4299 = vmatpush.bf16.msra.mxu0 %v4274
          %4300 = vmatpush.bf16.msra.mxu0 %v4273
          %4301 = vmatpush.bf16.msra.mxu0 %v4272
          %4302 = vmatpush.bf16.msra.mxu0 %v4271
          %4303 = vmatpush.bf16.msra.mxu0 %v4270
          %4304 = vmatpush.bf16.msra.mxu0 %v4269
          %4305 = vmatpush.bf16.msra.mxu0 %v4268
          %4306 = vmatpush.bf16.msra.mxu0 %v4267
          %4307 = vmatmul.bf16.gmra.mxu0 %v4234
          %v4308 = vpop.f32.mrf.mxu0
          %v4309 = vadd.f32 0.0, %v4308
          %v4310 = vpop.f32.mrf.mxu0
          %v4311 = vadd.f32 0.0, %v4310
          %4312 = vdwg.mxu0
          %v4313 = vadd.f32 %v4213, %v4309
          %v4314 = vadd.f32 %v4214, %v4311
          %s4315 = scalar_lea.vmem %s3, 1536
          %v4316 = vld [vmem:[%s4315] sm:$0xf]
          %v4317 = vld [vmem:[%s4315 + $0x4] sm:$0xf]
          %v4318 = vld [vmem:[%s4315 + $0x8] sm:$0xf]
          %v4319 = vld [vmem:[%s4315 + $0xc] sm:$0xf]
          %v4320 = vld [vmem:[%s4315 + $0x10] sm:$0xf]
          %v4321 = vld [vmem:[%s4315 + $0x14] sm:$0xf]
          %v4322 = vld [vmem:[%s4315 + $0x18] sm:$0xf]
          %v4323 = vld [vmem:[%s4315 + $0x1c] sm:$0xf]
          %v4324 = vld [vmem:[%s4315 + $0x20] sm:$0xf]
          %v4325 = vld [vmem:[%s4315 + $0x24] sm:$0xf]
          %v4326 = vld [vmem:[%s4315 + $0x28] sm:$0xf]
          %v4327 = vld [vmem:[%s4315 + $0x2c] sm:$0xf]
          %v4328 = vld [vmem:[%s4315 + $0x30] sm:$0xf]
          %v4329 = vld [vmem:[%s4315 + $0x34] sm:$0xf]
          %v4330 = vld [vmem:[%s4315 + $0x38] sm:$0xf]
          %v4331 = vld [vmem:[%s4315 + $0x3c] sm:$0xf]
          %v4332 = vld [vmem:[%s3931 + $0x4] sm:$0xff]
          %v4333 = vld [vmem:[%s3931 + $0xc] sm:$0x3f]
          %v4334 = vpack.c.bf16 %v4333, %v4332
          %v4351 = vunpack.c.l.b16 %v4316
          %v4352 = vunpack.c.l.b16 %v4317
          %v4353 = vunpack.c.l.b16 %v4318
          %v4354 = vunpack.c.l.b16 %v4319
          %v4355 = vunpack.c.l.b16 %v4320
          %v4356 = vunpack.c.l.b16 %v4321
          %v4357 = vunpack.c.l.b16 %v4322
          %v4358 = vunpack.c.l.b16 %v4323
          %v4359 = vunpack.c.l.b16 %v4324
          %v4360 = vunpack.c.l.b16 %v4325
          %v4361 = vunpack.c.l.b16 %v4326
          %v4362 = vunpack.c.l.b16 %v4327
          %v4363 = vunpack.c.l.b16 %v4328
          %v4364 = vunpack.c.l.b16 %v4329
          %v4365 = vunpack.c.l.b16 %v4330
          %v4366 = vunpack.c.l.b16 %v4331
          %v4367 = vpack.c.b16 %v4352, %v4351
          %v4368 = vpack.c.b16 %v4354, %v4353
          %v4369 = vpack.c.b16 %v4356, %v4355
          %v4370 = vpack.c.b16 %v4358, %v4357
          %v4371 = vpack.c.b16 %v4360, %v4359
          %v4372 = vpack.c.b16 %v4362, %v4361
          %v4373 = vpack.c.b16 %v4364, %v4363
          %v4374 = vpack.c.b16 %v4366, %v4365
          %4383 = vmatpush.bf16.msra.mxu0 %v4374
          %4384 = vmatpush.bf16.msra.mxu0 %v4373
          %4385 = vmatpush.bf16.msra.mxu0 %v4372
          %4386 = vmatpush.bf16.msra.mxu0 %v4371
          %4387 = vmatpush.bf16.msra.mxu0 %v4370
          %4388 = vmatpush.bf16.msra.mxu0 %v4369
          %4389 = vmatpush.bf16.msra.mxu0 %v4368
          %4390 = vmatpush.bf16.msra.mxu0 %v4367
          %4391 = vmatmul.bf16.gmra.mxu0 %v3831
          %v4392 = vpop.f32.mrf.mxu0
          %v4393 = vadd.f32 0.0, %v4392
          %v4394 = vpop.f32.mrf.mxu0
          %v4395 = vadd.f32 0.0, %v4394
          %4396 = vdwg.mxu0
          %v4397 = vadd.f32 %v4297, %v4393
          %v4398 = vadd.f32 %v4298, %v4395
          %4399 = vmatpush.bf16.msra.mxu0 %v4374
          %4400 = vmatpush.bf16.msra.mxu0 %v4373
          %4401 = vmatpush.bf16.msra.mxu0 %v4372
          %4402 = vmatpush.bf16.msra.mxu0 %v4371
          %4403 = vmatpush.bf16.msra.mxu0 %v4370
          %4404 = vmatpush.bf16.msra.mxu0 %v4369
          %4405 = vmatpush.bf16.msra.mxu0 %v4368
          %4406 = vmatpush.bf16.msra.mxu0 %v4367
          %4407 = vmatmul.bf16.gmra.mxu0 %v4334
          %v4408 = vpop.f32.mrf.mxu0
          %v4409 = vadd.f32 0.0, %v4408
          %v4410 = vpop.f32.mrf.mxu0
          %v4411 = vadd.f32 0.0, %v4410
          %4412 = vdwg.mxu0
          %v4413 = vadd.f32 %v4313, %v4409
          %v4414 = vadd.f32 %v4314, %v4411
          %v4415 = vadd.f32 %v4397, %v1883
          %v4416 = vadd.f32 %v4398, %v1883
          %v4417 = vmax.f32 %v4415, 0.0
          %v4418 = vmax.f32 %v4416, 0.0
          %v4419 = vadd.f32 %v4413, %v1883
          %v4420 = vadd.f32 %v4414, %v1883
          %v4421 = vmax.f32 %v4419, 0.0
          %v4422 = vmax.f32 %v4420, 0.0
          %v4423 = vmax.f32 %v4417, %v4421
          %v4424 = vmax.f32 %v4418, %v4422
          %4425 = vst [vmem:[#allocation5] sm:$0xff] %v4423
          %4426 = vst [vmem:[#allocation5 + $0x8] sm:$0x3f] %v4424
          %v4427 = vld [vmem:[#allocation5] ss:$2 sm:$0x7f]
          %s4428 = scalar_lea.vmem [#allocation5], 1
          %v4429 = vld [vmem:[%s4428] ss:$2 sm:$0x7f]
          %v4430 = vmax.f32 %v4427, %v4429
          %s4431 = smul.u32 %s1886, 7
          %s4432 = smul.u32 %s4431, 5
          %s4433 = smul.addr %s4432, 4
          %s4434 = scalar_lea.vmem %s5, %s4433
          %v4435 = vld [vmem:[%s4434] sm:$0xf]
          %v4436 = vld [vmem:[%s4434 + $0x4] sm:$0xf]
          %v4437 = vld [vmem:[%s4434 + $0x8] sm:$0xf]
          %v4438 = vld [vmem:[%s4434 + $0xc] sm:$0xf]
          %v4439 = vld [vmem:[%s4434 + $0x10] sm:$0xf]
          %s4440 = sadd.s32 %s4431, 1
          %s4441 = smul.u32 %s4440, 5
          %s4442 = smul.addr %s4441, 4
          %s4443 = scalar_lea.vmem %s5, %s4442
          %v4444 = vld [vmem:[%s4443] sm:$0xf]
          %v4445 = vld [vmem:[%s4443 + $0x4] sm:$0xf]
          %v4446 = vld [vmem:[%s4443 + $0x8] sm:$0xf]
          %v4447 = vld [vmem:[%s4443 + $0xc] sm:$0xf]
          %v4448 = vld [vmem:[%s4443 + $0x10] sm:$0xf]
          %v4450 = vrot.slane %v4430, 1
          %v4456 = vunpack.c.l.b16 %v4444
          %v4457 = vunpack.c.l.b16 %v4445
          %v4458 = vunpack.c.l.b16 %v4446
          %v4459 = vunpack.c.l.b16 %v4447
          %v4460 = vunpack.c.l.b16 %v4448
          %v4461 = vpack.c.b16 %v4457, %v4456
          %v4462 = vpack.c.b16 %v4459, %v4458
          %v4463 = vpack.c.b16 %v4460, %v4460
          %vm4466 = vcmask 326656
          %v4467 = vsel %vm4466, %v4450, 0
          %v4470 = vsel %vm895, %v4463, 0
          %4472 = vmatpush.bf16.msra.mxu0 0
          %4473 = vmatpush.bf16.msra.mxu0 0
          %4474 = vmatpush.bf16.msra.mxu0 0
          %4475 = vmatpush.bf16.msra.mxu0 0
          %4476 = vmatpush.bf16.msra.mxu0 0
          %4477 = vmatpush.bf16.msra.mxu0 %v4470
          %4478 = vmatpush.bf16.msra.mxu0 %v4462
          %4479 = vmatpush.bf16.msra.mxu0 %v4461
          %4480 = vmatmul.f32.gmra.mxu0 %v4467
          %v4481 = vpop.f32.mrf.mxu0
          %v4482 = vadd.f32 0.0, %v4481
          %4483 = vdwg.mxu0
          %v4489 = vunpack.c.l.b16 %v4435
          %v4490 = vunpack.c.l.b16 %v4436
          %v4491 = vunpack.c.l.b16 %v4437
          %v4492 = vunpack.c.l.b16 %v4438
          %v4493 = vunpack.c.l.b16 %v4439
          %v4494 = vpack.c.b16 %v4490, %v4489
          %v4495 = vpack.c.b16 %v4492, %v4491
          %v4496 = vpack.c.b16 %v4493, %v4493
          %v4499 = vsel %vm4466, %v4430, 0
          %v4502 = vsel %vm895, %v4496, 0
          %4504 = vmatpush.bf16.msra.mxu0 0
          %4505 = vmatpush.bf16.msra.mxu0 0
          %4506 = vmatpush.bf16.msra.mxu0 0
          %4507 = vmatpush.bf16.msra.mxu0 0
          %4508 = vmatpush.bf16.msra.mxu0 0
          %4509 = vmatpush.bf16.msra.mxu0 %v4502
          %4510 = vmatpush.bf16.msra.mxu0 %v4495
          %4511 = vmatpush.bf16.msra.mxu0 %v4494
          %4512 = vmatmul.f32.gmra.mxu0 %v4499
          %v4513 = vpop.f32.mrf.mxu0
          %v4514 = vadd.f32 %v4482, %v4513
          %4515 = vdwg.mxu0
          %s4516 = sadd.s32 %s4431, 2
          %s4517 = smul.u32 %s4516, 5
          %s4518 = smul.addr %s4517, 4
          %s4519 = scalar_lea.vmem %s5, %s4518
          %v4520 = vld [vmem:[%s4519] sm:$0xf]
          %v4521 = vld [vmem:[%s4519 + $0x4] sm:$0xf]
          %v4522 = vld [vmem:[%s4519 + $0x8] sm:$0xf]
          %v4523 = vld [vmem:[%s4519 + $0xc] sm:$0xf]
          %v4524 = vld [vmem:[%s4519 + $0x10] sm:$0xf]
          %v4525 = vrot.slane %v4430, 2
          %v4531 = vunpack.c.l.b16 %v4520
          %v4532 = vunpack.c.l.b16 %v4521
          %v4533 = vunpack.c.l.b16 %v4522
          %v4534 = vunpack.c.l.b16 %v4523
          %v4535 = vunpack.c.l.b16 %v4524
          %v4536 = vpack.c.b16 %v4532, %v4531
          %v4537 = vpack.c.b16 %v4534, %v4533
          %v4538 = vpack.c.b16 %v4535, %v4535
          %v4541 = vsel %vm4466, %v4525, 0
          %v4544 = vsel %vm895, %v4538, 0
          %4546 = vmatpush.bf16.msra.mxu0 0
          %4547 = vmatpush.bf16.msra.mxu0 0
          %4548 = vmatpush.bf16.msra.mxu0 0
          %4549 = vmatpush.bf16.msra.mxu0 0
          %4550 = vmatpush.bf16.msra.mxu0 0
          %4551 = vmatpush.bf16.msra.mxu0 %v4544
          %4552 = vmatpush.bf16.msra.mxu0 %v4537
          %4553 = vmatpush.bf16.msra.mxu0 %v4536
          %4554 = vmatmul.f32.gmra.mxu0 %v4541
          %v4555 = vpop.f32.mrf.mxu0
          %v4556 = vadd.f32 0.0, %v4555
          %4557 = vdwg.mxu0
          %v4558 = vadd.f32 %v4514, %v4556
          %s4559 = sadd.s32 %s4431, 3
          %s4560 = smul.u32 %s4559, 5
          %s4561 = smul.addr %s4560, 4
          %s4562 = scalar_lea.vmem %s5, %s4561
          %v4563 = vld [vmem:[%s4562] sm:$0xf]
          %v4564 = vld [vmem:[%s4562 + $0x4] sm:$0xf]
          %v4565 = vld [vmem:[%s4562 + $0x8] sm:$0xf]
          %v4566 = vld [vmem:[%s4562 + $0xc] sm:$0xf]
          %v4567 = vld [vmem:[%s4562 + $0x10] sm:$0xf]
          %v4568 = vrot.slane %v4430, 3
          %v4574 = vunpack.c.l.b16 %v4563
          %v4575 = vunpack.c.l.b16 %v4564
          %v4576 = vunpack.c.l.b16 %v4565
          %v4577 = vunpack.c.l.b16 %v4566
          %v4578 = vunpack.c.l.b16 %v4567
          %v4579 = vpack.c.b16 %v4575, %v4574
          %v4580 = vpack.c.b16 %v4577, %v4576
          %v4581 = vpack.c.b16 %v4578, %v4578
          %v4584 = vsel %vm4466, %v4568, 0
          %v4587 = vsel %vm895, %v4581, 0
          %4589 = vmatpush.bf16.msra.mxu0 0
          %4590 = vmatpush.bf16.msra.mxu0 0
          %4591 = vmatpush.bf16.msra.mxu0 0
          %4592 = vmatpush.bf16.msra.mxu0 0
          %4593 = vmatpush.bf16.msra.mxu0 0
          %4594 = vmatpush.bf16.msra.mxu0 %v4587
          %4595 = vmatpush.bf16.msra.mxu0 %v4580
          %4596 = vmatpush.bf16.msra.mxu0 %v4579
          %4597 = vmatmul.f32.gmra.mxu0 %v4584
          %v4598 = vpop.f32.mrf.mxu0
          %v4599 = vadd.f32 0.0, %v4598
          %4600 = vdwg.mxu0
          %v4601 = vadd.f32 %v4558, %v4599
          %s4602 = sadd.s32 %s4431, 4
          %s4603 = smul.u32 %s4602, 5
          %s4604 = smul.addr %s4603, 4
          %s4605 = scalar_lea.vmem %s5, %s4604
          %v4606 = vld [vmem:[%s4605] sm:$0xf]
          %v4607 = vld [vmem:[%s4605 + $0x4] sm:$0xf]
          %v4608 = vld [vmem:[%s4605 + $0x8] sm:$0xf]
          %v4609 = vld [vmem:[%s4605 + $0xc] sm:$0xf]
          %v4610 = vld [vmem:[%s4605 + $0x10] sm:$0xf]
          %v4611 = vrot.slane %v4430, 4
          %v4617 = vunpack.c.l.b16 %v4606
          %v4618 = vunpack.c.l.b16 %v4607
          %v4619 = vunpack.c.l.b16 %v4608
          %v4620 = vunpack.c.l.b16 %v4609
          %v4621 = vunpack.c.l.b16 %v4610
          %v4622 = vpack.c.b16 %v4618, %v4617
          %v4623 = vpack.c.b16 %v4620, %v4619
          %v4624 = vpack.c.b16 %v4621, %v4621
          %v4627 = vsel %vm4466, %v4611, 0
          %v4630 = vsel %vm895, %v4624, 0
          %4632 = vmatpush.bf16.msra.mxu0 0
          %4633 = vmatpush.bf16.msra.mxu0 0
          %4634 = vmatpush.bf16.msra.mxu0 0
          %4635 = vmatpush.bf16.msra.mxu0 0
          %4636 = vmatpush.bf16.msra.mxu0 0
          %4637 = vmatpush.bf16.msra.mxu0 %v4630
          %4638 = vmatpush.bf16.msra.mxu0 %v4623
          %4639 = vmatpush.bf16.msra.mxu0 %v4622
          %4640 = vmatmul.f32.gmra.mxu0 %v4627
          %v4641 = vpop.f32.mrf.mxu0
          %v4642 = vadd.f32 0.0, %v4641
          %4643 = vdwg.mxu0
          %v4644 = vadd.f32 %v4601, %v4642
          %s4645 = sadd.s32 %s4431, 5
          %s4646 = smul.u32 %s4645, 5
          %s4647 = smul.addr %s4646, 4
          %s4648 = scalar_lea.vmem %s5, %s4647
          %v4649 = vld [vmem:[%s4648] sm:$0xf]
          %v4650 = vld [vmem:[%s4648 + $0x4] sm:$0xf]
          %v4651 = vld [vmem:[%s4648 + $0x8] sm:$0xf]
          %v4652 = vld [vmem:[%s4648 + $0xc] sm:$0xf]
          %v4653 = vld [vmem:[%s4648 + $0x10] sm:$0xf]
          %v4654 = vrot.slane %v4430, 5
          %v4660 = vunpack.c.l.b16 %v4649
          %v4661 = vunpack.c.l.b16 %v4650
          %v4662 = vunpack.c.l.b16 %v4651
          %v4663 = vunpack.c.l.b16 %v4652
          %v4664 = vunpack.c.l.b16 %v4653
          %v4665 = vpack.c.b16 %v4661, %v4660
          %v4666 = vpack.c.b16 %v4663, %v4662
          %v4667 = vpack.c.b16 %v4664, %v4664
          %v4670 = vsel %vm4466, %v4654, 0
          %v4673 = vsel %vm895, %v4667, 0
          %4675 = vmatpush.bf16.msra.mxu0 0
          %4676 = vmatpush.bf16.msra.mxu0 0
          %4677 = vmatpush.bf16.msra.mxu0 0
          %4678 = vmatpush.bf16.msra.mxu0 0
          %4679 = vmatpush.bf16.msra.mxu0 0
          %4680 = vmatpush.bf16.msra.mxu0 %v4673
          %4681 = vmatpush.bf16.msra.mxu0 %v4666
          %4682 = vmatpush.bf16.msra.mxu0 %v4665
          %4683 = vmatmul.f32.gmra.mxu0 %v4670
          %v4684 = vpop.f32.mrf.mxu0
          %v4685 = vadd.f32 0.0, %v4684
          %4686 = vdwg.mxu0
          %v4687 = vadd.f32 %v4644, %v4685
          %s4688 = sadd.s32 %s4431, 6
          %s4689 = smul.u32 %s4688, 5
          %s4690 = smul.addr %s4689, 4
          %s4691 = scalar_lea.vmem %s5, %s4690
          %v4692 = vld [vmem:[%s4691] sm:$0xf]
          %v4693 = vld [vmem:[%s4691 + $0x4] sm:$0xf]
          %v4694 = vld [vmem:[%s4691 + $0x8] sm:$0xf]
          %v4695 = vld [vmem:[%s4691 + $0xc] sm:$0xf]
          %v4696 = vld [vmem:[%s4691 + $0x10] sm:$0xf]
          %v4697 = vrot.slane %v4430, 6
          %v4703 = vunpack.c.l.b16 %v4692
          %v4704 = vunpack.c.l.b16 %v4693
          %v4705 = vunpack.c.l.b16 %v4694
          %v4706 = vunpack.c.l.b16 %v4695
          %v4707 = vunpack.c.l.b16 %v4696
          %v4708 = vpack.c.b16 %v4704, %v4703
          %v4709 = vpack.c.b16 %v4706, %v4705
          %v4710 = vpack.c.b16 %v4707, %v4707
          %v4713 = vsel %vm4466, %v4697, 0
          %v4716 = vsel %vm895, %v4710, 0
          %4718 = vmatpush.bf16.msra.mxu0 0
          %4719 = vmatpush.bf16.msra.mxu0 0
          %4720 = vmatpush.bf16.msra.mxu0 0
          %4721 = vmatpush.bf16.msra.mxu0 0
          %4722 = vmatpush.bf16.msra.mxu0 0
          %4723 = vmatpush.bf16.msra.mxu0 %v4716
          %4724 = vmatpush.bf16.msra.mxu0 %v4709
          %4725 = vmatpush.bf16.msra.mxu0 %v4708
          %4726 = vmatmul.f32.gmra.mxu0 %v4713
          %v4727 = vpop.f32.mrf.mxu0
          %v4728 = vadd.f32 0.0, %v4727
          %4729 = vdwg.mxu0
          %v4730 = vadd.f32 %v4687, %v4728
          %v4731 = vld [vmem:[#allocation6] sm:$0x1]
          %v4732 = vadd.f32 %v4731, %v4730
          %4733 = vst [vmem:[#allocation6] sm:$0x1] %v4732
        $region69: #{model5_forward.1} parent=63 // loop_footer
          %s1890 = sadd.s32 1, %s1886
        $region70: #{model5_forward.1} parent=63 // loop_footer_branch
          %1885 = sbr.rel target = $region66
        $region71: #{model5_forward.1} parent=63 // loop_exit
          _
        %v4734 = vld [vmem:[#allocation6] sm:$0x1]
        %v4735 = vld [vmem:[%s6] sm:$0x1]
        %v4736 = vadd.f32 %v4734, %v4735
        %v4737 = vand.u32 2147483647, %v4736
        %v4738 = vsub.f32 0.0, %v4737
        %v4739 = vmul.f32 %v4738, 1.442695
        %v4740 = vpow.pop %v4739
        %vm4741 = vcmp.ge.f32.partialorder %v4736, 0.0
        %v4742 = vadd.f32 %v4740, 1.0
        %v4743 = vrcp.pop %v4742
        %v4744 = vmul.f32 %v4742, %v4743
        %v4745 = vsub.f32 1.0, %v4744
        %v4746 = vmul.f32 %v4743, %v4745
        %v4747 = vadd.f32 %v4743, %v4746
        %vm4748 = vweird.f32 %v4742
        %vm4749 = vweird.f32 %v4743
        %vm4750 = vmor %vm4748, %vm4749
        %v4751 = vsel %vm4750, %v4743, %v4747
        %v4752 = vand.u32 2147483647, %v4742
        %vm4753 = vcmp.eq.f32.partialorder %v4752, 8.507059e+37
        %v4754 = vand.u32 %v4742, 2147483648
        %v4755 = vor.u32 1.1754944e-38, %v4754
        %v4756 = vsel %vm4753, %v4755, %v4751
        %v4757 = vmul.f32 1.0, %v4756
        %v4758 = vmul.f32 %v4740, %v4756
        %v4759 = vsel %vm4741, %v4757, %v4758
        %v4760 = vld [vmem:[%s7] sm:$0xf]
        %v4761 = vld [vmem:[%s7 + $0x4] sm:$0xf]
        %v4762 = vld [vmem:[%s7 + $0x8] sm:$0xf]
        %v4763 = vld [vmem:[%s7 + $0xc] sm:$0xf]
        %v4764 = vld [vmem:[%s7 + $0x10] sm:$0xf]
        %v4765 = vld [vmem:[%s7 + $0x14] sm:$0xf]
        %v4766 = vld [vmem:[%s7 + $0x18] sm:$0xf]
        %v4767 = vld [vmem:[%s7 + $0x1c] sm:$0xf]
        %v4768 = vld [vmem:[%s7 + $0x20] sm:$0xf]
        %v4769 = vld [vmem:[%s7 + $0x24] sm:$0xf]
        %v4770 = vld [vmem:[%s7 + $0x28] sm:$0xf]
        %v4771 = vld [vmem:[%s7 + $0x2c] sm:$0xf]
        %v4772 = vld [vmem:[%s7 + $0x30] sm:$0xf]
        %v4773 = vld [vmem:[%s7 + $0x34] sm:$0xf]
        %v4774 = vld [vmem:[%s7 + $0x38] sm:$0xf]
        %v4775 = vld [vmem:[%s7 + $0x3c] sm:$0xf]
        %v4776 = vld [vmem:[%s8] sm:$0x1]
        %v4793 = vunpack.c.l.b16 %v4760
        %v4794 = vunpack.c.l.b16 %v4761
        %v4795 = vunpack.c.l.b16 %v4762
        %v4796 = vunpack.c.l.b16 %v4763
        %v4797 = vunpack.c.l.b16 %v4764
        %v4798 = vunpack.c.l.b16 %v4765
        %v4799 = vunpack.c.l.b16 %v4766
        %v4800 = vunpack.c.l.b16 %v4767
        %v4801 = vunpack.c.l.b16 %v4768
        %v4802 = vunpack.c.l.b16 %v4769
        %v4803 = vunpack.c.l.b16 %v4770
        %v4804 = vunpack.c.l.b16 %v4771
        %v4805 = vunpack.c.l.b16 %v4772
        %v4806 = vunpack.c.l.b16 %v4773
        %v4807 = vunpack.c.l.b16 %v4774
        %v4808 = vunpack.c.l.b16 %v4775
        %v4809 = vpack.c.b16 %v4794, %v4793
        %v4810 = vpack.c.b16 %v4796, %v4795
        %v4811 = vpack.c.b16 %v4798, %v4797
        %v4812 = vpack.c.b16 %v4800, %v4799
        %v4813 = vpack.c.b16 %v4802, %v4801
        %v4814 = vpack.c.b16 %v4804, %v4803
        %v4815 = vpack.c.b16 %v4806, %v4805
        %v4816 = vpack.c.b16 %v4808, %v4807
        %4825 = vmatpush.bf16.msra.mxu0 %v4816
        %4826 = vmatpush.bf16.msra.mxu0 %v4815
        %4827 = vmatpush.bf16.msra.mxu0 %v4814
        %4828 = vmatpush.bf16.msra.mxu0 %v4813
        %4829 = vmatpush.bf16.msra.mxu0 %v4812
        %4830 = vmatpush.bf16.msra.mxu0 %v4811
        %4831 = vmatpush.bf16.msra.mxu0 %v4810
        %4832 = vmatpush.bf16.msra.mxu0 %v4809
        %4833 = vmatmul.f32.gmra.mxu0 %v4759
        %v4834 = vpop.f32.mrf.mxu0
        %v4835 = vadd.f32 %v4776, %v4834
        %4836 = vdwg.mxu0
        %v4837 = vand.u32 2147483647, %v4835
        %v4838 = vsub.f32 0.0, %v4837
        %v4839 = vmul.f32 %v4838, 1.442695
        %v4840 = vpow.pop %v4839
        %vm4841 = vcmp.ge.f32.partialorder %v4835, 0.0
        %v4842 = vadd.f32 %v4840, 1.0
        %v4843 = vrcp.pop %v4842
        %v4844 = vmul.f32 %v4842, %v4843
        %v4845 = vsub.f32 1.0, %v4844
        %v4846 = vmul.f32 %v4843, %v4845
        %v4847 = vadd.f32 %v4843, %v4846
        %vm4848 = vweird.f32 %v4842
        %vm4849 = vweird.f32 %v4843
        %vm4850 = vmor %vm4848, %vm4849
        %v4851 = vsel %vm4850, %v4843, %v4847
        %v4852 = vand.u32 2147483647, %v4842
        %vm4853 = vcmp.eq.f32.partialorder %v4852, 8.507059e+37
        %v4854 = vand.u32 %v4842, 2147483648
        %v4855 = vor.u32 1.1754944e-38, %v4854
        %v4856 = vsel %vm4853, %v4855, %v4851
        %v4857 = vmul.f32 1.0, %v4856
        %v4858 = vmul.f32 %v4840, %v4856
        %v4859 = vsel %vm4841, %v4857, %v4858
        %v4860 = vld [vmem:[%s9] sm:$0xf]
        %v4861 = vld [vmem:[%s9 + $0x4] sm:$0xf]
        %v4862 = vld [vmem:[%s9 + $0x8] sm:$0xf]
        %v4863 = vld [vmem:[%s9 + $0xc] sm:$0xf]
        %v4864 = vld [vmem:[%s9 + $0x10] sm:$0xf]
        %v4865 = vld [vmem:[%s9 + $0x14] sm:$0xf]
        %v4866 = vld [vmem:[%s9 + $0x18] sm:$0xf]
        %v4867 = vld [vmem:[%s9 + $0x1c] sm:$0xf]
        %v4868 = vld [vmem:[%s9 + $0x20] sm:$0xf]
        %v4869 = vld [vmem:[%s9 + $0x24] sm:$0xf]
        %v4870 = vld [vmem:[%s9 + $0x28] sm:$0xf]
        %v4871 = vld [vmem:[%s9 + $0x2c] sm:$0xf]
        %v4872 = vld [vmem:[%s9 + $0x30] sm:$0xf]
        %v4873 = vld [vmem:[%s9 + $0x34] sm:$0xf]
        %v4874 = vld [vmem:[%s9 + $0x38] sm:$0xf]
        %v4875 = vld [vmem:[%s9 + $0x3c] sm:$0xf]
        %v4876 = vld [vmem:[%s10] sm:$0x1]
        %v4893 = vunpack.c.l.b16 %v4860
        %v4894 = vunpack.c.l.b16 %v4861
        %v4895 = vunpack.c.l.b16 %v4862
        %v4896 = vunpack.c.l.b16 %v4863
        %v4897 = vunpack.c.l.b16 %v4864
        %v4898 = vunpack.c.l.b16 %v4865
        %v4899 = vunpack.c.l.b16 %v4866
        %v4900 = vunpack.c.l.b16 %v4867
        %v4901 = vunpack.c.l.b16 %v4868
        %v4902 = vunpack.c.l.b16 %v4869
        %v4903 = vunpack.c.l.b16 %v4870
        %v4904 = vunpack.c.l.b16 %v4871
        %v4905 = vunpack.c.l.b16 %v4872
        %v4906 = vunpack.c.l.b16 %v4873
        %v4907 = vunpack.c.l.b16 %v4874
        %v4908 = vunpack.c.l.b16 %v4875
        %v4909 = vpack.c.b16 %v4894, %v4893
        %v4910 = vpack.c.b16 %v4896, %v4895
        %v4911 = vpack.c.b16 %v4898, %v4897
        %v4912 = vpack.c.b16 %v4900, %v4899
        %v4913 = vpack.c.b16 %v4902, %v4901
        %v4914 = vpack.c.b16 %v4904, %v4903
        %v4915 = vpack.c.b16 %v4906, %v4905
        %v4916 = vpack.c.b16 %v4908, %v4907
        %4925 = vmatpush.bf16.msra.mxu0 %v4916
        %4926 = vmatpush.bf16.msra.mxu0 %v4915
        %4927 = vmatpush.bf16.msra.mxu0 %v4914
        %4928 = vmatpush.bf16.msra.mxu0 %v4913
        %4929 = vmatpush.bf16.msra.mxu0 %v4912
        %4930 = vmatpush.bf16.msra.mxu0 %v4911
        %4931 = vmatpush.bf16.msra.mxu0 %v4910
        %4932 = vmatpush.bf16.msra.mxu0 %v4909
        %4933 = vmatmul.f32.gmra.mxu0 %v4859
        %v4934 = vpop.f32.mrf.mxu0
        %v4935 = vadd.f32 %v4876, %v4934
        %4936 = vdwg.mxu0
        %4937 = vst [vmem:[%s378] sm:$0x1] %v4935
        %s4938 = sand.u32 %s269, 1
        %s4939 = scalar_lea.sflag [#allocation8], %s4938
        %s4940 = sand.u32 %s269, 1
        %s4941 = scalar_lea.vmem [#allocation7], %s4940
        // Predicated region
        $region72: #{model5_forward.1} parent=63 // pred_check
          %p4942 = pneg %p279
        $region73: #{model5_forward.1} parent=63 // pred_check_branch
          %4944 = sbr.rel (%p4942) target = $region75
        $region74: #{model5_forward.1} parent=63 // pred_region
          %4946 = vsyncadd %s4939, 0
          %s4947 = scalar_lea.hbm %s11, %s25
          %s4949 = sshll.u32 %s4941, 4
          %s4950 = int_to_ptr.vmem [resolvable:$true] %s4949
          %s4951 = sshll.u32 %s4947, 4
          %s4952 = int_to_ptr.hbm [resolvable:$true] %s4951
          %4954 = dma.vmem_to_hbm [thread:$0]  %s4950, 16, %s4952, %s4939
        $region75: #{model5_forward.1} parent=63 // pred_fallthru
          _
      $region64: #{model5_forward.1} parent=5 // pred_fallthru
        _
      %p4955 = scmp.le.s32.totalorder 2, %s20
      // Predicated region
      $region76: #{model5_forward.1} parent=5 // pred_check
        %p4956 = pneg %p4955
      $region77: #{model5_forward.1} parent=5 // pred_check_branch
        %4958 = sbr.rel (%p4956) target = $region79
      $region78: #{model5_forward.1} parent=5 // pred_region
        %s4959 = ssub.s32 %s20, 2
        // Predicated region
        $region80: #{model5_forward.1} parent=78 // pred_check
          %p4960 = pneg %p285
        $region81: #{model5_forward.1} parent=78 // pred_check_branch
          %4962 = sbr.rel (%p4960) target = $region83
        $region82: #{model5_forward.1} parent=78 // pred_region
          %s4963 = sand.u32 %s270, 1
          %s4964 = scalar_lea.sflag [#allocation8], %s4963
          %s4965 = sand.u32 %s270, 1
          %s4966 = scalar_lea.vmem [#allocation7], %s4965
          %4968 = dma.done %s4964, 16
        $region83: #{model5_forward.1} parent=78 // pred_fallthru
          _
      $region79: #{model5_forward.1} parent=5 // pred_fallthru
        _
    $region6: #{model5_forward.1} parent=1 // loop_footer
      %s24 = sadd.s32 1, %s20
    $region7: #{model5_forward.1} parent=1 // loop_footer_branch
      %19 = sbr.rel target = $region3
    $region8: #{model5_forward.1} parent=1 // loop_exit
      _
    %4969 = vsyncpa [#allocation8], 1
    %s4970 = scalar_lea.sflag [#allocation8], 1
    %4971 = vsyncpa %s4970, 1

</llo_original>
